<compile_context>
chip_gen: v6e
topology: v6e:2x2x1
jax: 0.10.0
libtpu: 0.0.40
codegen_flags: <defaults>
</compile_context>

<pallas_src>
import functools

import jax
import jax.numpy as jnp
from jax.experimental import pallas as pl
from jax.experimental.pallas import tpu as pltpu


# ----------------------------- Pallas kernels ------------------------------ #

def _conv_bn_kernel(p_ref, w_ref, s_ref, b_ref, *rest, relu, has_res):
    """im2col matmul (bf16 -> f32 acc) + BN affine (+ residual) (+ ReLU) epilogue."""
    if has_res:
        r_ref, o_ref = rest
    else:
        (o_ref,) = rest
    acc = jnp.dot(p_ref[...], w_ref[...], preferred_element_type=jnp.float32)
    y = acc * s_ref[...] + b_ref[...]
    if has_res:
        y = y + r_ref[...].astype(jnp.float32)
    if relu:
        y = jnp.maximum(y, 0.0)
    o_ref[...] = y.astype(o_ref.dtype)


def _maxpool_kernel(p00_ref, p01_ref, p10_ref, p11_ref, o_ref):
    """3x3 stride-2 pad-1 max pool from the four stride-2 parity planes."""
    OH, OW = o_ref.shape[1], o_ref.shape[2]
    p00 = p00_ref[...]
    p01 = p01_ref[...]
    p10 = p10_ref[...]
    p11 = p11_ref[...]
    m = p00[:, 0:OH, 0:OW, :]
    m = jnp.maximum(m, p00[:, 0:OH, 1:OW + 1, :])
    m = jnp.maximum(m, p00[:, 1:OH + 1, 0:OW, :])
    m = jnp.maximum(m, p00[:, 1:OH + 1, 1:OW + 1, :])
    m = jnp.maximum(m, p01[:, 0:OH, 0:OW, :])
    m = jnp.maximum(m, p01[:, 1:OH + 1, 0:OW, :])
    m = jnp.maximum(m, p10[:, 0:OH, 0:OW, :])
    m = jnp.maximum(m, p10[:, 0:OH, 1:OW + 1, :])
    m = jnp.maximum(m, p11[:, 0:OH, 0:OW, :])
    o_ref[...] = m


def _head_kernel(x_ref, w_ref, b_ref, o_ref):
    """Global average pool over the spatial axis fused with the FC layer."""
    x = x_ref[...].astype(jnp.float32)              # (N, H*W, C)
    pooled = jnp.mean(x, axis=1)                    # (N, C)
    o_ref[...] = jnp.dot(pooled, w_ref[...],
                         preferred_element_type=jnp.float32) + b_ref[...]


# ----------------------------- layer wrappers ------------------------------ #

def _fused_conv_call(patches, w_mat, scale, bias, residual, relu):
    """patches: (M, K) bf16, w_mat: (K, C) bf16 -> (M, C) bf16, fused BN/res/ReLU."""
    M, K = patches.shape
    C = w_mat.shape[1]
    tm = min(M, 512)                 # M is always a power of two >= 8 here
    in_specs = [
        pl.BlockSpec((tm, K), lambda m: (m, 0)),
        pl.BlockSpec((K, C), lambda m: (0, 0)),
        pl.BlockSpec((1, C), lambda m: (0, 0)),
        pl.BlockSpec((1, C), lambda m: (0, 0)),
    ]
    args = [patches, w_mat, scale, bias]
    if residual is not None:
        in_specs.append(pl.BlockSpec((tm, C), lambda m: (m, 0)))
        args.append(residual)
    return pl.pallas_call(
        functools.partial(_conv_bn_kernel, relu=relu,
                          has_res=residual is not None),
        out_shape=jax.ShapeDtypeStruct((M, C), jnp.bfloat16),
        grid=(M // tm,),
        in_specs=in_specs,
        out_specs=pl.BlockSpec((tm, C), lambda m: (m, 0)),
        compiler_params=pltpu.CompilerParams(
            dimension_semantics=("parallel",),
            vmem_limit_bytes=32 * 1024 * 1024),
    )(*args)


def conv_bn(x, w_mat, bn, *, k, stride, pad, relu, residual=None):
    """k x k conv (groups folded into block-diagonal w_mat) + BN (+ residual) (+ ReLU)."""
    N, H, W, Cin = x.shape
    OH = (H + 2 * pad - k) // stride + 1
    OW = (W + 2 * pad - k) // stride + 1
    xp = jnp.pad(x, ((0, 0), (pad, pad), (pad, pad), (0, 0))) if pad else x
    if k == 1:
        patches = xp[:, :stride * (OH - 1) + 1:stride,
                     :stride * (OW - 1) + 1:stride, :]
        patches = patches.reshape(N * OH * OW, Cin)
    else:
        views = []                  # im2col glue in bf16; the Pallas matmul is the hot path
        for i in range(k):
            for j in range(k):
                views.append(xp[:, i:i + stride * (OH - 1) + 1:stride,
                                j:j + stride * (OW - 1) + 1:stride, :])
        patches = jnp.stack(views, axis=3).reshape(N * OH * OW, k * k * Cin)
    patches = patches.astype(jnp.bfloat16)
    res = None
    if residual is not None:
        res = residual.reshape(N * OH * OW, -1).astype(jnp.bfloat16)
    out = _fused_conv_call(patches, w_mat, bn["scale"], bn["bias"], res, relu)
    return out.reshape(N, OH, OW, w_mat.shape[1])


def maxpool_3x3_s2_p1(x):
    N, H, W, C = x.shape
    OH = (H - 1) // 2 + 1
    OW = (W - 1) // 2 + 1
    xp = jnp.pad(x, ((0, 0), (1, 1), (1, 1), (0, 0)), constant_values=-jnp.inf)
    p00 = xp[:, 0::2, 0::2, :]       # stride-2 parity planes (~1x bytes, not 9x)
    p01 = xp[:, 0::2, 1::2, :]
    p10 = xp[:, 1::2, 0::2, :]
    p11 = xp[:, 1::2, 1::2, :]
    return pl.pallas_call(
        _maxpool_kernel,
        out_shape=jax.ShapeDtypeStruct((N, OH, OW, C), x.dtype),
    )(p00, p01, p10, p11)


def basic_block(x, p, stride):
    out1 = conv_bn(x, p["conv1_w"], p["bn1"], k=3, stride=stride, pad=1, relu=True)
    if "down_w" in p:
        identity = conv_bn(x, p["down_w"], p["down_bn"],
                           k=1, stride=stride, pad=0, relu=False)
    else:
        identity = x
    # conv2 + bn2 + residual add + relu fused in one kernel
    return conv_bn(out1, p["conv2_w"], p["bn2"], k=3, stride=1, pad=1,
                   relu=True, residual=identity)


def resnet18_grouped_forward(params, x_nchw):
    x = jnp.transpose(x_nchw, (0, 2, 3, 1)).astype(jnp.bfloat16)   # NCHW -> NHWC
    x = conv_bn(x, params["conv1_w"], params["bn1"],
                k=7, stride=2, pad=3, relu=True)                   # stem 7x7/2 (+BN+ReLU)
    x = maxpool_3x3_s2_p1(x)
    for li in range(4):
        for b, blk in enumerate(params[f"layer{li + 1}"]):
            stride = 2 if (li > 0 and b == 0) else 1
            x = basic_block(x, blk, stride)
    N, H, W, C = x.shape
    logits = pl.pallas_call(
        _head_kernel,
        out_shape=jax.ShapeDtypeStruct((N, params["fc_w"].shape[1]), jnp.float32),
    )(x.reshape(N, H * W, C), params["fc_w"], params["fc_b"])
    return logits


# --------------------------- deterministic params -------------------------- #

def _make_bn(key, c, eps=1e-5):
    k1, k2, k3, k4 = jax.random.split(key, 4)
    gamma = 1.0 + 0.1 * jax.random.normal(k1, (c,), jnp.float32)
    beta = 0.1 * jax.random.normal(k2, (c,), jnp.float32)
    mean = 0.1 * jax.random.normal(k3, (c,), jnp.float32)
    var = 1.0 + 0.1 * jnp.abs(jax.random.normal(k4, (c,), jnp.float32))
    scale = gamma / jnp.sqrt(var + eps)
    bias = beta - mean * scale
    return {"scale": scale.reshape(1, c), "bias": bias.reshape(1, c)}


def _make_conv(key, cin, cout, k, groups):
    cin_g, cout_g = cin // groups, cout // groups
    fan_in = float(cin_g * k * k)
    return (jax.random.normal(key, (groups, k, k, cin_g, cout_g), jnp.float32)
            / jnp.sqrt(fan_in))


def _conv_weight_to_matrix(w):
    """(G, KH, KW, cin_g, cout_g) grouped weight -> dense block-diagonal (KH*KW*Cin, Cout).

    Row index = tap * Cin + (g * cin_g + ic), matching the im2col patch layout and
    PyTorch's contiguous-group channel convention; column = g * cout_g + oc.
    """
    G, KH, KW, cin_g, cout_g = w.shape
    T = KH * KW
    wt = w.reshape(G, T, cin_g, cout_g)
    mat = jnp.zeros((T, G, cin_g, G, cout_g), w.dtype)
    for g in range(G):
        mat = mat.at[:, g, :, g, :].set(wt[g])
    return mat.reshape(T * G * cin_g, G * cout_g)


def _prep_conv(key, cin, cout, k, groups):
    return _conv_weight_to_matrix(
        _make_conv(key, cin, cout, k, groups)).astype(jnp.bfloat16)


def _make_block(key, cin, cout, stride, groups):
    ks = jax.random.split(key, 6)
    p = {
        "conv1_w": _prep_conv(ks[0], cin, cout, 3, groups),
        "bn1": _make_bn(ks[1], cout),
        "conv2_w": _prep_conv(ks[2], cout, cout, 3, groups),
        "bn2": _make_bn(ks[3], cout),
    }
    if stride != 1 or cin != cout:
        p["down_w"] = _prep_conv(ks[4], cin, cout, 1, 1)   # 1x1 stays ungrouped
        p["down_bn"] = _make_bn(ks[5], cout)
    return p


def init_params(key, width=8, num_classes=10, groups=2):
    ks = jax.random.split(key, 12)
    params = {
        # stem: in_channels=3 not divisible by groups, gcd(3, width)=1 -> regular conv
        "conv1_w": _prep_conv(ks[0], 3, width, 7, 1),
        "bn1": _make_bn(ks[1], width),
    }
    chans = [width, width * 2, width * 4, width * 8]
    cin = width
    ki = 2
    for li, cout in enumerate(chans):
        blocks = []
        for b in range(2):
            stride = 2 if (li > 0 and b == 0) else 1
            blocks.append(_make_block(ks[ki], cin if b == 0 else cout,
                                      cout, stride, groups))
            ki += 1
        params[f"layer{li + 1}"] = blocks
        cin = cout
    params["fc_w"] = (jax.random.normal(ks[10], (chans[-1], num_classes),
                                        jnp.float32) / jnp.sqrt(chans[-1]))
    params["fc_b"] = 0.1 * jax.random.normal(ks[11], (1, num_classes), jnp.float32)
    return params


# ---------------------------------- main ----------------------------------- #

if __name__ == "__main__":
    key = jax.random.PRNGKey(0)
    pkey, xkey = jax.random.split(key)
    params = init_params(pkey, width=8, num_classes=10, groups=2)
    x = jax.random.normal(xkey, (2, 3, 64, 64), jnp.float32)  # NCHW, like PyTorch
    fwd = jax.jit(resnet18_grouped_forward)
    logits = fwd(params, x)
    jax.block_until_ready(logits)
    assert logits.shape == (2, 10), logits.shape
    assert bool(jnp.all(jnp.isfinite(logits)))
    print("KERNEL_OK")
</pallas_src>

<mosaic_0001>
module attributes {stable_mosaic.version = 11 : i64} {
  func.func @_conv_bn_kernel(%arg0: i32, %arg1: memref<512x147xbf16, #tpu.memory_space<vmem>>, %arg2: memref<147x8xbf16, #tpu.memory_space<vmem>>, %arg3: memref<1x8xf32, #tpu.memory_space<vmem>>, %arg4: memref<1x8xf32, #tpu.memory_space<vmem>>, %arg5: memref<512x8xbf16, #tpu.memory_space<vmem>>) attributes {dimension_semantics = [#tpu.dimension_semantics<parallel>], iteration_bounds = array<i64: 4>, scalar_prefetch = 0 : i64, scratch_operands = 0 : i64, tpu.core_type = #tpu.core_type<tc>, window_params = [{transform_indices = @transform_0, window_bounds = array<i64: 512, 147>}, {pipeline_mode = #tpu.pipeline_mode<synchronous>, transform_indices = @transform_1, window_bounds = array<i64: 147, 8>}, {pipeline_mode = #tpu.pipeline_mode<synchronous>, transform_indices = @transform_2, window_bounds = array<i64: 1, 8>}, {pipeline_mode = #tpu.pipeline_mode<synchronous>, transform_indices = @transform_3, window_bounds = array<i64: 1, 8>}, {transform_indices = @transform_4, window_bounds = array<i64: 512, 8>}]} {
    %c0 = arith.constant 0 : index
    %c0_0 = arith.constant 0 : index
    %0 = vector.load %arg1[%c0, %c0_0] : memref<512x147xbf16, #tpu.memory_space<vmem>>, vector<512x147xbf16>
    %c0_1 = arith.constant 0 : index
    %c0_2 = arith.constant 0 : index
    %1 = vector.load %arg2[%c0_1, %c0_2] : memref<147x8xbf16, #tpu.memory_space<vmem>>, vector<147x8xbf16>
    %cst = arith.constant dense<0.000000e+00> : vector<512x8xf32>
    %2 = tpu.matmul %0, %1, %cst {dimension_numbers = #tpu.dot_dimension_numbers<[1], [0], [0], [1], [0, 0, 1, 1], [], []>} : vector<512x147xbf16>, vector<147x8xbf16>, vector<512x8xf32> -> vector<512x8xf32>
    %c0_3 = arith.constant 0 : index
    %c0_4 = arith.constant 0 : index
    %3 = vector.load %arg3[%c0_3, %c0_4] : memref<1x8xf32, #tpu.memory_space<vmem>>, vector<1x8xf32>
    %4 = vector.broadcast %3 : vector<1x8xf32> to vector<512x8xf32>
    %5 = arith.mulf %2, %4 : vector<512x8xf32>
    %c0_5 = arith.constant 0 : index
    %c0_6 = arith.constant 0 : index
    %6 = vector.load %arg4[%c0_5, %c0_6] : memref<1x8xf32, #tpu.memory_space<vmem>>, vector<1x8xf32>
    %7 = vector.broadcast %6 : vector<1x8xf32> to vector<512x8xf32>
    %8 = arith.addf %5, %7 : vector<512x8xf32>
    %cst_7 = arith.constant 0.000000e+00 : f32
    %9 = vector.broadcast %cst_7 : f32 to vector<512x8xf32>
    %10 = arith.maximumf %8, %9 : vector<512x8xf32>
    %11 = arith.truncf %10 : vector<512x8xf32> to vector<512x8xbf16>
    %c0_8 = arith.constant 0 : index
    %c0_9 = arith.constant 0 : index
    %12 = vector.load %arg5[%c0_8, %c0_9] : memref<512x8xbf16, #tpu.memory_space<vmem>>, vector<512x8xbf16>
    tpu.vector_store %arg5[%c0_8, %c0_9], %11 {strides = array<i32>} : memref<512x8xbf16, #tpu.memory_space<vmem>>, vector<512x8xbf16>,
    return
  }
  func.func @transform_0(%arg0: i32) -> (i32, i32) {
    %c0_i32 = arith.constant 0 : i32
    %c0_i32_0 = arith.constant 0 : i32
    return %arg0, %c0_i32 : i32, i32
  }
  func.func @transform_1(%arg0: i32) -> (i32, i32) {
    %c0_i32 = arith.constant 0 : i32
    %c0_i32_0 = arith.constant 0 : i32
    %c0_i32_1 = arith.constant 0 : i32
    return %c0_i32, %c0_i32_0 : i32, i32
  }
  func.func @transform_2(%arg0: i32) -> (i32, i32) {
    %c0_i32 = arith.constant 0 : i32
    %c0_i32_0 = arith.constant 0 : i32
    %c0_i32_1 = arith.constant 0 : i32
    return %c0_i32, %c0_i32_0 : i32, i32
  }
  func.func @transform_3(%arg0: i32) -> (i32, i32) {
    %c0_i32 = arith.constant 0 : i32
    %c0_i32_0 = arith.constant 0 : i32
    %c0_i32_1 = arith.constant 0 : i32
    return %c0_i32, %c0_i32_0 : i32, i32
  }
  func.func @transform_4(%arg0: i32) -> (i32, i32) {
    %c0_i32 = arith.constant 0 : i32
    %c0_i32_0 = arith.constant 0 : i32
    return %arg0, %c0_i32 : i32, i32
  }
}

module attributes {stable_mosaic.version = 11 : i64} {
  func.func @_maxpool_kernel(%arg0: memref<2x17x17x8xbf16, #tpu.memory_space<vmem>>, %arg1: memref<2x17x17x8xbf16, #tpu.memory_space<vmem>>, %arg2: memref<2x17x17x8xbf16, #tpu.memory_space<vmem>>, %arg3: memref<2x17x17x8xbf16, #tpu.memory_space<vmem>>, %arg4: memref<2x16x16x8xbf16, #tpu.memory_space<vmem>>) attributes {dimension_semantics = [], scalar_prefetch = 0 : i64, scratch_operands = 0 : i64, tpu.core_type = #tpu.core_type<tc>} {
    %c0 = arith.constant 0 : index
    %c0_0 = arith.constant 0 : index
    %c0_1 = arith.constant 0 : index
    %c0_2 = arith.constant 0 : index
    %0 = vector.load %arg0[%c0, %c0_0, %c0_1, %c0_2] : memref<2x17x17x8xbf16, #tpu.memory_space<vmem>>, vector<2x17x17x8xbf16>
    %c0_3 = arith.constant 0 : index
    %c0_4 = arith.constant 0 : index
    %c0_5 = arith.constant 0 : index
    %c0_6 = arith.constant 0 : index
    %1 = vector.load %arg1[%c0_3, %c0_4, %c0_5, %c0_6] : memref<2x17x17x8xbf16, #tpu.memory_space<vmem>>, vector<2x17x17x8xbf16>
    %c0_7 = arith.constant 0 : index
    %c0_8 = arith.constant 0 : index
    %c0_9 = arith.constant 0 : index
    %c0_10 = arith.constant 0 : index
    %2 = vector.load %arg2[%c0_7, %c0_8, %c0_9, %c0_10] : memref<2x17x17x8xbf16, #tpu.memory_space<vmem>>, vector<2x17x17x8xbf16>
    %c0_11 = arith.constant 0 : index
    %c0_12 = arith.constant 0 : index
    %c0_13 = arith.constant 0 : index
    %c0_14 = arith.constant 0 : index
    %3 = vector.load %arg3[%c0_11, %c0_12, %c0_13, %c0_14] : memref<2x17x17x8xbf16, #tpu.memory_space<vmem>>, vector<2x17x17x8xbf16>
    %4 = vector.extract_strided_slice %0 {offsets = [0, 0, 0, 0], sizes = [2, 16, 16, 8], strides = [1, 1, 1, 1]} : vector<2x17x17x8xbf16> to vector<2x16x16x8xbf16>
    %5 = vector.extract_strided_slice %0 {offsets = [0, 0, 1, 0], sizes = [2, 16, 16, 8], strides = [1, 1, 1, 1]} : vector<2x17x17x8xbf16> to vector<2x16x16x8xbf16>
    %6 = arith.maximumf %4, %5 : vector<2x16x16x8xbf16>
    %7 = vector.extract_strided_slice %0 {offsets = [0, 1, 0, 0], sizes = [2, 16, 16, 8], strides = [1, 1, 1, 1]} : vector<2x17x17x8xbf16> to vector<2x16x16x8xbf16>
    %8 = arith.maximumf %6, %7 : vector<2x16x16x8xbf16>
    %9 = vector.extract_strided_slice %0 {offsets = [0, 1, 1, 0], sizes = [2, 16, 16, 8], strides = [1, 1, 1, 1]} : vector<2x17x17x8xbf16> to vector<2x16x16x8xbf16>
    %10 = arith.maximumf %8, %9 : vector<2x16x16x8xbf16>
    %11 = vector.extract_strided_slice %1 {offsets = [0, 0, 0, 0], sizes = [2, 16, 16, 8], strides = [1, 1, 1, 1]} : vector<2x17x17x8xbf16> to vector<2x16x16x8xbf16>
    %12 = arith.maximumf %10, %11 : vector<2x16x16x8xbf16>
    %13 = vector.extract_strided_slice %1 {offsets = [0, 1, 0, 0], sizes = [2, 16, 16, 8], strides = [1, 1, 1, 1]} : vector<2x17x17x8xbf16> to vector<2x16x16x8xbf16>
    %14 = arith.maximumf %12, %13 : vector<2x16x16x8xbf16>
    %15 = vector.extract_strided_slice %2 {offsets = [0, 0, 0, 0], sizes = [2, 16, 16, 8], strides = [1, 1, 1, 1]} : vector<2x17x17x8xbf16> to vector<2x16x16x8xbf16>
    %16 = arith.maximumf %14, %15 : vector<2x16x16x8xbf16>
    %17 = vector.extract_strided_slice %2 {offsets = [0, 0, 1, 0], sizes = [2, 16, 16, 8], strides = [1, 1, 1, 1]} : vector<2x17x17x8xbf16> to vector<2x16x16x8xbf16>
    %18 = arith.maximumf %16, %17 : vector<2x16x16x8xbf16>
    %19 = vector.extract_strided_slice %3 {offsets = [0, 0, 0, 0], sizes = [2, 16, 16, 8], strides = [1, 1, 1, 1]} : vector<2x17x17x8xbf16> to vector<2x16x16x8xbf16>
    %20 = arith.maximumf %18, %19 : vector<2x16x16x8xbf16>
    %c0_15 = arith.constant 0 : index
    %c0_16 = arith.constant 0 : index
    %c0_17 = arith.constant 0 : index
    %c0_18 = arith.constant 0 : index
    %21 = vector.load %arg4[%c0_15, %c0_16, %c0_17, %c0_18] : memref<2x16x16x8xbf16, #tpu.memory_space<vmem>>, vector<2x16x16x8xbf16>
    tpu.vector_store %arg4[%c0_15, %c0_16, %c0_17, %c0_18], %20 {strides = array<i32>} : memref<2x16x16x8xbf16, #tpu.memory_space<vmem>>, vector<2x16x16x8xbf16>,
    return
  }
}

module attributes {stable_mosaic.version = 11 : i64} {
  func.func @_conv_bn_kernel(%arg0: i32, %arg1: memref<512x72xbf16, #tpu.memory_space<vmem>>, %arg2: memref<72x8xbf16, #tpu.memory_space<vmem>>, %arg3: memref<1x8xf32, #tpu.memory_space<vmem>>, %arg4: memref<1x8xf32, #tpu.memory_space<vmem>>, %arg5: memref<512x8xbf16, #tpu.memory_space<vmem>>) attributes {dimension_semantics = [#tpu.dimension_semantics<parallel>], iteration_bounds = array<i64: 1>, scalar_prefetch = 0 : i64, scratch_operands = 0 : i64, tpu.core_type = #tpu.core_type<tc>, window_params = [{transform_indices = @transform_0, window_bounds = array<i64: 512, 72>}, {pipeline_mode = #tpu.pipeline_mode<synchronous>, transform_indices = @transform_1, window_bounds = array<i64: 72, 8>}, {pipeline_mode = #tpu.pipeline_mode<synchronous>, transform_indices = @transform_2, window_bounds = array<i64: 1, 8>}, {pipeline_mode = #tpu.pipeline_mode<synchronous>, transform_indices = @transform_3, window_bounds = array<i64: 1, 8>}, {transform_indices = @transform_4, window_bounds = array<i64: 512, 8>}]} {
    %c0 = arith.constant 0 : index
    %c0_0 = arith.constant 0 : index
    %0 = vector.load %arg1[%c0, %c0_0] : memref<512x72xbf16, #tpu.memory_space<vmem>>, vector<512x72xbf16>
    %c0_1 = arith.constant 0 : index
    %c0_2 = arith.constant 0 : index
    %1 = vector.load %arg2[%c0_1, %c0_2] : memref<72x8xbf16, #tpu.memory_space<vmem>>, vector<72x8xbf16>
    %cst = arith.constant dense<0.000000e+00> : vector<512x8xf32>
    %2 = tpu.matmul %0, %1, %cst {dimension_numbers = #tpu.dot_dimension_numbers<[1], [0], [0], [1], [0, 0, 1, 1], [], []>} : vector<512x72xbf16>, vector<72x8xbf16>, vector<512x8xf32> -> vector<512x8xf32>
    %c0_3 = arith.constant 0 : index
    %c0_4 = arith.constant 0 : index
    %3 = vector.load %arg3[%c0_3, %c0_4] : memref<1x8xf32, #tpu.memory_space<vmem>>, vector<1x8xf32>
    %4 = vector.broadcast %3 : vector<1x8xf32> to vector<512x8xf32>
    %5 = arith.mulf %2, %4 : vector<512x8xf32>
    %c0_5 = arith.constant 0 : index
    %c0_6 = arith.constant 0 : index
    %6 = vector.load %arg4[%c0_5, %c0_6] : memref<1x8xf32, #tpu.memory_space<vmem>>, vector<1x8xf32>
    %7 = vector.broadcast %6 : vector<1x8xf32> to vector<512x8xf32>
    %8 = arith.addf %5, %7 : vector<512x8xf32>
    %cst_7 = arith.constant 0.000000e+00 : f32
    %9 = vector.broadcast %cst_7 : f32 to vector<512x8xf32>
    %10 = arith.maximumf %8, %9 : vector<512x8xf32>
    %11 = arith.truncf %10 : vector<512x8xf32> to vector<512x8xbf16>
    %c0_8 = arith.constant 0 : index
    %c0_9 = arith.constant 0 : index
    %12 = vector.load %arg5[%c0_8, %c0_9] : memref<512x8xbf16, #tpu.memory_space<vmem>>, vector<512x8xbf16>
    tpu.vector_store %arg5[%c0_8, %c0_9], %11 {strides = array<i32>} : memref<512x8xbf16, #tpu.memory_space<vmem>>, vector<512x8xbf16>,
    return
  }
  func.func @transform_0(%arg0: i32) -> (i32, i32) {
    %c0_i32 = arith.constant 0 : i32
    %c0_i32_0 = arith.constant 0 : i32
    return %arg0, %c0_i32 : i32, i32
  }
  func.func @transform_1(%arg0: i32) -> (i32, i32) {
    %c0_i32 = arith.constant 0 : i32
    %c0_i32_0 = arith.constant 0 : i32
    %c0_i32_1 = arith.constant 0 : i32
    return %c0_i32, %c0_i32_0 : i32, i32
  }
  func.func @transform_2(%arg0: i32) -> (i32, i32) {
    %c0_i32 = arith.constant 0 : i32
    %c0_i32_0 = arith.constant 0 : i32
    %c0_i32_1 = arith.constant 0 : i32
    return %c0_i32, %c0_i32_0 : i32, i32
  }
  func.func @transform_3(%arg0: i32) -> (i32, i32) {
    %c0_i32 = arith.constant 0 : i32
    %c0_i32_0 = arith.constant 0 : i32
    %c0_i32_1 = arith.constant 0 : i32
    return %c0_i32, %c0_i32_0 : i32, i32
  }
  func.func @transform_4(%arg0: i32) -> (i32, i32) {
    %c0_i32 = arith.constant 0 : i32
    %c0_i32_0 = arith.constant 0 : i32
    return %arg0, %c0_i32 : i32, i32
  }
}

module attributes {stable_mosaic.version = 11 : i64} {
  func.func @_conv_bn_kernel(%arg0: i32, %arg1: memref<512x72xbf16, #tpu.memory_space<vmem>>, %arg2: memref<72x8xbf16, #tpu.memory_space<vmem>>, %arg3: memref<1x8xf32, #tpu.memory_space<vmem>>, %arg4: memref<1x8xf32, #tpu.memory_space<vmem>>, %arg5: memref<512x8xbf16, #tpu.memory_space<vmem>>, %arg6: memref<512x8xbf16, #tpu.memory_space<vmem>>) attributes {dimension_semantics = [#tpu.dimension_semantics<parallel>], iteration_bounds = array<i64: 1>, scalar_prefetch = 0 : i64, scratch_operands = 0 : i64, tpu.core_type = #tpu.core_type<tc>, window_params = [{transform_indices = @transform_0, window_bounds = array<i64: 512, 72>}, {pipeline_mode = #tpu.pipeline_mode<synchronous>, transform_indices = @transform_1, window_bounds = array<i64: 72, 8>}, {pipeline_mode = #tpu.pipeline_mode<synchronous>, transform_indices = @transform_2, window_bounds = array<i64: 1, 8>}, {pipeline_mode = #tpu.pipeline_mode<synchronous>, transform_indices = @transform_3, window_bounds = array<i64: 1, 8>}, {transform_indices = @transform_4, window_bounds = array<i64: 512, 8>}, {transform_indices = @transform_5, window_bounds = array<i64: 512, 8>}]} {
    %c0 = arith.constant 0 : index
    %c0_0 = arith.constant 0 : index
    %0 = vector.load %arg1[%c0, %c0_0] : memref<512x72xbf16, #tpu.memory_space<vmem>>, vector<512x72xbf16>
    %c0_1 = arith.constant 0 : index
    %c0_2 = arith.constant 0 : index
    %1 = vector.load %arg2[%c0_1, %c0_2] : memref<72x8xbf16, #tpu.memory_space<vmem>>, vector<72x8xbf16>
    %cst = arith.constant dense<0.000000e+00> : vector<512x8xf32>
    %2 = tpu.matmul %0, %1, %cst {dimension_numbers = #tpu.dot_dimension_numbers<[1], [0], [0], [1], [0, 0, 1, 1], [], []>} : vector<512x72xbf16>, vector<72x8xbf16>, vector<512x8xf32> -> vector<512x8xf32>
    %c0_3 = arith.constant 0 : index
    %c0_4 = arith.constant 0 : index
    %3 = vector.load %arg3[%c0_3, %c0_4] : memref<1x8xf32, #tpu.memory_space<vmem>>, vector<1x8xf32>
    %4 = vector.broadcast %3 : vector<1x8xf32> to vector<512x8xf32>
    %5 = arith.mulf %2, %4 : vector<512x8xf32>
    %c0_5 = arith.constant 0 : index
    %c0_6 = arith.constant 0 : index
    %6 = vector.load %arg4[%c0_5, %c0_6] : memref<1x8xf32, #tpu.memory_space<vmem>>, vector<1x8xf32>
    %7 = vector.broadcast %6 : vector<1x8xf32> to vector<512x8xf32>
    %8 = arith.addf %5, %7 : vector<512x8xf32>
    %c0_7 = arith.constant 0 : index
    %c0_8 = arith.constant 0 : index
    %9 = vector.load %arg5[%c0_7, %c0_8] : memref<512x8xbf16, #tpu.memory_space<vmem>>, vector<512x8xbf16>
    %10 = arith.extf %9 : vector<512x8xbf16> to vector<512x8xf32>
    %11 = arith.addf %8, %10 : vector<512x8xf32>
    %cst_9 = arith.constant 0.000000e+00 : f32
    %12 = vector.broadcast %cst_9 : f32 to vector<512x8xf32>
    %13 = arith.maximumf %11, %12 : vector<512x8xf32>
    %14 = arith.truncf %13 : vector<512x8xf32> to vector<512x8xbf16>
    %c0_10 = arith.constant 0 : index
    %c0_11 = arith.constant 0 : index
    %15 = vector.load %arg6[%c0_10, %c0_11] : memref<512x8xbf16, #tpu.memory_space<vmem>>, vector<512x8xbf16>
    tpu.vector_store %arg6[%c0_10, %c0_11], %14 {strides = array<i32>} : memref<512x8xbf16, #tpu.memory_space<vmem>>, vector<512x8xbf16>,
    return
  }
  func.func @transform_0(%arg0: i32) -> (i32, i32) {
    %c0_i32 = arith.constant 0 : i32
    %c0_i32_0 = arith.constant 0 : i32
    return %arg0, %c0_i32 : i32, i32
  }
  func.func @transform_1(%arg0: i32) -> (i32, i32) {
    %c0_i32 = arith.constant 0 : i32
    %c0_i32_0 = arith.constant 0 : i32
    %c0_i32_1 = arith.constant 0 : i32
    return %c0_i32, %c0_i32_0 : i32, i32
  }
  func.func @transform_2(%arg0: i32) -> (i32, i32) {
    %c0_i32 = arith.constant 0 : i32
    %c0_i32_0 = arith.constant 0 : i32
    %c0_i32_1 = arith.constant 0 : i32
    return %c0_i32, %c0_i32_0 : i32, i32
  }
  func.func @transform_3(%arg0: i32) -> (i32, i32) {
    %c0_i32 = arith.constant 0 : i32
    %c0_i32_0 = arith.constant 0 : i32
    %c0_i32_1 = arith.constant 0 : i32
    return %c0_i32, %c0_i32_0 : i32, i32
  }
  func.func @transform_4(%arg0: i32) -> (i32, i32) {
    %c0_i32 = arith.constant 0 : i32
    %c0_i32_0 = arith.constant 0 : i32
    return %arg0, %c0_i32 : i32, i32
  }
  func.func @transform_5(%arg0: i32) -> (i32, i32) {
    %c0_i32 = arith.constant 0 : i32
    %c0_i32_0 = arith.constant 0 : i32
    return %arg0, %c0_i32 : i32, i32
  }
}

module attributes {stable_mosaic.version = 11 : i64} {
  func.func @_conv_bn_kernel(%arg0: i32, %arg1: memref<128x72xbf16, #tpu.memory_space<vmem>>, %arg2: memref<72x16xbf16, #tpu.memory_space<vmem>>, %arg3: memref<1x16xf32, #tpu.memory_space<vmem>>, %arg4: memref<1x16xf32, #tpu.memory_space<vmem>>, %arg5: memref<128x16xbf16, #tpu.memory_space<vmem>>) attributes {dimension_semantics = [#tpu.dimension_semantics<parallel>], iteration_bounds = array<i64: 1>, scalar_prefetch = 0 : i64, scratch_operands = 0 : i64, tpu.core_type = #tpu.core_type<tc>, window_params = [{transform_indices = @transform_0, window_bounds = array<i64: 128, 72>}, {pipeline_mode = #tpu.pipeline_mode<synchronous>, transform_indices = @transform_1, window_bounds = array<i64: 72, 16>}, {pipeline_mode = #tpu.pipeline_mode<synchronous>, transform_indices = @transform_2, window_bounds = array<i64: 1, 16>}, {pipeline_mode = #tpu.pipeline_mode<synchronous>, transform_indices = @transform_3, window_bounds = array<i64: 1, 16>}, {transform_indices = @transform_4, window_bounds = array<i64: 128, 16>}]} {
    %c0 = arith.constant 0 : index
    %c0_0 = arith.constant 0 : index
    %0 = vector.load %arg1[%c0, %c0_0] : memref<128x72xbf16, #tpu.memory_space<vmem>>, vector<128x72xbf16>
    %c0_1 = arith.constant 0 : index
    %c0_2 = arith.constant 0 : index
    %1 = vector.load %arg2[%c0_1, %c0_2] : memref<72x16xbf16, #tpu.memory_space<vmem>>, vector<72x16xbf16>
    %cst = arith.constant dense<0.000000e+00> : vector<128x16xf32>
    %2 = tpu.matmul %0, %1, %cst {dimension_numbers = #tpu.dot_dimension_numbers<[1], [0], [0], [1], [0, 0, 1, 1], [], []>} : vector<128x72xbf16>, vector<72x16xbf16>, vector<128x16xf32> -> vector<128x16xf32>
    %c0_3 = arith.constant 0 : index
    %c0_4 = arith.constant 0 : index
    %3 = vector.load %arg3[%c0_3, %c0_4] : memref<1x16xf32, #tpu.memory_space<vmem>>, vector<1x16xf32>
    %4 = vector.broadcast %3 : vector<1x16xf32> to vector<128x16xf32>
    %5 = arith.mulf %2, %4 : vector<128x16xf32>
    %c0_5 = arith.constant 0 : index
    %c0_6 = arith.constant 0 : index
    %6 = vector.load %arg4[%c0_5, %c0_6] : memref<1x16xf32, #tpu.memory_space<vmem>>, vector<1x16xf32>
    %7 = vector.broadcast %6 : vector<1x16xf32> to vector<128x16xf32>
    %8 = arith.addf %5, %7 : vector<128x16xf32>
    %cst_7 = arith.constant 0.000000e+00 : f32
    %9 = vector.broadcast %cst_7 : f32 to vector<128x16xf32>
    %10 = arith.maximumf %8, %9 : vector<128x16xf32>
    %11 = arith.truncf %10 : vector<128x16xf32> to vector<128x16xbf16>
    %c0_8 = arith.constant 0 : index
    %c0_9 = arith.constant 0 : index
    %12 = vector.load %arg5[%c0_8, %c0_9] : memref<128x16xbf16, #tpu.memory_space<vmem>>, vector<128x16xbf16>
    tpu.vector_store %arg5[%c0_8, %c0_9], %11 {strides = array<i32>} : memref<128x16xbf16, #tpu.memory_space<vmem>>, vector<128x16xbf16>,
    return
  }
  func.func @transform_0(%arg0: i32) -> (i32, i32) {
    %c0_i32 = arith.constant 0 : i32
    %c0_i32_0 = arith.constant 0 : i32
    return %arg0, %c0_i32 : i32, i32
  }
  func.func @transform_1(%arg0: i32) -> (i32, i32) {
    %c0_i32 = arith.constant 0 : i32
    %c0_i32_0 = arith.constant 0 : i32
    %c0_i32_1 = arith.constant 0 : i32
    return %c0_i32, %c0_i32_0 : i32, i32
  }
  func.func @transform_2(%arg0: i32) -> (i32, i32) {
    %c0_i32 = arith.constant 0 : i32
    %c0_i32_0 = arith.constant 0 : i32
    %c0_i32_1 = arith.constant 0 : i32
    return %c0_i32, %c0_i32_0 : i32, i32
  }
  func.func @transform_3(%arg0: i32) -> (i32, i32) {
    %c0_i32 = arith.constant 0 : i32
    %c0_i32_0 = arith.constant 0 : i32
    %c0_i32_1 = arith.constant 0 : i32
    return %c0_i32, %c0_i32_0 : i32, i32
  }
  func.func @transform_4(%arg0: i32) -> (i32, i32) {
    %c0_i32 = arith.constant 0 : i32
    %c0_i32_0 = arith.constant 0 : i32
    return %arg0, %c0_i32 : i32, i32
  }
}

module attributes {stable_mosaic.version = 11 : i64} {
  func.func @_conv_bn_kernel(%arg0: i32, %arg1: memref<128x8xbf16, #tpu.memory_space<vmem>>, %arg2: memref<8x16xbf16, #tpu.memory_space<vmem>>, %arg3: memref<1x16xf32, #tpu.memory_space<vmem>>, %arg4: memref<1x16xf32, #tpu.memory_space<vmem>>, %arg5: memref<128x16xbf16, #tpu.memory_space<vmem>>) attributes {dimension_semantics = [#tpu.dimension_semantics<parallel>], iteration_bounds = array<i64: 1>, scalar_prefetch = 0 : i64, scratch_operands = 0 : i64, tpu.core_type = #tpu.core_type<tc>, window_params = [{transform_indices = @transform_0, window_bounds = array<i64: 128, 8>}, {pipeline_mode = #tpu.pipeline_mode<synchronous>, transform_indices = @transform_1, window_bounds = array<i64: 8, 16>}, {pipeline_mode = #tpu.pipeline_mode<synchronous>, transform_indices = @transform_2, window_bounds = array<i64: 1, 16>}, {pipeline_mode = #tpu.pipeline_mode<synchronous>, transform_indices = @transform_3, window_bounds = array<i64: 1, 16>}, {transform_indices = @transform_4, window_bounds = array<i64: 128, 16>}]} {
    %c0 = arith.constant 0 : index
    %c0_0 = arith.constant 0 : index
    %0 = vector.load %arg1[%c0, %c0_0] : memref<128x8xbf16, #tpu.memory_space<vmem>>, vector<128x8xbf16>
    %c0_1 = arith.constant 0 : index
    %c0_2 = arith.constant 0 : index
    %1 = vector.load %arg2[%c0_1, %c0_2] : memref<8x16xbf16, #tpu.memory_space<vmem>>, vector<8x16xbf16>
    %cst = arith.constant dense<0.000000e+00> : vector<128x16xf32>
    %2 = tpu.matmul %0, %1, %cst {dimension_numbers = #tpu.dot_dimension_numbers<[1], [0], [0], [1], [0, 0, 1, 1], [], []>} : vector<128x8xbf16>, vector<8x16xbf16>, vector<128x16xf32> -> vector<128x16xf32>
    %c0_3 = arith.constant 0 : index
    %c0_4 = arith.constant 0 : index
    %3 = vector.load %arg3[%c0_3, %c0_4] : memref<1x16xf32, #tpu.memory_space<vmem>>, vector<1x16xf32>
    %4 = vector.broadcast %3 : vector<1x16xf32> to vector<128x16xf32>
    %5 = arith.mulf %2, %4 : vector<128x16xf32>
    %c0_5 = arith.constant 0 : index
    %c0_6 = arith.constant 0 : index
    %6 = vector.load %arg4[%c0_5, %c0_6] : memref<1x16xf32, #tpu.memory_space<vmem>>, vector<1x16xf32>
    %7 = vector.broadcast %6 : vector<1x16xf32> to vector<128x16xf32>
    %8 = arith.addf %5, %7 : vector<128x16xf32>
    %9 = arith.truncf %8 : vector<128x16xf32> to vector<128x16xbf16>
    %c0_7 = arith.constant 0 : index
    %c0_8 = arith.constant 0 : index
    %10 = vector.load %arg5[%c0_7, %c0_8] : memref<128x16xbf16, #tpu.memory_space<vmem>>, vector<128x16xbf16>
    tpu.vector_store %arg5[%c0_7, %c0_8], %9 {strides = array<i32>} : memref<128x16xbf16, #tpu.memory_space<vmem>>, vector<128x16xbf16>,
    return
  }
  func.func @transform_0(%arg0: i32) -> (i32, i32) {
    %c0_i32 = arith.constant 0 : i32
    %c0_i32_0 = arith.constant 0 : i32
    return %arg0, %c0_i32 : i32, i32
  }
  func.func @transform_1(%arg0: i32) -> (i32, i32) {
    %c0_i32 = arith.constant 0 : i32
    %c0_i32_0 = arith.constant 0 : i32
    %c0_i32_1 = arith.constant 0 : i32
    return %c0_i32, %c0_i32_0 : i32, i32
  }
  func.func @transform_2(%arg0: i32) -> (i32, i32) {
    %c0_i32 = arith.constant 0 : i32
    %c0_i32_0 = arith.constant 0 : i32
    %c0_i32_1 = arith.constant 0 : i32
    return %c0_i32, %c0_i32_0 : i32, i32
  }
  func.func @transform_3(%arg0: i32) -> (i32, i32) {
    %c0_i32 = arith.constant 0 : i32
    %c0_i32_0 = arith.constant 0 : i32
    %c0_i32_1 = arith.constant 0 : i32
    return %c0_i32, %c0_i32_0 : i32, i32
  }
  func.func @transform_4(%arg0: i32) -> (i32, i32) {
    %c0_i32 = arith.constant 0 : i32
    %c0_i32_0 = arith.constant 0 : i32
    return %arg0, %c0_i32 : i32, i32
  }
}

module attributes {stable_mosaic.version = 11 : i64} {
  func.func @_conv_bn_kernel(%arg0: i32, %arg1: memref<128x144xbf16, #tpu.memory_space<vmem>>, %arg2: memref<144x16xbf16, #tpu.memory_space<vmem>>, %arg3: memref<1x16xf32, #tpu.memory_space<vmem>>, %arg4: memref<1x16xf32, #tpu.memory_space<vmem>>, %arg5: memref<128x16xbf16, #tpu.memory_space<vmem>>, %arg6: memref<128x16xbf16, #tpu.memory_space<vmem>>) attributes {dimension_semantics = [#tpu.dimension_semantics<parallel>], iteration_bounds = array<i64: 1>, scalar_prefetch = 0 : i64, scratch_operands = 0 : i64, tpu.core_type = #tpu.core_type<tc>, window_params = [{transform_indices = @transform_0, window_bounds = array<i64: 128, 144>}, {pipeline_mode = #tpu.pipeline_mode<synchronous>, transform_indices = @transform_1, window_bounds = array<i64: 144, 16>}, {pipeline_mode = #tpu.pipeline_mode<synchronous>, transform_indices = @transform_2, window_bounds = array<i64: 1, 16>}, {pipeline_mode = #tpu.pipeline_mode<synchronous>, transform_indices = @transform_3, window_bounds = array<i64: 1, 16>}, {transform_indices = @transform_4, window_bounds = array<i64: 128, 16>}, {transform_indices = @transform_5, window_bounds = array<i64: 128, 16>}]} {
    %c0 = arith.constant 0 : index
    %c0_0 = arith.constant 0 : index
    %0 = vector.load %arg1[%c0, %c0_0] : memref<128x144xbf16, #tpu.memory_space<vmem>>, vector<128x144xbf16>
    %c0_1 = arith.constant 0 : index
    %c0_2 = arith.constant 0 : index
    %1 = vector.load %arg2[%c0_1, %c0_2] : memref<144x16xbf16, #tpu.memory_space<vmem>>, vector<144x16xbf16>
    %cst = arith.constant dense<0.000000e+00> : vector<128x16xf32>
    %2 = tpu.matmul %0, %1, %cst {dimension_numbers = #tpu.dot_dimension_numbers<[1], [0], [0], [1], [0, 0, 1, 1], [], []>} : vector<128x144xbf16>, vector<144x16xbf16>, vector<128x16xf32> -> vector<128x16xf32>
    %c0_3 = arith.constant 0 : index
    %c0_4 = arith.constant 0 : index
    %3 = vector.load %arg3[%c0_3, %c0_4] : memref<1x16xf32, #tpu.memory_space<vmem>>, vector<1x16xf32>
    %4 = vector.broadcast %3 : vector<1x16xf32> to vector<128x16xf32>
    %5 = arith.mulf %2, %4 : vector<128x16xf32>
    %c0_5 = arith.constant 0 : index
    %c0_6 = arith.constant 0 : index
    %6 = vector.load %arg4[%c0_5, %c0_6] : memref<1x16xf32, #tpu.memory_space<vmem>>, vector<1x16xf32>
    %7 = vector.broadcast %6 : vector<1x16xf32> to vector<128x16xf32>
    %8 = arith.addf %5, %7 : vector<128x16xf32>
    %c0_7 = arith.constant 0 : index
    %c0_8 = arith.constant 0 : index
    %9 = vector.load %arg5[%c0_7, %c0_8] : memref<128x16xbf16, #tpu.memory_space<vmem>>, vector<128x16xbf16>
    %10 = arith.extf %9 : vector<128x16xbf16> to vector<128x16xf32>
    %11 = arith.addf %8, %10 : vector<128x16xf32>
    %cst_9 = arith.constant 0.000000e+00 : f32
    %12 = vector.broadcast %cst_9 : f32 to vector<128x16xf32>
    %13 = arith.maximumf %11, %12 : vector<128x16xf32>
    %14 = arith.truncf %13 : vector<128x16xf32> to vector<128x16xbf16>
    %c0_10 = arith.constant 0 : index
    %c0_11 = arith.constant 0 : index
    %15 = vector.load %arg6[%c0_10, %c0_11] : memref<128x16xbf16, #tpu.memory_space<vmem>>, vector<128x16xbf16>
    tpu.vector_store %arg6[%c0_10, %c0_11], %14 {strides = array<i32>} : memref<128x16xbf16, #tpu.memory_space<vmem>>, vector<128x16xbf16>,
    return
  }
  func.func @transform_0(%arg0: i32) -> (i32, i32) {
    %c0_i32 = arith.constant 0 : i32
    %c0_i32_0 = arith.constant 0 : i32
    return %arg0, %c0_i32 : i32, i32
  }
  func.func @transform_1(%arg0: i32) -> (i32, i32) {
    %c0_i32 = arith.constant 0 : i32
    %c0_i32_0 = arith.constant 0 : i32
    %c0_i32_1 = arith.constant 0 : i32
    return %c0_i32, %c0_i32_0 : i32, i32
  }
  func.func @transform_2(%arg0: i32) -> (i32, i32) {
    %c0_i32 = arith.constant 0 : i32
    %c0_i32_0 = arith.constant 0 : i32
    %c0_i32_1 = arith.constant 0 : i32
    return %c0_i32, %c0_i32_0 : i32, i32
  }
  func.func @transform_3(%arg0: i32) -> (i32, i32) {
    %c0_i32 = arith.constant 0 : i32
    %c0_i32_0 = arith.constant 0 : i32
    %c0_i32_1 = arith.constant 0 : i32
    return %c0_i32, %c0_i32_0 : i32, i32
  }
  func.func @transform_4(%arg0: i32) -> (i32, i32) {
    %c0_i32 = arith.constant 0 : i32
    %c0_i32_0 = arith.constant 0 : i32
    return %arg0, %c0_i32 : i32, i32
  }
  func.func @transform_5(%arg0: i32) -> (i32, i32) {
    %c0_i32 = arith.constant 0 : i32
    %c0_i32_0 = arith.constant 0 : i32
    return %arg0, %c0_i32 : i32, i32
  }
}

module attributes {stable_mosaic.version = 11 : i64} {
  func.func @_conv_bn_kernel(%arg0: i32, %arg1: memref<128x144xbf16, #tpu.memory_space<vmem>>, %arg2: memref<144x16xbf16, #tpu.memory_space<vmem>>, %arg3: memref<1x16xf32, #tpu.memory_space<vmem>>, %arg4: memref<1x16xf32, #tpu.memory_space<vmem>>, %arg5: memref<128x16xbf16, #tpu.memory_space<vmem>>) attributes {dimension_semantics = [#tpu.dimension_semantics<parallel>], iteration_bounds = array<i64: 1>, scalar_prefetch = 0 : i64, scratch_operands = 0 : i64, tpu.core_type = #tpu.core_type<tc>, window_params = [{transform_indices = @transform_0, window_bounds = array<i64: 128, 144>}, {pipeline_mode = #tpu.pipeline_mode<synchronous>, transform_indices = @transform_1, window_bounds = array<i64: 144, 16>}, {pipeline_mode = #tpu.pipeline_mode<synchronous>, transform_indices = @transform_2, window_bounds = array<i64: 1, 16>}, {pipeline_mode = #tpu.pipeline_mode<synchronous>, transform_indices = @transform_3, window_bounds = array<i64: 1, 16>}, {transform_indices = @transform_4, window_bounds = array<i64: 128, 16>}]} {
    %c0 = arith.constant 0 : index
    %c0_0 = arith.constant 0 : index
    %0 = vector.load %arg1[%c0, %c0_0] : memref<128x144xbf16, #tpu.memory_space<vmem>>, vector<128x144xbf16>
    %c0_1 = arith.constant 0 : index
    %c0_2 = arith.constant 0 : index
    %1 = vector.load %arg2[%c0_1, %c0_2] : memref<144x16xbf16, #tpu.memory_space<vmem>>, vector<144x16xbf16>
    %cst = arith.constant dense<0.000000e+00> : vector<128x16xf32>
    %2 = tpu.matmul %0, %1, %cst {dimension_numbers = #tpu.dot_dimension_numbers<[1], [0], [0], [1], [0, 0, 1, 1], [], []>} : vector<128x144xbf16>, vector<144x16xbf16>, vector<128x16xf32> -> vector<128x16xf32>
    %c0_3 = arith.constant 0 : index
    %c0_4 = arith.constant 0 : index
    %3 = vector.load %arg3[%c0_3, %c0_4] : memref<1x16xf32, #tpu.memory_space<vmem>>, vector<1x16xf32>
    %4 = vector.broadcast %3 : vector<1x16xf32> to vector<128x16xf32>
    %5 = arith.mulf %2, %4 : vector<128x16xf32>
    %c0_5 = arith.constant 0 : index
    %c0_6 = arith.constant 0 : index
    %6 = vector.load %arg4[%c0_5, %c0_6] : memref<1x16xf32, #tpu.memory_space<vmem>>, vector<1x16xf32>
    %7 = vector.broadcast %6 : vector<1x16xf32> to vector<128x16xf32>
    %8 = arith.addf %5, %7 : vector<128x16xf32>
    %cst_7 = arith.constant 0.000000e+00 : f32
    %9 = vector.broadcast %cst_7 : f32 to vector<128x16xf32>
    %10 = arith.maximumf %8, %9 : vector<128x16xf32>
    %11 = arith.truncf %10 : vector<128x16xf32> to vector<128x16xbf16>
    %c0_8 = arith.constant 0 : index
    %c0_9 = arith.constant 0 : index
    %12 = vector.load %arg5[%c0_8, %c0_9] : memref<128x16xbf16, #tpu.memory_space<vmem>>, vector<128x16xbf16>
    tpu.vector_store %arg5[%c0_8, %c0_9], %11 {strides = array<i32>} : memref<128x16xbf16, #tpu.memory_space<vmem>>, vector<128x16xbf16>,
    return
  }
  func.func @transform_0(%arg0: i32) -> (i32, i32) {
    %c0_i32 = arith.constant 0 : i32
    %c0_i32_0 = arith.constant 0 : i32
    return %arg0, %c0_i32 : i32, i32
  }
  func.func @transform_1(%arg0: i32) -> (i32, i32) {
    %c0_i32 = arith.constant 0 : i32
    %c0_i32_0 = arith.constant 0 : i32
    %c0_i32_1 = arith.constant 0 : i32
    return %c0_i32, %c0_i32_0 : i32, i32
  }
  func.func @transform_2(%arg0: i32) -> (i32, i32) {
    %c0_i32 = arith.constant 0 : i32
    %c0_i32_0 = arith.constant 0 : i32
    %c0_i32_1 = arith.constant 0 : i32
    return %c0_i32, %c0_i32_0 : i32, i32
  }
  func.func @transform_3(%arg0: i32) -> (i32, i32) {
    %c0_i32 = arith.constant 0 : i32
    %c0_i32_0 = arith.constant 0 : i32
    %c0_i32_1 = arith.constant 0 : i32
    return %c0_i32, %c0_i32_0 : i32, i32
  }
  func.func @transform_4(%arg0: i32) -> (i32, i32) {
    %c0_i32 = arith.constant 0 : i32
    %c0_i32_0 = arith.constant 0 : i32
    return %arg0, %c0_i32 : i32, i32
  }
}

module attributes {stable_mosaic.version = 11 : i64} {
  func.func @_conv_bn_kernel(%arg0: i32, %arg1: memref<32x144xbf16, #tpu.memory_space<vmem>>, %arg2: memref<144x32xbf16, #tpu.memory_space<vmem>>, %arg3: memref<1x32xf32, #tpu.memory_space<vmem>>, %arg4: memref<1x32xf32, #tpu.memory_space<vmem>>, %arg5: memref<32x32xbf16, #tpu.memory_space<vmem>>) attributes {dimension_semantics = [#tpu.dimension_semantics<parallel>], iteration_bounds = array<i64: 1>, scalar_prefetch = 0 : i64, scratch_operands = 0 : i64, tpu.core_type = #tpu.core_type<tc>, window_params = [{transform_indices = @transform_0, window_bounds = array<i64: 32, 144>}, {pipeline_mode = #tpu.pipeline_mode<synchronous>, transform_indices = @transform_1, window_bounds = array<i64: 144, 32>}, {pipeline_mode = #tpu.pipeline_mode<synchronous>, transform_indices = @transform_2, window_bounds = array<i64: 1, 32>}, {pipeline_mode = #tpu.pipeline_mode<synchronous>, transform_indices = @transform_3, window_bounds = array<i64: 1, 32>}, {transform_indices = @transform_4, window_bounds = array<i64: 32, 32>}]} {
    %c0 = arith.constant 0 : index
    %c0_0 = arith.constant 0 : index
    %0 = vector.load %arg1[%c0, %c0_0] : memref<32x144xbf16, #tpu.memory_space<vmem>>, vector<32x144xbf16>
    %c0_1 = arith.constant 0 : index
    %c0_2 = arith.constant 0 : index
    %1 = vector.load %arg2[%c0_1, %c0_2] : memref<144x32xbf16, #tpu.memory_space<vmem>>, vector<144x32xbf16>
    %cst = arith.constant dense<0.000000e+00> : vector<32x32xf32>
    %2 = tpu.matmul %0, %1, %cst {dimension_numbers = #tpu.dot_dimension_numbers<[1], [0], [0], [1], [0, 0, 1, 1], [], []>} : vector<32x144xbf16>, vector<144x32xbf16>, vector<32x32xf32> -> vector<32x32xf32>
    %c0_3 = arith.constant 0 : index
    %c0_4 = arith.constant 0 : index
    %3 = vector.load %arg3[%c0_3, %c0_4] : memref<1x32xf32, #tpu.memory_space<vmem>>, vector<1x32xf32>
    %4 = vector.broadcast %3 : vector<1x32xf32> to vector<32x32xf32>
    %5 = arith.mulf %2, %4 : vector<32x32xf32>
    %c0_5 = arith.constant 0 : index
    %c0_6 = arith.constant 0 : index
    %6 = vector.load %arg4[%c0_5, %c0_6] : memref<1x32xf32, #tpu.memory_space<vmem>>, vector<1x32xf32>
    %7 = vector.broadcast %6 : vector<1x32xf32> to vector<32x32xf32>
    %8 = arith.addf %5, %7 : vector<32x32xf32>
    %cst_7 = arith.constant 0.000000e+00 : f32
    %9 = vector.broadcast %cst_7 : f32 to vector<32x32xf32>
    %10 = arith.maximumf %8, %9 : vector<32x32xf32>
    %11 = arith.truncf %10 : vector<32x32xf32> to vector<32x32xbf16>
    %c0_8 = arith.constant 0 : index
    %c0_9 = arith.constant 0 : index
    %12 = vector.load %arg5[%c0_8, %c0_9] : memref<32x32xbf16, #tpu.memory_space<vmem>>, vector<32x32xbf16>
    tpu.vector_store %arg5[%c0_8, %c0_9], %11 {strides = array<i32>} : memref<32x32xbf16, #tpu.memory_space<vmem>>, vector<32x32xbf16>,
    return
  }
  func.func @transform_0(%arg0: i32) -> (i32, i32) {
    %c0_i32 = arith.constant 0 : i32
    %c0_i32_0 = arith.constant 0 : i32
    return %arg0, %c0_i32 : i32, i32
  }
  func.func @transform_1(%arg0: i32) -> (i32, i32) {
    %c0_i32 = arith.constant 0 : i32
    %c0_i32_0 = arith.constant 0 : i32
    %c0_i32_1 = arith.constant 0 : i32
    return %c0_i32, %c0_i32_0 : i32, i32
  }
  func.func @transform_2(%arg0: i32) -> (i32, i32) {
    %c0_i32 = arith.constant 0 : i32
    %c0_i32_0 = arith.constant 0 : i32
    %c0_i32_1 = arith.constant 0 : i32
    return %c0_i32, %c0_i32_0 : i32, i32
  }
  func.func @transform_3(%arg0: i32) -> (i32, i32) {
    %c0_i32 = arith.constant 0 : i32
    %c0_i32_0 = arith.constant 0 : i32
    %c0_i32_1 = arith.constant 0 : i32
    return %c0_i32, %c0_i32_0 : i32, i32
  }
  func.func @transform_4(%arg0: i32) -> (i32, i32) {
    %c0_i32 = arith.constant 0 : i32
    %c0_i32_0 = arith.constant 0 : i32
    return %arg0, %c0_i32 : i32, i32
  }
}

module attributes {stable_mosaic.version = 11 : i64} {
  func.func @_conv_bn_kernel(%arg0: i32, %arg1: memref<32x16xbf16, #tpu.memory_space<vmem>>, %arg2: memref<16x32xbf16, #tpu.memory_space<vmem>>, %arg3: memref<1x32xf32, #tpu.memory_space<vmem>>, %arg4: memref<1x32xf32, #tpu.memory_space<vmem>>, %arg5: memref<32x32xbf16, #tpu.memory_space<vmem>>) attributes {dimension_semantics = [#tpu.dimension_semantics<parallel>], iteration_bounds = array<i64: 1>, scalar_prefetch = 0 : i64, scratch_operands = 0 : i64, tpu.core_type = #tpu.core_type<tc>, window_params = [{transform_indices = @transform_0, window_bounds = array<i64: 32, 16>}, {pipeline_mode = #tpu.pipeline_mode<synchronous>, transform_indices = @transform_1, window_bounds = array<i64: 16, 32>}, {pipeline_mode = #tpu.pipeline_mode<synchronous>, transform_indices = @transform_2, window_bounds = array<i64: 1, 32>}, {pipeline_mode = #tpu.pipeline_mode<synchronous>, transform_indices = @transform_3, window_bounds = array<i64: 1, 32>}, {transform_indices = @transform_4, window_bounds = array<i64: 32, 32>}]} {
    %c0 = arith.constant 0 : index
    %c0_0 = arith.constant 0 : index
    %0 = vector.load %arg1[%c0, %c0_0] : memref<32x16xbf16, #tpu.memory_space<vmem>>, vector<32x16xbf16>
    %c0_1 = arith.constant 0 : index
    %c0_2 = arith.constant 0 : index
    %1 = vector.load %arg2[%c0_1, %c0_2] : memref<16x32xbf16, #tpu.memory_space<vmem>>, vector<16x32xbf16>
    %cst = arith.constant dense<0.000000e+00> : vector<32x32xf32>
    %2 = tpu.matmul %0, %1, %cst {dimension_numbers = #tpu.dot_dimension_numbers<[1], [0], [0], [1], [0, 0, 1, 1], [], []>} : vector<32x16xbf16>, vector<16x32xbf16>, vector<32x32xf32> -> vector<32x32xf32>
    %c0_3 = arith.constant 0 : index
    %c0_4 = arith.constant 0 : index
    %3 = vector.load %arg3[%c0_3, %c0_4] : memref<1x32xf32, #tpu.memory_space<vmem>>, vector<1x32xf32>
    %4 = vector.broadcast %3 : vector<1x32xf32> to vector<32x32xf32>
    %5 = arith.mulf %2, %4 : vector<32x32xf32>
    %c0_5 = arith.constant 0 : index
    %c0_6 = arith.constant 0 : index
    %6 = vector.load %arg4[%c0_5, %c0_6] : memref<1x32xf32, #tpu.memory_space<vmem>>, vector<1x32xf32>
    %7 = vector.broadcast %6 : vector<1x32xf32> to vector<32x32xf32>
    %8 = arith.addf %5, %7 : vector<32x32xf32>
    %9 = arith.truncf %8 : vector<32x32xf32> to vector<32x32xbf16>
    %c0_7 = arith.constant 0 : index
    %c0_8 = arith.constant 0 : index
    %10 = vector.load %arg5[%c0_7, %c0_8] : memref<32x32xbf16, #tpu.memory_space<vmem>>, vector<32x32xbf16>
    tpu.vector_store %arg5[%c0_7, %c0_8], %9 {strides = array<i32>} : memref<32x32xbf16, #tpu.memory_space<vmem>>, vector<32x32xbf16>,
    return
  }
  func.func @transform_0(%arg0: i32) -> (i32, i32) {
    %c0_i32 = arith.constant 0 : i32
    %c0_i32_0 = arith.constant 0 : i32
    return %arg0, %c0_i32 : i32, i32
  }
  func.func @transform_1(%arg0: i32) -> (i32, i32) {
    %c0_i32 = arith.constant 0 : i32
    %c0_i32_0 = arith.constant 0 : i32
    %c0_i32_1 = arith.constant 0 : i32
    return %c0_i32, %c0_i32_0 : i32, i32
  }
  func.func @transform_2(%arg0: i32) -> (i32, i32) {
    %c0_i32 = arith.constant 0 : i32
    %c0_i32_0 = arith.constant 0 : i32
    %c0_i32_1 = arith.constant 0 : i32
    return %c0_i32, %c0_i32_0 : i32, i32
  }
  func.func @transform_3(%arg0: i32) -> (i32, i32) {
    %c0_i32 = arith.constant 0 : i32
    %c0_i32_0 = arith.constant 0 : i32
    %c0_i32_1 = arith.constant 0 : i32
    return %c0_i32, %c0_i32_0 : i32, i32
  }
  func.func @transform_4(%arg0: i32) -> (i32, i32) {
    %c0_i32 = arith.constant 0 : i32
    %c0_i32_0 = arith.constant 0 : i32
    return %arg0, %c0_i32 : i32, i32
  }
}

module attributes {stable_mosaic.version = 11 : i64} {
  func.func @_conv_bn_kernel(%arg0: i32, %arg1: memref<32x288xbf16, #tpu.memory_space<vmem>>, %arg2: memref<288x32xbf16, #tpu.memory_space<vmem>>, %arg3: memref<1x32xf32, #tpu.memory_space<vmem>>, %arg4: memref<1x32xf32, #tpu.memory_space<vmem>>, %arg5: memref<32x32xbf16, #tpu.memory_space<vmem>>, %arg6: memref<32x32xbf16, #tpu.memory_space<vmem>>) attributes {dimension_semantics = [#tpu.dimension_semantics<parallel>], iteration_bounds = array<i64: 1>, scalar_prefetch = 0 : i64, scratch_operands = 0 : i64, tpu.core_type = #tpu.core_type<tc>, window_params = [{transform_indices = @transform_0, window_bounds = array<i64: 32, 288>}, {pipeline_mode = #tpu.pipeline_mode<synchronous>, transform_indices = @transform_1, window_bounds = array<i64: 288, 32>}, {pipeline_mode = #tpu.pipeline_mode<synchronous>, transform_indices = @transform_2, window_bounds = array<i64: 1, 32>}, {pipeline_mode = #tpu.pipeline_mode<synchronous>, transform_indices = @transform_3, window_bounds = array<i64: 1, 32>}, {transform_indices = @transform_4, window_bounds = array<i64: 32, 32>}, {transform_indices = @transform_5, window_bounds = array<i64: 32, 32>}]} {
    %c0 = arith.constant 0 : index
    %c0_0 = arith.constant 0 : index
    %0 = vector.load %arg1[%c0, %c0_0] : memref<32x288xbf16, #tpu.memory_space<vmem>>, vector<32x288xbf16>
    %c0_1 = arith.constant 0 : index
    %c0_2 = arith.constant 0 : index
    %1 = vector.load %arg2[%c0_1, %c0_2] : memref<288x32xbf16, #tpu.memory_space<vmem>>, vector<288x32xbf16>
    %cst = arith.constant dense<0.000000e+00> : vector<32x32xf32>
    %2 = tpu.matmul %0, %1, %cst {dimension_numbers = #tpu.dot_dimension_numbers<[1], [0], [0], [1], [0, 0, 1, 1], [], []>} : vector<32x288xbf16>, vector<288x32xbf16>, vector<32x32xf32> -> vector<32x32xf32>
    %c0_3 = arith.constant 0 : index
    %c0_4 = arith.constant 0 : index
    %3 = vector.load %arg3[%c0_3, %c0_4] : memref<1x32xf32, #tpu.memory_space<vmem>>, vector<1x32xf32>
    %4 = vector.broadcast %3 : vector<1x32xf32> to vector<32x32xf32>
    %5 = arith.mulf %2, %4 : vector<32x32xf32>
    %c0_5 = arith.constant 0 : index
    %c0_6 = arith.constant 0 : index
    %6 = vector.load %arg4[%c0_5, %c0_6] : memref<1x32xf32, #tpu.memory_space<vmem>>, vector<1x32xf32>
    %7 = vector.broadcast %6 : vector<1x32xf32> to vector<32x32xf32>
    %8 = arith.addf %5, %7 : vector<32x32xf32>
    %c0_7 = arith.constant 0 : index
    %c0_8 = arith.constant 0 : index
    %9 = vector.load %arg5[%c0_7, %c0_8] : memref<32x32xbf16, #tpu.memory_space<vmem>>, vector<32x32xbf16>
    %10 = arith.extf %9 : vector<32x32xbf16> to vector<32x32xf32>
    %11 = arith.addf %8, %10 : vector<32x32xf32>
    %cst_9 = arith.constant 0.000000e+00 : f32
    %12 = vector.broadcast %cst_9 : f32 to vector<32x32xf32>
    %13 = arith.maximumf %11, %12 : vector<32x32xf32>
    %14 = arith.truncf %13 : vector<32x32xf32> to vector<32x32xbf16>
    %c0_10 = arith.constant 0 : index
    %c0_11 = arith.constant 0 : index
    %15 = vector.load %arg6[%c0_10, %c0_11] : memref<32x32xbf16, #tpu.memory_space<vmem>>, vector<32x32xbf16>
    tpu.vector_store %arg6[%c0_10, %c0_11], %14 {strides = array<i32>} : memref<32x32xbf16, #tpu.memory_space<vmem>>, vector<32x32xbf16>,
    return
  }
  func.func @transform_0(%arg0: i32) -> (i32, i32) {
    %c0_i32 = arith.constant 0 : i32
    %c0_i32_0 = arith.constant 0 : i32
    return %arg0, %c0_i32 : i32, i32
  }
  func.func @transform_1(%arg0: i32) -> (i32, i32) {
    %c0_i32 = arith.constant 0 : i32
    %c0_i32_0 = arith.constant 0 : i32
    %c0_i32_1 = arith.constant 0 : i32
    return %c0_i32, %c0_i32_0 : i32, i32
  }
  func.func @transform_2(%arg0: i32) -> (i32, i32) {
    %c0_i32 = arith.constant 0 : i32
    %c0_i32_0 = arith.constant 0 : i32
    %c0_i32_1 = arith.constant 0 : i32
    return %c0_i32, %c0_i32_0 : i32, i32
  }
  func.func @transform_3(%arg0: i32) -> (i32, i32) {
    %c0_i32 = arith.constant 0 : i32
    %c0_i32_0 = arith.constant 0 : i32
    %c0_i32_1 = arith.constant 0 : i32
    return %c0_i32, %c0_i32_0 : i32, i32
  }
  func.func @transform_4(%arg0: i32) -> (i32, i32) {
    %c0_i32 = arith.constant 0 : i32
    %c0_i32_0 = arith.constant 0 : i32
    return %arg0, %c0_i32 : i32, i32
  }
  func.func @transform_5(%arg0: i32) -> (i32, i32) {
    %c0_i32 = arith.constant 0 : i32
    %c0_i32_0 = arith.constant 0 : i32
    return %arg0, %c0_i32 : i32, i32
  }
}

module attributes {stable_mosaic.version = 11 : i64} {
  func.func @_conv_bn_kernel(%arg0: i32, %arg1: memref<32x288xbf16, #tpu.memory_space<vmem>>, %arg2: memref<288x32xbf16, #tpu.memory_space<vmem>>, %arg3: memref<1x32xf32, #tpu.memory_space<vmem>>, %arg4: memref<1x32xf32, #tpu.memory_space<vmem>>, %arg5: memref<32x32xbf16, #tpu.memory_space<vmem>>) attributes {dimension_semantics = [#tpu.dimension_semantics<parallel>], iteration_bounds = array<i64: 1>, scalar_prefetch = 0 : i64, scratch_operands = 0 : i64, tpu.core_type = #tpu.core_type<tc>, window_params = [{transform_indices = @transform_0, window_bounds = array<i64: 32, 288>}, {pipeline_mode = #tpu.pipeline_mode<synchronous>, transform_indices = @transform_1, window_bounds = array<i64: 288, 32>}, {pipeline_mode = #tpu.pipeline_mode<synchronous>, transform_indices = @transform_2, window_bounds = array<i64: 1, 32>}, {pipeline_mode = #tpu.pipeline_mode<synchronous>, transform_indices = @transform_3, window_bounds = array<i64: 1, 32>}, {transform_indices = @transform_4, window_bounds = array<i64: 32, 32>}]} {
    %c0 = arith.constant 0 : index
    %c0_0 = arith.constant 0 : index
    %0 = vector.load %arg1[%c0, %c0_0] : memref<32x288xbf16, #tpu.memory_space<vmem>>, vector<32x288xbf16>
    %c0_1 = arith.constant 0 : index
    %c0_2 = arith.constant 0 : index
    %1 = vector.load %arg2[%c0_1, %c0_2] : memref<288x32xbf16, #tpu.memory_space<vmem>>, vector<288x32xbf16>
    %cst = arith.constant dense<0.000000e+00> : vector<32x32xf32>
    %2 = tpu.matmul %0, %1, %cst {dimension_numbers = #tpu.dot_dimension_numbers<[1], [0], [0], [1], [0, 0, 1, 1], [], []>} : vector<32x288xbf16>, vector<288x32xbf16>, vector<32x32xf32> -> vector<32x32xf32>
    %c0_3 = arith.constant 0 : index
    %c0_4 = arith.constant 0 : index
    %3 = vector.load %arg3[%c0_3, %c0_4] : memref<1x32xf32, #tpu.memory_space<vmem>>, vector<1x32xf32>
    %4 = vector.broadcast %3 : vector<1x32xf32> to vector<32x32xf32>
    %5 = arith.mulf %2, %4 : vector<32x32xf32>
    %c0_5 = arith.constant 0 : index
    %c0_6 = arith.constant 0 : index
    %6 = vector.load %arg4[%c0_5, %c0_6] : memref<1x32xf32, #tpu.memory_space<vmem>>, vector<1x32xf32>
    %7 = vector.broadcast %6 : vector<1x32xf32> to vector<32x32xf32>
    %8 = arith.addf %5, %7 : vector<32x32xf32>
    %cst_7 = arith.constant 0.000000e+00 : f32
    %9 = vector.broadcast %cst_7 : f32 to vector<32x32xf32>
    %10 = arith.maximumf %8, %9 : vector<32x32xf32>
    %11 = arith.truncf %10 : vector<32x32xf32> to vector<32x32xbf16>
    %c0_8 = arith.constant 0 : index
    %c0_9 = arith.constant 0 : index
    %12 = vector.load %arg5[%c0_8, %c0_9] : memref<32x32xbf16, #tpu.memory_space<vmem>>, vector<32x32xbf16>
    tpu.vector_store %arg5[%c0_8, %c0_9], %11 {strides = array<i32>} : memref<32x32xbf16, #tpu.memory_space<vmem>>, vector<32x32xbf16>,
    return
  }
  func.func @transform_0(%arg0: i32) -> (i32, i32) {
    %c0_i32 = arith.constant 0 : i32
    %c0_i32_0 = arith.constant 0 : i32
    return %arg0, %c0_i32 : i32, i32
  }
  func.func @transform_1(%arg0: i32) -> (i32, i32) {
    %c0_i32 = arith.constant 0 : i32
    %c0_i32_0 = arith.constant 0 : i32
    %c0_i32_1 = arith.constant 0 : i32
    return %c0_i32, %c0_i32_0 : i32, i32
  }
  func.func @transform_2(%arg0: i32) -> (i32, i32) {
    %c0_i32 = arith.constant 0 : i32
    %c0_i32_0 = arith.constant 0 : i32
    %c0_i32_1 = arith.constant 0 : i32
    return %c0_i32, %c0_i32_0 : i32, i32
  }
  func.func @transform_3(%arg0: i32) -> (i32, i32) {
    %c0_i32 = arith.constant 0 : i32
    %c0_i32_0 = arith.constant 0 : i32
    %c0_i32_1 = arith.constant 0 : i32
    return %c0_i32, %c0_i32_0 : i32, i32
  }
  func.func @transform_4(%arg0: i32) -> (i32, i32) {
    %c0_i32 = arith.constant 0 : i32
    %c0_i32_0 = arith.constant 0 : i32
    return %arg0, %c0_i32 : i32, i32
  }
}

module attributes {stable_mosaic.version = 11 : i64} {
  func.func @_conv_bn_kernel(%arg0: i32, %arg1: memref<8x288xbf16, #tpu.memory_space<vmem>>, %arg2: memref<288x64xbf16, #tpu.memory_space<vmem>>, %arg3: memref<1x64xf32, #tpu.memory_space<vmem>>, %arg4: memref<1x64xf32, #tpu.memory_space<vmem>>, %arg5: memref<8x64xbf16, #tpu.memory_space<vmem>>) attributes {dimension_semantics = [#tpu.dimension_semantics<parallel>], iteration_bounds = array<i64: 1>, scalar_prefetch = 0 : i64, scratch_operands = 0 : i64, tpu.core_type = #tpu.core_type<tc>, window_params = [{transform_indices = @transform_0, window_bounds = array<i64: 8, 288>}, {pipeline_mode = #tpu.pipeline_mode<synchronous>, transform_indices = @transform_1, window_bounds = array<i64: 288, 64>}, {pipeline_mode = #tpu.pipeline_mode<synchronous>, transform_indices = @transform_2, window_bounds = array<i64: 1, 64>}, {pipeline_mode = #tpu.pipeline_mode<synchronous>, transform_indices = @transform_3, window_bounds = array<i64: 1, 64>}, {transform_indices = @transform_4, window_bounds = array<i64: 8, 64>}]} {
    %c0 = arith.constant 0 : index
    %c0_0 = arith.constant 0 : index
    %0 = vector.load %arg1[%c0, %c0_0] : memref<8x288xbf16, #tpu.memory_space<vmem>>, vector<8x288xbf16>
    %c0_1 = arith.constant 0 : index
    %c0_2 = arith.constant 0 : index
    %1 = vector.load %arg2[%c0_1, %c0_2] : memref<288x64xbf16, #tpu.memory_space<vmem>>, vector<288x64xbf16>
    %cst = arith.constant dense<0.000000e+00> : vector<8x64xf32>
    %2 = tpu.matmul %0, %1, %cst {dimension_numbers = #tpu.dot_dimension_numbers<[1], [0], [0], [1], [0, 0, 1, 1], [], []>} : vector<8x288xbf16>, vector<288x64xbf16>, vector<8x64xf32> -> vector<8x64xf32>
    %c0_3 = arith.constant 0 : index
    %c0_4 = arith.constant 0 : index
    %3 = vector.load %arg3[%c0_3, %c0_4] : memref<1x64xf32, #tpu.memory_space<vmem>>, vector<1x64xf32>
    %4 = vector.broadcast %3 : vector<1x64xf32> to vector<8x64xf32>
    %5 = arith.mulf %2, %4 : vector<8x64xf32>
    %c0_5 = arith.constant 0 : index
    %c0_6 = arith.constant 0 : index
    %6 = vector.load %arg4[%c0_5, %c0_6] : memref<1x64xf32, #tpu.memory_space<vmem>>, vector<1x64xf32>
    %7 = vector.broadcast %6 : vector<1x64xf32> to vector<8x64xf32>
    %8 = arith.addf %5, %7 : vector<8x64xf32>
    %cst_7 = arith.constant 0.000000e+00 : f32
    %9 = vector.broadcast %cst_7 : f32 to vector<8x64xf32>
    %10 = arith.maximumf %8, %9 : vector<8x64xf32>
    %11 = arith.truncf %10 : vector<8x64xf32> to vector<8x64xbf16>
    %c0_8 = arith.constant 0 : index
    %c0_9 = arith.constant 0 : index
    %12 = vector.load %arg5[%c0_8, %c0_9] : memref<8x64xbf16, #tpu.memory_space<vmem>>, vector<8x64xbf16>
    tpu.vector_store %arg5[%c0_8, %c0_9], %11 {strides = array<i32>} : memref<8x64xbf16, #tpu.memory_space<vmem>>, vector<8x64xbf16>,
    return
  }
  func.func @transform_0(%arg0: i32) -> (i32, i32) {
    %c0_i32 = arith.constant 0 : i32
    %c0_i32_0 = arith.constant 0 : i32
    return %arg0, %c0_i32 : i32, i32
  }
  func.func @transform_1(%arg0: i32) -> (i32, i32) {
    %c0_i32 = arith.constant 0 : i32
    %c0_i32_0 = arith.constant 0 : i32
    %c0_i32_1 = arith.constant 0 : i32
    return %c0_i32, %c0_i32_0 : i32, i32
  }
  func.func @transform_2(%arg0: i32) -> (i32, i32) {
    %c0_i32 = arith.constant 0 : i32
    %c0_i32_0 = arith.constant 0 : i32
    %c0_i32_1 = arith.constant 0 : i32
    return %c0_i32, %c0_i32_0 : i32, i32
  }
  func.func @transform_3(%arg0: i32) -> (i32, i32) {
    %c0_i32 = arith.constant 0 : i32
    %c0_i32_0 = arith.constant 0 : i32
    %c0_i32_1 = arith.constant 0 : i32
    return %c0_i32, %c0_i32_0 : i32, i32
  }
  func.func @transform_4(%arg0: i32) -> (i32, i32) {
    %c0_i32 = arith.constant 0 : i32
    %c0_i32_0 = arith.constant 0 : i32
    return %arg0, %c0_i32 : i32, i32
  }
}

module attributes {stable_mosaic.version = 11 : i64} {
  func.func @_conv_bn_kernel(%arg0: i32, %arg1: memref<8x32xbf16, #tpu.memory_space<vmem>>, %arg2: memref<32x64xbf16, #tpu.memory_space<vmem>>, %arg3: memref<1x64xf32, #tpu.memory_space<vmem>>, %arg4: memref<1x64xf32, #tpu.memory_space<vmem>>, %arg5: memref<8x64xbf16, #tpu.memory_space<vmem>>) attributes {dimension_semantics = [#tpu.dimension_semantics<parallel>], iteration_bounds = array<i64: 1>, scalar_prefetch = 0 : i64, scratch_operands = 0 : i64, tpu.core_type = #tpu.core_type<tc>, window_params = [{transform_indices = @transform_0, window_bounds = array<i64: 8, 32>}, {pipeline_mode = #tpu.pipeline_mode<synchronous>, transform_indices = @transform_1, window_bounds = array<i64: 32, 64>}, {pipeline_mode = #tpu.pipeline_mode<synchronous>, transform_indices = @transform_2, window_bounds = array<i64: 1, 64>}, {pipeline_mode = #tpu.pipeline_mode<synchronous>, transform_indices = @transform_3, window_bounds = array<i64: 1, 64>}, {transform_indices = @transform_4, window_bounds = array<i64: 8, 64>}]} {
    %c0 = arith.constant 0 : index
    %c0_0 = arith.constant 0 : index
    %0 = vector.load %arg1[%c0, %c0_0] : memref<8x32xbf16, #tpu.memory_space<vmem>>, vector<8x32xbf16>
    %c0_1 = arith.constant 0 : index
    %c0_2 = arith.constant 0 : index
    %1 = vector.load %arg2[%c0_1, %c0_2] : memref<32x64xbf16, #tpu.memory_space<vmem>>, vector<32x64xbf16>
    %cst = arith.constant dense<0.000000e+00> : vector<8x64xf32>
    %2 = tpu.matmul %0, %1, %cst {dimension_numbers = #tpu.dot_dimension_numbers<[1], [0], [0], [1], [0, 0, 1, 1], [], []>} : vector<8x32xbf16>, vector<32x64xbf16>, vector<8x64xf32> -> vector<8x64xf32>
    %c0_3 = arith.constant 0 : index
    %c0_4 = arith.constant 0 : index
    %3 = vector.load %arg3[%c0_3, %c0_4] : memref<1x64xf32, #tpu.memory_space<vmem>>, vector<1x64xf32>
    %4 = vector.broadcast %3 : vector<1x64xf32> to vector<8x64xf32>
    %5 = arith.mulf %2, %4 : vector<8x64xf32>
    %c0_5 = arith.constant 0 : index
    %c0_6 = arith.constant 0 : index
    %6 = vector.load %arg4[%c0_5, %c0_6] : memref<1x64xf32, #tpu.memory_space<vmem>>, vector<1x64xf32>
    %7 = vector.broadcast %6 : vector<1x64xf32> to vector<8x64xf32>
    %8 = arith.addf %5, %7 : vector<8x64xf32>
    %9 = arith.truncf %8 : vector<8x64xf32> to vector<8x64xbf16>
    %c0_7 = arith.constant 0 : index
    %c0_8 = arith.constant 0 : index
    %10 = vector.load %arg5[%c0_7, %c0_8] : memref<8x64xbf16, #tpu.memory_space<vmem>>, vector<8x64xbf16>
    tpu.vector_store %arg5[%c0_7, %c0_8], %9 {strides = array<i32>} : memref<8x64xbf16, #tpu.memory_space<vmem>>, vector<8x64xbf16>,
    return
  }
  func.func @transform_0(%arg0: i32) -> (i32, i32) {
    %c0_i32 = arith.constant 0 : i32
    %c0_i32_0 = arith.constant 0 : i32
    return %arg0, %c0_i32 : i32, i32
  }
  func.func @transform_1(%arg0: i32) -> (i32, i32) {
    %c0_i32 = arith.constant 0 : i32
    %c0_i32_0 = arith.constant 0 : i32
    %c0_i32_1 = arith.constant 0 : i32
    return %c0_i32, %c0_i32_0 : i32, i32
  }
  func.func @transform_2(%arg0: i32) -> (i32, i32) {
    %c0_i32 = arith.constant 0 : i32
    %c0_i32_0 = arith.constant 0 : i32
    %c0_i32_1 = arith.constant 0 : i32
    return %c0_i32, %c0_i32_0 : i32, i32
  }
  func.func @transform_3(%arg0: i32) -> (i32, i32) {
    %c0_i32 = arith.constant 0 : i32
    %c0_i32_0 = arith.constant 0 : i32
    %c0_i32_1 = arith.constant 0 : i32
    return %c0_i32, %c0_i32_0 : i32, i32
  }
  func.func @transform_4(%arg0: i32) -> (i32, i32) {
    %c0_i32 = arith.constant 0 : i32
    %c0_i32_0 = arith.constant 0 : i32
    return %arg0, %c0_i32 : i32, i32
  }
}

module attributes {stable_mosaic.version = 11 : i64} {
  func.func @_conv_bn_kernel(%arg0: i32, %arg1: memref<8x576xbf16, #tpu.memory_space<vmem>>, %arg2: memref<576x64xbf16, #tpu.memory_space<vmem>>, %arg3: memref<1x64xf32, #tpu.memory_space<vmem>>, %arg4: memref<1x64xf32, #tpu.memory_space<vmem>>, %arg5: memref<8x64xbf16, #tpu.memory_space<vmem>>, %arg6: memref<8x64xbf16, #tpu.memory_space<vmem>>) attributes {dimension_semantics = [#tpu.dimension_semantics<parallel>], iteration_bounds = array<i64: 1>, scalar_prefetch = 0 : i64, scratch_operands = 0 : i64, tpu.core_type = #tpu.core_type<tc>, window_params = [{transform_indices = @transform_0, window_bounds = array<i64: 8, 576>}, {pipeline_mode = #tpu.pipeline_mode<synchronous>, transform_indices = @transform_1, window_bounds = array<i64: 576, 64>}, {pipeline_mode = #tpu.pipeline_mode<synchronous>, transform_indices = @transform_2, window_bounds = array<i64: 1, 64>}, {pipeline_mode = #tpu.pipeline_mode<synchronous>, transform_indices = @transform_3, window_bounds = array<i64: 1, 64>}, {transform_indices = @transform_4, window_bounds = array<i64: 8, 64>}, {transform_indices = @transform_5, window_bounds = array<i64: 8, 64>}]} {
    %c0 = arith.constant 0 : index
    %c0_0 = arith.constant 0 : index
    %0 = vector.load %arg1[%c0, %c0_0] : memref<8x576xbf16, #tpu.memory_space<vmem>>, vector<8x576xbf16>
    %c0_1 = arith.constant 0 : index
    %c0_2 = arith.constant 0 : index
    %1 = vector.load %arg2[%c0_1, %c0_2] : memref<576x64xbf16, #tpu.memory_space<vmem>>, vector<576x64xbf16>
    %cst = arith.constant dense<0.000000e+00> : vector<8x64xf32>
    %2 = tpu.matmul %0, %1, %cst {dimension_numbers = #tpu.dot_dimension_numbers<[1], [0], [0], [1], [0, 0, 1, 1], [], []>} : vector<8x576xbf16>, vector<576x64xbf16>, vector<8x64xf32> -> vector<8x64xf32>
    %c0_3 = arith.constant 0 : index
    %c0_4 = arith.constant 0 : index
    %3 = vector.load %arg3[%c0_3, %c0_4] : memref<1x64xf32, #tpu.memory_space<vmem>>, vector<1x64xf32>
    %4 = vector.broadcast %3 : vector<1x64xf32> to vector<8x64xf32>
    %5 = arith.mulf %2, %4 : vector<8x64xf32>
    %c0_5 = arith.constant 0 : index
    %c0_6 = arith.constant 0 : index
    %6 = vector.load %arg4[%c0_5, %c0_6] : memref<1x64xf32, #tpu.memory_space<vmem>>, vector<1x64xf32>
    %7 = vector.broadcast %6 : vector<1x64xf32> to vector<8x64xf32>
    %8 = arith.addf %5, %7 : vector<8x64xf32>
    %c0_7 = arith.constant 0 : index
    %c0_8 = arith.constant 0 : index
    %9 = vector.load %arg5[%c0_7, %c0_8] : memref<8x64xbf16, #tpu.memory_space<vmem>>, vector<8x64xbf16>
    %10 = arith.extf %9 : vector<8x64xbf16> to vector<8x64xf32>
    %11 = arith.addf %8, %10 : vector<8x64xf32>
    %cst_9 = arith.constant 0.000000e+00 : f32
    %12 = vector.broadcast %cst_9 : f32 to vector<8x64xf32>
    %13 = arith.maximumf %11, %12 : vector<8x64xf32>
    %14 = arith.truncf %13 : vector<8x64xf32> to vector<8x64xbf16>
    %c0_10 = arith.constant 0 : index
    %c0_11 = arith.constant 0 : index
    %15 = vector.load %arg6[%c0_10, %c0_11] : memref<8x64xbf16, #tpu.memory_space<vmem>>, vector<8x64xbf16>
    tpu.vector_store %arg6[%c0_10, %c0_11], %14 {strides = array<i32>} : memref<8x64xbf16, #tpu.memory_space<vmem>>, vector<8x64xbf16>,
    return
  }
  func.func @transform_0(%arg0: i32) -> (i32, i32) {
    %c0_i32 = arith.constant 0 : i32
    %c0_i32_0 = arith.constant 0 : i32
    return %arg0, %c0_i32 : i32, i32
  }
  func.func @transform_1(%arg0: i32) -> (i32, i32) {
    %c0_i32 = arith.constant 0 : i32
    %c0_i32_0 = arith.constant 0 : i32
    %c0_i32_1 = arith.constant 0 : i32
    return %c0_i32, %c0_i32_0 : i32, i32
  }
  func.func @transform_2(%arg0: i32) -> (i32, i32) {
    %c0_i32 = arith.constant 0 : i32
    %c0_i32_0 = arith.constant 0 : i32
    %c0_i32_1 = arith.constant 0 : i32
    return %c0_i32, %c0_i32_0 : i32, i32
  }
  func.func @transform_3(%arg0: i32) -> (i32, i32) {
    %c0_i32 = arith.constant 0 : i32
    %c0_i32_0 = arith.constant 0 : i32
    %c0_i32_1 = arith.constant 0 : i32
    return %c0_i32, %c0_i32_0 : i32, i32
  }
  func.func @transform_4(%arg0: i32) -> (i32, i32) {
    %c0_i32 = arith.constant 0 : i32
    %c0_i32_0 = arith.constant 0 : i32
    return %arg0, %c0_i32 : i32, i32
  }
  func.func @transform_5(%arg0: i32) -> (i32, i32) {
    %c0_i32 = arith.constant 0 : i32
    %c0_i32_0 = arith.constant 0 : i32
    return %arg0, %c0_i32 : i32, i32
  }
}

module attributes {stable_mosaic.version = 11 : i64} {
  func.func @_conv_bn_kernel(%arg0: i32, %arg1: memref<8x576xbf16, #tpu.memory_space<vmem>>, %arg2: memref<576x64xbf16, #tpu.memory_space<vmem>>, %arg3: memref<1x64xf32, #tpu.memory_space<vmem>>, %arg4: memref<1x64xf32, #tpu.memory_space<vmem>>, %arg5: memref<8x64xbf16, #tpu.memory_space<vmem>>) attributes {dimension_semantics = [#tpu.dimension_semantics<parallel>], iteration_bounds = array<i64: 1>, scalar_prefetch = 0 : i64, scratch_operands = 0 : i64, tpu.core_type = #tpu.core_type<tc>, window_params = [{transform_indices = @transform_0, window_bounds = array<i64: 8, 576>}, {pipeline_mode = #tpu.pipeline_mode<synchronous>, transform_indices = @transform_1, window_bounds = array<i64: 576, 64>}, {pipeline_mode = #tpu.pipeline_mode<synchronous>, transform_indices = @transform_2, window_bounds = array<i64: 1, 64>}, {pipeline_mode = #tpu.pipeline_mode<synchronous>, transform_indices = @transform_3, window_bounds = array<i64: 1, 64>}, {transform_indices = @transform_4, window_bounds = array<i64: 8, 64>}]} {
    %c0 = arith.constant 0 : index
    %c0_0 = arith.constant 0 : index
    %0 = vector.load %arg1[%c0, %c0_0] : memref<8x576xbf16, #tpu.memory_space<vmem>>, vector<8x576xbf16>
    %c0_1 = arith.constant 0 : index
    %c0_2 = arith.constant 0 : index
    %1 = vector.load %arg2[%c0_1, %c0_2] : memref<576x64xbf16, #tpu.memory_space<vmem>>, vector<576x64xbf16>
    %cst = arith.constant dense<0.000000e+00> : vector<8x64xf32>
    %2 = tpu.matmul %0, %1, %cst {dimension_numbers = #tpu.dot_dimension_numbers<[1], [0], [0], [1], [0, 0, 1, 1], [], []>} : vector<8x576xbf16>, vector<576x64xbf16>, vector<8x64xf32> -> vector<8x64xf32>
    %c0_3 = arith.constant 0 : index
    %c0_4 = arith.constant 0 : index
    %3 = vector.load %arg3[%c0_3, %c0_4] : memref<1x64xf32, #tpu.memory_space<vmem>>, vector<1x64xf32>
    %4 = vector.broadcast %3 : vector<1x64xf32> to vector<8x64xf32>
    %5 = arith.mulf %2, %4 : vector<8x64xf32>
    %c0_5 = arith.constant 0 : index
    %c0_6 = arith.constant 0 : index
    %6 = vector.load %arg4[%c0_5, %c0_6] : memref<1x64xf32, #tpu.memory_space<vmem>>, vector<1x64xf32>
    %7 = vector.broadcast %6 : vector<1x64xf32> to vector<8x64xf32>
    %8 = arith.addf %5, %7 : vector<8x64xf32>
    %cst_7 = arith.constant 0.000000e+00 : f32
    %9 = vector.broadcast %cst_7 : f32 to vector<8x64xf32>
    %10 = arith.maximumf %8, %9 : vector<8x64xf32>
    %11 = arith.truncf %10 : vector<8x64xf32> to vector<8x64xbf16>
    %c0_8 = arith.constant 0 : index
    %c0_9 = arith.constant 0 : index
    %12 = vector.load %arg5[%c0_8, %c0_9] : memref<8x64xbf16, #tpu.memory_space<vmem>>, vector<8x64xbf16>
    tpu.vector_store %arg5[%c0_8, %c0_9], %11 {strides = array<i32>} : memref<8x64xbf16, #tpu.memory_space<vmem>>, vector<8x64xbf16>,
    return
  }
  func.func @transform_0(%arg0: i32) -> (i32, i32) {
    %c0_i32 = arith.constant 0 : i32
    %c0_i32_0 = arith.constant 0 : i32
    return %arg0, %c0_i32 : i32, i32
  }
  func.func @transform_1(%arg0: i32) -> (i32, i32) {
    %c0_i32 = arith.constant 0 : i32
    %c0_i32_0 = arith.constant 0 : i32
    %c0_i32_1 = arith.constant 0 : i32
    return %c0_i32, %c0_i32_0 : i32, i32
  }
  func.func @transform_2(%arg0: i32) -> (i32, i32) {
    %c0_i32 = arith.constant 0 : i32
    %c0_i32_0 = arith.constant 0 : i32
    %c0_i32_1 = arith.constant 0 : i32
    return %c0_i32, %c0_i32_0 : i32, i32
  }
  func.func @transform_3(%arg0: i32) -> (i32, i32) {
    %c0_i32 = arith.constant 0 : i32
    %c0_i32_0 = arith.constant 0 : i32
    %c0_i32_1 = arith.constant 0 : i32
    return %c0_i32, %c0_i32_0 : i32, i32
  }
  func.func @transform_4(%arg0: i32) -> (i32, i32) {
    %c0_i32 = arith.constant 0 : i32
    %c0_i32_0 = arith.constant 0 : i32
    return %arg0, %c0_i32 : i32, i32
  }
}

module attributes {stable_mosaic.version = 11 : i64} {
  func.func @_head_kernel(%arg0: memref<2x4x64xbf16, #tpu.memory_space<vmem>>, %arg1: memref<64x10xf32, #tpu.memory_space<vmem>>, %arg2: memref<1x10xf32, #tpu.memory_space<vmem>>, %arg3: memref<2x10xf32, #tpu.memory_space<vmem>>) attributes {dimension_semantics = [], scalar_prefetch = 0 : i64, scratch_operands = 0 : i64, tpu.core_type = #tpu.core_type<tc>} {
    %c0 = arith.constant 0 : index
    %c0_0 = arith.constant 0 : index
    %c0_1 = arith.constant 0 : index
    %0 = vector.load %arg0[%c0, %c0_0, %c0_1] : memref<2x4x64xbf16, #tpu.memory_space<vmem>>, vector<2x4x64xbf16>
    %1 = arith.extf %0 : vector<2x4x64xbf16> to vector<2x4x64xf32>
    %cst = arith.constant dense<0.000000e+00> : vector<2x64xf32>
    %2 = vector.multi_reduction <add>, %1, %cst [1] : vector<2x4x64xf32> to vector<2x64xf32>
    %cst_2 = arith.constant 4.000000e+00 : f32
    %3 = vector.broadcast %cst_2 : f32 to vector<2x64xf32>
    %4 = arith.divf %2, %3 : vector<2x64xf32>
    %c0_3 = arith.constant 0 : index
    %c0_4 = arith.constant 0 : index
    %5 = vector.load %arg1[%c0_3, %c0_4] : memref<64x10xf32, #tpu.memory_space<vmem>>, vector<64x10xf32>
    %cst_5 = arith.constant dense<0.000000e+00> : vector<2x10xf32>
    %6 = tpu.matmul %4, %5, %cst_5 {dimension_numbers = #tpu.dot_dimension_numbers<[1], [0], [0], [1], [0, 0, 1, 1], [], []>} : vector<2x64xf32>, vector<64x10xf32>, vector<2x10xf32> -> vector<2x10xf32>
    %c0_6 = arith.constant 0 : index
    %c0_7 = arith.constant 0 : index
    %7 = vector.load %arg2[%c0_6, %c0_7] : memref<1x10xf32, #tpu.memory_space<vmem>>, vector<1x10xf32>
    %8 = vector.broadcast %7 : vector<1x10xf32> to vector<2x10xf32>
    %9 = arith.addf %6, %8 : vector<2x10xf32>
    %c0_8 = arith.constant 0 : index
    %c0_9 = arith.constant 0 : index
    %10 = vector.load %arg3[%c0_8, %c0_9] : memref<2x10xf32, #tpu.memory_space<vmem>>, vector<2x10xf32>
    tpu.vector_store %arg3[%c0_8, %c0_9], %9 {strides = array<i32>} : memref<2x10xf32, #tpu.memory_space<vmem>>, vector<2x10xf32>,
    return
  }
}

</mosaic_0001>

<llo_original>
// kernel: resnet18_grouped_forward.22
$region0: #{resnet18_grouped_forward.22}
  #allocation0 [shape = 'u32[]', space=smem, size = 0x4, offset = 0x4, fixed_abs, tag = 'smem constant byte address 0x4 - core index']
  #allocation1 [shape = 'u32[144,128]{1,0:T(1,128)}', space=vmem, size = 0x12000, scoped, tag = 'internal scratch']
  %s0 = inlined_call_operand.vmem [shape: bf16[2048,147], index: 0, kind: input, shape index: {}]
  %s1 = inlined_call_operand.vmem [shape: bf16[147,8], index: 1, kind: input, shape index: {}]
  %s2 = inlined_call_operand.vmem [shape: f32[1,8], index: 2, kind: input, shape index: {}]
  %s3 = inlined_call_operand.vmem [shape: f32[1,8], index: 3, kind: input, shape index: {}]
  %s4 = inlined_call_operand.vmem [shape: bf16[2048,8], index: 4, kind: output, shape index: {}]
  %s5 = sld [smem:[#allocation0]]
  $region49: #{resnet18_grouped_forward.22} parent=0
    _
  %s7 = ssub.s32 1, %s5
  %s8 = scalar_select 0, %s7, %s5
  loop: start=0, step=1, limit=6
  $region2: #{resnet18_grouped_forward.22} parent=0 // loop_pre_header
    _
  $region3: #{resnet18_grouped_forward.22} parent=0 // loop_header
    %s10 = sphi 0, %s14
    %p11 = scmp.ge.s32.totalorder %s10, 6
    %s20 = sphi 0, %s22
    %s23 = sphi 0, %s20
    %s24 = sphi 0, %s23
    %s40 = sphi 0, %s24
    %s44 = sphi 0, %s44
    %s46 = sphi 0, %s44
    %s47 = sphi 0, %s46
    %s61 = sphi 0, %s47
    %s65 = sphi 0, %s65
    %s67 = sphi 0, %s65
    %s68 = sphi 0, %s67
    %s82 = sphi 0, %s68
    %s86 = sphi 0, %s86
    %s88 = sphi 0, %s86
    %s89 = sphi 0, %s88
    %s103 = sphi 0, %s89
    %s109 = sphi 0, %s111
    %s112 = sphi 0, %s109
    %s113 = sphi 0, %s112
    %s129 = sphi 0, %s113
  $region4: #{resnet18_grouped_forward.22} parent=0 // loop_header_branch
    %13 = sbr.rel (%p11) target = $region8
  $region5: #{resnet18_grouped_forward.22} parent=0 // loop_body
    %s15 = ssub.s32 %s10, 1
    %s16 = ssub.s32 %s10, 2
    %s17 = sadd.s32 %s10, 1
    %s18 = ssub.s32 %s10, %s17
    %p19 = scmp.eq.s32.totalorder %s18, 0
    %s21 = sadd.s32 %s20, 1
    %s22 = scalar_select %p19, %s20, %s21
    %p25 = pneg %p19
    %p26 = scmp.eq.s32.totalorder %s10, 3
    %p27 = por %p25, %p26
    %p28 = scmp.ne.s32.totalorder %s20, %s23
    %p29 = scmp.eq.s32.totalorder %s10, 0
    %p30 = por %p28, %p29
    %p31 = scmp.ne.s32.totalorder %s20, %s23
    %p32 = scmp.eq.s32.totalorder %s15, 3
    %p33 = por %p31, %p32
    %p34 = scmp.ne.s32.totalorder %s23, %s24
    %p35 = scmp.eq.s32.totalorder %s15, 0
    %p36 = por %p34, %p35
    %p37 = scmp.ne.s32.totalorder %s23, %s24
    %p38 = scmp.eq.s32.totalorder %s16, 3
    %p39 = por %p37, %p38
    %p41 = scmp.ne.s32.totalorder %s24, %s40
    %p42 = scmp.eq.s32.totalorder %s16, 0
    %p43 = por %p41, %p42
    %s45 = sadd.s32 %s44, 1
    %p48 = scmp.eq.s32.totalorder %s10, 3
    %p49 = scmp.ne.s32.totalorder %s44, %s46
    %p50 = scmp.eq.s32.totalorder %s10, 0
    %p51 = por %p49, %p50
    %p52 = scmp.ne.s32.totalorder %s44, %s46
    %p53 = scmp.eq.s32.totalorder %s15, 3
    %p54 = por %p52, %p53
    %p55 = scmp.ne.s32.totalorder %s46, %s47
    %p56 = scmp.eq.s32.totalorder %s15, 0
    %p57 = por %p55, %p56
    %p58 = scmp.ne.s32.totalorder %s46, %s47
    %p59 = scmp.eq.s32.totalorder %s16, 3
    %p60 = por %p58, %p59
    %p62 = scmp.ne.s32.totalorder %s47, %s61
    %p63 = scmp.eq.s32.totalorder %s16, 0
    %p64 = por %p62, %p63
    %s66 = sadd.s32 %s65, 1
    %p69 = scmp.eq.s32.totalorder %s10, 3
    %p70 = scmp.ne.s32.totalorder %s65, %s67
    %p71 = scmp.eq.s32.totalorder %s10, 0
    %p72 = por %p70, %p71
    %p73 = scmp.ne.s32.totalorder %s65, %s67
    %p74 = scmp.eq.s32.totalorder %s15, 3
    %p75 = por %p73, %p74
    %p76 = scmp.ne.s32.totalorder %s67, %s68
    %p77 = scmp.eq.s32.totalorder %s15, 0
    %p78 = por %p76, %p77
    %p79 = scmp.ne.s32.totalorder %s67, %s68
    %p80 = scmp.eq.s32.totalorder %s16, 3
    %p81 = por %p79, %p80
    %p83 = scmp.ne.s32.totalorder %s68, %s82
    %p84 = scmp.eq.s32.totalorder %s16, 0
    %p85 = por %p83, %p84
    %s87 = sadd.s32 %s86, 1
    %p90 = scmp.eq.s32.totalorder %s10, 3
    %p91 = scmp.ne.s32.totalorder %s86, %s88
    %p92 = scmp.eq.s32.totalorder %s10, 0
    %p93 = por %p91, %p92
    %p94 = scmp.ne.s32.totalorder %s86, %s88
    %p95 = scmp.eq.s32.totalorder %s15, 3
    %p96 = por %p94, %p95
    %p97 = scmp.ne.s32.totalorder %s88, %s89
    %p98 = scmp.eq.s32.totalorder %s15, 0
    %p99 = por %p97, %p98
    %p100 = scmp.ne.s32.totalorder %s88, %s89
    %p101 = scmp.eq.s32.totalorder %s16, 3
    %p102 = por %p100, %p101
    %p104 = scmp.ne.s32.totalorder %s89, %s103
    %p105 = scmp.eq.s32.totalorder %s16, 0
    %p106 = por %p104, %p105
    %s107 = ssub.s32 %s10, %s17
    %p108 = scmp.eq.s32.totalorder %s107, 0
    %s110 = sadd.s32 %s109, 1
    %s111 = scalar_select %p108, %s109, %s110
    %p114 = pneg %p108
    %p115 = scmp.eq.s32.totalorder %s10, 3
    %p116 = por %p114, %p115
    %p117 = scmp.ne.s32.totalorder %s109, %s112
    %p118 = scmp.eq.s32.totalorder %s10, 0
    %p119 = por %p117, %p118
    %p120 = scmp.ne.s32.totalorder %s109, %s112
    %p121 = scmp.eq.s32.totalorder %s15, 3
    %p122 = por %p120, %p121
    %p123 = scmp.ne.s32.totalorder %s112, %s113
    %p124 = scmp.eq.s32.totalorder %s15, 0
    %p125 = por %p123, %p124
    %p126 = scmp.ne.s32.totalorder %s112, %s113
    %p127 = scmp.eq.s32.totalorder %s16, 3
    %p128 = por %p126, %p127
    %p130 = scmp.ne.s32.totalorder %s113, %s129
    %p131 = scmp.eq.s32.totalorder %s16, 0
    %p132 = por %p130, %p131
    %p133 = scmp.le.s32.totalorder 1, %s10
    %p134 = scmp.lt.s32.totalorder %s10, 5
    %p135 = pnand %p133, %p134
    %p136 = pneg %p135
    // Predicated region
    $region9: #{resnet18_grouped_forward.22} parent=5 // pred_check
      _
    $region10: #{resnet18_grouped_forward.22} parent=5 // pred_check_branch
      %138 = sbr.rel (%p135) target = $region12
    $region11: #{resnet18_grouped_forward.22} parent=5 // pred_region
      %s139 = ssub.s32 %s10, 1
      // Predicated region
      $region13: #{resnet18_grouped_forward.22} parent=11 // pred_check
        %p140 = pneg %p57
      $region14: #{resnet18_grouped_forward.22} parent=11 // pred_check_branch
        %142 = sbr.rel (%p140) target = $region16
      $region15: #{resnet18_grouped_forward.22} parent=11 // pred_region
        _
      $region16: #{resnet18_grouped_forward.22} parent=11 // pred_fallthru
        _
      // Predicated region
      $region17: #{resnet18_grouped_forward.22} parent=11 // pred_check
        %p143 = pneg %p78
      $region18: #{resnet18_grouped_forward.22} parent=11 // pred_check_branch
        %145 = sbr.rel (%p143) target = $region20
      $region19: #{resnet18_grouped_forward.22} parent=11 // pred_region
        _
      $region20: #{resnet18_grouped_forward.22} parent=11 // pred_fallthru
        _
      // Predicated region
      $region21: #{resnet18_grouped_forward.22} parent=11 // pred_check
        %p146 = pneg %p99
      $region22: #{resnet18_grouped_forward.22} parent=11 // pred_check_branch
        %148 = sbr.rel (%p146) target = $region24
      $region23: #{resnet18_grouped_forward.22} parent=11 // pred_region
        _
      $region24: #{resnet18_grouped_forward.22} parent=11 // pred_fallthru
        _
    $region12: #{resnet18_grouped_forward.22} parent=5 // pred_fallthru
      _
    %p149 = scmp.lt.s32.totalorder %s10, 4
    // Predicated region
    $region25: #{resnet18_grouped_forward.22} parent=5 // pred_check
      %p150 = pneg %p149
    $region26: #{resnet18_grouped_forward.22} parent=5 // pred_check_branch
      %152 = sbr.rel (%p150) target = $region28
    $region27: #{resnet18_grouped_forward.22} parent=5 // pred_region
      // Predicated region
      $region29: #{resnet18_grouped_forward.22} parent=27 // pred_check
        %p153 = pneg %p30
      $region30: #{resnet18_grouped_forward.22} parent=27 // pred_check_branch
        %155 = sbr.rel (%p153) target = $region32
      $region31: #{resnet18_grouped_forward.22} parent=27 // pred_region
        %s156 = smul.u32 64, %s10
        %p157 = scmp.lt.s32.totalorder %s156, 255
        %s158 = scalar_select %p157, %s156, 255
        %s159 = smul.addr %s158, 2
        %s160 = smul.addr %s159, 4
        %s161 = scalar_lea.vmem %s0, %s160
        %s162 = smul.u32 64, %s10
      $region32: #{resnet18_grouped_forward.22} parent=27 // pred_fallthru
        _
    $region28: #{resnet18_grouped_forward.22} parent=5 // pred_fallthru
      _
    %p163 = scmp.le.s32.totalorder 1, %s10
    %p164 = scmp.lt.s32.totalorder %s10, 5
    %p165 = pnand %p163, %p164
    %p166 = pneg %p165
    // Predicated region
    $region33: #{resnet18_grouped_forward.22} parent=5 // pred_check
      _
    $region34: #{resnet18_grouped_forward.22} parent=5 // pred_check_branch
      %168 = sbr.rel (%p165) target = $region36
    $region35: #{resnet18_grouped_forward.22} parent=5 // pred_region
      %s169 = ssub.s32 %s10, 1
      %s170 = smul.u32 64, %s15
      %p171 = scmp.lt.s32.totalorder %s170, 255
      %s172 = scalar_select %p171, %s170, 255
      %s173 = smul.addr %s172, 2
      %s174 = smul.addr %s173, 4
      %s175 = scalar_lea.vmem %s0, %s174
      %p176 = pneg %p36
      %p177 = pneg %p33
      %p178 = pneg %p57
      %p179 = pneg %p54
      %p180 = pneg %p78
      %p181 = pneg %p75
      %p182 = pneg %p99
      %p183 = pneg %p96
      %p184 = pneg %p125
      %p185 = pneg %p122
      %s186 = smul.u32 64, %s15
      %p187 = scmp.lt.s32.totalorder %s186, 255
      %s188 = scalar_select %p187, %s186, 255
      %s189 = smul.addr %s188, 4
      %s190 = scalar_lea.vmem %s4, %s189
      %s191 = smul.u32 64, %s15
      %p192 = scmp.lt.s32.totalorder %s191, 255
      %s193 = scalar_select %p192, %s191, 255
      %s194 = smul.addr %s193, 2
      %s195 = smul.addr %s194, 4
      %s196 = scalar_lea.vmem %s0, %s195
      %s197 = smul.u32 64, %s15
      %s198 = smul.u32 64, %s15
      %p199 = scmp.lt.s32.totalorder %s198, 255
      %s200 = scalar_select %p199, %s198, 255
      %s201 = smul.addr %s200, 4
      %s202 = scalar_lea.vmem %s4, %s201
      %s203 = smul.u32 64, %s15
      %v205 = vld [vmem:[%s196] sm:$0xff]
      %v206 = vld [vmem:[%s196 + $0x8] sm:$0xff]
      %v207 = vld [vmem:[%s196 + $0x10] sm:$0xff]
      %v208 = vld [vmem:[%s196 + $0x18] sm:$0xff]
      %v209 = vld [vmem:[%s196 + $0x20] sm:$0xff]
      %v210 = vld [vmem:[%s196 + $0x28] sm:$0xff]
      %v211 = vld [vmem:[%s196 + $0x30] sm:$0xff]
      %v212 = vld [vmem:[%s196 + $0x38] sm:$0xff]
      %v213 = vld [vmem:[%s196 + $0x40] sm:$0xff]
      %v214 = vld [vmem:[%s196 + $0x48] sm:$0xff]
      %v215 = vld [vmem:[%s196 + $0x50] sm:$0xff]
      %v216 = vld [vmem:[%s196 + $0x58] sm:$0xff]
      %v217 = vld [vmem:[%s196 + $0x60] sm:$0xff]
      %v218 = vld [vmem:[%s196 + $0x68] sm:$0xff]
      %v219 = vld [vmem:[%s196 + $0x70] sm:$0xff]
      %v220 = vld [vmem:[%s196 + $0x78] sm:$0xff]
      %v221 = vld [vmem:[%s196 + $0x80] sm:$0xff]
      %v222 = vld [vmem:[%s196 + $0x88] sm:$0xff]
      %v223 = vld [vmem:[%s196 + $0x90] sm:$0xff]
      %v224 = vld [vmem:[%s196 + $0x98] sm:$0xff]
      %v225 = vld [vmem:[%s196 + $0xa0] sm:$0xff]
      %v226 = vld [vmem:[%s196 + $0xa8] sm:$0xff]
      %v227 = vld [vmem:[%s196 + $0xb0] sm:$0xff]
      %v228 = vld [vmem:[%s196 + $0xb8] sm:$0xff]
      %v229 = vld [vmem:[%s196 + $0xc0] sm:$0xff]
      %v230 = vld [vmem:[%s196 + $0xc8] sm:$0xff]
      %v231 = vld [vmem:[%s196 + $0xd0] sm:$0xff]
      %v232 = vld [vmem:[%s196 + $0xd8] sm:$0xff]
      %v233 = vld [vmem:[%s196 + $0xe0] sm:$0xff]
      %v234 = vld [vmem:[%s196 + $0xe8] sm:$0xff]
      %v235 = vld [vmem:[%s196 + $0xf0] sm:$0xff]
      %v236 = vld [vmem:[%s196 + $0xf8] sm:$0xff]
      %v237 = vld [vmem:[%s196 + $0x100] sm:$0xff]
      %v238 = vld [vmem:[%s196 + $0x108] sm:$0xff]
      %v239 = vld [vmem:[%s196 + $0x110] sm:$0xff]
      %v240 = vld [vmem:[%s196 + $0x118] sm:$0xff]
      %v241 = vld [vmem:[%s196 + $0x120] sm:$0xff]
      %v242 = vld [vmem:[%s196 + $0x128] sm:$0xff]
      %v243 = vld [vmem:[%s196 + $0x130] sm:$0xff]
      %v244 = vld [vmem:[%s196 + $0x138] sm:$0xff]
      %v245 = vld [vmem:[%s196 + $0x140] sm:$0xff]
      %v246 = vld [vmem:[%s196 + $0x148] sm:$0xff]
      %v247 = vld [vmem:[%s196 + $0x150] sm:$0xff]
      %v248 = vld [vmem:[%s196 + $0x158] sm:$0xff]
      %v249 = vld [vmem:[%s196 + $0x160] sm:$0xff]
      %v250 = vld [vmem:[%s196 + $0x168] sm:$0xff]
      %v251 = vld [vmem:[%s196 + $0x170] sm:$0xff]
      %v252 = vld [vmem:[%s196 + $0x178] sm:$0xff]
      %v253 = vld [vmem:[%s196 + $0x180] sm:$0xff]
      %v254 = vld [vmem:[%s196 + $0x188] sm:$0xff]
      %v255 = vld [vmem:[%s196 + $0x190] sm:$0xff]
      %v256 = vld [vmem:[%s196 + $0x198] sm:$0xff]
      %v257 = vld [vmem:[%s196 + $0x1a0] sm:$0xff]
      %v258 = vld [vmem:[%s196 + $0x1a8] sm:$0xff]
      %v259 = vld [vmem:[%s196 + $0x1b0] sm:$0xff]
      %v260 = vld [vmem:[%s196 + $0x1b8] sm:$0xff]
      %v261 = vld [vmem:[%s196 + $0x1c0] sm:$0xff]
      %v262 = vld [vmem:[%s196 + $0x1c8] sm:$0xff]
      %v263 = vld [vmem:[%s196 + $0x1d0] sm:$0xff]
      %v264 = vld [vmem:[%s196 + $0x1d8] sm:$0xff]
      %v265 = vld [vmem:[%s196 + $0x1e0] sm:$0xff]
      %v266 = vld [vmem:[%s196 + $0x1e8] sm:$0xff]
      %v267 = vld [vmem:[%s196 + $0x1f0] sm:$0xff]
      %v268 = vld [vmem:[%s196 + $0x1f8] sm:$0xff]
      %v269 = vld [vmem:[%s1] sm:$0xf]
      %v270 = vld [vmem:[%s1 + $0x4] sm:$0xf]
      %v271 = vld [vmem:[%s1 + $0x8] sm:$0xf]
      %v272 = vld [vmem:[%s1 + $0xc] sm:$0xf]
      %v273 = vld [vmem:[%s1 + $0x10] sm:$0xf]
      %v274 = vld [vmem:[%s1 + $0x14] sm:$0xf]
      %v275 = vld [vmem:[%s1 + $0x18] sm:$0xf]
      %v276 = vld [vmem:[%s1 + $0x1c] sm:$0xf]
      %v277 = vld [vmem:[%s1 + $0x20] sm:$0xf]
      %v278 = vld [vmem:[%s1 + $0x24] sm:$0xf]
      %v279 = vld [vmem:[%s1 + $0x28] sm:$0xf]
      %v280 = vld [vmem:[%s1 + $0x2c] sm:$0xf]
      %v281 = vld [vmem:[%s1 + $0x30] sm:$0xf]
      %v282 = vld [vmem:[%s1 + $0x34] sm:$0xf]
      %v283 = vld [vmem:[%s1 + $0x38] sm:$0xf]
      %v284 = vld [vmem:[%s1 + $0x3c] sm:$0xf]
      %v285 = vld [vmem:[%s1 + $0x40] sm:$0xf]
      %v286 = vld [vmem:[%s1 + $0x44] sm:$0xf]
      %v287 = vld [vmem:[%s1 + $0x48] sm:$0x3]
      %v352 = vunpack.c.l.b16 %v205
      %v353 = vunpack.c.h.b16 %v205
      %v354 = vunpack.c.l.b16 %v206
      %v355 = vunpack.c.h.b16 %v206
      %v356 = vunpack.c.l.b16 %v207
      %v357 = vunpack.c.h.b16 %v207
      %v358 = vunpack.c.l.b16 %v208
      %v359 = vunpack.c.h.b16 %v208
      %v360 = vunpack.c.l.b16 %v209
      %v361 = vunpack.c.h.b16 %v209
      %v362 = vunpack.c.l.b16 %v210
      %v363 = vunpack.c.h.b16 %v210
      %v364 = vunpack.c.l.b16 %v211
      %v365 = vunpack.c.h.b16 %v211
      %v366 = vunpack.c.l.b16 %v212
      %v367 = vunpack.c.h.b16 %v212
      %v368 = vunpack.c.l.b16 %v213
      %v369 = vunpack.c.h.b16 %v213
      %v370 = vunpack.c.l.b16 %v214
      %v371 = vunpack.c.h.b16 %v214
      %v372 = vunpack.c.l.b16 %v215
      %v373 = vunpack.c.h.b16 %v215
      %v374 = vunpack.c.l.b16 %v216
      %v375 = vunpack.c.h.b16 %v216
      %v376 = vunpack.c.l.b16 %v217
      %v377 = vunpack.c.h.b16 %v217
      %v378 = vunpack.c.l.b16 %v218
      %v379 = vunpack.c.h.b16 %v218
      %v380 = vunpack.c.l.b16 %v219
      %v381 = vunpack.c.h.b16 %v219
      %v382 = vunpack.c.l.b16 %v220
      %v383 = vunpack.c.h.b16 %v220
      %v384 = vunpack.c.l.b16 %v221
      %v385 = vunpack.c.h.b16 %v221
      %v386 = vunpack.c.l.b16 %v222
      %v387 = vunpack.c.h.b16 %v222
      %v388 = vunpack.c.l.b16 %v223
      %v389 = vunpack.c.h.b16 %v223
      %v390 = vunpack.c.l.b16 %v224
      %v391 = vunpack.c.h.b16 %v224
      %v392 = vunpack.c.l.b16 %v225
      %v393 = vunpack.c.h.b16 %v225
      %v394 = vunpack.c.l.b16 %v226
      %v395 = vunpack.c.h.b16 %v226
      %v396 = vunpack.c.l.b16 %v227
      %v397 = vunpack.c.h.b16 %v227
      %v398 = vunpack.c.l.b16 %v228
      %v399 = vunpack.c.h.b16 %v228
      %v400 = vunpack.c.l.b16 %v229
      %v401 = vunpack.c.h.b16 %v229
      %v402 = vunpack.c.l.b16 %v230
      %v403 = vunpack.c.h.b16 %v230
      %v404 = vunpack.c.l.b16 %v231
      %v405 = vunpack.c.h.b16 %v231
      %v406 = vunpack.c.l.b16 %v232
      %v407 = vunpack.c.h.b16 %v232
      %v408 = vunpack.c.l.b16 %v233
      %v409 = vunpack.c.h.b16 %v233
      %v410 = vunpack.c.l.b16 %v234
      %v411 = vunpack.c.h.b16 %v234
      %v412 = vunpack.c.l.b16 %v235
      %v413 = vunpack.c.h.b16 %v235
      %v414 = vunpack.c.l.b16 %v236
      %v415 = vunpack.c.h.b16 %v236
      %v416 = vunpack.c.l.b16 %v237
      %v417 = vunpack.c.h.b16 %v237
      %v418 = vunpack.c.l.b16 %v238
      %v419 = vunpack.c.h.b16 %v238
      %v420 = vunpack.c.l.b16 %v239
      %v421 = vunpack.c.h.b16 %v239
      %v422 = vunpack.c.l.b16 %v240
      %v423 = vunpack.c.h.b16 %v240
      %v424 = vunpack.c.l.b16 %v241
      %v425 = vunpack.c.h.b16 %v241
      %v426 = vunpack.c.l.b16 %v242
      %v427 = vunpack.c.h.b16 %v242
      %v428 = vunpack.c.l.b16 %v243
      %v429 = vunpack.c.h.b16 %v243
      %v430 = vunpack.c.l.b16 %v244
      %v431 = vunpack.c.h.b16 %v244
      %v432 = vunpack.c.l.b16 %v245
      %v433 = vunpack.c.h.b16 %v245
      %v434 = vunpack.c.l.b16 %v246
      %v435 = vunpack.c.h.b16 %v246
      %v436 = vunpack.c.l.b16 %v247
      %v437 = vunpack.c.h.b16 %v247
      %v438 = vunpack.c.l.b16 %v248
      %v439 = vunpack.c.h.b16 %v248
      %v440 = vunpack.c.l.b16 %v249
      %v441 = vunpack.c.h.b16 %v249
      %v442 = vunpack.c.l.b16 %v250
      %v443 = vunpack.c.h.b16 %v250
      %v444 = vunpack.c.l.b16 %v251
      %v445 = vunpack.c.h.b16 %v251
      %v446 = vunpack.c.l.b16 %v252
      %v447 = vunpack.c.h.b16 %v252
      %v448 = vunpack.c.l.b16 %v253
      %v449 = vunpack.c.h.b16 %v253
      %v450 = vunpack.c.l.b16 %v254
      %v451 = vunpack.c.h.b16 %v254
      %v452 = vunpack.c.l.b16 %v255
      %v453 = vunpack.c.h.b16 %v255
      %v454 = vunpack.c.l.b16 %v256
      %v455 = vunpack.c.h.b16 %v256
      %v456 = vunpack.c.l.b16 %v257
      %v457 = vunpack.c.h.b16 %v257
      %v458 = vunpack.c.l.b16 %v258
      %v459 = vunpack.c.h.b16 %v258
      %v460 = vunpack.c.l.b16 %v259
      %v461 = vunpack.c.h.b16 %v259
      %v462 = vunpack.c.l.b16 %v260
      %v463 = vunpack.c.h.b16 %v260
      %v464 = vunpack.c.l.b16 %v261
      %v465 = vunpack.c.h.b16 %v261
      %v466 = vunpack.c.l.b16 %v262
      %v467 = vunpack.c.h.b16 %v262
      %v468 = vunpack.c.l.b16 %v263
      %v469 = vunpack.c.h.b16 %v263
      %v470 = vunpack.c.l.b16 %v264
      %v471 = vunpack.c.h.b16 %v264
      %v472 = vunpack.c.l.b16 %v265
      %v473 = vunpack.c.h.b16 %v265
      %v474 = vunpack.c.l.b16 %v266
      %v475 = vunpack.c.h.b16 %v266
      %v476 = vunpack.c.l.b16 %v267
      %v477 = vunpack.c.h.b16 %v267
      %v478 = vunpack.c.l.b16 %v268
      %v479 = vunpack.c.h.b16 %v268
      %v480 = vpack.c.b16 %v354, %v352
      %v481 = vpack.c.b16 %v355, %v353
      %v482 = vpack.c.b16 %v358, %v356
      %v483 = vpack.c.b16 %v359, %v357
      %v484 = vpack.c.b16 %v362, %v360
      %v485 = vpack.c.b16 %v363, %v361
      %v486 = vpack.c.b16 %v366, %v364
      %v487 = vpack.c.b16 %v367, %v365
      %v488 = vpack.c.b16 %v370, %v368
      %v489 = vpack.c.b16 %v371, %v369
      %v490 = vpack.c.b16 %v374, %v372
      %v491 = vpack.c.b16 %v375, %v373
      %v492 = vpack.c.b16 %v378, %v376
      %v493 = vpack.c.b16 %v379, %v377
      %v494 = vpack.c.b16 %v382, %v380
      %v495 = vpack.c.b16 %v383, %v381
      %v496 = vpack.c.b16 %v386, %v384
      %v497 = vpack.c.b16 %v387, %v385
      %v498 = vpack.c.b16 %v390, %v388
      %v499 = vpack.c.b16 %v391, %v389
      %v500 = vpack.c.b16 %v394, %v392
      %v501 = vpack.c.b16 %v395, %v393
      %v502 = vpack.c.b16 %v398, %v396
      %v503 = vpack.c.b16 %v399, %v397
      %v504 = vpack.c.b16 %v402, %v400
      %v505 = vpack.c.b16 %v403, %v401
      %v506 = vpack.c.b16 %v406, %v404
      %v507 = vpack.c.b16 %v407, %v405
      %v508 = vpack.c.b16 %v410, %v408
      %v509 = vpack.c.b16 %v411, %v409
      %v510 = vpack.c.b16 %v414, %v412
      %v511 = vpack.c.b16 %v415, %v413
      %v512 = vpack.c.b16 %v418, %v416
      %v513 = vpack.c.b16 %v419, %v417
      %v514 = vpack.c.b16 %v422, %v420
      %v515 = vpack.c.b16 %v423, %v421
      %v516 = vpack.c.b16 %v426, %v424
      %v517 = vpack.c.b16 %v427, %v425
      %v518 = vpack.c.b16 %v430, %v428
      %v519 = vpack.c.b16 %v431, %v429
      %v520 = vpack.c.b16 %v434, %v432
      %v521 = vpack.c.b16 %v435, %v433
      %v522 = vpack.c.b16 %v438, %v436
      %v523 = vpack.c.b16 %v439, %v437
      %v524 = vpack.c.b16 %v442, %v440
      %v525 = vpack.c.b16 %v443, %v441
      %v526 = vpack.c.b16 %v446, %v444
      %v527 = vpack.c.b16 %v447, %v445
      %v528 = vpack.c.b16 %v450, %v448
      %v529 = vpack.c.b16 %v451, %v449
      %v530 = vpack.c.b16 %v454, %v452
      %v531 = vpack.c.b16 %v455, %v453
      %v532 = vpack.c.b16 %v458, %v456
      %v533 = vpack.c.b16 %v459, %v457
      %v534 = vpack.c.b16 %v462, %v460
      %v535 = vpack.c.b16 %v463, %v461
      %v536 = vpack.c.b16 %v466, %v464
      %v537 = vpack.c.b16 %v467, %v465
      %v538 = vpack.c.b16 %v470, %v468
      %v539 = vpack.c.b16 %v471, %v469
      %v540 = vpack.c.b16 %v474, %v472
      %v541 = vpack.c.b16 %v475, %v473
      %v542 = vpack.c.b16 %v478, %v476
      %v543 = vpack.c.b16 %v479, %v477
      %v595 = vunpack.c.l.b16 %v269
      %v596 = vunpack.c.l.b16 %v270
      %v597 = vunpack.c.l.b16 %v271
      %v598 = vunpack.c.l.b16 %v272
      %v599 = vunpack.c.l.b16 %v273
      %v600 = vunpack.c.l.b16 %v274
      %v601 = vunpack.c.l.b16 %v275
      %v602 = vunpack.c.l.b16 %v276
      %v603 = vunpack.c.l.b16 %v277
      %v604 = vunpack.c.l.b16 %v278
      %v605 = vunpack.c.l.b16 %v279
      %v606 = vunpack.c.l.b16 %v280
      %v607 = vunpack.c.l.b16 %v281
      %v608 = vunpack.c.l.b16 %v282
      %v609 = vunpack.c.l.b16 %v283
      %v610 = vunpack.c.l.b16 %v284
      %v611 = vunpack.c.l.b16 %v285
      %v612 = vunpack.c.l.b16 %v286
      %v613 = vunpack.c.l.b16 %v287
      %v614 = vpack.c.b16 %v596, %v595
      %v615 = vpack.c.b16 %v598, %v597
      %v616 = vpack.c.b16 %v600, %v599
      %v617 = vpack.c.b16 %v602, %v601
      %v618 = vpack.c.b16 %v604, %v603
      %v619 = vpack.c.b16 %v606, %v605
      %v620 = vpack.c.b16 %v608, %v607
      %v621 = vpack.c.b16 %v610, %v609
      %v622 = vpack.c.b16 %v612, %v611
      %v623 = vpack.c.b16 %v613, %v613
      %vm633 = vcmask 154624
      %v635 = vsel %vm633, %v481, 0
      %v638 = vsel %vm633, %v483, 0
      %v641 = vsel %vm633, %v485, 0
      %v644 = vsel %vm633, %v487, 0
      %v647 = vsel %vm633, %v489, 0
      %v650 = vsel %vm633, %v491, 0
      %v653 = vsel %vm633, %v493, 0
      %v656 = vsel %vm633, %v495, 0
      %v659 = vsel %vm633, %v497, 0
      %v662 = vsel %vm633, %v499, 0
      %v665 = vsel %vm633, %v501, 0
      %v668 = vsel %vm633, %v503, 0
      %v671 = vsel %vm633, %v505, 0
      %v674 = vsel %vm633, %v507, 0
      %v677 = vsel %vm633, %v509, 0
      %v680 = vsel %vm633, %v511, 0
      %v683 = vsel %vm633, %v513, 0
      %v686 = vsel %vm633, %v515, 0
      %v689 = vsel %vm633, %v517, 0
      %v692 = vsel %vm633, %v519, 0
      %v695 = vsel %vm633, %v521, 0
      %v698 = vsel %vm633, %v523, 0
      %v701 = vsel %vm633, %v525, 0
      %v704 = vsel %vm633, %v527, 0
      %v707 = vsel %vm633, %v529, 0
      %v710 = vsel %vm633, %v531, 0
      %v713 = vsel %vm633, %v533, 0
      %v716 = vsel %vm633, %v535, 0
      %v719 = vsel %vm633, %v537, 0
      %v722 = vsel %vm633, %v539, 0
      %v725 = vsel %vm633, %v541, 0
      %v728 = vsel %vm633, %v543, 0
      %vm730 = vcmask 1040384
      %vm731 = vcmask 1041408
      %v732 = vsel %vm730, 4294967295, 65535
      %v733 = vsel %vm731, %v732, 0
      %v735 = vand.u32 %v623, %v733
      %737 = vmatprep.subr.bf16.mxu0 0
      %738 = vmatpush1.bf16.msra.mxu0 %v621
      %739 = vmatprep.subr.bf16.mxu0 0
      %740 = vmatpush1.bf16.msra.mxu0 %v620
      %741 = vmatprep.subr.bf16.mxu0 0
      %742 = vmatpush1.bf16.msra.mxu0 %v619
      %743 = vmatprep.subr.bf16.mxu0 0
      %744 = vmatpush1.bf16.msra.mxu0 %v618
      %745 = vmatprep.subr.bf16.mxu0 0
      %746 = vmatpush1.bf16.msra.mxu0 %v617
      %747 = vmatprep.subr.bf16.mxu0 0
      %748 = vmatpush1.bf16.msra.mxu0 %v616
      %749 = vmatprep.subr.bf16.mxu0 0
      %750 = vmatpush1.bf16.msra.mxu0 %v615
      %751 = vmatprep.subr.bf16.mxu0 0
      %752 = vmatpush1.bf16.msra.mxu0 %v614
      %753 = vmatprep.subr.bf16.mxu0 0
      %754 = vmatpush2.bf16.msra.mxu0 0
      %755 = vmatprep.subr.bf16.mxu0 0
      %756 = vmatpush2.bf16.msra.mxu0 0
      %757 = vmatprep.subr.bf16.mxu0 0
      %758 = vmatpush2.bf16.msra.mxu0 0
      %759 = vmatprep.subr.bf16.mxu0 0
      %760 = vmatpush2.bf16.msra.mxu0 0
      %761 = vmatprep.subr.bf16.mxu0 0
      %762 = vmatpush2.bf16.msra.mxu0 0
      %763 = vmatprep.subr.bf16.mxu0 0
      %764 = vmatpush2.bf16.msra.mxu0 0
      %765 = vmatprep.subr.bf16.mxu0 0
      %766 = vmatpush2.bf16.msra.mxu0 %v735
      %767 = vmatprep.subr.bf16.mxu0 0
      %768 = vmatpush2.bf16.msra.mxu0 %v622
      %769 = vmatprep.mubr.bf16.mxu0 %v635
      %770 = vmatmul.mubr.bf16.gmra.mxu0 %v480
      %v771 = vpop.f32.mrf.mxu0
      %v772 = vadd.f32 0.0, %v771
      %v773 = vpop.f32.mrf.mxu0
      %v774 = vpop.f32.mrf.mxu0
      %v775 = vadd.f32 0.0, %v774
      %v776 = vpop.f32.mrf.mxu0
      %777 = vmatprep.mubr.bf16.mxu0 %v638
      %778 = vmatmul.mubr.bf16.gmra.mxu0 %v482
      %v779 = vpop.f32.mrf.mxu0
      %v780 = vadd.f32 0.0, %v779
      %v781 = vpop.f32.mrf.mxu0
      %v782 = vpop.f32.mrf.mxu0
      %v783 = vadd.f32 0.0, %v782
      %v784 = vpop.f32.mrf.mxu0
      %785 = vmatprep.mubr.bf16.mxu0 %v641
      %786 = vmatmul.mubr.bf16.gmra.mxu0 %v484
      %v787 = vpop.f32.mrf.mxu0
      %v788 = vadd.f32 0.0, %v787
      %v789 = vpop.f32.mrf.mxu0
      %v790 = vpop.f32.mrf.mxu0
      %v791 = vadd.f32 0.0, %v790
      %v792 = vpop.f32.mrf.mxu0
      %793 = vmatprep.mubr.bf16.mxu0 %v644
      %794 = vmatmul.mubr.bf16.gmra.mxu0 %v486
      %v795 = vpop.f32.mrf.mxu0
      %v796 = vadd.f32 0.0, %v795
      %v797 = vpop.f32.mrf.mxu0
      %v798 = vpop.f32.mrf.mxu0
      %v799 = vadd.f32 0.0, %v798
      %v800 = vpop.f32.mrf.mxu0
      %801 = vmatprep.mubr.bf16.mxu0 %v647
      %802 = vmatmul.mubr.bf16.gmra.mxu0 %v488
      %v803 = vpop.f32.mrf.mxu0
      %v804 = vadd.f32 0.0, %v803
      %v805 = vpop.f32.mrf.mxu0
      %v806 = vpop.f32.mrf.mxu0
      %v807 = vadd.f32 0.0, %v806
      %v808 = vpop.f32.mrf.mxu0
      %809 = vmatprep.mubr.bf16.mxu0 %v650
      %810 = vmatmul.mubr.bf16.gmra.mxu0 %v490
      %v811 = vpop.f32.mrf.mxu0
      %v812 = vadd.f32 0.0, %v811
      %v813 = vpop.f32.mrf.mxu0
      %v814 = vpop.f32.mrf.mxu0
      %v815 = vadd.f32 0.0, %v814
      %v816 = vpop.f32.mrf.mxu0
      %817 = vmatprep.mubr.bf16.mxu0 %v653
      %818 = vmatmul.mubr.bf16.gmra.mxu0 %v492
      %v819 = vpop.f32.mrf.mxu0
      %v820 = vadd.f32 0.0, %v819
      %v821 = vpop.f32.mrf.mxu0
      %v822 = vpop.f32.mrf.mxu0
      %v823 = vadd.f32 0.0, %v822
      %v824 = vpop.f32.mrf.mxu0
      %825 = vmatprep.mubr.bf16.mxu0 %v656
      %826 = vmatmul.mubr.bf16.gmra.mxu0 %v494
      %v827 = vpop.f32.mrf.mxu0
      %v828 = vadd.f32 0.0, %v827
      %v829 = vpop.f32.mrf.mxu0
      %v830 = vpop.f32.mrf.mxu0
      %v831 = vadd.f32 0.0, %v830
      %v832 = vpop.f32.mrf.mxu0
      %833 = vmatprep.mubr.bf16.mxu0 %v659
      %834 = vmatmul.mubr.bf16.gmra.mxu0 %v496
      %v835 = vpop.f32.mrf.mxu0
      %v836 = vadd.f32 0.0, %v835
      %v837 = vpop.f32.mrf.mxu0
      %v838 = vpop.f32.mrf.mxu0
      %v839 = vadd.f32 0.0, %v838
      %v840 = vpop.f32.mrf.mxu0
      %841 = vmatprep.mubr.bf16.mxu0 %v662
      %842 = vmatmul.mubr.bf16.gmra.mxu0 %v498
      %v843 = vpop.f32.mrf.mxu0
      %v844 = vadd.f32 0.0, %v843
      %v845 = vpop.f32.mrf.mxu0
      %v846 = vpop.f32.mrf.mxu0
      %v847 = vadd.f32 0.0, %v846
      %v848 = vpop.f32.mrf.mxu0
      %849 = vmatprep.mubr.bf16.mxu0 %v665
      %850 = vmatmul.mubr.bf16.gmra.mxu0 %v500
      %v851 = vpop.f32.mrf.mxu0
      %v852 = vadd.f32 0.0, %v851
      %v853 = vpop.f32.mrf.mxu0
      %v854 = vpop.f32.mrf.mxu0
      %v855 = vadd.f32 0.0, %v854
      %v856 = vpop.f32.mrf.mxu0
      %857 = vmatprep.mubr.bf16.mxu0 %v668
      %858 = vmatmul.mubr.bf16.gmra.mxu0 %v502
      %v859 = vpop.f32.mrf.mxu0
      %v860 = vadd.f32 0.0, %v859
      %v861 = vpop.f32.mrf.mxu0
      %v862 = vpop.f32.mrf.mxu0
      %v863 = vadd.f32 0.0, %v862
      %v864 = vpop.f32.mrf.mxu0
      %865 = vmatprep.mubr.bf16.mxu0 %v671
      %866 = vmatmul.mubr.bf16.gmra.mxu0 %v504
      %v867 = vpop.f32.mrf.mxu0
      %v868 = vadd.f32 0.0, %v867
      %v869 = vpop.f32.mrf.mxu0
      %v870 = vpop.f32.mrf.mxu0
      %v871 = vadd.f32 0.0, %v870
      %v872 = vpop.f32.mrf.mxu0
      %873 = vmatprep.mubr.bf16.mxu0 %v674
      %874 = vmatmul.mubr.bf16.gmra.mxu0 %v506
      %v875 = vpop.f32.mrf.mxu0
      %v876 = vadd.f32 0.0, %v875
      %v877 = vpop.f32.mrf.mxu0
      %v878 = vpop.f32.mrf.mxu0
      %v879 = vadd.f32 0.0, %v878
      %v880 = vpop.f32.mrf.mxu0
      %881 = vmatprep.mubr.bf16.mxu0 %v677
      %882 = vmatmul.mubr.bf16.gmra.mxu0 %v508
      %v883 = vpop.f32.mrf.mxu0
      %v884 = vadd.f32 0.0, %v883
      %v885 = vpop.f32.mrf.mxu0
      %v886 = vpop.f32.mrf.mxu0
      %v887 = vadd.f32 0.0, %v886
      %v888 = vpop.f32.mrf.mxu0
      %889 = vmatprep.mubr.bf16.mxu0 %v680
      %890 = vmatmul.mubr.bf16.gmra.mxu0 %v510
      %v891 = vpop.f32.mrf.mxu0
      %v892 = vadd.f32 0.0, %v891
      %v893 = vpop.f32.mrf.mxu0
      %v894 = vpop.f32.mrf.mxu0
      %v895 = vadd.f32 0.0, %v894
      %v896 = vpop.f32.mrf.mxu0
      %897 = vmatprep.mubr.bf16.mxu0 %v683
      %898 = vmatmul.mubr.bf16.gmra.mxu0 %v512
      %v899 = vpop.f32.mrf.mxu0
      %v900 = vadd.f32 0.0, %v899
      %v901 = vpop.f32.mrf.mxu0
      %v902 = vpop.f32.mrf.mxu0
      %v903 = vadd.f32 0.0, %v902
      %v904 = vpop.f32.mrf.mxu0
      %905 = vmatprep.mubr.bf16.mxu0 %v686
      %906 = vmatmul.mubr.bf16.gmra.mxu0 %v514
      %v907 = vpop.f32.mrf.mxu0
      %v908 = vadd.f32 0.0, %v907
      %v909 = vpop.f32.mrf.mxu0
      %v910 = vpop.f32.mrf.mxu0
      %v911 = vadd.f32 0.0, %v910
      %v912 = vpop.f32.mrf.mxu0
      %913 = vmatprep.mubr.bf16.mxu0 %v689
      %914 = vmatmul.mubr.bf16.gmra.mxu0 %v516
      %v915 = vpop.f32.mrf.mxu0
      %v916 = vadd.f32 0.0, %v915
      %v917 = vpop.f32.mrf.mxu0
      %v918 = vpop.f32.mrf.mxu0
      %v919 = vadd.f32 0.0, %v918
      %v920 = vpop.f32.mrf.mxu0
      %921 = vmatprep.mubr.bf16.mxu0 %v692
      %922 = vmatmul.mubr.bf16.gmra.mxu0 %v518
      %v923 = vpop.f32.mrf.mxu0
      %v924 = vadd.f32 0.0, %v923
      %v925 = vpop.f32.mrf.mxu0
      %v926 = vpop.f32.mrf.mxu0
      %v927 = vadd.f32 0.0, %v926
      %v928 = vpop.f32.mrf.mxu0
      %929 = vmatprep.mubr.bf16.mxu0 %v695
      %930 = vmatmul.mubr.bf16.gmra.mxu0 %v520
      %v931 = vpop.f32.mrf.mxu0
      %v932 = vadd.f32 0.0, %v931
      %v933 = vpop.f32.mrf.mxu0
      %v934 = vpop.f32.mrf.mxu0
      %v935 = vadd.f32 0.0, %v934
      %v936 = vpop.f32.mrf.mxu0
      %937 = vmatprep.mubr.bf16.mxu0 %v698
      %938 = vmatmul.mubr.bf16.gmra.mxu0 %v522
      %v939 = vpop.f32.mrf.mxu0
      %v940 = vadd.f32 0.0, %v939
      %v941 = vpop.f32.mrf.mxu0
      %v942 = vpop.f32.mrf.mxu0
      %v943 = vadd.f32 0.0, %v942
      %v944 = vpop.f32.mrf.mxu0
      %945 = vmatprep.mubr.bf16.mxu0 %v701
      %946 = vmatmul.mubr.bf16.gmra.mxu0 %v524
      %v947 = vpop.f32.mrf.mxu0
      %v948 = vadd.f32 0.0, %v947
      %v949 = vpop.f32.mrf.mxu0
      %v950 = vpop.f32.mrf.mxu0
      %v951 = vadd.f32 0.0, %v950
      %v952 = vpop.f32.mrf.mxu0
      %953 = vmatprep.mubr.bf16.mxu0 %v704
      %954 = vmatmul.mubr.bf16.gmra.mxu0 %v526
      %v955 = vpop.f32.mrf.mxu0
      %v956 = vadd.f32 0.0, %v955
      %v957 = vpop.f32.mrf.mxu0
      %v958 = vpop.f32.mrf.mxu0
      %v959 = vadd.f32 0.0, %v958
      %v960 = vpop.f32.mrf.mxu0
      %961 = vmatprep.mubr.bf16.mxu0 %v707
      %962 = vmatmul.mubr.bf16.gmra.mxu0 %v528
      %v963 = vpop.f32.mrf.mxu0
      %v964 = vadd.f32 0.0, %v963
      %v965 = vpop.f32.mrf.mxu0
      %v966 = vpop.f32.mrf.mxu0
      %v967 = vadd.f32 0.0, %v966
      %v968 = vpop.f32.mrf.mxu0
      %969 = vmatprep.mubr.bf16.mxu0 %v710
      %970 = vmatmul.mubr.bf16.gmra.mxu0 %v530
      %v971 = vpop.f32.mrf.mxu0
      %v972 = vadd.f32 0.0, %v971
      %v973 = vpop.f32.mrf.mxu0
      %v974 = vpop.f32.mrf.mxu0
      %v975 = vadd.f32 0.0, %v974
      %v976 = vpop.f32.mrf.mxu0
      %977 = vmatprep.mubr.bf16.mxu0 %v713
      %978 = vmatmul.mubr.bf16.gmra.mxu0 %v532
      %v979 = vpop.f32.mrf.mxu0
      %v980 = vadd.f32 0.0, %v979
      %v981 = vpop.f32.mrf.mxu0
      %v982 = vpop.f32.mrf.mxu0
      %v983 = vadd.f32 0.0, %v982
      %v984 = vpop.f32.mrf.mxu0
      %985 = vmatprep.mubr.bf16.mxu0 %v716
      %986 = vmatmul.mubr.bf16.gmra.mxu0 %v534
      %v987 = vpop.f32.mrf.mxu0
      %v988 = vadd.f32 0.0, %v987
      %v989 = vpop.f32.mrf.mxu0
      %v990 = vpop.f32.mrf.mxu0
      %v991 = vadd.f32 0.0, %v990
      %v992 = vpop.f32.mrf.mxu0
      %993 = vmatprep.mubr.bf16.mxu0 %v719
      %994 = vmatmul.mubr.bf16.gmra.mxu0 %v536
      %v995 = vpop.f32.mrf.mxu0
      %v996 = vadd.f32 0.0, %v995
      %v997 = vpop.f32.mrf.mxu0
      %v998 = vpop.f32.mrf.mxu0
      %v999 = vadd.f32 0.0, %v998
      %v1000 = vpop.f32.mrf.mxu0
      %1001 = vmatprep.mubr.bf16.mxu0 %v722
      %1002 = vmatmul.mubr.bf16.gmra.mxu0 %v538
      %v1003 = vpop.f32.mrf.mxu0
      %v1004 = vadd.f32 0.0, %v1003
      %v1005 = vpop.f32.mrf.mxu0
      %v1006 = vpop.f32.mrf.mxu0
      %v1007 = vadd.f32 0.0, %v1006
      %v1008 = vpop.f32.mrf.mxu0
      %1009 = vmatprep.mubr.bf16.mxu0 %v725
      %1010 = vmatmul.mubr.bf16.gmra.mxu0 %v540
      %v1011 = vpop.f32.mrf.mxu0
      %v1012 = vadd.f32 0.0, %v1011
      %v1013 = vpop.f32.mrf.mxu0
      %v1014 = vpop.f32.mrf.mxu0
      %v1015 = vadd.f32 0.0, %v1014
      %v1016 = vpop.f32.mrf.mxu0
      %1017 = vmatprep.mubr.bf16.mxu0 %v728
      %1018 = vmatmul.mubr.bf16.gmra.mxu0 %v542
      %v1019 = vpop.f32.mrf.mxu0
      %v1020 = vadd.f32 0.0, %v1019
      %v1021 = vpop.f32.mrf.mxu0
      %v1022 = vpop.f32.mrf.mxu0
      %v1023 = vadd.f32 0.0, %v1022
      %v1024 = vpop.f32.mrf.mxu0
      %1025 = vdwg.mxu0
      %v1026 = vld [vmem:[%s2] sm:$0x1]
      %v1028 = vlaneseq
      %v1029 = vshrl.u32 %v1028, 7
      %v1030 = vsub.s32 0, %v1029
      %v1031 = vrot.slane %v1026, %v1030
      %v1033 = vmul.f32 %v772, %v1031
      %v1034 = vmul.f32 %v775, %v1031
      %v1035 = vmul.f32 %v780, %v1031
      %v1036 = vmul.f32 %v783, %v1031
      %v1037 = vmul.f32 %v788, %v1031
      %v1038 = vmul.f32 %v791, %v1031
      %v1039 = vmul.f32 %v796, %v1031
      %v1040 = vmul.f32 %v799, %v1031
      %v1041 = vmul.f32 %v804, %v1031
      %v1042 = vmul.f32 %v807, %v1031
      %v1043 = vmul.f32 %v812, %v1031
      %v1044 = vmul.f32 %v815, %v1031
      %v1045 = vmul.f32 %v820, %v1031
      %v1046 = vmul.f32 %v823, %v1031
      %v1047 = vmul.f32 %v828, %v1031
      %v1048 = vmul.f32 %v831, %v1031
      %v1049 = vmul.f32 %v836, %v1031
      %v1050 = vmul.f32 %v839, %v1031
      %v1051 = vmul.f32 %v844, %v1031
      %v1052 = vmul.f32 %v847, %v1031
      %v1053 = vmul.f32 %v852, %v1031
      %v1054 = vmul.f32 %v855, %v1031
      %v1055 = vmul.f32 %v860, %v1031
      %v1056 = vmul.f32 %v863, %v1031
      %v1057 = vmul.f32 %v868, %v1031
      %v1058 = vmul.f32 %v871, %v1031
      %v1059 = vmul.f32 %v876, %v1031
      %v1060 = vmul.f32 %v879, %v1031
      %v1061 = vmul.f32 %v884, %v1031
      %v1062 = vmul.f32 %v887, %v1031
      %v1063 = vmul.f32 %v892, %v1031
      %v1064 = vmul.f32 %v895, %v1031
      %v1065 = vmul.f32 %v900, %v1031
      %v1066 = vmul.f32 %v903, %v1031
      %v1067 = vmul.f32 %v908, %v1031
      %v1068 = vmul.f32 %v911, %v1031
      %v1069 = vmul.f32 %v916, %v1031
      %v1070 = vmul.f32 %v919, %v1031
      %v1071 = vmul.f32 %v924, %v1031
      %v1072 = vmul.f32 %v927, %v1031
      %v1073 = vmul.f32 %v932, %v1031
      %v1074 = vmul.f32 %v935, %v1031
      %v1075 = vmul.f32 %v940, %v1031
      %v1076 = vmul.f32 %v943, %v1031
      %v1077 = vmul.f32 %v948, %v1031
      %v1078 = vmul.f32 %v951, %v1031
      %v1079 = vmul.f32 %v956, %v1031
      %v1080 = vmul.f32 %v959, %v1031
      %v1081 = vmul.f32 %v964, %v1031
      %v1082 = vmul.f32 %v967, %v1031
      %v1083 = vmul.f32 %v972, %v1031
      %v1084 = vmul.f32 %v975, %v1031
      %v1085 = vmul.f32 %v980, %v1031
      %v1086 = vmul.f32 %v983, %v1031
      %v1087 = vmul.f32 %v988, %v1031
      %v1088 = vmul.f32 %v991, %v1031
      %v1089 = vmul.f32 %v996, %v1031
      %v1090 = vmul.f32 %v999, %v1031
      %v1091 = vmul.f32 %v1004, %v1031
      %v1092 = vmul.f32 %v1007, %v1031
      %v1093 = vmul.f32 %v1012, %v1031
      %v1094 = vmul.f32 %v1015, %v1031
      %v1095 = vmul.f32 %v1020, %v1031
      %v1096 = vmul.f32 %v1023, %v1031
      %v1097 = vld [vmem:[%s3] sm:$0x1]
      %v1099 = vlaneseq
      %v1100 = vshrl.u32 %v1099, 7
      %v1101 = vsub.s32 0, %v1100
      %v1102 = vrot.slane %v1097, %v1101
      %v1104 = vadd.f32 %v1033, %v1102
      %v1105 = vadd.f32 %v1034, %v1102
      %v1106 = vadd.f32 %v1035, %v1102
      %v1107 = vadd.f32 %v1036, %v1102
      %v1108 = vadd.f32 %v1037, %v1102
      %v1109 = vadd.f32 %v1038, %v1102
      %v1110 = vadd.f32 %v1039, %v1102
      %v1111 = vadd.f32 %v1040, %v1102
      %v1112 = vadd.f32 %v1041, %v1102
      %v1113 = vadd.f32 %v1042, %v1102
      %v1114 = vadd.f32 %v1043, %v1102
      %v1115 = vadd.f32 %v1044, %v1102
      %v1116 = vadd.f32 %v1045, %v1102
      %v1117 = vadd.f32 %v1046, %v1102
      %v1118 = vadd.f32 %v1047, %v1102
      %v1119 = vadd.f32 %v1048, %v1102
      %v1120 = vadd.f32 %v1049, %v1102
      %v1121 = vadd.f32 %v1050, %v1102
      %v1122 = vadd.f32 %v1051, %v1102
      %v1123 = vadd.f32 %v1052, %v1102
      %v1124 = vadd.f32 %v1053, %v1102
      %v1125 = vadd.f32 %v1054, %v1102
      %v1126 = vadd.f32 %v1055, %v1102
      %v1127 = vadd.f32 %v1056, %v1102
      %v1128 = vadd.f32 %v1057, %v1102
      %v1129 = vadd.f32 %v1058, %v1102
      %v1130 = vadd.f32 %v1059, %v1102
      %v1131 = vadd.f32 %v1060, %v1102
      %v1132 = vadd.f32 %v1061, %v1102
      %v1133 = vadd.f32 %v1062, %v1102
      %v1134 = vadd.f32 %v1063, %v1102
      %v1135 = vadd.f32 %v1064, %v1102
      %v1136 = vadd.f32 %v1065, %v1102
      %v1137 = vadd.f32 %v1066, %v1102
      %v1138 = vadd.f32 %v1067, %v1102
      %v1139 = vadd.f32 %v1068, %v1102
      %v1140 = vadd.f32 %v1069, %v1102
      %v1141 = vadd.f32 %v1070, %v1102
      %v1142 = vadd.f32 %v1071, %v1102
      %v1143 = vadd.f32 %v1072, %v1102
      %v1144 = vadd.f32 %v1073, %v1102
      %v1145 = vadd.f32 %v1074, %v1102
      %v1146 = vadd.f32 %v1075, %v1102
      %v1147 = vadd.f32 %v1076, %v1102
      %v1148 = vadd.f32 %v1077, %v1102
      %v1149 = vadd.f32 %v1078, %v1102
      %v1150 = vadd.f32 %v1079, %v1102
      %v1151 = vadd.f32 %v1080, %v1102
      %v1152 = vadd.f32 %v1081, %v1102
      %v1153 = vadd.f32 %v1082, %v1102
      %v1154 = vadd.f32 %v1083, %v1102
      %v1155 = vadd.f32 %v1084, %v1102
      %v1156 = vadd.f32 %v1085, %v1102
      %v1157 = vadd.f32 %v1086, %v1102
      %v1158 = vadd.f32 %v1087, %v1102
      %v1159 = vadd.f32 %v1088, %v1102
      %v1160 = vadd.f32 %v1089, %v1102
      %v1161 = vadd.f32 %v1090, %v1102
      %v1162 = vadd.f32 %v1091, %v1102
      %v1163 = vadd.f32 %v1092, %v1102
      %v1164 = vadd.f32 %v1093, %v1102
      %v1165 = vadd.f32 %v1094, %v1102
      %v1166 = vadd.f32 %v1095, %v1102
      %v1167 = vadd.f32 %v1096, %v1102
      %v1168 = vmax.f32 %v1104, 0.0
      %v1169 = vmax.f32 %v1105, 0.0
      %v1170 = vmax.f32 %v1106, 0.0
      %v1171 = vmax.f32 %v1107, 0.0
      %v1172 = vmax.f32 %v1108, 0.0
      %v1173 = vmax.f32 %v1109, 0.0
      %v1174 = vmax.f32 %v1110, 0.0
      %v1175 = vmax.f32 %v1111, 0.0
      %v1176 = vmax.f32 %v1112, 0.0
      %v1177 = vmax.f32 %v1113, 0.0
      %v1178 = vmax.f32 %v1114, 0.0
      %v1179 = vmax.f32 %v1115, 0.0
      %v1180 = vmax.f32 %v1116, 0.0
      %v1181 = vmax.f32 %v1117, 0.0
      %v1182 = vmax.f32 %v1118, 0.0
      %v1183 = vmax.f32 %v1119, 0.0
      %v1184 = vmax.f32 %v1120, 0.0
      %v1185 = vmax.f32 %v1121, 0.0
      %v1186 = vmax.f32 %v1122, 0.0
      %v1187 = vmax.f32 %v1123, 0.0
      %v1188 = vmax.f32 %v1124, 0.0
      %v1189 = vmax.f32 %v1125, 0.0
      %v1190 = vmax.f32 %v1126, 0.0
      %v1191 = vmax.f32 %v1127, 0.0
      %v1192 = vmax.f32 %v1128, 0.0
      %v1193 = vmax.f32 %v1129, 0.0
      %v1194 = vmax.f32 %v1130, 0.0
      %v1195 = vmax.f32 %v1131, 0.0
      %v1196 = vmax.f32 %v1132, 0.0
      %v1197 = vmax.f32 %v1133, 0.0
      %v1198 = vmax.f32 %v1134, 0.0
      %v1199 = vmax.f32 %v1135, 0.0
      %v1200 = vmax.f32 %v1136, 0.0
      %v1201 = vmax.f32 %v1137, 0.0
      %v1202 = vmax.f32 %v1138, 0.0
      %v1203 = vmax.f32 %v1139, 0.0
      %v1204 = vmax.f32 %v1140, 0.0
      %v1205 = vmax.f32 %v1141, 0.0
      %v1206 = vmax.f32 %v1142, 0.0
      %v1207 = vmax.f32 %v1143, 0.0
      %v1208 = vmax.f32 %v1144, 0.0
      %v1209 = vmax.f32 %v1145, 0.0
      %v1210 = vmax.f32 %v1146, 0.0
      %v1211 = vmax.f32 %v1147, 0.0
      %v1212 = vmax.f32 %v1148, 0.0
      %v1213 = vmax.f32 %v1149, 0.0
      %v1214 = vmax.f32 %v1150, 0.0
      %v1215 = vmax.f32 %v1151, 0.0
      %v1216 = vmax.f32 %v1152, 0.0
      %v1217 = vmax.f32 %v1153, 0.0
      %v1218 = vmax.f32 %v1154, 0.0
      %v1219 = vmax.f32 %v1155, 0.0
      %v1220 = vmax.f32 %v1156, 0.0
      %v1221 = vmax.f32 %v1157, 0.0
      %v1222 = vmax.f32 %v1158, 0.0
      %v1223 = vmax.f32 %v1159, 0.0
      %v1224 = vmax.f32 %v1160, 0.0
      %v1225 = vmax.f32 %v1161, 0.0
      %v1226 = vmax.f32 %v1162, 0.0
      %v1227 = vmax.f32 %v1163, 0.0
      %v1228 = vmax.f32 %v1164, 0.0
      %v1229 = vmax.f32 %v1165, 0.0
      %v1230 = vmax.f32 %v1166, 0.0
      %v1231 = vmax.f32 %v1167, 0.0
      %v1232 = vpack.c.bf16 %v1169, %v1168
      %v1233 = vpack.c.bf16 %v1171, %v1170
      %v1234 = vpack.c.bf16 %v1173, %v1172
      %v1235 = vpack.c.bf16 %v1175, %v1174
      %v1236 = vpack.c.bf16 %v1177, %v1176
      %v1237 = vpack.c.bf16 %v1179, %v1178
      %v1238 = vpack.c.bf16 %v1181, %v1180
      %v1239 = vpack.c.bf16 %v1183, %v1182
      %v1240 = vpack.c.bf16 %v1185, %v1184
      %v1241 = vpack.c.bf16 %v1187, %v1186
      %v1242 = vpack.c.bf16 %v1189, %v1188
      %v1243 = vpack.c.bf16 %v1191, %v1190
      %v1244 = vpack.c.bf16 %v1193, %v1192
      %v1245 = vpack.c.bf16 %v1195, %v1194
      %v1246 = vpack.c.bf16 %v1197, %v1196
      %v1247 = vpack.c.bf16 %v1199, %v1198
      %v1248 = vpack.c.bf16 %v1201, %v1200
      %v1249 = vpack.c.bf16 %v1203, %v1202
      %v1250 = vpack.c.bf16 %v1205, %v1204
      %v1251 = vpack.c.bf16 %v1207, %v1206
      %v1252 = vpack.c.bf16 %v1209, %v1208
      %v1253 = vpack.c.bf16 %v1211, %v1210
      %v1254 = vpack.c.bf16 %v1213, %v1212
      %v1255 = vpack.c.bf16 %v1215, %v1214
      %v1256 = vpack.c.bf16 %v1217, %v1216
      %v1257 = vpack.c.bf16 %v1219, %v1218
      %v1258 = vpack.c.bf16 %v1221, %v1220
      %v1259 = vpack.c.bf16 %v1223, %v1222
      %v1260 = vpack.c.bf16 %v1225, %v1224
      %v1261 = vpack.c.bf16 %v1227, %v1226
      %v1262 = vpack.c.bf16 %v1229, %v1228
      %v1263 = vpack.c.bf16 %v1231, %v1230
      %v1296 = vunpack.c.l.b16 %v1232
      %v1297 = vunpack.c.h.b16 %v1232
      %v1298 = vunpack.c.l.b16 %v1233
      %v1299 = vunpack.c.h.b16 %v1233
      %v1300 = vunpack.c.l.b16 %v1234
      %v1301 = vunpack.c.h.b16 %v1234
      %v1302 = vunpack.c.l.b16 %v1235
      %v1303 = vunpack.c.h.b16 %v1235
      %v1304 = vunpack.c.l.b16 %v1236
      %v1305 = vunpack.c.h.b16 %v1236
      %v1306 = vunpack.c.l.b16 %v1237
      %v1307 = vunpack.c.h.b16 %v1237
      %v1308 = vunpack.c.l.b16 %v1238
      %v1309 = vunpack.c.h.b16 %v1238
      %v1310 = vunpack.c.l.b16 %v1239
      %v1311 = vunpack.c.h.b16 %v1239
      %v1312 = vunpack.c.l.b16 %v1240
      %v1313 = vunpack.c.h.b16 %v1240
      %v1314 = vunpack.c.l.b16 %v1241
      %v1315 = vunpack.c.h.b16 %v1241
      %v1316 = vunpack.c.l.b16 %v1242
      %v1317 = vunpack.c.h.b16 %v1242
      %v1318 = vunpack.c.l.b16 %v1243
      %v1319 = vunpack.c.h.b16 %v1243
      %v1320 = vunpack.c.l.b16 %v1244
      %v1321 = vunpack.c.h.b16 %v1244
      %v1322 = vunpack.c.l.b16 %v1245
      %v1323 = vunpack.c.h.b16 %v1245
      %v1324 = vunpack.c.l.b16 %v1246
      %v1325 = vunpack.c.h.b16 %v1246
      %v1326 = vunpack.c.l.b16 %v1247
      %v1327 = vunpack.c.h.b16 %v1247
      %v1328 = vunpack.c.l.b16 %v1248
      %v1329 = vunpack.c.h.b16 %v1248
      %v1330 = vunpack.c.l.b16 %v1249
      %v1331 = vunpack.c.h.b16 %v1249
      %v1332 = vunpack.c.l.b16 %v1250
      %v1333 = vunpack.c.h.b16 %v1250
      %v1334 = vunpack.c.l.b16 %v1251
      %v1335 = vunpack.c.h.b16 %v1251
      %v1336 = vunpack.c.l.b16 %v1252
      %v1337 = vunpack.c.h.b16 %v1252
      %v1338 = vunpack.c.l.b16 %v1253
      %v1339 = vunpack.c.h.b16 %v1253
      %v1340 = vunpack.c.l.b16 %v1254
      %v1341 = vunpack.c.h.b16 %v1254
      %v1342 = vunpack.c.l.b16 %v1255
      %v1343 = vunpack.c.h.b16 %v1255
      %v1344 = vunpack.c.l.b16 %v1256
      %v1345 = vunpack.c.h.b16 %v1256
      %v1346 = vunpack.c.l.b16 %v1257
      %v1347 = vunpack.c.h.b16 %v1257
      %v1348 = vunpack.c.l.b16 %v1258
      %v1349 = vunpack.c.h.b16 %v1258
      %v1350 = vunpack.c.l.b16 %v1259
      %v1351 = vunpack.c.h.b16 %v1259
      %v1352 = vunpack.c.l.b16 %v1260
      %v1353 = vunpack.c.h.b16 %v1260
      %v1354 = vunpack.c.l.b16 %v1261
      %v1355 = vunpack.c.h.b16 %v1261
      %v1356 = vunpack.c.l.b16 %v1262
      %v1357 = vunpack.c.h.b16 %v1262
      %v1358 = vunpack.c.l.b16 %v1263
      %v1359 = vunpack.c.h.b16 %v1263
      %v1360 = vpack.c.b16 %v1296, %v1296
      %v1361 = vpack.c.b16 %v1297, %v1297
      %v1362 = vpack.c.b16 %v1298, %v1298
      %v1363 = vpack.c.b16 %v1299, %v1299
      %v1364 = vpack.c.b16 %v1300, %v1300
      %v1365 = vpack.c.b16 %v1301, %v1301
      %v1366 = vpack.c.b16 %v1302, %v1302
      %v1367 = vpack.c.b16 %v1303, %v1303
      %v1368 = vpack.c.b16 %v1304, %v1304
      %v1369 = vpack.c.b16 %v1305, %v1305
      %v1370 = vpack.c.b16 %v1306, %v1306
      %v1371 = vpack.c.b16 %v1307, %v1307
      %v1372 = vpack.c.b16 %v1308, %v1308
      %v1373 = vpack.c.b16 %v1309, %v1309
      %v1374 = vpack.c.b16 %v1310, %v1310
      %v1375 = vpack.c.b16 %v1311, %v1311
      %v1376 = vpack.c.b16 %v1312, %v1312
      %v1377 = vpack.c.b16 %v1313, %v1313
      %v1378 = vpack.c.b16 %v1314, %v1314
      %v1379 = vpack.c.b16 %v1315, %v1315
      %v1380 = vpack.c.b16 %v1316, %v1316
      %v1381 = vpack.c.b16 %v1317, %v1317
      %v1382 = vpack.c.b16 %v1318, %v1318
      %v1383 = vpack.c.b16 %v1319, %v1319
      %v1384 = vpack.c.b16 %v1320, %v1320
      %v1385 = vpack.c.b16 %v1321, %v1321
      %v1386 = vpack.c.b16 %v1322, %v1322
      %v1387 = vpack.c.b16 %v1323, %v1323
      %v1388 = vpack.c.b16 %v1324, %v1324
      %v1389 = vpack.c.b16 %v1325, %v1325
      %v1390 = vpack.c.b16 %v1326, %v1326
      %v1391 = vpack.c.b16 %v1327, %v1327
      %v1392 = vpack.c.b16 %v1328, %v1328
      %v1393 = vpack.c.b16 %v1329, %v1329
      %v1394 = vpack.c.b16 %v1330, %v1330
      %v1395 = vpack.c.b16 %v1331, %v1331
      %v1396 = vpack.c.b16 %v1332, %v1332
      %v1397 = vpack.c.b16 %v1333, %v1333
      %v1398 = vpack.c.b16 %v1334, %v1334
      %v1399 = vpack.c.b16 %v1335, %v1335
      %v1400 = vpack.c.b16 %v1336, %v1336
      %v1401 = vpack.c.b16 %v1337, %v1337
      %v1402 = vpack.c.b16 %v1338, %v1338
      %v1403 = vpack.c.b16 %v1339, %v1339
      %v1404 = vpack.c.b16 %v1340, %v1340
      %v1405 = vpack.c.b16 %v1341, %v1341
      %v1406 = vpack.c.b16 %v1342, %v1342
      %v1407 = vpack.c.b16 %v1343, %v1343
      %v1408 = vpack.c.b16 %v1344, %v1344
      %v1409 = vpack.c.b16 %v1345, %v1345
      %v1410 = vpack.c.b16 %v1346, %v1346
      %v1411 = vpack.c.b16 %v1347, %v1347
      %v1412 = vpack.c.b16 %v1348, %v1348
      %v1413 = vpack.c.b16 %v1349, %v1349
      %v1414 = vpack.c.b16 %v1350, %v1350
      %v1415 = vpack.c.b16 %v1351, %v1351
      %v1416 = vpack.c.b16 %v1352, %v1352
      %v1417 = vpack.c.b16 %v1353, %v1353
      %v1418 = vpack.c.b16 %v1354, %v1354
      %v1419 = vpack.c.b16 %v1355, %v1355
      %v1420 = vpack.c.b16 %v1356, %v1356
      %v1421 = vpack.c.b16 %v1357, %v1357
      %v1422 = vpack.c.b16 %v1358, %v1358
      %v1423 = vpack.c.b16 %v1359, %v1359
      %vm1488 = vcmask 60416
      %1489 = vst.msk [vmem:[%s202] sm:$0xf] %vm1488, %v1360
      %1490 = vst.msk [vmem:[%s202 + $0x4] sm:$0xf] %vm1488, %v1361
      %1491 = vst.msk [vmem:[%s202 + $0x8] sm:$0xf] %vm1488, %v1362
      %1492 = vst.msk [vmem:[%s202 + $0xc] sm:$0xf] %vm1488, %v1363
      %1493 = vst.msk [vmem:[%s202 + $0x10] sm:$0xf] %vm1488, %v1364
      %1494 = vst.msk [vmem:[%s202 + $0x14] sm:$0xf] %vm1488, %v1365
      %1495 = vst.msk [vmem:[%s202 + $0x18] sm:$0xf] %vm1488, %v1366
      %1496 = vst.msk [vmem:[%s202 + $0x1c] sm:$0xf] %vm1488, %v1367
      %1497 = vst.msk [vmem:[%s202 + $0x20] sm:$0xf] %vm1488, %v1368
      %1498 = vst.msk [vmem:[%s202 + $0x24] sm:$0xf] %vm1488, %v1369
      %1499 = vst.msk [vmem:[%s202 + $0x28] sm:$0xf] %vm1488, %v1370
      %1500 = vst.msk [vmem:[%s202 + $0x2c] sm:$0xf] %vm1488, %v1371
      %1501 = vst.msk [vmem:[%s202 + $0x30] sm:$0xf] %vm1488, %v1372
      %1502 = vst.msk [vmem:[%s202 + $0x34] sm:$0xf] %vm1488, %v1373
      %1503 = vst.msk [vmem:[%s202 + $0x38] sm:$0xf] %vm1488, %v1374
      %1504 = vst.msk [vmem:[%s202 + $0x3c] sm:$0xf] %vm1488, %v1375
      %1505 = vst.msk [vmem:[%s202 + $0x40] sm:$0xf] %vm1488, %v1376
      %1506 = vst.msk [vmem:[%s202 + $0x44] sm:$0xf] %vm1488, %v1377
      %1507 = vst.msk [vmem:[%s202 + $0x48] sm:$0xf] %vm1488, %v1378
      %1508 = vst.msk [vmem:[%s202 + $0x4c] sm:$0xf] %vm1488, %v1379
      %1509 = vst.msk [vmem:[%s202 + $0x50] sm:$0xf] %vm1488, %v1380
      %1510 = vst.msk [vmem:[%s202 + $0x54] sm:$0xf] %vm1488, %v1381
      %1511 = vst.msk [vmem:[%s202 + $0x58] sm:$0xf] %vm1488, %v1382
      %1512 = vst.msk [vmem:[%s202 + $0x5c] sm:$0xf] %vm1488, %v1383
      %1513 = vst.msk [vmem:[%s202 + $0x60] sm:$0xf] %vm1488, %v1384
      %1514 = vst.msk [vmem:[%s202 + $0x64] sm:$0xf] %vm1488, %v1385
      %1515 = vst.msk [vmem:[%s202 + $0x68] sm:$0xf] %vm1488, %v1386
      %1516 = vst.msk [vmem:[%s202 + $0x6c] sm:$0xf] %vm1488, %v1387
      %1517 = vst.msk [vmem:[%s202 + $0x70] sm:$0xf] %vm1488, %v1388
      %1518 = vst.msk [vmem:[%s202 + $0x74] sm:$0xf] %vm1488, %v1389
      %1519 = vst.msk [vmem:[%s202 + $0x78] sm:$0xf] %vm1488, %v1390
      %1520 = vst.msk [vmem:[%s202 + $0x7c] sm:$0xf] %vm1488, %v1391
      %1521 = vst.msk [vmem:[%s202 + $0x80] sm:$0xf] %vm1488, %v1392
      %1522 = vst.msk [vmem:[%s202 + $0x84] sm:$0xf] %vm1488, %v1393
      %1523 = vst.msk [vmem:[%s202 + $0x88] sm:$0xf] %vm1488, %v1394
      %1524 = vst.msk [vmem:[%s202 + $0x8c] sm:$0xf] %vm1488, %v1395
      %1525 = vst.msk [vmem:[%s202 + $0x90] sm:$0xf] %vm1488, %v1396
      %1526 = vst.msk [vmem:[%s202 + $0x94] sm:$0xf] %vm1488, %v1397
      %1527 = vst.msk [vmem:[%s202 + $0x98] sm:$0xf] %vm1488, %v1398
      %1528 = vst.msk [vmem:[%s202 + $0x9c] sm:$0xf] %vm1488, %v1399
      %1529 = vst.msk [vmem:[%s202 + $0xa0] sm:$0xf] %vm1488, %v1400
      %1530 = vst.msk [vmem:[%s202 + $0xa4] sm:$0xf] %vm1488, %v1401
      %1531 = vst.msk [vmem:[%s202 + $0xa8] sm:$0xf] %vm1488, %v1402
      %1532 = vst.msk [vmem:[%s202 + $0xac] sm:$0xf] %vm1488, %v1403
      %1533 = vst.msk [vmem:[%s202 + $0xb0] sm:$0xf] %vm1488, %v1404
      %1534 = vst.msk [vmem:[%s202 + $0xb4] sm:$0xf] %vm1488, %v1405
      %1535 = vst.msk [vmem:[%s202 + $0xb8] sm:$0xf] %vm1488, %v1406
      %1536 = vst.msk [vmem:[%s202 + $0xbc] sm:$0xf] %vm1488, %v1407
      %1537 = vst.msk [vmem:[%s202 + $0xc0] sm:$0xf] %vm1488, %v1408
      %1538 = vst.msk [vmem:[%s202 + $0xc4] sm:$0xf] %vm1488, %v1409
      %1539 = vst.msk [vmem:[%s202 + $0xc8] sm:$0xf] %vm1488, %v1410
      %1540 = vst.msk [vmem:[%s202 + $0xcc] sm:$0xf] %vm1488, %v1411
      %1541 = vst.msk [vmem:[%s202 + $0xd0] sm:$0xf] %vm1488, %v1412
      %1542 = vst.msk [vmem:[%s202 + $0xd4] sm:$0xf] %vm1488, %v1413
      %1543 = vst.msk [vmem:[%s202 + $0xd8] sm:$0xf] %vm1488, %v1414
      %1544 = vst.msk [vmem:[%s202 + $0xdc] sm:$0xf] %vm1488, %v1415
      %1545 = vst.msk [vmem:[%s202 + $0xe0] sm:$0xf] %vm1488, %v1416
      %1546 = vst.msk [vmem:[%s202 + $0xe4] sm:$0xf] %vm1488, %v1417
      %1547 = vst.msk [vmem:[%s202 + $0xe8] sm:$0xf] %vm1488, %v1418
      %1548 = vst.msk [vmem:[%s202 + $0xec] sm:$0xf] %vm1488, %v1419
      %1549 = vst.msk [vmem:[%s202 + $0xf0] sm:$0xf] %vm1488, %v1420
      %1550 = vst.msk [vmem:[%s202 + $0xf4] sm:$0xf] %vm1488, %v1421
      %1551 = vst.msk [vmem:[%s202 + $0xf8] sm:$0xf] %vm1488, %v1422
      %1552 = vst.msk [vmem:[%s202 + $0xfc] sm:$0xf] %vm1488, %v1423
      %s1553 = smul.u32 64, %s15
      %p1554 = scmp.lt.s32.totalorder %s1553, 255
      %s1555 = scalar_select %p1554, %s1553, 255
      %s1556 = smul.addr %s1555, 4
      %s1557 = scalar_lea.vmem %s4, %s1556
      // Predicated region
      $region37: #{resnet18_grouped_forward.22} parent=35 // pred_check
        %p1558 = pneg %p122
      $region38: #{resnet18_grouped_forward.22} parent=35 // pred_check_branch
        %1560 = sbr.rel (%p1558) target = $region40
      $region39: #{resnet18_grouped_forward.22} parent=35 // pred_region
        %s1561 = smul.u32 64, %s15
      $region40: #{resnet18_grouped_forward.22} parent=35 // pred_fallthru
        _
    $region36: #{resnet18_grouped_forward.22} parent=5 // pred_fallthru
      _
    %p1562 = scmp.le.s32.totalorder 2, %s10
    // Predicated region
    $region41: #{resnet18_grouped_forward.22} parent=5 // pred_check
      %p1563 = pneg %p1562
    $region42: #{resnet18_grouped_forward.22} parent=5 // pred_check_branch
      %1565 = sbr.rel (%p1563) target = $region44
    $region43: #{resnet18_grouped_forward.22} parent=5 // pred_region
      %s1566 = ssub.s32 %s10, 2
      // Predicated region
      $region45: #{resnet18_grouped_forward.22} parent=43 // pred_check
        %p1567 = pneg %p128
      $region46: #{resnet18_grouped_forward.22} parent=43 // pred_check_branch
        %1569 = sbr.rel (%p1567) target = $region48
      $region47: #{resnet18_grouped_forward.22} parent=43 // pred_region
        %s1570 = smul.u32 64, %s16
        %p1571 = scmp.lt.s32.totalorder %s1570, 255
        %s1572 = scalar_select %p1571, %s1570, 255
        %s1573 = smul.addr %s1572, 4
        %s1574 = scalar_lea.vmem %s4, %s1573
      $region48: #{resnet18_grouped_forward.22} parent=43 // pred_fallthru
        _
    $region44: #{resnet18_grouped_forward.22} parent=5 // pred_fallthru
      _
  $region6: #{resnet18_grouped_forward.22} parent=0 // loop_footer
    %s14 = sadd.s32 1, %s10
  $region7: #{resnet18_grouped_forward.22} parent=0 // loop_footer_branch
    %9 = sbr.rel target = $region3
  $region8: #{resnet18_grouped_forward.22} parent=0 // loop_exit
    _

// kernel: resnet18_grouped_forward.23
$region0: #{resnet18_grouped_forward.23}
  #allocation0 [shape = 'u32[]', space=smem, size = 0x4, offset = 0x4, fixed_abs, tag = 'smem constant byte address 0x4 - core index']
  #allocation1 [shape = 'u32[144,128]{1,0:T(1,128)}', space=vmem, size = 0x12000, scoped, tag = 'internal scratch']
  %s0 = inlined_call_operand.vmem [shape: bf16[2,17,17,8], index: 0, kind: input, shape index: {}]
  %s1 = inlined_call_operand.vmem [shape: bf16[2,17,17,8], index: 1, kind: input, shape index: {}]
  %s2 = inlined_call_operand.vmem [shape: bf16[2,17,17,8], index: 2, kind: input, shape index: {}]
  %s3 = inlined_call_operand.vmem [shape: bf16[2,17,17,8], index: 3, kind: input, shape index: {}]
  %s4 = inlined_call_operand.vmem [shape: bf16[2,16,16,8], index: 4, kind: output, shape index: {}]
  %s5 = sld [smem:[#allocation0]]
  $region26: #{resnet18_grouped_forward.23} parent=0
    _
  %s7 = ssub.s32 1, %s5
  %s8 = scalar_select 0, %s7, %s5
  // Predicated region
  $region2: #{resnet18_grouped_forward.23} parent=0 // pred_check
    _
  $region3: #{resnet18_grouped_forward.23} parent=0 // pred_check_branch
    %10 = sbr.rel (0) target = $region5
  $region4: #{resnet18_grouped_forward.23} parent=0 // pred_region
    _
  $region5: #{resnet18_grouped_forward.23} parent=0 // pred_fallthru
    _
  // Predicated region
  $region6: #{resnet18_grouped_forward.23} parent=0 // pred_check
    _
  $region7: #{resnet18_grouped_forward.23} parent=0 // pred_check_branch
    %12 = sbr.rel (0) target = $region9
  $region8: #{resnet18_grouped_forward.23} parent=0 // pred_region
    _
  $region9: #{resnet18_grouped_forward.23} parent=0 // pred_fallthru
    _
  // Predicated region
  $region10: #{resnet18_grouped_forward.23} parent=0 // pred_check
    _
  $region11: #{resnet18_grouped_forward.23} parent=0 // pred_check_branch
    %14 = sbr.rel (0) target = $region13
  $region12: #{resnet18_grouped_forward.23} parent=0 // pred_region
    _
  $region13: #{resnet18_grouped_forward.23} parent=0 // pred_fallthru
    _
  // Predicated region
  $region14: #{resnet18_grouped_forward.23} parent=0 // pred_check
    _
  $region15: #{resnet18_grouped_forward.23} parent=0 // pred_check_branch
    %16 = sbr.rel (0) target = $region17
  $region16: #{resnet18_grouped_forward.23} parent=0 // pred_region
    _
  $region17: #{resnet18_grouped_forward.23} parent=0 // pred_fallthru
    _
  %v17 = vld [vmem:[%s0] sm:$0xf]
  %v18 = vld [vmem:[%s0 + $0x4] sm:$0xf]
  %v19 = vld [vmem:[%s0 + $0x8] sm:$0x1]
  %v20 = vld [vmem:[%s0 + $0xc] sm:$0xf]
  %v21 = vld [vmem:[%s0 + $0x10] sm:$0xf]
  %v22 = vld [vmem:[%s0 + $0x14] sm:$0x1]
  %v23 = vld [vmem:[%s0 + $0x18] sm:$0xf]
  %v24 = vld [vmem:[%s0 + $0x1c] sm:$0xf]
  %v25 = vld [vmem:[%s0 + $0x20] sm:$0x1]
  %v26 = vld [vmem:[%s0 + $0x24] sm:$0xf]
  %v27 = vld [vmem:[%s0 + $0x28] sm:$0xf]
  %v28 = vld [vmem:[%s0 + $0x2c] sm:$0x1]
  %v29 = vld [vmem:[%s0 + $0x30] sm:$0xf]
  %v30 = vld [vmem:[%s0 + $0x34] sm:$0xf]
  %v31 = vld [vmem:[%s0 + $0x38] sm:$0x1]
  %v32 = vld [vmem:[%s0 + $0x3c] sm:$0xf]
  %v33 = vld [vmem:[%s0 + $0x40] sm:$0xf]
  %v34 = vld [vmem:[%s0 + $0x44] sm:$0x1]
  %v35 = vld [vmem:[%s0 + $0x48] sm:$0xf]
  %v36 = vld [vmem:[%s0 + $0x4c] sm:$0xf]
  %v37 = vld [vmem:[%s0 + $0x50] sm:$0x1]
  %v38 = vld [vmem:[%s0 + $0x54] sm:$0xf]
  %v39 = vld [vmem:[%s0 + $0x58] sm:$0xf]
  %v40 = vld [vmem:[%s0 + $0x5c] sm:$0x1]
  %v41 = vld [vmem:[%s0 + $0x60] sm:$0xf]
  %v42 = vld [vmem:[%s0 + $0x64] sm:$0xf]
  %v43 = vld [vmem:[%s0 + $0x68] sm:$0x1]
  %v44 = vld [vmem:[%s0 + $0x6c] sm:$0xf]
  %v45 = vld [vmem:[%s0 + $0x70] sm:$0xf]
  %v46 = vld [vmem:[%s0 + $0x74] sm:$0x1]
  %v47 = vld [vmem:[%s0 + $0x78] sm:$0xf]
  %v48 = vld [vmem:[%s0 + $0x7c] sm:$0xf]
  %v49 = vld [vmem:[%s0 + $0x80] sm:$0x1]
  %v50 = vld [vmem:[%s0 + $0x84] sm:$0xf]
  %v51 = vld [vmem:[%s0 + $0x88] sm:$0xf]
  %v52 = vld [vmem:[%s0 + $0x8c] sm:$0x1]
  %v53 = vld [vmem:[%s0 + $0x90] sm:$0xf]
  %v54 = vld [vmem:[%s0 + $0x94] sm:$0xf]
  %v55 = vld [vmem:[%s0 + $0x98] sm:$0x1]
  %v56 = vld [vmem:[%s0 + $0x9c] sm:$0xf]
  %v57 = vld [vmem:[%s0 + $0xa0] sm:$0xf]
  %v58 = vld [vmem:[%s0 + $0xa4] sm:$0x1]
  %v59 = vld [vmem:[%s0 + $0xa8] sm:$0xf]
  %v60 = vld [vmem:[%s0 + $0xac] sm:$0xf]
  %v61 = vld [vmem:[%s0 + $0xb0] sm:$0x1]
  %v62 = vld [vmem:[%s0 + $0xb4] sm:$0xf]
  %v63 = vld [vmem:[%s0 + $0xb8] sm:$0xf]
  %v64 = vld [vmem:[%s0 + $0xbc] sm:$0x1]
  %v65 = vld [vmem:[%s0 + $0xc0] sm:$0xf]
  %v66 = vld [vmem:[%s0 + $0xc4] sm:$0xf]
  %v67 = vld [vmem:[%s0 + $0xc8] sm:$0x1]
  %v68 = vld [vmem:[%s0 + $0xcc] sm:$0xf]
  %v69 = vld [vmem:[%s0 + $0xd0] sm:$0xf]
  %v70 = vld [vmem:[%s0 + $0xd4] sm:$0x1]
  %v71 = vld [vmem:[%s0 + $0xd8] sm:$0xf]
  %v72 = vld [vmem:[%s0 + $0xdc] sm:$0xf]
  %v73 = vld [vmem:[%s0 + $0xe0] sm:$0x1]
  %v74 = vld [vmem:[%s0 + $0xe4] sm:$0xf]
  %v75 = vld [vmem:[%s0 + $0xe8] sm:$0xf]
  %v76 = vld [vmem:[%s0 + $0xec] sm:$0x1]
  %v77 = vld [vmem:[%s0 + $0xf0] sm:$0xf]
  %v78 = vld [vmem:[%s0 + $0xf4] sm:$0xf]
  %v79 = vld [vmem:[%s0 + $0xf8] sm:$0x1]
  %v80 = vld [vmem:[%s0 + $0xfc] sm:$0xf]
  %v81 = vld [vmem:[%s0 + $0x100] sm:$0xf]
  %v82 = vld [vmem:[%s0 + $0x104] sm:$0x1]
  %v83 = vld [vmem:[%s0 + $0x108] sm:$0xf]
  %v84 = vld [vmem:[%s0 + $0x10c] sm:$0xf]
  %v85 = vld [vmem:[%s0 + $0x110] sm:$0x1]
  %v86 = vld [vmem:[%s0 + $0x114] sm:$0xf]
  %v87 = vld [vmem:[%s0 + $0x118] sm:$0xf]
  %v88 = vld [vmem:[%s0 + $0x11c] sm:$0x1]
  %v89 = vld [vmem:[%s0 + $0x120] sm:$0xf]
  %v90 = vld [vmem:[%s0 + $0x124] sm:$0xf]
  %v91 = vld [vmem:[%s0 + $0x128] sm:$0x1]
  %v92 = vld [vmem:[%s0 + $0x12c] sm:$0xf]
  %v93 = vld [vmem:[%s0 + $0x130] sm:$0xf]
  %v94 = vld [vmem:[%s0 + $0x134] sm:$0x1]
  %v95 = vld [vmem:[%s0 + $0x138] sm:$0xf]
  %v96 = vld [vmem:[%s0 + $0x13c] sm:$0xf]
  %v97 = vld [vmem:[%s0 + $0x140] sm:$0x1]
  %v98 = vld [vmem:[%s0 + $0x144] sm:$0xf]
  %v99 = vld [vmem:[%s0 + $0x148] sm:$0xf]
  %v100 = vld [vmem:[%s0 + $0x14c] sm:$0x1]
  %v101 = vld [vmem:[%s0 + $0x150] sm:$0xf]
  %v102 = vld [vmem:[%s0 + $0x154] sm:$0xf]
  %v103 = vld [vmem:[%s0 + $0x158] sm:$0x1]
  %v104 = vld [vmem:[%s0 + $0x15c] sm:$0xf]
  %v105 = vld [vmem:[%s0 + $0x160] sm:$0xf]
  %v106 = vld [vmem:[%s0 + $0x164] sm:$0x1]
  %v107 = vld [vmem:[%s0 + $0x168] sm:$0xf]
  %v108 = vld [vmem:[%s0 + $0x16c] sm:$0xf]
  %v109 = vld [vmem:[%s0 + $0x170] sm:$0x1]
  %v110 = vld [vmem:[%s0 + $0x174] sm:$0xf]
  %v111 = vld [vmem:[%s0 + $0x178] sm:$0xf]
  %v112 = vld [vmem:[%s0 + $0x17c] sm:$0x1]
  %v113 = vld [vmem:[%s0 + $0x180] sm:$0xf]
  %v114 = vld [vmem:[%s0 + $0x184] sm:$0xf]
  %v115 = vld [vmem:[%s0 + $0x188] sm:$0x1]
  %v116 = vld [vmem:[%s0 + $0x18c] sm:$0xf]
  %v117 = vld [vmem:[%s0 + $0x190] sm:$0xf]
  %v118 = vld [vmem:[%s0 + $0x194] sm:$0x1]
  %v119 = vld [vmem:[%s1] sm:$0xf]
  %v120 = vld [vmem:[%s1 + $0x4] sm:$0xf]
  %v121 = vld [vmem:[%s1 + $0xc] sm:$0xf]
  %v122 = vld [vmem:[%s1 + $0x10] sm:$0xf]
  %v123 = vld [vmem:[%s1 + $0x18] sm:$0xf]
  %v124 = vld [vmem:[%s1 + $0x1c] sm:$0xf]
  %v125 = vld [vmem:[%s1 + $0x24] sm:$0xf]
  %v126 = vld [vmem:[%s1 + $0x28] sm:$0xf]
  %v127 = vld [vmem:[%s1 + $0x30] sm:$0xf]
  %v128 = vld [vmem:[%s1 + $0x34] sm:$0xf]
  %v129 = vld [vmem:[%s1 + $0x3c] sm:$0xf]
  %v130 = vld [vmem:[%s1 + $0x40] sm:$0xf]
  %v131 = vld [vmem:[%s1 + $0x48] sm:$0xf]
  %v132 = vld [vmem:[%s1 + $0x4c] sm:$0xf]
  %v133 = vld [vmem:[%s1 + $0x54] sm:$0xf]
  %v134 = vld [vmem:[%s1 + $0x58] sm:$0xf]
  %v135 = vld [vmem:[%s1 + $0x60] sm:$0xf]
  %v136 = vld [vmem:[%s1 + $0x64] sm:$0xf]
  %v137 = vld [vmem:[%s1 + $0x6c] sm:$0xf]
  %v138 = vld [vmem:[%s1 + $0x70] sm:$0xf]
  %v139 = vld [vmem:[%s1 + $0x78] sm:$0xf]
  %v140 = vld [vmem:[%s1 + $0x7c] sm:$0xf]
  %v141 = vld [vmem:[%s1 + $0x84] sm:$0xf]
  %v142 = vld [vmem:[%s1 + $0x88] sm:$0xf]
  %v143 = vld [vmem:[%s1 + $0x90] sm:$0xf]
  %v144 = vld [vmem:[%s1 + $0x94] sm:$0xf]
  %v145 = vld [vmem:[%s1 + $0x9c] sm:$0xf]
  %v146 = vld [vmem:[%s1 + $0xa0] sm:$0xf]
  %v147 = vld [vmem:[%s1 + $0xa8] sm:$0xf]
  %v148 = vld [vmem:[%s1 + $0xac] sm:$0xf]
  %v149 = vld [vmem:[%s1 + $0xb4] sm:$0xf]
  %v150 = vld [vmem:[%s1 + $0xb8] sm:$0xf]
  %v151 = vld [vmem:[%s1 + $0xc0] sm:$0xf]
  %v152 = vld [vmem:[%s1 + $0xc4] sm:$0xf]
  %v153 = vld [vmem:[%s1 + $0xcc] sm:$0xf]
  %v154 = vld [vmem:[%s1 + $0xd0] sm:$0xf]
  %v155 = vld [vmem:[%s1 + $0xd8] sm:$0xf]
  %v156 = vld [vmem:[%s1 + $0xdc] sm:$0xf]
  %v157 = vld [vmem:[%s1 + $0xe4] sm:$0xf]
  %v158 = vld [vmem:[%s1 + $0xe8] sm:$0xf]
  %v159 = vld [vmem:[%s1 + $0xf0] sm:$0xf]
  %v160 = vld [vmem:[%s1 + $0xf4] sm:$0xf]
  %v161 = vld [vmem:[%s1 + $0xfc] sm:$0xf]
  %v162 = vld [vmem:[%s1 + $0x100] sm:$0xf]
  %v163 = vld [vmem:[%s1 + $0x108] sm:$0xf]
  %v164 = vld [vmem:[%s1 + $0x10c] sm:$0xf]
  %v165 = vld [vmem:[%s1 + $0x114] sm:$0xf]
  %v166 = vld [vmem:[%s1 + $0x118] sm:$0xf]
  %v167 = vld [vmem:[%s1 + $0x120] sm:$0xf]
  %v168 = vld [vmem:[%s1 + $0x124] sm:$0xf]
  %v169 = vld [vmem:[%s1 + $0x12c] sm:$0xf]
  %v170 = vld [vmem:[%s1 + $0x130] sm:$0xf]
  %v171 = vld [vmem:[%s1 + $0x138] sm:$0xf]
  %v172 = vld [vmem:[%s1 + $0x13c] sm:$0xf]
  %v173 = vld [vmem:[%s1 + $0x144] sm:$0xf]
  %v174 = vld [vmem:[%s1 + $0x148] sm:$0xf]
  %v175 = vld [vmem:[%s1 + $0x150] sm:$0xf]
  %v176 = vld [vmem:[%s1 + $0x154] sm:$0xf]
  %v177 = vld [vmem:[%s1 + $0x15c] sm:$0xf]
  %v178 = vld [vmem:[%s1 + $0x160] sm:$0xf]
  %v179 = vld [vmem:[%s1 + $0x168] sm:$0xf]
  %v180 = vld [vmem:[%s1 + $0x16c] sm:$0xf]
  %v181 = vld [vmem:[%s1 + $0x174] sm:$0xf]
  %v182 = vld [vmem:[%s1 + $0x178] sm:$0xf]
  %v183 = vld [vmem:[%s1 + $0x180] sm:$0xf]
  %v184 = vld [vmem:[%s1 + $0x184] sm:$0xf]
  %v185 = vld [vmem:[%s1 + $0x18c] sm:$0xf]
  %v186 = vld [vmem:[%s1 + $0x190] sm:$0xf]
  %v187 = vld [vmem:[%s2] sm:$0xf]
  %v188 = vld [vmem:[%s2 + $0x4] sm:$0xf]
  %v189 = vld [vmem:[%s2 + $0x8] sm:$0x1]
  %v190 = vld [vmem:[%s2 + $0xc] sm:$0xf]
  %v191 = vld [vmem:[%s2 + $0x10] sm:$0xf]
  %v192 = vld [vmem:[%s2 + $0x14] sm:$0x1]
  %v193 = vld [vmem:[%s2 + $0x18] sm:$0xf]
  %v194 = vld [vmem:[%s2 + $0x1c] sm:$0xf]
  %v195 = vld [vmem:[%s2 + $0x20] sm:$0x1]
  %v196 = vld [vmem:[%s2 + $0x24] sm:$0xf]
  %v197 = vld [vmem:[%s2 + $0x28] sm:$0xf]
  %v198 = vld [vmem:[%s2 + $0x2c] sm:$0x1]
  %v199 = vld [vmem:[%s2 + $0x30] sm:$0xf]
  %v200 = vld [vmem:[%s2 + $0x34] sm:$0xf]
  %v201 = vld [vmem:[%s2 + $0x38] sm:$0x1]
  %v202 = vld [vmem:[%s2 + $0x3c] sm:$0xf]
  %v203 = vld [vmem:[%s2 + $0x40] sm:$0xf]
  %v204 = vld [vmem:[%s2 + $0x44] sm:$0x1]
  %v205 = vld [vmem:[%s2 + $0x48] sm:$0xf]
  %v206 = vld [vmem:[%s2 + $0x4c] sm:$0xf]
  %v207 = vld [vmem:[%s2 + $0x50] sm:$0x1]
  %v208 = vld [vmem:[%s2 + $0x54] sm:$0xf]
  %v209 = vld [vmem:[%s2 + $0x58] sm:$0xf]
  %v210 = vld [vmem:[%s2 + $0x5c] sm:$0x1]
  %v211 = vld [vmem:[%s2 + $0x60] sm:$0xf]
  %v212 = vld [vmem:[%s2 + $0x64] sm:$0xf]
  %v213 = vld [vmem:[%s2 + $0x68] sm:$0x1]
  %v214 = vld [vmem:[%s2 + $0x6c] sm:$0xf]
  %v215 = vld [vmem:[%s2 + $0x70] sm:$0xf]
  %v216 = vld [vmem:[%s2 + $0x74] sm:$0x1]
  %v217 = vld [vmem:[%s2 + $0x78] sm:$0xf]
  %v218 = vld [vmem:[%s2 + $0x7c] sm:$0xf]
  %v219 = vld [vmem:[%s2 + $0x80] sm:$0x1]
  %v220 = vld [vmem:[%s2 + $0x84] sm:$0xf]
  %v221 = vld [vmem:[%s2 + $0x88] sm:$0xf]
  %v222 = vld [vmem:[%s2 + $0x8c] sm:$0x1]
  %v223 = vld [vmem:[%s2 + $0x90] sm:$0xf]
  %v224 = vld [vmem:[%s2 + $0x94] sm:$0xf]
  %v225 = vld [vmem:[%s2 + $0x98] sm:$0x1]
  %v226 = vld [vmem:[%s2 + $0x9c] sm:$0xf]
  %v227 = vld [vmem:[%s2 + $0xa0] sm:$0xf]
  %v228 = vld [vmem:[%s2 + $0xa4] sm:$0x1]
  %v229 = vld [vmem:[%s2 + $0xa8] sm:$0xf]
  %v230 = vld [vmem:[%s2 + $0xac] sm:$0xf]
  %v231 = vld [vmem:[%s2 + $0xb0] sm:$0x1]
  %v232 = vld [vmem:[%s2 + $0xb4] sm:$0xf]
  %v233 = vld [vmem:[%s2 + $0xb8] sm:$0xf]
  %v234 = vld [vmem:[%s2 + $0xbc] sm:$0x1]
  %v235 = vld [vmem:[%s2 + $0xcc] sm:$0xf]
  %v236 = vld [vmem:[%s2 + $0xd0] sm:$0xf]
  %v237 = vld [vmem:[%s2 + $0xd4] sm:$0x1]
  %v238 = vld [vmem:[%s2 + $0xd8] sm:$0xf]
  %v239 = vld [vmem:[%s2 + $0xdc] sm:$0xf]
  %v240 = vld [vmem:[%s2 + $0xe0] sm:$0x1]
  %v241 = vld [vmem:[%s2 + $0xe4] sm:$0xf]
  %v242 = vld [vmem:[%s2 + $0xe8] sm:$0xf]
  %v243 = vld [vmem:[%s2 + $0xec] sm:$0x1]
  %v244 = vld [vmem:[%s2 + $0xf0] sm:$0xf]
  %v245 = vld [vmem:[%s2 + $0xf4] sm:$0xf]
  %v246 = vld [vmem:[%s2 + $0xf8] sm:$0x1]
  %v247 = vld [vmem:[%s2 + $0xfc] sm:$0xf]
  %v248 = vld [vmem:[%s2 + $0x100] sm:$0xf]
  %v249 = vld [vmem:[%s2 + $0x104] sm:$0x1]
  %v250 = vld [vmem:[%s2 + $0x108] sm:$0xf]
  %v251 = vld [vmem:[%s2 + $0x10c] sm:$0xf]
  %v252 = vld [vmem:[%s2 + $0x110] sm:$0x1]
  %v253 = vld [vmem:[%s2 + $0x114] sm:$0xf]
  %v254 = vld [vmem:[%s2 + $0x118] sm:$0xf]
  %v255 = vld [vmem:[%s2 + $0x11c] sm:$0x1]
  %v256 = vld [vmem:[%s2 + $0x120] sm:$0xf]
  %v257 = vld [vmem:[%s2 + $0x124] sm:$0xf]
  %v258 = vld [vmem:[%s2 + $0x128] sm:$0x1]
  %v259 = vld [vmem:[%s2 + $0x12c] sm:$0xf]
  %v260 = vld [vmem:[%s2 + $0x130] sm:$0xf]
  %v261 = vld [vmem:[%s2 + $0x134] sm:$0x1]
  %v262 = vld [vmem:[%s2 + $0x138] sm:$0xf]
  %v263 = vld [vmem:[%s2 + $0x13c] sm:$0xf]
  %v264 = vld [vmem:[%s2 + $0x140] sm:$0x1]
  %v265 = vld [vmem:[%s2 + $0x144] sm:$0xf]
  %v266 = vld [vmem:[%s2 + $0x148] sm:$0xf]
  %v267 = vld [vmem:[%s2 + $0x14c] sm:$0x1]
  %v268 = vld [vmem:[%s2 + $0x150] sm:$0xf]
  %v269 = vld [vmem:[%s2 + $0x154] sm:$0xf]
  %v270 = vld [vmem:[%s2 + $0x158] sm:$0x1]
  %v271 = vld [vmem:[%s2 + $0x15c] sm:$0xf]
  %v272 = vld [vmem:[%s2 + $0x160] sm:$0xf]
  %v273 = vld [vmem:[%s2 + $0x164] sm:$0x1]
  %v274 = vld [vmem:[%s2 + $0x168] sm:$0xf]
  %v275 = vld [vmem:[%s2 + $0x16c] sm:$0xf]
  %v276 = vld [vmem:[%s2 + $0x170] sm:$0x1]
  %v277 = vld [vmem:[%s2 + $0x174] sm:$0xf]
  %v278 = vld [vmem:[%s2 + $0x178] sm:$0xf]
  %v279 = vld [vmem:[%s2 + $0x17c] sm:$0x1]
  %v280 = vld [vmem:[%s2 + $0x180] sm:$0xf]
  %v281 = vld [vmem:[%s2 + $0x184] sm:$0xf]
  %v282 = vld [vmem:[%s2 + $0x188] sm:$0x1]
  %v283 = vld [vmem:[%s3] sm:$0xf]
  %v284 = vld [vmem:[%s3 + $0x4] sm:$0xf]
  %v285 = vld [vmem:[%s3 + $0xc] sm:$0xf]
  %v286 = vld [vmem:[%s3 + $0x10] sm:$0xf]
  %v287 = vld [vmem:[%s3 + $0x18] sm:$0xf]
  %v288 = vld [vmem:[%s3 + $0x1c] sm:$0xf]
  %v289 = vld [vmem:[%s3 + $0x24] sm:$0xf]
  %v290 = vld [vmem:[%s3 + $0x28] sm:$0xf]
  %v291 = vld [vmem:[%s3 + $0x30] sm:$0xf]
  %v292 = vld [vmem:[%s3 + $0x34] sm:$0xf]
  %v293 = vld [vmem:[%s3 + $0x3c] sm:$0xf]
  %v294 = vld [vmem:[%s3 + $0x40] sm:$0xf]
  %v295 = vld [vmem:[%s3 + $0x48] sm:$0xf]
  %v296 = vld [vmem:[%s3 + $0x4c] sm:$0xf]
  %v297 = vld [vmem:[%s3 + $0x54] sm:$0xf]
  %v298 = vld [vmem:[%s3 + $0x58] sm:$0xf]
  %v299 = vld [vmem:[%s3 + $0x60] sm:$0xf]
  %v300 = vld [vmem:[%s3 + $0x64] sm:$0xf]
  %v301 = vld [vmem:[%s3 + $0x6c] sm:$0xf]
  %v302 = vld [vmem:[%s3 + $0x70] sm:$0xf]
  %v303 = vld [vmem:[%s3 + $0x78] sm:$0xf]
  %v304 = vld [vmem:[%s3 + $0x7c] sm:$0xf]
  %v305 = vld [vmem:[%s3 + $0x84] sm:$0xf]
  %v306 = vld [vmem:[%s3 + $0x88] sm:$0xf]
  %v307 = vld [vmem:[%s3 + $0x90] sm:$0xf]
  %v308 = vld [vmem:[%s3 + $0x94] sm:$0xf]
  %v309 = vld [vmem:[%s3 + $0x9c] sm:$0xf]
  %v310 = vld [vmem:[%s3 + $0xa0] sm:$0xf]
  %v311 = vld [vmem:[%s3 + $0xa8] sm:$0xf]
  %v312 = vld [vmem:[%s3 + $0xac] sm:$0xf]
  %v313 = vld [vmem:[%s3 + $0xb4] sm:$0xf]
  %v314 = vld [vmem:[%s3 + $0xb8] sm:$0xf]
  %v315 = vld [vmem:[%s3 + $0xcc] sm:$0xf]
  %v316 = vld [vmem:[%s3 + $0xd0] sm:$0xf]
  %v317 = vld [vmem:[%s3 + $0xd8] sm:$0xf]
  %v318 = vld [vmem:[%s3 + $0xdc] sm:$0xf]
  %v319 = vld [vmem:[%s3 + $0xe4] sm:$0xf]
  %v320 = vld [vmem:[%s3 + $0xe8] sm:$0xf]
  %v321 = vld [vmem:[%s3 + $0xf0] sm:$0xf]
  %v322 = vld [vmem:[%s3 + $0xf4] sm:$0xf]
  %v323 = vld [vmem:[%s3 + $0xfc] sm:$0xf]
  %v324 = vld [vmem:[%s3 + $0x100] sm:$0xf]
  %v325 = vld [vmem:[%s3 + $0x108] sm:$0xf]
  %v326 = vld [vmem:[%s3 + $0x10c] sm:$0xf]
  %v327 = vld [vmem:[%s3 + $0x114] sm:$0xf]
  %v328 = vld [vmem:[%s3 + $0x118] sm:$0xf]
  %v329 = vld [vmem:[%s3 + $0x120] sm:$0xf]
  %v330 = vld [vmem:[%s3 + $0x124] sm:$0xf]
  %v331 = vld [vmem:[%s3 + $0x12c] sm:$0xf]
  %v332 = vld [vmem:[%s3 + $0x130] sm:$0xf]
  %v333 = vld [vmem:[%s3 + $0x138] sm:$0xf]
  %v334 = vld [vmem:[%s3 + $0x13c] sm:$0xf]
  %v335 = vld [vmem:[%s3 + $0x144] sm:$0xf]
  %v336 = vld [vmem:[%s3 + $0x148] sm:$0xf]
  %v337 = vld [vmem:[%s3 + $0x150] sm:$0xf]
  %v338 = vld [vmem:[%s3 + $0x154] sm:$0xf]
  %v339 = vld [vmem:[%s3 + $0x15c] sm:$0xf]
  %v340 = vld [vmem:[%s3 + $0x160] sm:$0xf]
  %v341 = vld [vmem:[%s3 + $0x168] sm:$0xf]
  %v342 = vld [vmem:[%s3 + $0x16c] sm:$0xf]
  %v343 = vld [vmem:[%s3 + $0x174] sm:$0xf]
  %v344 = vld [vmem:[%s3 + $0x178] sm:$0xf]
  %v345 = vld [vmem:[%s3 + $0x180] sm:$0xf]
  %v346 = vld [vmem:[%s3 + $0x184] sm:$0xf]
  %vm347 = vsmask.f32 3328
  %vm348 = vsmask.f32 7440
  %vm349 = vmor %vm347, %vm348
  %v351 = vshrl.u32 %v17, 16
  %v353 = vrot.slane %v351, 4
  %v354 = vshll.u32 %v17, 16
  %v356 = vrot.slane %v354, 5
  %v357 = vor.u32 %v353, %v356
  %v358 = vrot.slane %v357, 4
  %v360 = vshll.u32 %v18, 16
  %v362 = vrot.slane %v360, 5
  %v363 = vsel %vm349, %v358, %v362
  %v364 = vshrl.u32 %v18, 16
  %v366 = vrot.slane %v364, 4
  %v367 = vor.u32 %v366, %v362
  %v368 = vrot.slane %v367, 4
  %v370 = vshll.u32 %v19, 16
  %v372 = vrot.slane %v370, 5
  %v373 = vsel %vm349, %v368, %v372
  %v375 = vshrl.u32 %v20, 16
  %v377 = vrot.slane %v375, 4
  %v378 = vshll.u32 %v20, 16
  %v380 = vrot.slane %v378, 5
  %v381 = vor.u32 %v377, %v380
  %v382 = vrot.slane %v381, 4
  %v384 = vshll.u32 %v21, 16
  %v386 = vrot.slane %v384, 5
  %v387 = vsel %vm349, %v382, %v386
  %v388 = vshrl.u32 %v21, 16
  %v390 = vrot.slane %v388, 4
  %v391 = vor.u32 %v390, %v386
  %v392 = vrot.slane %v391, 4
  %v394 = vshll.u32 %v22, 16
  %v396 = vrot.slane %v394, 5
  %v397 = vsel %vm349, %v392, %v396
  %v399 = vshrl.u32 %v23, 16
  %v401 = vrot.slane %v399, 4
  %v402 = vshll.u32 %v23, 16
  %v404 = vrot.slane %v402, 5
  %v405 = vor.u32 %v401, %v404
  %v406 = vrot.slane %v405, 4
  %v408 = vshll.u32 %v24, 16
  %v410 = vrot.slane %v408, 5
  %v411 = vsel %vm349, %v406, %v410
  %v412 = vshrl.u32 %v24, 16
  %v414 = vrot.slane %v412, 4
  %v415 = vor.u32 %v414, %v410
  %v416 = vrot.slane %v415, 4
  %v418 = vshll.u32 %v25, 16
  %v420 = vrot.slane %v418, 5
  %v421 = vsel %vm349, %v416, %v420
  %v423 = vshrl.u32 %v26, 16
  %v425 = vrot.slane %v423, 4
  %v426 = vshll.u32 %v26, 16
  %v428 = vrot.slane %v426, 5
  %v429 = vor.u32 %v425, %v428
  %v430 = vrot.slane %v429, 4
  %v432 = vshll.u32 %v27, 16
  %v434 = vrot.slane %v432, 5
  %v435 = vsel %vm349, %v430, %v434
  %v436 = vshrl.u32 %v27, 16
  %v438 = vrot.slane %v436, 4
  %v439 = vor.u32 %v438, %v434
  %v440 = vrot.slane %v439, 4
  %v442 = vshll.u32 %v28, 16
  %v444 = vrot.slane %v442, 5
  %v445 = vsel %vm349, %v440, %v444
  %v447 = vshrl.u32 %v29, 16
  %v449 = vrot.slane %v447, 4
  %v450 = vshll.u32 %v29, 16
  %v452 = vrot.slane %v450, 5
  %v453 = vor.u32 %v449, %v452
  %v454 = vrot.slane %v453, 4
  %v456 = vshll.u32 %v30, 16
  %v458 = vrot.slane %v456, 5
  %v459 = vsel %vm349, %v454, %v458
  %v460 = vshrl.u32 %v30, 16
  %v462 = vrot.slane %v460, 4
  %v463 = vor.u32 %v462, %v458
  %v464 = vrot.slane %v463, 4
  %v466 = vshll.u32 %v31, 16
  %v468 = vrot.slane %v466, 5
  %v469 = vsel %vm349, %v464, %v468
  %v471 = vshrl.u32 %v32, 16
  %v473 = vrot.slane %v471, 4
  %v474 = vshll.u32 %v32, 16
  %v476 = vrot.slane %v474, 5
  %v477 = vor.u32 %v473, %v476
  %v478 = vrot.slane %v477, 4
  %v480 = vshll.u32 %v33, 16
  %v482 = vrot.slane %v480, 5
  %v483 = vsel %vm349, %v478, %v482
  %v484 = vshrl.u32 %v33, 16
  %v486 = vrot.slane %v484, 4
  %v487 = vor.u32 %v486, %v482
  %v488 = vrot.slane %v487, 4
  %v490 = vshll.u32 %v34, 16
  %v492 = vrot.slane %v490, 5
  %v493 = vsel %vm349, %v488, %v492
  %v495 = vshrl.u32 %v35, 16
  %v497 = vrot.slane %v495, 4
  %v498 = vshll.u32 %v35, 16
  %v500 = vrot.slane %v498, 5
  %v501 = vor.u32 %v497, %v500
  %v502 = vrot.slane %v501, 4
  %v504 = vshll.u32 %v36, 16
  %v506 = vrot.slane %v504, 5
  %v507 = vsel %vm349, %v502, %v506
  %v508 = vshrl.u32 %v36, 16
  %v510 = vrot.slane %v508, 4
  %v511 = vor.u32 %v510, %v506
  %v512 = vrot.slane %v511, 4
  %v514 = vshll.u32 %v37, 16
  %v516 = vrot.slane %v514, 5
  %v517 = vsel %vm349, %v512, %v516
  %v519 = vshrl.u32 %v38, 16
  %v521 = vrot.slane %v519, 4
  %v522 = vshll.u32 %v38, 16
  %v524 = vrot.slane %v522, 5
  %v525 = vor.u32 %v521, %v524
  %v526 = vrot.slane %v525, 4
  %v528 = vshll.u32 %v39, 16
  %v530 = vrot.slane %v528, 5
  %v531 = vsel %vm349, %v526, %v530
  %v532 = vshrl.u32 %v39, 16
  %v534 = vrot.slane %v532, 4
  %v535 = vor.u32 %v534, %v530
  %v536 = vrot.slane %v535, 4
  %v538 = vshll.u32 %v40, 16
  %v540 = vrot.slane %v538, 5
  %v541 = vsel %vm349, %v536, %v540
  %v543 = vshrl.u32 %v41, 16
  %v545 = vrot.slane %v543, 4
  %v546 = vshll.u32 %v41, 16
  %v548 = vrot.slane %v546, 5
  %v549 = vor.u32 %v545, %v548
  %v550 = vrot.slane %v549, 4
  %v552 = vshll.u32 %v42, 16
  %v554 = vrot.slane %v552, 5
  %v555 = vsel %vm349, %v550, %v554
  %v556 = vshrl.u32 %v42, 16
  %v558 = vrot.slane %v556, 4
  %v559 = vor.u32 %v558, %v554
  %v560 = vrot.slane %v559, 4
  %v562 = vshll.u32 %v43, 16
  %v564 = vrot.slane %v562, 5
  %v565 = vsel %vm349, %v560, %v564
  %v567 = vshrl.u32 %v44, 16
  %v569 = vrot.slane %v567, 4
  %v570 = vshll.u32 %v44, 16
  %v572 = vrot.slane %v570, 5
  %v573 = vor.u32 %v569, %v572
  %v574 = vrot.slane %v573, 4
  %v576 = vshll.u32 %v45, 16
  %v578 = vrot.slane %v576, 5
  %v579 = vsel %vm349, %v574, %v578
  %v580 = vshrl.u32 %v45, 16
  %v582 = vrot.slane %v580, 4
  %v583 = vor.u32 %v582, %v578
  %v584 = vrot.slane %v583, 4
  %v586 = vshll.u32 %v46, 16
  %v588 = vrot.slane %v586, 5
  %v589 = vsel %vm349, %v584, %v588
  %v591 = vshrl.u32 %v47, 16
  %v593 = vrot.slane %v591, 4
  %v594 = vshll.u32 %v47, 16
  %v596 = vrot.slane %v594, 5
  %v597 = vor.u32 %v593, %v596
  %v598 = vrot.slane %v597, 4
  %v600 = vshll.u32 %v48, 16
  %v602 = vrot.slane %v600, 5
  %v603 = vsel %vm349, %v598, %v602
  %v604 = vshrl.u32 %v48, 16
  %v606 = vrot.slane %v604, 4
  %v607 = vor.u32 %v606, %v602
  %v608 = vrot.slane %v607, 4
  %v610 = vshll.u32 %v49, 16
  %v612 = vrot.slane %v610, 5
  %v613 = vsel %vm349, %v608, %v612
  %v615 = vshrl.u32 %v50, 16
  %v617 = vrot.slane %v615, 4
  %v618 = vshll.u32 %v50, 16
  %v620 = vrot.slane %v618, 5
  %v621 = vor.u32 %v617, %v620
  %v622 = vrot.slane %v621, 4
  %v624 = vshll.u32 %v51, 16
  %v626 = vrot.slane %v624, 5
  %v627 = vsel %vm349, %v622, %v626
  %v628 = vshrl.u32 %v51, 16
  %v630 = vrot.slane %v628, 4
  %v631 = vor.u32 %v630, %v626
  %v632 = vrot.slane %v631, 4
  %v634 = vshll.u32 %v52, 16
  %v636 = vrot.slane %v634, 5
  %v637 = vsel %vm349, %v632, %v636
  %v639 = vshrl.u32 %v53, 16
  %v641 = vrot.slane %v639, 4
  %v642 = vshll.u32 %v53, 16
  %v644 = vrot.slane %v642, 5
  %v645 = vor.u32 %v641, %v644
  %v646 = vrot.slane %v645, 4
  %v648 = vshll.u32 %v54, 16
  %v650 = vrot.slane %v648, 5
  %v651 = vsel %vm349, %v646, %v650
  %v652 = vshrl.u32 %v54, 16
  %v654 = vrot.slane %v652, 4
  %v655 = vor.u32 %v654, %v650
  %v656 = vrot.slane %v655, 4
  %v658 = vshll.u32 %v55, 16
  %v660 = vrot.slane %v658, 5
  %v661 = vsel %vm349, %v656, %v660
  %v663 = vshrl.u32 %v56, 16
  %v665 = vrot.slane %v663, 4
  %v666 = vshll.u32 %v56, 16
  %v668 = vrot.slane %v666, 5
  %v669 = vor.u32 %v665, %v668
  %v670 = vrot.slane %v669, 4
  %v672 = vshll.u32 %v57, 16
  %v674 = vrot.slane %v672, 5
  %v675 = vsel %vm349, %v670, %v674
  %v676 = vshrl.u32 %v57, 16
  %v678 = vrot.slane %v676, 4
  %v679 = vor.u32 %v678, %v674
  %v680 = vrot.slane %v679, 4
  %v682 = vshll.u32 %v58, 16
  %v684 = vrot.slane %v682, 5
  %v685 = vsel %vm349, %v680, %v684
  %v687 = vshrl.u32 %v59, 16
  %v689 = vrot.slane %v687, 4
  %v690 = vshll.u32 %v59, 16
  %v692 = vrot.slane %v690, 5
  %v693 = vor.u32 %v689, %v692
  %v694 = vrot.slane %v693, 4
  %v696 = vshll.u32 %v60, 16
  %v698 = vrot.slane %v696, 5
  %v699 = vsel %vm349, %v694, %v698
  %v700 = vshrl.u32 %v60, 16
  %v702 = vrot.slane %v700, 4
  %v703 = vor.u32 %v702, %v698
  %v704 = vrot.slane %v703, 4
  %v706 = vshll.u32 %v61, 16
  %v708 = vrot.slane %v706, 5
  %v709 = vsel %vm349, %v704, %v708
  %v711 = vshrl.u32 %v62, 16
  %v713 = vrot.slane %v711, 4
  %v714 = vshll.u32 %v62, 16
  %v716 = vrot.slane %v714, 5
  %v717 = vor.u32 %v713, %v716
  %v718 = vrot.slane %v717, 4
  %v720 = vshll.u32 %v63, 16
  %v722 = vrot.slane %v720, 5
  %v723 = vsel %vm349, %v718, %v722
  %v724 = vshrl.u32 %v63, 16
  %v726 = vrot.slane %v724, 4
  %v727 = vor.u32 %v726, %v722
  %v728 = vrot.slane %v727, 4
  %v730 = vshll.u32 %v64, 16
  %v732 = vrot.slane %v730, 5
  %v733 = vsel %vm349, %v728, %v732
  %v735 = vshrl.u32 %v68, 16
  %v737 = vrot.slane %v735, 4
  %v738 = vshll.u32 %v68, 16
  %v740 = vrot.slane %v738, 5
  %v741 = vor.u32 %v737, %v740
  %v742 = vrot.slane %v741, 4
  %v744 = vshll.u32 %v69, 16
  %v746 = vrot.slane %v744, 5
  %v747 = vsel %vm349, %v742, %v746
  %v748 = vshrl.u32 %v69, 16
  %v750 = vrot.slane %v748, 4
  %v751 = vor.u32 %v750, %v746
  %v752 = vrot.slane %v751, 4
  %v754 = vshll.u32 %v70, 16
  %v756 = vrot.slane %v754, 5
  %v757 = vsel %vm349, %v752, %v756
  %v759 = vshrl.u32 %v71, 16
  %v761 = vrot.slane %v759, 4
  %v762 = vshll.u32 %v71, 16
  %v764 = vrot.slane %v762, 5
  %v765 = vor.u32 %v761, %v764
  %v766 = vrot.slane %v765, 4
  %v768 = vshll.u32 %v72, 16
  %v770 = vrot.slane %v768, 5
  %v771 = vsel %vm349, %v766, %v770
  %v772 = vshrl.u32 %v72, 16
  %v774 = vrot.slane %v772, 4
  %v775 = vor.u32 %v774, %v770
  %v776 = vrot.slane %v775, 4
  %v778 = vshll.u32 %v73, 16
  %v780 = vrot.slane %v778, 5
  %v781 = vsel %vm349, %v776, %v780
  %v783 = vshrl.u32 %v74, 16
  %v785 = vrot.slane %v783, 4
  %v786 = vshll.u32 %v74, 16
  %v788 = vrot.slane %v786, 5
  %v789 = vor.u32 %v785, %v788
  %v790 = vrot.slane %v789, 4
  %v792 = vshll.u32 %v75, 16
  %v794 = vrot.slane %v792, 5
  %v795 = vsel %vm349, %v790, %v794
  %v796 = vshrl.u32 %v75, 16
  %v798 = vrot.slane %v796, 4
  %v799 = vor.u32 %v798, %v794
  %v800 = vrot.slane %v799, 4
  %v802 = vshll.u32 %v76, 16
  %v804 = vrot.slane %v802, 5
  %v805 = vsel %vm349, %v800, %v804
  %v807 = vshrl.u32 %v77, 16
  %v809 = vrot.slane %v807, 4
  %v810 = vshll.u32 %v77, 16
  %v812 = vrot.slane %v810, 5
  %v813 = vor.u32 %v809, %v812
  %v814 = vrot.slane %v813, 4
  %v816 = vshll.u32 %v78, 16
  %v818 = vrot.slane %v816, 5
  %v819 = vsel %vm349, %v814, %v818
  %v820 = vshrl.u32 %v78, 16
  %v822 = vrot.slane %v820, 4
  %v823 = vor.u32 %v822, %v818
  %v824 = vrot.slane %v823, 4
  %v826 = vshll.u32 %v79, 16
  %v828 = vrot.slane %v826, 5
  %v829 = vsel %vm349, %v824, %v828
  %v831 = vshrl.u32 %v80, 16
  %v833 = vrot.slane %v831, 4
  %v834 = vshll.u32 %v80, 16
  %v836 = vrot.slane %v834, 5
  %v837 = vor.u32 %v833, %v836
  %v838 = vrot.slane %v837, 4
  %v840 = vshll.u32 %v81, 16
  %v842 = vrot.slane %v840, 5
  %v843 = vsel %vm349, %v838, %v842
  %v844 = vshrl.u32 %v81, 16
  %v846 = vrot.slane %v844, 4
  %v847 = vor.u32 %v846, %v842
  %v848 = vrot.slane %v847, 4
  %v850 = vshll.u32 %v82, 16
  %v852 = vrot.slane %v850, 5
  %v853 = vsel %vm349, %v848, %v852
  %v855 = vshrl.u32 %v83, 16
  %v857 = vrot.slane %v855, 4
  %v858 = vshll.u32 %v83, 16
  %v860 = vrot.slane %v858, 5
  %v861 = vor.u32 %v857, %v860
  %v862 = vrot.slane %v861, 4
  %v864 = vshll.u32 %v84, 16
  %v866 = vrot.slane %v864, 5
  %v867 = vsel %vm349, %v862, %v866
  %v868 = vshrl.u32 %v84, 16
  %v870 = vrot.slane %v868, 4
  %v871 = vor.u32 %v870, %v866
  %v872 = vrot.slane %v871, 4
  %v874 = vshll.u32 %v85, 16
  %v876 = vrot.slane %v874, 5
  %v877 = vsel %vm349, %v872, %v876
  %v879 = vshrl.u32 %v86, 16
  %v881 = vrot.slane %v879, 4
  %v882 = vshll.u32 %v86, 16
  %v884 = vrot.slane %v882, 5
  %v885 = vor.u32 %v881, %v884
  %v886 = vrot.slane %v885, 4
  %v888 = vshll.u32 %v87, 16
  %v890 = vrot.slane %v888, 5
  %v891 = vsel %vm349, %v886, %v890
  %v892 = vshrl.u32 %v87, 16
  %v894 = vrot.slane %v892, 4
  %v895 = vor.u32 %v894, %v890
  %v896 = vrot.slane %v895, 4
  %v898 = vshll.u32 %v88, 16
  %v900 = vrot.slane %v898, 5
  %v901 = vsel %vm349, %v896, %v900
  %v903 = vshrl.u32 %v89, 16
  %v905 = vrot.slane %v903, 4
  %v906 = vshll.u32 %v89, 16
  %v908 = vrot.slane %v906, 5
  %v909 = vor.u32 %v905, %v908
  %v910 = vrot.slane %v909, 4
  %v912 = vshll.u32 %v90, 16
  %v914 = vrot.slane %v912, 5
  %v915 = vsel %vm349, %v910, %v914
  %v916 = vshrl.u32 %v90, 16
  %v918 = vrot.slane %v916, 4
  %v919 = vor.u32 %v918, %v914
  %v920 = vrot.slane %v919, 4
  %v922 = vshll.u32 %v91, 16
  %v924 = vrot.slane %v922, 5
  %v925 = vsel %vm349, %v920, %v924
  %v927 = vshrl.u32 %v92, 16
  %v929 = vrot.slane %v927, 4
  %v930 = vshll.u32 %v92, 16
  %v932 = vrot.slane %v930, 5
  %v933 = vor.u32 %v929, %v932
  %v934 = vrot.slane %v933, 4
  %v936 = vshll.u32 %v93, 16
  %v938 = vrot.slane %v936, 5
  %v939 = vsel %vm349, %v934, %v938
  %v940 = vshrl.u32 %v93, 16
  %v942 = vrot.slane %v940, 4
  %v943 = vor.u32 %v942, %v938
  %v944 = vrot.slane %v943, 4
  %v946 = vshll.u32 %v94, 16
  %v948 = vrot.slane %v946, 5
  %v949 = vsel %vm349, %v944, %v948
  %v951 = vshrl.u32 %v95, 16
  %v953 = vrot.slane %v951, 4
  %v954 = vshll.u32 %v95, 16
  %v956 = vrot.slane %v954, 5
  %v957 = vor.u32 %v953, %v956
  %v958 = vrot.slane %v957, 4
  %v960 = vshll.u32 %v96, 16
  %v962 = vrot.slane %v960, 5
  %v963 = vsel %vm349, %v958, %v962
  %v964 = vshrl.u32 %v96, 16
  %v966 = vrot.slane %v964, 4
  %v967 = vor.u32 %v966, %v962
  %v968 = vrot.slane %v967, 4
  %v970 = vshll.u32 %v97, 16
  %v972 = vrot.slane %v970, 5
  %v973 = vsel %vm349, %v968, %v972
  %v975 = vshrl.u32 %v98, 16
  %v977 = vrot.slane %v975, 4
  %v978 = vshll.u32 %v98, 16
  %v980 = vrot.slane %v978, 5
  %v981 = vor.u32 %v977, %v980
  %v982 = vrot.slane %v981, 4
  %v984 = vshll.u32 %v99, 16
  %v986 = vrot.slane %v984, 5
  %v987 = vsel %vm349, %v982, %v986
  %v988 = vshrl.u32 %v99, 16
  %v990 = vrot.slane %v988, 4
  %v991 = vor.u32 %v990, %v986
  %v992 = vrot.slane %v991, 4
  %v994 = vshll.u32 %v100, 16
  %v996 = vrot.slane %v994, 5
  %v997 = vsel %vm349, %v992, %v996
  %v999 = vshrl.u32 %v101, 16
  %v1001 = vrot.slane %v999, 4
  %v1002 = vshll.u32 %v101, 16
  %v1004 = vrot.slane %v1002, 5
  %v1005 = vor.u32 %v1001, %v1004
  %v1006 = vrot.slane %v1005, 4
  %v1008 = vshll.u32 %v102, 16
  %v1010 = vrot.slane %v1008, 5
  %v1011 = vsel %vm349, %v1006, %v1010
  %v1012 = vshrl.u32 %v102, 16
  %v1014 = vrot.slane %v1012, 4
  %v1015 = vor.u32 %v1014, %v1010
  %v1016 = vrot.slane %v1015, 4
  %v1018 = vshll.u32 %v103, 16
  %v1020 = vrot.slane %v1018, 5
  %v1021 = vsel %vm349, %v1016, %v1020
  %v1023 = vshrl.u32 %v104, 16
  %v1025 = vrot.slane %v1023, 4
  %v1026 = vshll.u32 %v104, 16
  %v1028 = vrot.slane %v1026, 5
  %v1029 = vor.u32 %v1025, %v1028
  %v1030 = vrot.slane %v1029, 4
  %v1032 = vshll.u32 %v105, 16
  %v1034 = vrot.slane %v1032, 5
  %v1035 = vsel %vm349, %v1030, %v1034
  %v1036 = vshrl.u32 %v105, 16
  %v1038 = vrot.slane %v1036, 4
  %v1039 = vor.u32 %v1038, %v1034
  %v1040 = vrot.slane %v1039, 4
  %v1042 = vshll.u32 %v106, 16
  %v1044 = vrot.slane %v1042, 5
  %v1045 = vsel %vm349, %v1040, %v1044
  %v1047 = vshrl.u32 %v107, 16
  %v1049 = vrot.slane %v1047, 4
  %v1050 = vshll.u32 %v107, 16
  %v1052 = vrot.slane %v1050, 5
  %v1053 = vor.u32 %v1049, %v1052
  %v1054 = vrot.slane %v1053, 4
  %v1056 = vshll.u32 %v108, 16
  %v1058 = vrot.slane %v1056, 5
  %v1059 = vsel %vm349, %v1054, %v1058
  %v1060 = vshrl.u32 %v108, 16
  %v1062 = vrot.slane %v1060, 4
  %v1063 = vor.u32 %v1062, %v1058
  %v1064 = vrot.slane %v1063, 4
  %v1066 = vshll.u32 %v109, 16
  %v1068 = vrot.slane %v1066, 5
  %v1069 = vsel %vm349, %v1064, %v1068
  %v1071 = vshrl.u32 %v110, 16
  %v1073 = vrot.slane %v1071, 4
  %v1074 = vshll.u32 %v110, 16
  %v1076 = vrot.slane %v1074, 5
  %v1077 = vor.u32 %v1073, %v1076
  %v1078 = vrot.slane %v1077, 4
  %v1080 = vshll.u32 %v111, 16
  %v1082 = vrot.slane %v1080, 5
  %v1083 = vsel %vm349, %v1078, %v1082
  %v1084 = vshrl.u32 %v111, 16
  %v1086 = vrot.slane %v1084, 4
  %v1087 = vor.u32 %v1086, %v1082
  %v1088 = vrot.slane %v1087, 4
  %v1090 = vshll.u32 %v112, 16
  %v1092 = vrot.slane %v1090, 5
  %v1093 = vsel %vm349, %v1088, %v1092
  %v1095 = vshrl.u32 %v113, 16
  %v1097 = vrot.slane %v1095, 4
  %v1098 = vshll.u32 %v113, 16
  %v1100 = vrot.slane %v1098, 5
  %v1101 = vor.u32 %v1097, %v1100
  %v1102 = vrot.slane %v1101, 4
  %v1104 = vshll.u32 %v114, 16
  %v1106 = vrot.slane %v1104, 5
  %v1107 = vsel %vm349, %v1102, %v1106
  %v1108 = vshrl.u32 %v114, 16
  %v1110 = vrot.slane %v1108, 4
  %v1111 = vor.u32 %v1110, %v1106
  %v1112 = vrot.slane %v1111, 4
  %v1114 = vshll.u32 %v115, 16
  %v1116 = vrot.slane %v1114, 5
  %v1117 = vsel %vm349, %v1112, %v1116
  %v1182 = vmax.bf16 %v17, %v363
  %v1183 = vmax.bf16 %v18, %v373
  %v1184 = vmax.bf16 %v20, %v387
  %v1185 = vmax.bf16 %v21, %v397
  %v1186 = vmax.bf16 %v23, %v411
  %v1187 = vmax.bf16 %v24, %v421
  %v1188 = vmax.bf16 %v26, %v435
  %v1189 = vmax.bf16 %v27, %v445
  %v1190 = vmax.bf16 %v29, %v459
  %v1191 = vmax.bf16 %v30, %v469
  %v1192 = vmax.bf16 %v32, %v483
  %v1193 = vmax.bf16 %v33, %v493
  %v1194 = vmax.bf16 %v35, %v507
  %v1195 = vmax.bf16 %v36, %v517
  %v1196 = vmax.bf16 %v38, %v531
  %v1197 = vmax.bf16 %v39, %v541
  %v1198 = vmax.bf16 %v41, %v555
  %v1199 = vmax.bf16 %v42, %v565
  %v1200 = vmax.bf16 %v44, %v579
  %v1201 = vmax.bf16 %v45, %v589
  %v1202 = vmax.bf16 %v47, %v603
  %v1203 = vmax.bf16 %v48, %v613
  %v1204 = vmax.bf16 %v50, %v627
  %v1205 = vmax.bf16 %v51, %v637
  %v1206 = vmax.bf16 %v53, %v651
  %v1207 = vmax.bf16 %v54, %v661
  %v1208 = vmax.bf16 %v56, %v675
  %v1209 = vmax.bf16 %v57, %v685
  %v1210 = vmax.bf16 %v59, %v699
  %v1211 = vmax.bf16 %v60, %v709
  %v1212 = vmax.bf16 %v62, %v723
  %v1213 = vmax.bf16 %v63, %v733
  %v1214 = vmax.bf16 %v68, %v747
  %v1215 = vmax.bf16 %v69, %v757
  %v1216 = vmax.bf16 %v71, %v771
  %v1217 = vmax.bf16 %v72, %v781
  %v1218 = vmax.bf16 %v74, %v795
  %v1219 = vmax.bf16 %v75, %v805
  %v1220 = vmax.bf16 %v77, %v819
  %v1221 = vmax.bf16 %v78, %v829
  %v1222 = vmax.bf16 %v80, %v843
  %v1223 = vmax.bf16 %v81, %v853
  %v1224 = vmax.bf16 %v83, %v867
  %v1225 = vmax.bf16 %v84, %v877
  %v1226 = vmax.bf16 %v86, %v891
  %v1227 = vmax.bf16 %v87, %v901
  %v1228 = vmax.bf16 %v89, %v915
  %v1229 = vmax.bf16 %v90, %v925
  %v1230 = vmax.bf16 %v92, %v939
  %v1231 = vmax.bf16 %v93, %v949
  %v1232 = vmax.bf16 %v95, %v963
  %v1233 = vmax.bf16 %v96, %v973
  %v1234 = vmax.bf16 %v98, %v987
  %v1235 = vmax.bf16 %v99, %v997
  %v1236 = vmax.bf16 %v101, %v1011
  %v1237 = vmax.bf16 %v102, %v1021
  %v1238 = vmax.bf16 %v104, %v1035
  %v1239 = vmax.bf16 %v105, %v1045
  %v1240 = vmax.bf16 %v107, %v1059
  %v1241 = vmax.bf16 %v108, %v1069
  %v1242 = vmax.bf16 %v110, %v1083
  %v1243 = vmax.bf16 %v111, %v1093
  %v1244 = vmax.bf16 %v113, %v1107
  %v1245 = vmax.bf16 %v114, %v1117
  %v1246 = vmax.bf16 %v1182, %v20
  %v1247 = vmax.bf16 %v1183, %v21
  %v1248 = vmax.bf16 %v1184, %v23
  %v1249 = vmax.bf16 %v1185, %v24
  %v1250 = vmax.bf16 %v1186, %v26
  %v1251 = vmax.bf16 %v1187, %v27
  %v1252 = vmax.bf16 %v1188, %v29
  %v1253 = vmax.bf16 %v1189, %v30
  %v1254 = vmax.bf16 %v1190, %v32
  %v1255 = vmax.bf16 %v1191, %v33
  %v1256 = vmax.bf16 %v1192, %v35
  %v1257 = vmax.bf16 %v1193, %v36
  %v1258 = vmax.bf16 %v1194, %v38
  %v1259 = vmax.bf16 %v1195, %v39
  %v1260 = vmax.bf16 %v1196, %v41
  %v1261 = vmax.bf16 %v1197, %v42
  %v1262 = vmax.bf16 %v1198, %v44
  %v1263 = vmax.bf16 %v1199, %v45
  %v1264 = vmax.bf16 %v1200, %v47
  %v1265 = vmax.bf16 %v1201, %v48
  %v1266 = vmax.bf16 %v1202, %v50
  %v1267 = vmax.bf16 %v1203, %v51
  %v1268 = vmax.bf16 %v1204, %v53
  %v1269 = vmax.bf16 %v1205, %v54
  %v1270 = vmax.bf16 %v1206, %v56
  %v1271 = vmax.bf16 %v1207, %v57
  %v1272 = vmax.bf16 %v1208, %v59
  %v1273 = vmax.bf16 %v1209, %v60
  %v1274 = vmax.bf16 %v1210, %v62
  %v1275 = vmax.bf16 %v1211, %v63
  %v1276 = vmax.bf16 %v1212, %v65
  %v1277 = vmax.bf16 %v1213, %v66
  %v1278 = vmax.bf16 %v1214, %v71
  %v1279 = vmax.bf16 %v1215, %v72
  %v1280 = vmax.bf16 %v1216, %v74
  %v1281 = vmax.bf16 %v1217, %v75
  %v1282 = vmax.bf16 %v1218, %v77
  %v1283 = vmax.bf16 %v1219, %v78
  %v1284 = vmax.bf16 %v1220, %v80
  %v1285 = vmax.bf16 %v1221, %v81
  %v1286 = vmax.bf16 %v1222, %v83
  %v1287 = vmax.bf16 %v1223, %v84
  %v1288 = vmax.bf16 %v1224, %v86
  %v1289 = vmax.bf16 %v1225, %v87
  %v1290 = vmax.bf16 %v1226, %v89
  %v1291 = vmax.bf16 %v1227, %v90
  %v1292 = vmax.bf16 %v1228, %v92
  %v1293 = vmax.bf16 %v1229, %v93
  %v1294 = vmax.bf16 %v1230, %v95
  %v1295 = vmax.bf16 %v1231, %v96
  %v1296 = vmax.bf16 %v1232, %v98
  %v1297 = vmax.bf16 %v1233, %v99
  %v1298 = vmax.bf16 %v1234, %v101
  %v1299 = vmax.bf16 %v1235, %v102
  %v1300 = vmax.bf16 %v1236, %v104
  %v1301 = vmax.bf16 %v1237, %v105
  %v1302 = vmax.bf16 %v1238, %v107
  %v1303 = vmax.bf16 %v1239, %v108
  %v1304 = vmax.bf16 %v1240, %v110
  %v1305 = vmax.bf16 %v1241, %v111
  %v1306 = vmax.bf16 %v1242, %v113
  %v1307 = vmax.bf16 %v1243, %v114
  %v1308 = vmax.bf16 %v1244, %v116
  %v1309 = vmax.bf16 %v1245, %v117
  %v1311 = vshrl.u32 %v65, 16
  %v1313 = vrot.slane %v1311, 4
  %v1314 = vshll.u32 %v65, 16
  %v1316 = vrot.slane %v1314, 5
  %v1317 = vor.u32 %v1313, %v1316
  %v1318 = vrot.slane %v1317, 4
  %v1320 = vshll.u32 %v66, 16
  %v1322 = vrot.slane %v1320, 5
  %v1323 = vsel %vm349, %v1318, %v1322
  %v1324 = vshrl.u32 %v66, 16
  %v1326 = vrot.slane %v1324, 4
  %v1327 = vor.u32 %v1326, %v1322
  %v1328 = vrot.slane %v1327, 4
  %v1330 = vshll.u32 %v67, 16
  %v1332 = vrot.slane %v1330, 5
  %v1333 = vsel %vm349, %v1328, %v1332
  %v1335 = vshrl.u32 %v116, 16
  %v1337 = vrot.slane %v1335, 4
  %v1338 = vshll.u32 %v116, 16
  %v1340 = vrot.slane %v1338, 5
  %v1341 = vor.u32 %v1337, %v1340
  %v1342 = vrot.slane %v1341, 4
  %v1344 = vshll.u32 %v117, 16
  %v1346 = vrot.slane %v1344, 5
  %v1347 = vsel %vm349, %v1342, %v1346
  %v1348 = vshrl.u32 %v117, 16
  %v1350 = vrot.slane %v1348, 4
  %v1351 = vor.u32 %v1350, %v1346
  %v1352 = vrot.slane %v1351, 4
  %v1354 = vshll.u32 %v118, 16
  %v1356 = vrot.slane %v1354, 5
  %v1357 = vsel %vm349, %v1352, %v1356
  %v1362 = vmax.bf16 %v1246, %v387
  %v1363 = vmax.bf16 %v1247, %v397
  %v1364 = vmax.bf16 %v1248, %v411
  %v1365 = vmax.bf16 %v1249, %v421
  %v1366 = vmax.bf16 %v1250, %v435
  %v1367 = vmax.bf16 %v1251, %v445
  %v1368 = vmax.bf16 %v1252, %v459
  %v1369 = vmax.bf16 %v1253, %v469
  %v1370 = vmax.bf16 %v1254, %v483
  %v1371 = vmax.bf16 %v1255, %v493
  %v1372 = vmax.bf16 %v1256, %v507
  %v1373 = vmax.bf16 %v1257, %v517
  %v1374 = vmax.bf16 %v1258, %v531
  %v1375 = vmax.bf16 %v1259, %v541
  %v1376 = vmax.bf16 %v1260, %v555
  %v1377 = vmax.bf16 %v1261, %v565
  %v1378 = vmax.bf16 %v1262, %v579
  %v1379 = vmax.bf16 %v1263, %v589
  %v1380 = vmax.bf16 %v1264, %v603
  %v1381 = vmax.bf16 %v1265, %v613
  %v1382 = vmax.bf16 %v1266, %v627
  %v1383 = vmax.bf16 %v1267, %v637
  %v1384 = vmax.bf16 %v1268, %v651
  %v1385 = vmax.bf16 %v1269, %v661
  %v1386 = vmax.bf16 %v1270, %v675
  %v1387 = vmax.bf16 %v1271, %v685
  %v1388 = vmax.bf16 %v1272, %v699
  %v1389 = vmax.bf16 %v1273, %v709
  %v1390 = vmax.bf16 %v1274, %v723
  %v1391 = vmax.bf16 %v1275, %v733
  %v1392 = vmax.bf16 %v1276, %v1323
  %v1393 = vmax.bf16 %v1277, %v1333
  %v1394 = vmax.bf16 %v1278, %v771
  %v1395 = vmax.bf16 %v1279, %v781
  %v1396 = vmax.bf16 %v1280, %v795
  %v1397 = vmax.bf16 %v1281, %v805
  %v1398 = vmax.bf16 %v1282, %v819
  %v1399 = vmax.bf16 %v1283, %v829
  %v1400 = vmax.bf16 %v1284, %v843
  %v1401 = vmax.bf16 %v1285, %v853
  %v1402 = vmax.bf16 %v1286, %v867
  %v1403 = vmax.bf16 %v1287, %v877
  %v1404 = vmax.bf16 %v1288, %v891
  %v1405 = vmax.bf16 %v1289, %v901
  %v1406 = vmax.bf16 %v1290, %v915
  %v1407 = vmax.bf16 %v1291, %v925
  %v1408 = vmax.bf16 %v1292, %v939
  %v1409 = vmax.bf16 %v1293, %v949
  %v1410 = vmax.bf16 %v1294, %v963
  %v1411 = vmax.bf16 %v1295, %v973
  %v1412 = vmax.bf16 %v1296, %v987
  %v1413 = vmax.bf16 %v1297, %v997
  %v1414 = vmax.bf16 %v1298, %v1011
  %v1415 = vmax.bf16 %v1299, %v1021
  %v1416 = vmax.bf16 %v1300, %v1035
  %v1417 = vmax.bf16 %v1301, %v1045
  %v1418 = vmax.bf16 %v1302, %v1059
  %v1419 = vmax.bf16 %v1303, %v1069
  %v1420 = vmax.bf16 %v1304, %v1083
  %v1421 = vmax.bf16 %v1305, %v1093
  %v1422 = vmax.bf16 %v1306, %v1107
  %v1423 = vmax.bf16 %v1307, %v1117
  %v1424 = vmax.bf16 %v1308, %v1347
  %v1425 = vmax.bf16 %v1309, %v1357
  %v1426 = vmax.bf16 %v1362, %v119
  %v1427 = vmax.bf16 %v1363, %v120
  %v1428 = vmax.bf16 %v1364, %v121
  %v1429 = vmax.bf16 %v1365, %v122
  %v1430 = vmax.bf16 %v1366, %v123
  %v1431 = vmax.bf16 %v1367, %v124
  %v1432 = vmax.bf16 %v1368, %v125
  %v1433 = vmax.bf16 %v1369, %v126
  %v1434 = vmax.bf16 %v1370, %v127
  %v1435 = vmax.bf16 %v1371, %v128
  %v1436 = vmax.bf16 %v1372, %v129
  %v1437 = vmax.bf16 %v1373, %v130
  %v1438 = vmax.bf16 %v1374, %v131
  %v1439 = vmax.bf16 %v1375, %v132
  %v1440 = vmax.bf16 %v1376, %v133
  %v1441 = vmax.bf16 %v1377, %v134
  %v1442 = vmax.bf16 %v1378, %v135
  %v1443 = vmax.bf16 %v1379, %v136
  %v1444 = vmax.bf16 %v1380, %v137
  %v1445 = vmax.bf16 %v1381, %v138
  %v1446 = vmax.bf16 %v1382, %v139
  %v1447 = vmax.bf16 %v1383, %v140
  %v1448 = vmax.bf16 %v1384, %v141
  %v1449 = vmax.bf16 %v1385, %v142
  %v1450 = vmax.bf16 %v1386, %v143
  %v1451 = vmax.bf16 %v1387, %v144
  %v1452 = vmax.bf16 %v1388, %v145
  %v1453 = vmax.bf16 %v1389, %v146
  %v1454 = vmax.bf16 %v1390, %v147
  %v1455 = vmax.bf16 %v1391, %v148
  %v1456 = vmax.bf16 %v1392, %v149
  %v1457 = vmax.bf16 %v1393, %v150
  %v1458 = vmax.bf16 %v1394, %v153
  %v1459 = vmax.bf16 %v1395, %v154
  %v1460 = vmax.bf16 %v1396, %v155
  %v1461 = vmax.bf16 %v1397, %v156
  %v1462 = vmax.bf16 %v1398, %v157
  %v1463 = vmax.bf16 %v1399, %v158
  %v1464 = vmax.bf16 %v1400, %v159
  %v1465 = vmax.bf16 %v1401, %v160
  %v1466 = vmax.bf16 %v1402, %v161
  %v1467 = vmax.bf16 %v1403, %v162
  %v1468 = vmax.bf16 %v1404, %v163
  %v1469 = vmax.bf16 %v1405, %v164
  %v1470 = vmax.bf16 %v1406, %v165
  %v1471 = vmax.bf16 %v1407, %v166
  %v1472 = vmax.bf16 %v1408, %v167
  %v1473 = vmax.bf16 %v1409, %v168
  %v1474 = vmax.bf16 %v1410, %v169
  %v1475 = vmax.bf16 %v1411, %v170
  %v1476 = vmax.bf16 %v1412, %v171
  %v1477 = vmax.bf16 %v1413, %v172
  %v1478 = vmax.bf16 %v1414, %v173
  %v1479 = vmax.bf16 %v1415, %v174
  %v1480 = vmax.bf16 %v1416, %v175
  %v1481 = vmax.bf16 %v1417, %v176
  %v1482 = vmax.bf16 %v1418, %v177
  %v1483 = vmax.bf16 %v1419, %v178
  %v1484 = vmax.bf16 %v1420, %v179
  %v1485 = vmax.bf16 %v1421, %v180
  %v1486 = vmax.bf16 %v1422, %v181
  %v1487 = vmax.bf16 %v1423, %v182
  %v1488 = vmax.bf16 %v1424, %v183
  %v1489 = vmax.bf16 %v1425, %v184
  %v1490 = vmax.bf16 %v1426, %v121
  %v1491 = vmax.bf16 %v1427, %v122
  %v1492 = vmax.bf16 %v1428, %v123
  %v1493 = vmax.bf16 %v1429, %v124
  %v1494 = vmax.bf16 %v1430, %v125
  %v1495 = vmax.bf16 %v1431, %v126
  %v1496 = vmax.bf16 %v1432, %v127
  %v1497 = vmax.bf16 %v1433, %v128
  %v1498 = vmax.bf16 %v1434, %v129
  %v1499 = vmax.bf16 %v1435, %v130
  %v1500 = vmax.bf16 %v1436, %v131
  %v1501 = vmax.bf16 %v1437, %v132
  %v1502 = vmax.bf16 %v1438, %v133
  %v1503 = vmax.bf16 %v1439, %v134
  %v1504 = vmax.bf16 %v1440, %v135
  %v1505 = vmax.bf16 %v1441, %v136
  %v1506 = vmax.bf16 %v1442, %v137
  %v1507 = vmax.bf16 %v1443, %v138
  %v1508 = vmax.bf16 %v1444, %v139
  %v1509 = vmax.bf16 %v1445, %v140
  %v1510 = vmax.bf16 %v1446, %v141
  %v1511 = vmax.bf16 %v1447, %v142
  %v1512 = vmax.bf16 %v1448, %v143
  %v1513 = vmax.bf16 %v1449, %v144
  %v1514 = vmax.bf16 %v1450, %v145
  %v1515 = vmax.bf16 %v1451, %v146
  %v1516 = vmax.bf16 %v1452, %v147
  %v1517 = vmax.bf16 %v1453, %v148
  %v1518 = vmax.bf16 %v1454, %v149
  %v1519 = vmax.bf16 %v1455, %v150
  %v1520 = vmax.bf16 %v1456, %v151
  %v1521 = vmax.bf16 %v1457, %v152
  %v1522 = vmax.bf16 %v1458, %v155
  %v1523 = vmax.bf16 %v1459, %v156
  %v1524 = vmax.bf16 %v1460, %v157
  %v1525 = vmax.bf16 %v1461, %v158
  %v1526 = vmax.bf16 %v1462, %v159
  %v1527 = vmax.bf16 %v1463, %v160
  %v1528 = vmax.bf16 %v1464, %v161
  %v1529 = vmax.bf16 %v1465, %v162
  %v1530 = vmax.bf16 %v1466, %v163
  %v1531 = vmax.bf16 %v1467, %v164
  %v1532 = vmax.bf16 %v1468, %v165
  %v1533 = vmax.bf16 %v1469, %v166
  %v1534 = vmax.bf16 %v1470, %v167
  %v1535 = vmax.bf16 %v1471, %v168
  %v1536 = vmax.bf16 %v1472, %v169
  %v1537 = vmax.bf16 %v1473, %v170
  %v1538 = vmax.bf16 %v1474, %v171
  %v1539 = vmax.bf16 %v1475, %v172
  %v1540 = vmax.bf16 %v1476, %v173
  %v1541 = vmax.bf16 %v1477, %v174
  %v1542 = vmax.bf16 %v1478, %v175
  %v1543 = vmax.bf16 %v1479, %v176
  %v1544 = vmax.bf16 %v1480, %v177
  %v1545 = vmax.bf16 %v1481, %v178
  %v1546 = vmax.bf16 %v1482, %v179
  %v1547 = vmax.bf16 %v1483, %v180
  %v1548 = vmax.bf16 %v1484, %v181
  %v1549 = vmax.bf16 %v1485, %v182
  %v1550 = vmax.bf16 %v1486, %v183
  %v1551 = vmax.bf16 %v1487, %v184
  %v1552 = vmax.bf16 %v1488, %v185
  %v1553 = vmax.bf16 %v1489, %v186
  %v1554 = vmax.bf16 %v1490, %v187
  %v1555 = vmax.bf16 %v1491, %v188
  %v1556 = vmax.bf16 %v1492, %v190
  %v1557 = vmax.bf16 %v1493, %v191
  %v1558 = vmax.bf16 %v1494, %v193
  %v1559 = vmax.bf16 %v1495, %v194
  %v1560 = vmax.bf16 %v1496, %v196
  %v1561 = vmax.bf16 %v1497, %v197
  %v1562 = vmax.bf16 %v1498, %v199
  %v1563 = vmax.bf16 %v1499, %v200
  %v1564 = vmax.bf16 %v1500, %v202
  %v1565 = vmax.bf16 %v1501, %v203
  %v1566 = vmax.bf16 %v1502, %v205
  %v1567 = vmax.bf16 %v1503, %v206
  %v1568 = vmax.bf16 %v1504, %v208
  %v1569 = vmax.bf16 %v1505, %v209
  %v1570 = vmax.bf16 %v1506, %v211
  %v1571 = vmax.bf16 %v1507, %v212
  %v1572 = vmax.bf16 %v1508, %v214
  %v1573 = vmax.bf16 %v1509, %v215
  %v1574 = vmax.bf16 %v1510, %v217
  %v1575 = vmax.bf16 %v1511, %v218
  %v1576 = vmax.bf16 %v1512, %v220
  %v1577 = vmax.bf16 %v1513, %v221
  %v1578 = vmax.bf16 %v1514, %v223
  %v1579 = vmax.bf16 %v1515, %v224
  %v1580 = vmax.bf16 %v1516, %v226
  %v1581 = vmax.bf16 %v1517, %v227
  %v1582 = vmax.bf16 %v1518, %v229
  %v1583 = vmax.bf16 %v1519, %v230
  %v1584 = vmax.bf16 %v1520, %v232
  %v1585 = vmax.bf16 %v1521, %v233
  %v1586 = vmax.bf16 %v1522, %v235
  %v1587 = vmax.bf16 %v1523, %v236
  %v1588 = vmax.bf16 %v1524, %v238
  %v1589 = vmax.bf16 %v1525, %v239
  %v1590 = vmax.bf16 %v1526, %v241
  %v1591 = vmax.bf16 %v1527, %v242
  %v1592 = vmax.bf16 %v1528, %v244
  %v1593 = vmax.bf16 %v1529, %v245
  %v1594 = vmax.bf16 %v1530, %v247
  %v1595 = vmax.bf16 %v1531, %v248
  %v1596 = vmax.bf16 %v1532, %v250
  %v1597 = vmax.bf16 %v1533, %v251
  %v1598 = vmax.bf16 %v1534, %v253
  %v1599 = vmax.bf16 %v1535, %v254
  %v1600 = vmax.bf16 %v1536, %v256
  %v1601 = vmax.bf16 %v1537, %v257
  %v1602 = vmax.bf16 %v1538, %v259
  %v1603 = vmax.bf16 %v1539, %v260
  %v1604 = vmax.bf16 %v1540, %v262
  %v1605 = vmax.bf16 %v1541, %v263
  %v1606 = vmax.bf16 %v1542, %v265
  %v1607 = vmax.bf16 %v1543, %v266
  %v1608 = vmax.bf16 %v1544, %v268
  %v1609 = vmax.bf16 %v1545, %v269
  %v1610 = vmax.bf16 %v1546, %v271
  %v1611 = vmax.bf16 %v1547, %v272
  %v1612 = vmax.bf16 %v1548, %v274
  %v1613 = vmax.bf16 %v1549, %v275
  %v1614 = vmax.bf16 %v1550, %v277
  %v1615 = vmax.bf16 %v1551, %v278
  %v1616 = vmax.bf16 %v1552, %v280
  %v1617 = vmax.bf16 %v1553, %v281
  %v1619 = vshrl.u32 %v187, 16
  %v1621 = vrot.slane %v1619, 4
  %v1622 = vshll.u32 %v187, 16
  %v1624 = vrot.slane %v1622, 5
  %v1625 = vor.u32 %v1621, %v1624
  %v1626 = vrot.slane %v1625, 4
  %v1628 = vshll.u32 %v188, 16
  %v1630 = vrot.slane %v1628, 5
  %v1631 = vsel %vm349, %v1626, %v1630
  %v1632 = vshrl.u32 %v188, 16
  %v1634 = vrot.slane %v1632, 4
  %v1635 = vor.u32 %v1634, %v1630
  %v1636 = vrot.slane %v1635, 4
  %v1638 = vshll.u32 %v189, 16
  %v1640 = vrot.slane %v1638, 5
  %v1641 = vsel %vm349, %v1636, %v1640
  %v1643 = vshrl.u32 %v190, 16
  %v1645 = vrot.slane %v1643, 4
  %v1646 = vshll.u32 %v190, 16
  %v1648 = vrot.slane %v1646, 5
  %v1649 = vor.u32 %v1645, %v1648
  %v1650 = vrot.slane %v1649, 4
  %v1652 = vshll.u32 %v191, 16
  %v1654 = vrot.slane %v1652, 5
  %v1655 = vsel %vm349, %v1650, %v1654
  %v1656 = vshrl.u32 %v191, 16
  %v1658 = vrot.slane %v1656, 4
  %v1659 = vor.u32 %v1658, %v1654
  %v1660 = vrot.slane %v1659, 4
  %v1662 = vshll.u32 %v192, 16
  %v1664 = vrot.slane %v1662, 5
  %v1665 = vsel %vm349, %v1660, %v1664
  %v1667 = vshrl.u32 %v193, 16
  %v1669 = vrot.slane %v1667, 4
  %v1670 = vshll.u32 %v193, 16
  %v1672 = vrot.slane %v1670, 5
  %v1673 = vor.u32 %v1669, %v1672
  %v1674 = vrot.slane %v1673, 4
  %v1676 = vshll.u32 %v194, 16
  %v1678 = vrot.slane %v1676, 5
  %v1679 = vsel %vm349, %v1674, %v1678
  %v1680 = vshrl.u32 %v194, 16
  %v1682 = vrot.slane %v1680, 4
  %v1683 = vor.u32 %v1682, %v1678
  %v1684 = vrot.slane %v1683, 4
  %v1686 = vshll.u32 %v195, 16
  %v1688 = vrot.slane %v1686, 5
  %v1689 = vsel %vm349, %v1684, %v1688
  %v1691 = vshrl.u32 %v196, 16
  %v1693 = vrot.slane %v1691, 4
  %v1694 = vshll.u32 %v196, 16
  %v1696 = vrot.slane %v1694, 5
  %v1697 = vor.u32 %v1693, %v1696
  %v1698 = vrot.slane %v1697, 4
  %v1700 = vshll.u32 %v197, 16
  %v1702 = vrot.slane %v1700, 5
  %v1703 = vsel %vm349, %v1698, %v1702
  %v1704 = vshrl.u32 %v197, 16
  %v1706 = vrot.slane %v1704, 4
  %v1707 = vor.u32 %v1706, %v1702
  %v1708 = vrot.slane %v1707, 4
  %v1710 = vshll.u32 %v198, 16
  %v1712 = vrot.slane %v1710, 5
  %v1713 = vsel %vm349, %v1708, %v1712
  %v1715 = vshrl.u32 %v199, 16
  %v1717 = vrot.slane %v1715, 4
  %v1718 = vshll.u32 %v199, 16
  %v1720 = vrot.slane %v1718, 5
  %v1721 = vor.u32 %v1717, %v1720
  %v1722 = vrot.slane %v1721, 4
  %v1724 = vshll.u32 %v200, 16
  %v1726 = vrot.slane %v1724, 5
  %v1727 = vsel %vm349, %v1722, %v1726
  %v1728 = vshrl.u32 %v200, 16
  %v1730 = vrot.slane %v1728, 4
  %v1731 = vor.u32 %v1730, %v1726
  %v1732 = vrot.slane %v1731, 4
  %v1734 = vshll.u32 %v201, 16
  %v1736 = vrot.slane %v1734, 5
  %v1737 = vsel %vm349, %v1732, %v1736
  %v1739 = vshrl.u32 %v202, 16
  %v1741 = vrot.slane %v1739, 4
  %v1742 = vshll.u32 %v202, 16
  %v1744 = vrot.slane %v1742, 5
  %v1745 = vor.u32 %v1741, %v1744
  %v1746 = vrot.slane %v1745, 4
  %v1748 = vshll.u32 %v203, 16
  %v1750 = vrot.slane %v1748, 5
  %v1751 = vsel %vm349, %v1746, %v1750
  %v1752 = vshrl.u32 %v203, 16
  %v1754 = vrot.slane %v1752, 4
  %v1755 = vor.u32 %v1754, %v1750
  %v1756 = vrot.slane %v1755, 4
  %v1758 = vshll.u32 %v204, 16
  %v1760 = vrot.slane %v1758, 5
  %v1761 = vsel %vm349, %v1756, %v1760
  %v1763 = vshrl.u32 %v205, 16
  %v1765 = vrot.slane %v1763, 4
  %v1766 = vshll.u32 %v205, 16
  %v1768 = vrot.slane %v1766, 5
  %v1769 = vor.u32 %v1765, %v1768
  %v1770 = vrot.slane %v1769, 4
  %v1772 = vshll.u32 %v206, 16
  %v1774 = vrot.slane %v1772, 5
  %v1775 = vsel %vm349, %v1770, %v1774
  %v1776 = vshrl.u32 %v206, 16
  %v1778 = vrot.slane %v1776, 4
  %v1779 = vor.u32 %v1778, %v1774
  %v1780 = vrot.slane %v1779, 4
  %v1782 = vshll.u32 %v207, 16
  %v1784 = vrot.slane %v1782, 5
  %v1785 = vsel %vm349, %v1780, %v1784
  %v1787 = vshrl.u32 %v208, 16
  %v1789 = vrot.slane %v1787, 4
  %v1790 = vshll.u32 %v208, 16
  %v1792 = vrot.slane %v1790, 5
  %v1793 = vor.u32 %v1789, %v1792
  %v1794 = vrot.slane %v1793, 4
  %v1796 = vshll.u32 %v209, 16
  %v1798 = vrot.slane %v1796, 5
  %v1799 = vsel %vm349, %v1794, %v1798
  %v1800 = vshrl.u32 %v209, 16
  %v1802 = vrot.slane %v1800, 4
  %v1803 = vor.u32 %v1802, %v1798
  %v1804 = vrot.slane %v1803, 4
  %v1806 = vshll.u32 %v210, 16
  %v1808 = vrot.slane %v1806, 5
  %v1809 = vsel %vm349, %v1804, %v1808
  %v1811 = vshrl.u32 %v211, 16
  %v1813 = vrot.slane %v1811, 4
  %v1814 = vshll.u32 %v211, 16
  %v1816 = vrot.slane %v1814, 5
  %v1817 = vor.u32 %v1813, %v1816
  %v1818 = vrot.slane %v1817, 4
  %v1820 = vshll.u32 %v212, 16
  %v1822 = vrot.slane %v1820, 5
  %v1823 = vsel %vm349, %v1818, %v1822
  %v1824 = vshrl.u32 %v212, 16
  %v1826 = vrot.slane %v1824, 4
  %v1827 = vor.u32 %v1826, %v1822
  %v1828 = vrot.slane %v1827, 4
  %v1830 = vshll.u32 %v213, 16
  %v1832 = vrot.slane %v1830, 5
  %v1833 = vsel %vm349, %v1828, %v1832
  %v1835 = vshrl.u32 %v214, 16
  %v1837 = vrot.slane %v1835, 4
  %v1838 = vshll.u32 %v214, 16
  %v1840 = vrot.slane %v1838, 5
  %v1841 = vor.u32 %v1837, %v1840
  %v1842 = vrot.slane %v1841, 4
  %v1844 = vshll.u32 %v215, 16
  %v1846 = vrot.slane %v1844, 5
  %v1847 = vsel %vm349, %v1842, %v1846
  %v1848 = vshrl.u32 %v215, 16
  %v1850 = vrot.slane %v1848, 4
  %v1851 = vor.u32 %v1850, %v1846
  %v1852 = vrot.slane %v1851, 4
  %v1854 = vshll.u32 %v216, 16
  %v1856 = vrot.slane %v1854, 5
  %v1857 = vsel %vm349, %v1852, %v1856
  %v1859 = vshrl.u32 %v217, 16
  %v1861 = vrot.slane %v1859, 4
  %v1862 = vshll.u32 %v217, 16
  %v1864 = vrot.slane %v1862, 5
  %v1865 = vor.u32 %v1861, %v1864
  %v1866 = vrot.slane %v1865, 4
  %v1868 = vshll.u32 %v218, 16
  %v1870 = vrot.slane %v1868, 5
  %v1871 = vsel %vm349, %v1866, %v1870
  %v1872 = vshrl.u32 %v218, 16
  %v1874 = vrot.slane %v1872, 4
  %v1875 = vor.u32 %v1874, %v1870
  %v1876 = vrot.slane %v1875, 4
  %v1878 = vshll.u32 %v219, 16
  %v1880 = vrot.slane %v1878, 5
  %v1881 = vsel %vm349, %v1876, %v1880
  %v1883 = vshrl.u32 %v220, 16
  %v1885 = vrot.slane %v1883, 4
  %v1886 = vshll.u32 %v220, 16
  %v1888 = vrot.slane %v1886, 5
  %v1889 = vor.u32 %v1885, %v1888
  %v1890 = vrot.slane %v1889, 4
  %v1892 = vshll.u32 %v221, 16
  %v1894 = vrot.slane %v1892, 5
  %v1895 = vsel %vm349, %v1890, %v1894
  %v1896 = vshrl.u32 %v221, 16
  %v1898 = vrot.slane %v1896, 4
  %v1899 = vor.u32 %v1898, %v1894
  %v1900 = vrot.slane %v1899, 4
  %v1902 = vshll.u32 %v222, 16
  %v1904 = vrot.slane %v1902, 5
  %v1905 = vsel %vm349, %v1900, %v1904
  %v1907 = vshrl.u32 %v223, 16
  %v1909 = vrot.slane %v1907, 4
  %v1910 = vshll.u32 %v223, 16
  %v1912 = vrot.slane %v1910, 5
  %v1913 = vor.u32 %v1909, %v1912
  %v1914 = vrot.slane %v1913, 4
  %v1916 = vshll.u32 %v224, 16
  %v1918 = vrot.slane %v1916, 5
  %v1919 = vsel %vm349, %v1914, %v1918
  %v1920 = vshrl.u32 %v224, 16
  %v1922 = vrot.slane %v1920, 4
  %v1923 = vor.u32 %v1922, %v1918
  %v1924 = vrot.slane %v1923, 4
  %v1926 = vshll.u32 %v225, 16
  %v1928 = vrot.slane %v1926, 5
  %v1929 = vsel %vm349, %v1924, %v1928
  %v1931 = vshrl.u32 %v226, 16
  %v1933 = vrot.slane %v1931, 4
  %v1934 = vshll.u32 %v226, 16
  %v1936 = vrot.slane %v1934, 5
  %v1937 = vor.u32 %v1933, %v1936
  %v1938 = vrot.slane %v1937, 4
  %v1940 = vshll.u32 %v227, 16
  %v1942 = vrot.slane %v1940, 5
  %v1943 = vsel %vm349, %v1938, %v1942
  %v1944 = vshrl.u32 %v227, 16
  %v1946 = vrot.slane %v1944, 4
  %v1947 = vor.u32 %v1946, %v1942
  %v1948 = vrot.slane %v1947, 4
  %v1950 = vshll.u32 %v228, 16
  %v1952 = vrot.slane %v1950, 5
  %v1953 = vsel %vm349, %v1948, %v1952
  %v1955 = vshrl.u32 %v229, 16
  %v1957 = vrot.slane %v1955, 4
  %v1958 = vshll.u32 %v229, 16
  %v1960 = vrot.slane %v1958, 5
  %v1961 = vor.u32 %v1957, %v1960
  %v1962 = vrot.slane %v1961, 4
  %v1964 = vshll.u32 %v230, 16
  %v1966 = vrot.slane %v1964, 5
  %v1967 = vsel %vm349, %v1962, %v1966
  %v1968 = vshrl.u32 %v230, 16
  %v1970 = vrot.slane %v1968, 4
  %v1971 = vor.u32 %v1970, %v1966
  %v1972 = vrot.slane %v1971, 4
  %v1974 = vshll.u32 %v231, 16
  %v1976 = vrot.slane %v1974, 5
  %v1977 = vsel %vm349, %v1972, %v1976
  %v1979 = vshrl.u32 %v232, 16
  %v1981 = vrot.slane %v1979, 4
  %v1982 = vshll.u32 %v232, 16
  %v1984 = vrot.slane %v1982, 5
  %v1985 = vor.u32 %v1981, %v1984
  %v1986 = vrot.slane %v1985, 4
  %v1988 = vshll.u32 %v233, 16
  %v1990 = vrot.slane %v1988, 5
  %v1991 = vsel %vm349, %v1986, %v1990
  %v1992 = vshrl.u32 %v233, 16
  %v1994 = vrot.slane %v1992, 4
  %v1995 = vor.u32 %v1994, %v1990
  %v1996 = vrot.slane %v1995, 4
  %v1998 = vshll.u32 %v234, 16
  %v2000 = vrot.slane %v1998, 5
  %v2001 = vsel %vm349, %v1996, %v2000
  %v2003 = vshrl.u32 %v235, 16
  %v2005 = vrot.slane %v2003, 4
  %v2006 = vshll.u32 %v235, 16
  %v2008 = vrot.slane %v2006, 5
  %v2009 = vor.u32 %v2005, %v2008
  %v2010 = vrot.slane %v2009, 4
  %v2012 = vshll.u32 %v236, 16
  %v2014 = vrot.slane %v2012, 5
  %v2015 = vsel %vm349, %v2010, %v2014
  %v2016 = vshrl.u32 %v236, 16
  %v2018 = vrot.slane %v2016, 4
  %v2019 = vor.u32 %v2018, %v2014
  %v2020 = vrot.slane %v2019, 4
  %v2022 = vshll.u32 %v237, 16
  %v2024 = vrot.slane %v2022, 5
  %v2025 = vsel %vm349, %v2020, %v2024
  %v2027 = vshrl.u32 %v238, 16
  %v2029 = vrot.slane %v2027, 4
  %v2030 = vshll.u32 %v238, 16
  %v2032 = vrot.slane %v2030, 5
  %v2033 = vor.u32 %v2029, %v2032
  %v2034 = vrot.slane %v2033, 4
  %v2036 = vshll.u32 %v239, 16
  %v2038 = vrot.slane %v2036, 5
  %v2039 = vsel %vm349, %v2034, %v2038
  %v2040 = vshrl.u32 %v239, 16
  %v2042 = vrot.slane %v2040, 4
  %v2043 = vor.u32 %v2042, %v2038
  %v2044 = vrot.slane %v2043, 4
  %v2046 = vshll.u32 %v240, 16
  %v2048 = vrot.slane %v2046, 5
  %v2049 = vsel %vm349, %v2044, %v2048
  %v2051 = vshrl.u32 %v241, 16
  %v2053 = vrot.slane %v2051, 4
  %v2054 = vshll.u32 %v241, 16
  %v2056 = vrot.slane %v2054, 5
  %v2057 = vor.u32 %v2053, %v2056
  %v2058 = vrot.slane %v2057, 4
  %v2060 = vshll.u32 %v242, 16
  %v2062 = vrot.slane %v2060, 5
  %v2063 = vsel %vm349, %v2058, %v2062
  %v2064 = vshrl.u32 %v242, 16
  %v2066 = vrot.slane %v2064, 4
  %v2067 = vor.u32 %v2066, %v2062
  %v2068 = vrot.slane %v2067, 4
  %v2070 = vshll.u32 %v243, 16
  %v2072 = vrot.slane %v2070, 5
  %v2073 = vsel %vm349, %v2068, %v2072
  %v2075 = vshrl.u32 %v244, 16
  %v2077 = vrot.slane %v2075, 4
  %v2078 = vshll.u32 %v244, 16
  %v2080 = vrot.slane %v2078, 5
  %v2081 = vor.u32 %v2077, %v2080
  %v2082 = vrot.slane %v2081, 4
  %v2084 = vshll.u32 %v245, 16
  %v2086 = vrot.slane %v2084, 5
  %v2087 = vsel %vm349, %v2082, %v2086
  %v2088 = vshrl.u32 %v245, 16
  %v2090 = vrot.slane %v2088, 4
  %v2091 = vor.u32 %v2090, %v2086
  %v2092 = vrot.slane %v2091, 4
  %v2094 = vshll.u32 %v246, 16
  %v2096 = vrot.slane %v2094, 5
  %v2097 = vsel %vm349, %v2092, %v2096
  %v2099 = vshrl.u32 %v247, 16
  %v2101 = vrot.slane %v2099, 4
  %v2102 = vshll.u32 %v247, 16
  %v2104 = vrot.slane %v2102, 5
  %v2105 = vor.u32 %v2101, %v2104
  %v2106 = vrot.slane %v2105, 4
  %v2108 = vshll.u32 %v248, 16
  %v2110 = vrot.slane %v2108, 5
  %v2111 = vsel %vm349, %v2106, %v2110
  %v2112 = vshrl.u32 %v248, 16
  %v2114 = vrot.slane %v2112, 4
  %v2115 = vor.u32 %v2114, %v2110
  %v2116 = vrot.slane %v2115, 4
  %v2118 = vshll.u32 %v249, 16
  %v2120 = vrot.slane %v2118, 5
  %v2121 = vsel %vm349, %v2116, %v2120
  %v2123 = vshrl.u32 %v250, 16
  %v2125 = vrot.slane %v2123, 4
  %v2126 = vshll.u32 %v250, 16
  %v2128 = vrot.slane %v2126, 5
  %v2129 = vor.u32 %v2125, %v2128
  %v2130 = vrot.slane %v2129, 4
  %v2132 = vshll.u32 %v251, 16
  %v2134 = vrot.slane %v2132, 5
  %v2135 = vsel %vm349, %v2130, %v2134
  %v2136 = vshrl.u32 %v251, 16
  %v2138 = vrot.slane %v2136, 4
  %v2139 = vor.u32 %v2138, %v2134
  %v2140 = vrot.slane %v2139, 4
  %v2142 = vshll.u32 %v252, 16
  %v2144 = vrot.slane %v2142, 5
  %v2145 = vsel %vm349, %v2140, %v2144
  %v2147 = vshrl.u32 %v253, 16
  %v2149 = vrot.slane %v2147, 4
  %v2150 = vshll.u32 %v253, 16
  %v2152 = vrot.slane %v2150, 5
  %v2153 = vor.u32 %v2149, %v2152
  %v2154 = vrot.slane %v2153, 4
  %v2156 = vshll.u32 %v254, 16
  %v2158 = vrot.slane %v2156, 5
  %v2159 = vsel %vm349, %v2154, %v2158
  %v2160 = vshrl.u32 %v254, 16
  %v2162 = vrot.slane %v2160, 4
  %v2163 = vor.u32 %v2162, %v2158
  %v2164 = vrot.slane %v2163, 4
  %v2166 = vshll.u32 %v255, 16
  %v2168 = vrot.slane %v2166, 5
  %v2169 = vsel %vm349, %v2164, %v2168
  %v2171 = vshrl.u32 %v256, 16
  %v2173 = vrot.slane %v2171, 4
  %v2174 = vshll.u32 %v256, 16
  %v2176 = vrot.slane %v2174, 5
  %v2177 = vor.u32 %v2173, %v2176
  %v2178 = vrot.slane %v2177, 4
  %v2180 = vshll.u32 %v257, 16
  %v2182 = vrot.slane %v2180, 5
  %v2183 = vsel %vm349, %v2178, %v2182
  %v2184 = vshrl.u32 %v257, 16
  %v2186 = vrot.slane %v2184, 4
  %v2187 = vor.u32 %v2186, %v2182
  %v2188 = vrot.slane %v2187, 4
  %v2190 = vshll.u32 %v258, 16
  %v2192 = vrot.slane %v2190, 5
  %v2193 = vsel %vm349, %v2188, %v2192
  %v2195 = vshrl.u32 %v259, 16
  %v2197 = vrot.slane %v2195, 4
  %v2198 = vshll.u32 %v259, 16
  %v2200 = vrot.slane %v2198, 5
  %v2201 = vor.u32 %v2197, %v2200
  %v2202 = vrot.slane %v2201, 4
  %v2204 = vshll.u32 %v260, 16
  %v2206 = vrot.slane %v2204, 5
  %v2207 = vsel %vm349, %v2202, %v2206
  %v2208 = vshrl.u32 %v260, 16
  %v2210 = vrot.slane %v2208, 4
  %v2211 = vor.u32 %v2210, %v2206
  %v2212 = vrot.slane %v2211, 4
  %v2214 = vshll.u32 %v261, 16
  %v2216 = vrot.slane %v2214, 5
  %v2217 = vsel %vm349, %v2212, %v2216
  %v2219 = vshrl.u32 %v262, 16
  %v2221 = vrot.slane %v2219, 4
  %v2222 = vshll.u32 %v262, 16
  %v2224 = vrot.slane %v2222, 5
  %v2225 = vor.u32 %v2221, %v2224
  %v2226 = vrot.slane %v2225, 4
  %v2228 = vshll.u32 %v263, 16
  %v2230 = vrot.slane %v2228, 5
  %v2231 = vsel %vm349, %v2226, %v2230
  %v2232 = vshrl.u32 %v263, 16
  %v2234 = vrot.slane %v2232, 4
  %v2235 = vor.u32 %v2234, %v2230
  %v2236 = vrot.slane %v2235, 4
  %v2238 = vshll.u32 %v264, 16
  %v2240 = vrot.slane %v2238, 5
  %v2241 = vsel %vm349, %v2236, %v2240
  %v2243 = vshrl.u32 %v265, 16
  %v2245 = vrot.slane %v2243, 4
  %v2246 = vshll.u32 %v265, 16
  %v2248 = vrot.slane %v2246, 5
  %v2249 = vor.u32 %v2245, %v2248
  %v2250 = vrot.slane %v2249, 4
  %v2252 = vshll.u32 %v266, 16
  %v2254 = vrot.slane %v2252, 5
  %v2255 = vsel %vm349, %v2250, %v2254
  %v2256 = vshrl.u32 %v266, 16
  %v2258 = vrot.slane %v2256, 4
  %v2259 = vor.u32 %v2258, %v2254
  %v2260 = vrot.slane %v2259, 4
  %v2262 = vshll.u32 %v267, 16
  %v2264 = vrot.slane %v2262, 5
  %v2265 = vsel %vm349, %v2260, %v2264
  %v2267 = vshrl.u32 %v268, 16
  %v2269 = vrot.slane %v2267, 4
  %v2270 = vshll.u32 %v268, 16
  %v2272 = vrot.slane %v2270, 5
  %v2273 = vor.u32 %v2269, %v2272
  %v2274 = vrot.slane %v2273, 4
  %v2276 = vshll.u32 %v269, 16
  %v2278 = vrot.slane %v2276, 5
  %v2279 = vsel %vm349, %v2274, %v2278
  %v2280 = vshrl.u32 %v269, 16
  %v2282 = vrot.slane %v2280, 4
  %v2283 = vor.u32 %v2282, %v2278
  %v2284 = vrot.slane %v2283, 4
  %v2286 = vshll.u32 %v270, 16
  %v2288 = vrot.slane %v2286, 5
  %v2289 = vsel %vm349, %v2284, %v2288
  %v2291 = vshrl.u32 %v271, 16
  %v2293 = vrot.slane %v2291, 4
  %v2294 = vshll.u32 %v271, 16
  %v2296 = vrot.slane %v2294, 5
  %v2297 = vor.u32 %v2293, %v2296
  %v2298 = vrot.slane %v2297, 4
  %v2300 = vshll.u32 %v272, 16
  %v2302 = vrot.slane %v2300, 5
  %v2303 = vsel %vm349, %v2298, %v2302
  %v2304 = vshrl.u32 %v272, 16
  %v2306 = vrot.slane %v2304, 4
  %v2307 = vor.u32 %v2306, %v2302
  %v2308 = vrot.slane %v2307, 4
  %v2310 = vshll.u32 %v273, 16
  %v2312 = vrot.slane %v2310, 5
  %v2313 = vsel %vm349, %v2308, %v2312
  %v2315 = vshrl.u32 %v274, 16
  %v2317 = vrot.slane %v2315, 4
  %v2318 = vshll.u32 %v274, 16
  %v2320 = vrot.slane %v2318, 5
  %v2321 = vor.u32 %v2317, %v2320
  %v2322 = vrot.slane %v2321, 4
  %v2324 = vshll.u32 %v275, 16
  %v2326 = vrot.slane %v2324, 5
  %v2327 = vsel %vm349, %v2322, %v2326
  %v2328 = vshrl.u32 %v275, 16
  %v2330 = vrot.slane %v2328, 4
  %v2331 = vor.u32 %v2330, %v2326
  %v2332 = vrot.slane %v2331, 4
  %v2334 = vshll.u32 %v276, 16
  %v2336 = vrot.slane %v2334, 5
  %v2337 = vsel %vm349, %v2332, %v2336
  %v2339 = vshrl.u32 %v277, 16
  %v2341 = vrot.slane %v2339, 4
  %v2342 = vshll.u32 %v277, 16
  %v2344 = vrot.slane %v2342, 5
  %v2345 = vor.u32 %v2341, %v2344
  %v2346 = vrot.slane %v2345, 4
  %v2348 = vshll.u32 %v278, 16
  %v2350 = vrot.slane %v2348, 5
  %v2351 = vsel %vm349, %v2346, %v2350
  %v2352 = vshrl.u32 %v278, 16
  %v2354 = vrot.slane %v2352, 4
  %v2355 = vor.u32 %v2354, %v2350
  %v2356 = vrot.slane %v2355, 4
  %v2358 = vshll.u32 %v279, 16
  %v2360 = vrot.slane %v2358, 5
  %v2361 = vsel %vm349, %v2356, %v2360
  %v2363 = vshrl.u32 %v280, 16
  %v2365 = vrot.slane %v2363, 4
  %v2366 = vshll.u32 %v280, 16
  %v2368 = vrot.slane %v2366, 5
  %v2369 = vor.u32 %v2365, %v2368
  %v2370 = vrot.slane %v2369, 4
  %v2372 = vshll.u32 %v281, 16
  %v2374 = vrot.slane %v2372, 5
  %v2375 = vsel %vm349, %v2370, %v2374
  %v2376 = vshrl.u32 %v281, 16
  %v2378 = vrot.slane %v2376, 4
  %v2379 = vor.u32 %v2378, %v2374
  %v2380 = vrot.slane %v2379, 4
  %v2382 = vshll.u32 %v282, 16
  %v2384 = vrot.slane %v2382, 5
  %v2385 = vsel %vm349, %v2380, %v2384
  %v2450 = vmax.bf16 %v1554, %v1631
  %v2451 = vmax.bf16 %v1555, %v1641
  %v2452 = vmax.bf16 %v1556, %v1655
  %v2453 = vmax.bf16 %v1557, %v1665
  %v2454 = vmax.bf16 %v1558, %v1679
  %v2455 = vmax.bf16 %v1559, %v1689
  %v2456 = vmax.bf16 %v1560, %v1703
  %v2457 = vmax.bf16 %v1561, %v1713
  %v2458 = vmax.bf16 %v1562, %v1727
  %v2459 = vmax.bf16 %v1563, %v1737
  %v2460 = vmax.bf16 %v1564, %v1751
  %v2461 = vmax.bf16 %v1565, %v1761
  %v2462 = vmax.bf16 %v1566, %v1775
  %v2463 = vmax.bf16 %v1567, %v1785
  %v2464 = vmax.bf16 %v1568, %v1799
  %v2465 = vmax.bf16 %v1569, %v1809
  %v2466 = vmax.bf16 %v1570, %v1823
  %v2467 = vmax.bf16 %v1571, %v1833
  %v2468 = vmax.bf16 %v1572, %v1847
  %v2469 = vmax.bf16 %v1573, %v1857
  %v2470 = vmax.bf16 %v1574, %v1871
  %v2471 = vmax.bf16 %v1575, %v1881
  %v2472 = vmax.bf16 %v1576, %v1895
  %v2473 = vmax.bf16 %v1577, %v1905
  %v2474 = vmax.bf16 %v1578, %v1919
  %v2475 = vmax.bf16 %v1579, %v1929
  %v2476 = vmax.bf16 %v1580, %v1943
  %v2477 = vmax.bf16 %v1581, %v1953
  %v2478 = vmax.bf16 %v1582, %v1967
  %v2479 = vmax.bf16 %v1583, %v1977
  %v2480 = vmax.bf16 %v1584, %v1991
  %v2481 = vmax.bf16 %v1585, %v2001
  %v2482 = vmax.bf16 %v1586, %v2015
  %v2483 = vmax.bf16 %v1587, %v2025
  %v2484 = vmax.bf16 %v1588, %v2039
  %v2485 = vmax.bf16 %v1589, %v2049
  %v2486 = vmax.bf16 %v1590, %v2063
  %v2487 = vmax.bf16 %v1591, %v2073
  %v2488 = vmax.bf16 %v1592, %v2087
  %v2489 = vmax.bf16 %v1593, %v2097
  %v2490 = vmax.bf16 %v1594, %v2111
  %v2491 = vmax.bf16 %v1595, %v2121
  %v2492 = vmax.bf16 %v1596, %v2135
  %v2493 = vmax.bf16 %v1597, %v2145
  %v2494 = vmax.bf16 %v1598, %v2159
  %v2495 = vmax.bf16 %v1599, %v2169
  %v2496 = vmax.bf16 %v1600, %v2183
  %v2497 = vmax.bf16 %v1601, %v2193
  %v2498 = vmax.bf16 %v1602, %v2207
  %v2499 = vmax.bf16 %v1603, %v2217
  %v2500 = vmax.bf16 %v1604, %v2231
  %v2501 = vmax.bf16 %v1605, %v2241
  %v2502 = vmax.bf16 %v1606, %v2255
  %v2503 = vmax.bf16 %v1607, %v2265
  %v2504 = vmax.bf16 %v1608, %v2279
  %v2505 = vmax.bf16 %v1609, %v2289
  %v2506 = vmax.bf16 %v1610, %v2303
  %v2507 = vmax.bf16 %v1611, %v2313
  %v2508 = vmax.bf16 %v1612, %v2327
  %v2509 = vmax.bf16 %v1613, %v2337
  %v2510 = vmax.bf16 %v1614, %v2351
  %v2511 = vmax.bf16 %v1615, %v2361
  %v2512 = vmax.bf16 %v1616, %v2375
  %v2513 = vmax.bf16 %v1617, %v2385
  %v2514 = vmax.bf16 %v2450, %v283
  %v2515 = vmax.bf16 %v2451, %v284
  %v2516 = vmax.bf16 %v2452, %v285
  %v2517 = vmax.bf16 %v2453, %v286
  %v2518 = vmax.bf16 %v2454, %v287
  %v2519 = vmax.bf16 %v2455, %v288
  %v2520 = vmax.bf16 %v2456, %v289
  %v2521 = vmax.bf16 %v2457, %v290
  %v2522 = vmax.bf16 %v2458, %v291
  %v2523 = vmax.bf16 %v2459, %v292
  %v2524 = vmax.bf16 %v2460, %v293
  %v2525 = vmax.bf16 %v2461, %v294
  %v2526 = vmax.bf16 %v2462, %v295
  %v2527 = vmax.bf16 %v2463, %v296
  %v2528 = vmax.bf16 %v2464, %v297
  %v2529 = vmax.bf16 %v2465, %v298
  %v2530 = vmax.bf16 %v2466, %v299
  %v2531 = vmax.bf16 %v2467, %v300
  %v2532 = vmax.bf16 %v2468, %v301
  %v2533 = vmax.bf16 %v2469, %v302
  %v2534 = vmax.bf16 %v2470, %v303
  %v2535 = vmax.bf16 %v2471, %v304
  %v2536 = vmax.bf16 %v2472, %v305
  %v2537 = vmax.bf16 %v2473, %v306
  %v2538 = vmax.bf16 %v2474, %v307
  %v2539 = vmax.bf16 %v2475, %v308
  %v2540 = vmax.bf16 %v2476, %v309
  %v2541 = vmax.bf16 %v2477, %v310
  %v2542 = vmax.bf16 %v2478, %v311
  %v2543 = vmax.bf16 %v2479, %v312
  %v2544 = vmax.bf16 %v2480, %v313
  %v2545 = vmax.bf16 %v2481, %v314
  %v2546 = vmax.bf16 %v2482, %v315
  %v2547 = vmax.bf16 %v2483, %v316
  %v2548 = vmax.bf16 %v2484, %v317
  %v2549 = vmax.bf16 %v2485, %v318
  %v2550 = vmax.bf16 %v2486, %v319
  %v2551 = vmax.bf16 %v2487, %v320
  %v2552 = vmax.bf16 %v2488, %v321
  %v2553 = vmax.bf16 %v2489, %v322
  %v2554 = vmax.bf16 %v2490, %v323
  %v2555 = vmax.bf16 %v2491, %v324
  %v2556 = vmax.bf16 %v2492, %v325
  %v2557 = vmax.bf16 %v2493, %v326
  %v2558 = vmax.bf16 %v2494, %v327
  %v2559 = vmax.bf16 %v2495, %v328
  %v2560 = vmax.bf16 %v2496, %v329
  %v2561 = vmax.bf16 %v2497, %v330
  %v2562 = vmax.bf16 %v2498, %v331
  %v2563 = vmax.bf16 %v2499, %v332
  %v2564 = vmax.bf16 %v2500, %v333
  %v2565 = vmax.bf16 %v2501, %v334
  %v2566 = vmax.bf16 %v2502, %v335
  %v2567 = vmax.bf16 %v2503, %v336
  %v2568 = vmax.bf16 %v2504, %v337
  %v2569 = vmax.bf16 %v2505, %v338
  %v2570 = vmax.bf16 %v2506, %v339
  %v2571 = vmax.bf16 %v2507, %v340
  %v2572 = vmax.bf16 %v2508, %v341
  %v2573 = vmax.bf16 %v2509, %v342
  %v2574 = vmax.bf16 %v2510, %v343
  %v2575 = vmax.bf16 %v2511, %v344
  %v2576 = vmax.bf16 %v2512, %v345
  %v2577 = vmax.bf16 %v2513, %v346
  %vm2578 = vcmask 60416
  %2579 = vst.msk [vmem:[%s4] sm:$0xf] %vm2578, %v2514
  %2580 = vst.msk [vmem:[%s4 + $0x4] sm:$0xf] %vm2578, %v2515
  %2581 = vst.msk [vmem:[%s4 + $0x8] sm:$0xf] %vm2578, %v2516
  %2582 = vst.msk [vmem:[%s4 + $0xc] sm:$0xf] %vm2578, %v2517
  %2583 = vst.msk [vmem:[%s4 + $0x10] sm:$0xf] %vm2578, %v2518
  %2584 = vst.msk [vmem:[%s4 + $0x14] sm:$0xf] %vm2578, %v2519
  %2585 = vst.msk [vmem:[%s4 + $0x18] sm:$0xf] %vm2578, %v2520
  %2586 = vst.msk [vmem:[%s4 + $0x1c] sm:$0xf] %vm2578, %v2521
  %2587 = vst.msk [vmem:[%s4 + $0x20] sm:$0xf] %vm2578, %v2522
  %2588 = vst.msk [vmem:[%s4 + $0x24] sm:$0xf] %vm2578, %v2523
  %2589 = vst.msk [vmem:[%s4 + $0x28] sm:$0xf] %vm2578, %v2524
  %2590 = vst.msk [vmem:[%s4 + $0x2c] sm:$0xf] %vm2578, %v2525
  %2591 = vst.msk [vmem:[%s4 + $0x30] sm:$0xf] %vm2578, %v2526
  %2592 = vst.msk [vmem:[%s4 + $0x34] sm:$0xf] %vm2578, %v2527
  %2593 = vst.msk [vmem:[%s4 + $0x38] sm:$0xf] %vm2578, %v2528
  %2594 = vst.msk [vmem:[%s4 + $0x3c] sm:$0xf] %vm2578, %v2529
  %2595 = vst.msk [vmem:[%s4 + $0x40] sm:$0xf] %vm2578, %v2530
  %2596 = vst.msk [vmem:[%s4 + $0x44] sm:$0xf] %vm2578, %v2531
  %2597 = vst.msk [vmem:[%s4 + $0x48] sm:$0xf] %vm2578, %v2532
  %2598 = vst.msk [vmem:[%s4 + $0x4c] sm:$0xf] %vm2578, %v2533
  %2599 = vst.msk [vmem:[%s4 + $0x50] sm:$0xf] %vm2578, %v2534
  %2600 = vst.msk [vmem:[%s4 + $0x54] sm:$0xf] %vm2578, %v2535
  %2601 = vst.msk [vmem:[%s4 + $0x58] sm:$0xf] %vm2578, %v2536
  %2602 = vst.msk [vmem:[%s4 + $0x5c] sm:$0xf] %vm2578, %v2537
  %2603 = vst.msk [vmem:[%s4 + $0x60] sm:$0xf] %vm2578, %v2538
  %2604 = vst.msk [vmem:[%s4 + $0x64] sm:$0xf] %vm2578, %v2539
  %2605 = vst.msk [vmem:[%s4 + $0x68] sm:$0xf] %vm2578, %v2540
  %2606 = vst.msk [vmem:[%s4 + $0x6c] sm:$0xf] %vm2578, %v2541
  %2607 = vst.msk [vmem:[%s4 + $0x70] sm:$0xf] %vm2578, %v2542
  %2608 = vst.msk [vmem:[%s4 + $0x74] sm:$0xf] %vm2578, %v2543
  %2609 = vst.msk [vmem:[%s4 + $0x78] sm:$0xf] %vm2578, %v2544
  %2610 = vst.msk [vmem:[%s4 + $0x7c] sm:$0xf] %vm2578, %v2545
  %2611 = vst.msk [vmem:[%s4 + $0x80] sm:$0xf] %vm2578, %v2546
  %2612 = vst.msk [vmem:[%s4 + $0x84] sm:$0xf] %vm2578, %v2547
  %2613 = vst.msk [vmem:[%s4 + $0x88] sm:$0xf] %vm2578, %v2548
  %2614 = vst.msk [vmem:[%s4 + $0x8c] sm:$0xf] %vm2578, %v2549
  %2615 = vst.msk [vmem:[%s4 + $0x90] sm:$0xf] %vm2578, %v2550
  %2616 = vst.msk [vmem:[%s4 + $0x94] sm:$0xf] %vm2578, %v2551
  %2617 = vst.msk [vmem:[%s4 + $0x98] sm:$0xf] %vm2578, %v2552
  %2618 = vst.msk [vmem:[%s4 + $0x9c] sm:$0xf] %vm2578, %v2553
  %2619 = vst.msk [vmem:[%s4 + $0xa0] sm:$0xf] %vm2578, %v2554
  %2620 = vst.msk [vmem:[%s4 + $0xa4] sm:$0xf] %vm2578, %v2555
  %2621 = vst.msk [vmem:[%s4 + $0xa8] sm:$0xf] %vm2578, %v2556
  %2622 = vst.msk [vmem:[%s4 + $0xac] sm:$0xf] %vm2578, %v2557
  %2623 = vst.msk [vmem:[%s4 + $0xb0] sm:$0xf] %vm2578, %v2558
  %2624 = vst.msk [vmem:[%s4 + $0xb4] sm:$0xf] %vm2578, %v2559
  %2625 = vst.msk [vmem:[%s4 + $0xb8] sm:$0xf] %vm2578, %v2560
  %2626 = vst.msk [vmem:[%s4 + $0xbc] sm:$0xf] %vm2578, %v2561
  %2627 = vst.msk [vmem:[%s4 + $0xc0] sm:$0xf] %vm2578, %v2562
  %2628 = vst.msk [vmem:[%s4 + $0xc4] sm:$0xf] %vm2578, %v2563
  %2629 = vst.msk [vmem:[%s4 + $0xc8] sm:$0xf] %vm2578, %v2564
  %2630 = vst.msk [vmem:[%s4 + $0xcc] sm:$0xf] %vm2578, %v2565
  %2631 = vst.msk [vmem:[%s4 + $0xd0] sm:$0xf] %vm2578, %v2566
  %2632 = vst.msk [vmem:[%s4 + $0xd4] sm:$0xf] %vm2578, %v2567
  %2633 = vst.msk [vmem:[%s4 + $0xd8] sm:$0xf] %vm2578, %v2568
  %2634 = vst.msk [vmem:[%s4 + $0xdc] sm:$0xf] %vm2578, %v2569
  %2635 = vst.msk [vmem:[%s4 + $0xe0] sm:$0xf] %vm2578, %v2570
  %2636 = vst.msk [vmem:[%s4 + $0xe4] sm:$0xf] %vm2578, %v2571
  %2637 = vst.msk [vmem:[%s4 + $0xe8] sm:$0xf] %vm2578, %v2572
  %2638 = vst.msk [vmem:[%s4 + $0xec] sm:$0xf] %vm2578, %v2573
  %2639 = vst.msk [vmem:[%s4 + $0xf0] sm:$0xf] %vm2578, %v2574
  %2640 = vst.msk [vmem:[%s4 + $0xf4] sm:$0xf] %vm2578, %v2575
  %2641 = vst.msk [vmem:[%s4 + $0xf8] sm:$0xf] %vm2578, %v2576
  %2642 = vst.msk [vmem:[%s4 + $0xfc] sm:$0xf] %vm2578, %v2577
  // Predicated region
  $region18: #{resnet18_grouped_forward.23} parent=0 // pred_check
    _
  $region19: #{resnet18_grouped_forward.23} parent=0 // pred_check_branch
    %2644 = sbr.rel (0) target = $region21
  $region20: #{resnet18_grouped_forward.23} parent=0 // pred_region
    _
  $region21: #{resnet18_grouped_forward.23} parent=0 // pred_fallthru
    _
  // Predicated region
  $region22: #{resnet18_grouped_forward.23} parent=0 // pred_check
    _
  $region23: #{resnet18_grouped_forward.23} parent=0 // pred_check_branch
    %2646 = sbr.rel (0) target = $region25
  $region24: #{resnet18_grouped_forward.23} parent=0 // pred_region
    _
  $region25: #{resnet18_grouped_forward.23} parent=0 // pred_fallthru
    _

// kernel: resnet18_grouped_forward.24
$region0: #{resnet18_grouped_forward.24}
  #allocation0 [shape = 'u32[]', space=smem, size = 0x4, offset = 0x4, fixed_abs, tag = 'smem constant byte address 0x4 - core index']
  #allocation1 [shape = 'u32[144,128]{1,0:T(1,128)}', space=vmem, size = 0x12000, scoped, tag = 'internal scratch']
  %s0 = inlined_call_operand.vmem [shape: bf16[512,72], index: 0, kind: input, shape index: {}]
  %s1 = inlined_call_operand.vmem [shape: bf16[72,8], index: 1, kind: input, shape index: {}]
  %s2 = inlined_call_operand.vmem [shape: f32[1,8], index: 2, kind: input, shape index: {}]
  %s3 = inlined_call_operand.vmem [shape: f32[1,8], index: 3, kind: input, shape index: {}]
  %s4 = inlined_call_operand.vmem [shape: bf16[512,8], index: 4, kind: output, shape index: {}]
  %s5 = sld [smem:[#allocation0]]
  $region26: #{resnet18_grouped_forward.24} parent=0
    _
  %s7 = ssub.s32 1, %s5
  %s8 = scalar_select 0, %s7, %s5
  // Predicated region
  $region2: #{resnet18_grouped_forward.24} parent=0 // pred_check
    _
  $region3: #{resnet18_grouped_forward.24} parent=0 // pred_check_branch
    %10 = sbr.rel (0) target = $region5
  $region4: #{resnet18_grouped_forward.24} parent=0 // pred_region
    _
  $region5: #{resnet18_grouped_forward.24} parent=0 // pred_fallthru
    _
  // Predicated region
  $region6: #{resnet18_grouped_forward.24} parent=0 // pred_check
    _
  $region7: #{resnet18_grouped_forward.24} parent=0 // pred_check_branch
    %12 = sbr.rel (0) target = $region9
  $region8: #{resnet18_grouped_forward.24} parent=0 // pred_region
    _
  $region9: #{resnet18_grouped_forward.24} parent=0 // pred_fallthru
    _
  // Predicated region
  $region10: #{resnet18_grouped_forward.24} parent=0 // pred_check
    _
  $region11: #{resnet18_grouped_forward.24} parent=0 // pred_check_branch
    %14 = sbr.rel (0) target = $region13
  $region12: #{resnet18_grouped_forward.24} parent=0 // pred_region
    _
  $region13: #{resnet18_grouped_forward.24} parent=0 // pred_fallthru
    _
  // Predicated region
  $region14: #{resnet18_grouped_forward.24} parent=0 // pred_check
    _
  $region15: #{resnet18_grouped_forward.24} parent=0 // pred_check_branch
    %16 = sbr.rel (0) target = $region17
  $region16: #{resnet18_grouped_forward.24} parent=0 // pred_region
    _
  $region17: #{resnet18_grouped_forward.24} parent=0 // pred_fallthru
    _
  %v18 = vld [vmem:[%s0] sm:$0xf]
  %v19 = vld [vmem:[%s0 + $0x4] sm:$0xf]
  %v20 = vld [vmem:[%s0 + $0x8] sm:$0xf]
  %v21 = vld [vmem:[%s0 + $0xc] sm:$0xf]
  %v22 = vld [vmem:[%s0 + $0x10] sm:$0xf]
  %v23 = vld [vmem:[%s0 + $0x14] sm:$0xf]
  %v24 = vld [vmem:[%s0 + $0x18] sm:$0xf]
  %v25 = vld [vmem:[%s0 + $0x1c] sm:$0xf]
  %v26 = vld [vmem:[%s0 + $0x20] sm:$0xf]
  %v27 = vld [vmem:[%s0 + $0x24] sm:$0xf]
  %v28 = vld [vmem:[%s0 + $0x28] sm:$0xf]
  %v29 = vld [vmem:[%s0 + $0x2c] sm:$0xf]
  %v30 = vld [vmem:[%s0 + $0x30] sm:$0xf]
  %v31 = vld [vmem:[%s0 + $0x34] sm:$0xf]
  %v32 = vld [vmem:[%s0 + $0x38] sm:$0xf]
  %v33 = vld [vmem:[%s0 + $0x3c] sm:$0xf]
  %v34 = vld [vmem:[%s0 + $0x40] sm:$0xf]
  %v35 = vld [vmem:[%s0 + $0x44] sm:$0xf]
  %v36 = vld [vmem:[%s0 + $0x48] sm:$0xf]
  %v37 = vld [vmem:[%s0 + $0x4c] sm:$0xf]
  %v38 = vld [vmem:[%s0 + $0x50] sm:$0xf]
  %v39 = vld [vmem:[%s0 + $0x54] sm:$0xf]
  %v40 = vld [vmem:[%s0 + $0x58] sm:$0xf]
  %v41 = vld [vmem:[%s0 + $0x5c] sm:$0xf]
  %v42 = vld [vmem:[%s0 + $0x60] sm:$0xf]
  %v43 = vld [vmem:[%s0 + $0x64] sm:$0xf]
  %v44 = vld [vmem:[%s0 + $0x68] sm:$0xf]
  %v45 = vld [vmem:[%s0 + $0x6c] sm:$0xf]
  %v46 = vld [vmem:[%s0 + $0x70] sm:$0xf]
  %v47 = vld [vmem:[%s0 + $0x74] sm:$0xf]
  %v48 = vld [vmem:[%s0 + $0x78] sm:$0xf]
  %v49 = vld [vmem:[%s0 + $0x7c] sm:$0xf]
  %v50 = vld [vmem:[%s0 + $0x80] sm:$0xf]
  %v51 = vld [vmem:[%s0 + $0x84] sm:$0xf]
  %v52 = vld [vmem:[%s0 + $0x88] sm:$0xf]
  %v53 = vld [vmem:[%s0 + $0x8c] sm:$0xf]
  %v54 = vld [vmem:[%s0 + $0x90] sm:$0xf]
  %v55 = vld [vmem:[%s0 + $0x94] sm:$0xf]
  %v56 = vld [vmem:[%s0 + $0x98] sm:$0xf]
  %v57 = vld [vmem:[%s0 + $0x9c] sm:$0xf]
  %v58 = vld [vmem:[%s0 + $0xa0] sm:$0xf]
  %v59 = vld [vmem:[%s0 + $0xa4] sm:$0xf]
  %v60 = vld [vmem:[%s0 + $0xa8] sm:$0xf]
  %v61 = vld [vmem:[%s0 + $0xac] sm:$0xf]
  %v62 = vld [vmem:[%s0 + $0xb0] sm:$0xf]
  %v63 = vld [vmem:[%s0 + $0xb4] sm:$0xf]
  %v64 = vld [vmem:[%s0 + $0xb8] sm:$0xf]
  %v65 = vld [vmem:[%s0 + $0xbc] sm:$0xf]
  %v66 = vld [vmem:[%s0 + $0xc0] sm:$0xf]
  %v67 = vld [vmem:[%s0 + $0xc4] sm:$0xf]
  %v68 = vld [vmem:[%s0 + $0xc8] sm:$0xf]
  %v69 = vld [vmem:[%s0 + $0xcc] sm:$0xf]
  %v70 = vld [vmem:[%s0 + $0xd0] sm:$0xf]
  %v71 = vld [vmem:[%s0 + $0xd4] sm:$0xf]
  %v72 = vld [vmem:[%s0 + $0xd8] sm:$0xf]
  %v73 = vld [vmem:[%s0 + $0xdc] sm:$0xf]
  %v74 = vld [vmem:[%s0 + $0xe0] sm:$0xf]
  %v75 = vld [vmem:[%s0 + $0xe4] sm:$0xf]
  %v76 = vld [vmem:[%s0 + $0xe8] sm:$0xf]
  %v77 = vld [vmem:[%s0 + $0xec] sm:$0xf]
  %v78 = vld [vmem:[%s0 + $0xf0] sm:$0xf]
  %v79 = vld [vmem:[%s0 + $0xf4] sm:$0xf]
  %v80 = vld [vmem:[%s0 + $0xf8] sm:$0xf]
  %v81 = vld [vmem:[%s0 + $0xfc] sm:$0xf]
  %v82 = vld [vmem:[%s1] sm:$0xf]
  %v83 = vld [vmem:[%s1 + $0x4] sm:$0xf]
  %v84 = vld [vmem:[%s1 + $0x8] sm:$0xf]
  %v85 = vld [vmem:[%s1 + $0xc] sm:$0xf]
  %v86 = vld [vmem:[%s1 + $0x10] sm:$0xf]
  %v87 = vld [vmem:[%s1 + $0x14] sm:$0xf]
  %v88 = vld [vmem:[%s1 + $0x18] sm:$0xf]
  %v89 = vld [vmem:[%s1 + $0x1c] sm:$0xf]
  %v90 = vld [vmem:[%s1 + $0x20] sm:$0xf]
  %v155 = vunpack.c.l.b16 %v18
  %v156 = vunpack.c.l.b16 %v19
  %v157 = vunpack.c.l.b16 %v20
  %v158 = vunpack.c.l.b16 %v21
  %v159 = vunpack.c.l.b16 %v22
  %v160 = vunpack.c.l.b16 %v23
  %v161 = vunpack.c.l.b16 %v24
  %v162 = vunpack.c.l.b16 %v25
  %v163 = vunpack.c.l.b16 %v26
  %v164 = vunpack.c.l.b16 %v27
  %v165 = vunpack.c.l.b16 %v28
  %v166 = vunpack.c.l.b16 %v29
  %v167 = vunpack.c.l.b16 %v30
  %v168 = vunpack.c.l.b16 %v31
  %v169 = vunpack.c.l.b16 %v32
  %v170 = vunpack.c.l.b16 %v33
  %v171 = vunpack.c.l.b16 %v34
  %v172 = vunpack.c.l.b16 %v35
  %v173 = vunpack.c.l.b16 %v36
  %v174 = vunpack.c.l.b16 %v37
  %v175 = vunpack.c.l.b16 %v38
  %v176 = vunpack.c.l.b16 %v39
  %v177 = vunpack.c.l.b16 %v40
  %v178 = vunpack.c.l.b16 %v41
  %v179 = vunpack.c.l.b16 %v42
  %v180 = vunpack.c.l.b16 %v43
  %v181 = vunpack.c.l.b16 %v44
  %v182 = vunpack.c.l.b16 %v45
  %v183 = vunpack.c.l.b16 %v46
  %v184 = vunpack.c.l.b16 %v47
  %v185 = vunpack.c.l.b16 %v48
  %v186 = vunpack.c.l.b16 %v49
  %v187 = vunpack.c.l.b16 %v50
  %v188 = vunpack.c.l.b16 %v51
  %v189 = vunpack.c.l.b16 %v52
  %v190 = vunpack.c.l.b16 %v53
  %v191 = vunpack.c.l.b16 %v54
  %v192 = vunpack.c.l.b16 %v55
  %v193 = vunpack.c.l.b16 %v56
  %v194 = vunpack.c.l.b16 %v57
  %v195 = vunpack.c.l.b16 %v58
  %v196 = vunpack.c.l.b16 %v59
  %v197 = vunpack.c.l.b16 %v60
  %v198 = vunpack.c.l.b16 %v61
  %v199 = vunpack.c.l.b16 %v62
  %v200 = vunpack.c.l.b16 %v63
  %v201 = vunpack.c.l.b16 %v64
  %v202 = vunpack.c.l.b16 %v65
  %v203 = vunpack.c.l.b16 %v66
  %v204 = vunpack.c.l.b16 %v67
  %v205 = vunpack.c.l.b16 %v68
  %v206 = vunpack.c.l.b16 %v69
  %v207 = vunpack.c.l.b16 %v70
  %v208 = vunpack.c.l.b16 %v71
  %v209 = vunpack.c.l.b16 %v72
  %v210 = vunpack.c.l.b16 %v73
  %v211 = vunpack.c.l.b16 %v74
  %v212 = vunpack.c.l.b16 %v75
  %v213 = vunpack.c.l.b16 %v76
  %v214 = vunpack.c.l.b16 %v77
  %v215 = vunpack.c.l.b16 %v78
  %v216 = vunpack.c.l.b16 %v79
  %v217 = vunpack.c.l.b16 %v80
  %v218 = vunpack.c.l.b16 %v81
  %v219 = vpack.c.b16 %v156, %v155
  %v220 = vpack.c.b16 %v158, %v157
  %v221 = vpack.c.b16 %v160, %v159
  %v222 = vpack.c.b16 %v162, %v161
  %v223 = vpack.c.b16 %v164, %v163
  %v224 = vpack.c.b16 %v166, %v165
  %v225 = vpack.c.b16 %v168, %v167
  %v226 = vpack.c.b16 %v170, %v169
  %v227 = vpack.c.b16 %v172, %v171
  %v228 = vpack.c.b16 %v174, %v173
  %v229 = vpack.c.b16 %v176, %v175
  %v230 = vpack.c.b16 %v178, %v177
  %v231 = vpack.c.b16 %v180, %v179
  %v232 = vpack.c.b16 %v182, %v181
  %v233 = vpack.c.b16 %v184, %v183
  %v234 = vpack.c.b16 %v186, %v185
  %v235 = vpack.c.b16 %v188, %v187
  %v236 = vpack.c.b16 %v190, %v189
  %v237 = vpack.c.b16 %v192, %v191
  %v238 = vpack.c.b16 %v194, %v193
  %v239 = vpack.c.b16 %v196, %v195
  %v240 = vpack.c.b16 %v198, %v197
  %v241 = vpack.c.b16 %v200, %v199
  %v242 = vpack.c.b16 %v202, %v201
  %v243 = vpack.c.b16 %v204, %v203
  %v244 = vpack.c.b16 %v206, %v205
  %v245 = vpack.c.b16 %v208, %v207
  %v246 = vpack.c.b16 %v210, %v209
  %v247 = vpack.c.b16 %v212, %v211
  %v248 = vpack.c.b16 %v214, %v213
  %v249 = vpack.c.b16 %v216, %v215
  %v250 = vpack.c.b16 %v218, %v217
  %v260 = vunpack.c.l.b16 %v82
  %v261 = vunpack.c.l.b16 %v83
  %v262 = vunpack.c.l.b16 %v84
  %v263 = vunpack.c.l.b16 %v85
  %v264 = vunpack.c.l.b16 %v86
  %v265 = vunpack.c.l.b16 %v87
  %v266 = vunpack.c.l.b16 %v88
  %v267 = vunpack.c.l.b16 %v89
  %v268 = vunpack.c.l.b16 %v90
  %v269 = vpack.c.b16 %v261, %v260
  %v270 = vpack.c.b16 %v263, %v262
  %v271 = vpack.c.b16 %v265, %v264
  %v272 = vpack.c.b16 %v267, %v266
  %v273 = vpack.c.b16 %v268, %v268
  %vm278 = vcmask 588800
  %v280 = vsel %vm278, %v219, 0
  %v283 = vsel %vm278, %v220, 0
  %v286 = vsel %vm278, %v221, 0
  %v289 = vsel %vm278, %v222, 0
  %v292 = vsel %vm278, %v223, 0
  %v295 = vsel %vm278, %v224, 0
  %v298 = vsel %vm278, %v225, 0
  %v301 = vsel %vm278, %v226, 0
  %v304 = vsel %vm278, %v227, 0
  %v307 = vsel %vm278, %v228, 0
  %v310 = vsel %vm278, %v229, 0
  %v313 = vsel %vm278, %v230, 0
  %v316 = vsel %vm278, %v231, 0
  %v319 = vsel %vm278, %v232, 0
  %v322 = vsel %vm278, %v233, 0
  %v325 = vsel %vm278, %v234, 0
  %v328 = vsel %vm278, %v235, 0
  %v331 = vsel %vm278, %v236, 0
  %v334 = vsel %vm278, %v237, 0
  %v337 = vsel %vm278, %v238, 0
  %v340 = vsel %vm278, %v239, 0
  %v343 = vsel %vm278, %v240, 0
  %v346 = vsel %vm278, %v241, 0
  %v349 = vsel %vm278, %v242, 0
  %v352 = vsel %vm278, %v243, 0
  %v355 = vsel %vm278, %v244, 0
  %v358 = vsel %vm278, %v245, 0
  %v361 = vsel %vm278, %v246, 0
  %v364 = vsel %vm278, %v247, 0
  %v367 = vsel %vm278, %v248, 0
  %v370 = vsel %vm278, %v249, 0
  %v373 = vsel %vm278, %v250, 0
  %vm375 = vcmask 1043456
  %v377 = vsel %vm375, %v273, 0
  %379 = vmatprep.subr.bf16.mxu0 0
  %380 = vmatpush1.bf16.msra.mxu0 0
  %381 = vmatprep.subr.bf16.mxu0 0
  %382 = vmatpush1.bf16.msra.mxu0 0
  %383 = vmatprep.subr.bf16.mxu0 0
  %384 = vmatpush1.bf16.msra.mxu0 0
  %385 = vmatprep.subr.bf16.mxu0 0
  %386 = vmatpush1.bf16.msra.mxu0 %v377
  %387 = vmatprep.subr.bf16.mxu0 0
  %388 = vmatpush1.bf16.msra.mxu0 %v272
  %389 = vmatprep.subr.bf16.mxu0 0
  %390 = vmatpush1.bf16.msra.mxu0 %v271
  %391 = vmatprep.subr.bf16.mxu0 0
  %392 = vmatpush1.bf16.msra.mxu0 %v270
  %393 = vmatprep.subr.bf16.mxu0 0
  %394 = vmatpush1.bf16.msra.mxu0 %v269
  %395 = vmatprep.subr.bf16.mxu0 0
  %396 = vmatpush2.bf16.msra.mxu0 0
  %397 = vmatprep.subr.bf16.mxu0 0
  %398 = vmatpush2.bf16.msra.mxu0 0
  %399 = vmatprep.subr.bf16.mxu0 0
  %400 = vmatpush2.bf16.msra.mxu0 0
  %401 = vmatprep.subr.bf16.mxu0 0
  %402 = vmatpush2.bf16.msra.mxu0 0
  %403 = vmatprep.subr.bf16.mxu0 0
  %404 = vmatpush2.bf16.msra.mxu0 0
  %405 = vmatprep.subr.bf16.mxu0 0
  %406 = vmatpush2.bf16.msra.mxu0 0
  %407 = vmatprep.subr.bf16.mxu0 0
  %408 = vmatpush2.bf16.msra.mxu0 0
  %409 = vmatprep.subr.bf16.mxu0 0
  %410 = vmatpush2.bf16.msra.mxu0 0
  %411 = vmatprep.mubr.bf16.mxu0 0
  %412 = vmatmul.mubr.bf16.gmra.mxu0 %v280
  %v413 = vpop.f32.mrf.mxu0
  %v414 = vadd.f32 0.0, %v413
  %v415 = vpop.f32.mrf.mxu0
  %v416 = vpop.f32.mrf.mxu0
  %v417 = vadd.f32 0.0, %v416
  %v418 = vpop.f32.mrf.mxu0
  %419 = vmatprep.mubr.bf16.mxu0 0
  %420 = vmatmul.mubr.bf16.gmra.mxu0 %v283
  %v421 = vpop.f32.mrf.mxu0
  %v422 = vadd.f32 0.0, %v421
  %v423 = vpop.f32.mrf.mxu0
  %v424 = vpop.f32.mrf.mxu0
  %v425 = vadd.f32 0.0, %v424
  %v426 = vpop.f32.mrf.mxu0
  %427 = vmatprep.mubr.bf16.mxu0 0
  %428 = vmatmul.mubr.bf16.gmra.mxu0 %v286
  %v429 = vpop.f32.mrf.mxu0
  %v430 = vadd.f32 0.0, %v429
  %v431 = vpop.f32.mrf.mxu0
  %v432 = vpop.f32.mrf.mxu0
  %v433 = vadd.f32 0.0, %v432
  %v434 = vpop.f32.mrf.mxu0
  %435 = vmatprep.mubr.bf16.mxu0 0
  %436 = vmatmul.mubr.bf16.gmra.mxu0 %v289
  %v437 = vpop.f32.mrf.mxu0
  %v438 = vadd.f32 0.0, %v437
  %v439 = vpop.f32.mrf.mxu0
  %v440 = vpop.f32.mrf.mxu0
  %v441 = vadd.f32 0.0, %v440
  %v442 = vpop.f32.mrf.mxu0
  %443 = vmatprep.mubr.bf16.mxu0 0
  %444 = vmatmul.mubr.bf16.gmra.mxu0 %v292
  %v445 = vpop.f32.mrf.mxu0
  %v446 = vadd.f32 0.0, %v445
  %v447 = vpop.f32.mrf.mxu0
  %v448 = vpop.f32.mrf.mxu0
  %v449 = vadd.f32 0.0, %v448
  %v450 = vpop.f32.mrf.mxu0
  %451 = vmatprep.mubr.bf16.mxu0 0
  %452 = vmatmul.mubr.bf16.gmra.mxu0 %v295
  %v453 = vpop.f32.mrf.mxu0
  %v454 = vadd.f32 0.0, %v453
  %v455 = vpop.f32.mrf.mxu0
  %v456 = vpop.f32.mrf.mxu0
  %v457 = vadd.f32 0.0, %v456
  %v458 = vpop.f32.mrf.mxu0
  %459 = vmatprep.mubr.bf16.mxu0 0
  %460 = vmatmul.mubr.bf16.gmra.mxu0 %v298
  %v461 = vpop.f32.mrf.mxu0
  %v462 = vadd.f32 0.0, %v461
  %v463 = vpop.f32.mrf.mxu0
  %v464 = vpop.f32.mrf.mxu0
  %v465 = vadd.f32 0.0, %v464
  %v466 = vpop.f32.mrf.mxu0
  %467 = vmatprep.mubr.bf16.mxu0 0
  %468 = vmatmul.mubr.bf16.gmra.mxu0 %v301
  %v469 = vpop.f32.mrf.mxu0
  %v470 = vadd.f32 0.0, %v469
  %v471 = vpop.f32.mrf.mxu0
  %v472 = vpop.f32.mrf.mxu0
  %v473 = vadd.f32 0.0, %v472
  %v474 = vpop.f32.mrf.mxu0
  %475 = vmatprep.mubr.bf16.mxu0 0
  %476 = vmatmul.mubr.bf16.gmra.mxu0 %v304
  %v477 = vpop.f32.mrf.mxu0
  %v478 = vadd.f32 0.0, %v477
  %v479 = vpop.f32.mrf.mxu0
  %v480 = vpop.f32.mrf.mxu0
  %v481 = vadd.f32 0.0, %v480
  %v482 = vpop.f32.mrf.mxu0
  %483 = vmatprep.mubr.bf16.mxu0 0
  %484 = vmatmul.mubr.bf16.gmra.mxu0 %v307
  %v485 = vpop.f32.mrf.mxu0
  %v486 = vadd.f32 0.0, %v485
  %v487 = vpop.f32.mrf.mxu0
  %v488 = vpop.f32.mrf.mxu0
  %v489 = vadd.f32 0.0, %v488
  %v490 = vpop.f32.mrf.mxu0
  %491 = vmatprep.mubr.bf16.mxu0 0
  %492 = vmatmul.mubr.bf16.gmra.mxu0 %v310
  %v493 = vpop.f32.mrf.mxu0
  %v494 = vadd.f32 0.0, %v493
  %v495 = vpop.f32.mrf.mxu0
  %v496 = vpop.f32.mrf.mxu0
  %v497 = vadd.f32 0.0, %v496
  %v498 = vpop.f32.mrf.mxu0
  %499 = vmatprep.mubr.bf16.mxu0 0
  %500 = vmatmul.mubr.bf16.gmra.mxu0 %v313
  %v501 = vpop.f32.mrf.mxu0
  %v502 = vadd.f32 0.0, %v501
  %v503 = vpop.f32.mrf.mxu0
  %v504 = vpop.f32.mrf.mxu0
  %v505 = vadd.f32 0.0, %v504
  %v506 = vpop.f32.mrf.mxu0
  %507 = vmatprep.mubr.bf16.mxu0 0
  %508 = vmatmul.mubr.bf16.gmra.mxu0 %v316
  %v509 = vpop.f32.mrf.mxu0
  %v510 = vadd.f32 0.0, %v509
  %v511 = vpop.f32.mrf.mxu0
  %v512 = vpop.f32.mrf.mxu0
  %v513 = vadd.f32 0.0, %v512
  %v514 = vpop.f32.mrf.mxu0
  %515 = vmatprep.mubr.bf16.mxu0 0
  %516 = vmatmul.mubr.bf16.gmra.mxu0 %v319
  %v517 = vpop.f32.mrf.mxu0
  %v518 = vadd.f32 0.0, %v517
  %v519 = vpop.f32.mrf.mxu0
  %v520 = vpop.f32.mrf.mxu0
  %v521 = vadd.f32 0.0, %v520
  %v522 = vpop.f32.mrf.mxu0
  %523 = vmatprep.mubr.bf16.mxu0 0
  %524 = vmatmul.mubr.bf16.gmra.mxu0 %v322
  %v525 = vpop.f32.mrf.mxu0
  %v526 = vadd.f32 0.0, %v525
  %v527 = vpop.f32.mrf.mxu0
  %v528 = vpop.f32.mrf.mxu0
  %v529 = vadd.f32 0.0, %v528
  %v530 = vpop.f32.mrf.mxu0
  %531 = vmatprep.mubr.bf16.mxu0 0
  %532 = vmatmul.mubr.bf16.gmra.mxu0 %v325
  %v533 = vpop.f32.mrf.mxu0
  %v534 = vadd.f32 0.0, %v533
  %v535 = vpop.f32.mrf.mxu0
  %v536 = vpop.f32.mrf.mxu0
  %v537 = vadd.f32 0.0, %v536
  %v538 = vpop.f32.mrf.mxu0
  %539 = vmatprep.mubr.bf16.mxu0 0
  %540 = vmatmul.mubr.bf16.gmra.mxu0 %v328
  %v541 = vpop.f32.mrf.mxu0
  %v542 = vadd.f32 0.0, %v541
  %v543 = vpop.f32.mrf.mxu0
  %v544 = vpop.f32.mrf.mxu0
  %v545 = vadd.f32 0.0, %v544
  %v546 = vpop.f32.mrf.mxu0
  %547 = vmatprep.mubr.bf16.mxu0 0
  %548 = vmatmul.mubr.bf16.gmra.mxu0 %v331
  %v549 = vpop.f32.mrf.mxu0
  %v550 = vadd.f32 0.0, %v549
  %v551 = vpop.f32.mrf.mxu0
  %v552 = vpop.f32.mrf.mxu0
  %v553 = vadd.f32 0.0, %v552
  %v554 = vpop.f32.mrf.mxu0
  %555 = vmatprep.mubr.bf16.mxu0 0
  %556 = vmatmul.mubr.bf16.gmra.mxu0 %v334
  %v557 = vpop.f32.mrf.mxu0
  %v558 = vadd.f32 0.0, %v557
  %v559 = vpop.f32.mrf.mxu0
  %v560 = vpop.f32.mrf.mxu0
  %v561 = vadd.f32 0.0, %v560
  %v562 = vpop.f32.mrf.mxu0
  %563 = vmatprep.mubr.bf16.mxu0 0
  %564 = vmatmul.mubr.bf16.gmra.mxu0 %v337
  %v565 = vpop.f32.mrf.mxu0
  %v566 = vadd.f32 0.0, %v565
  %v567 = vpop.f32.mrf.mxu0
  %v568 = vpop.f32.mrf.mxu0
  %v569 = vadd.f32 0.0, %v568
  %v570 = vpop.f32.mrf.mxu0
  %571 = vmatprep.mubr.bf16.mxu0 0
  %572 = vmatmul.mubr.bf16.gmra.mxu0 %v340
  %v573 = vpop.f32.mrf.mxu0
  %v574 = vadd.f32 0.0, %v573
  %v575 = vpop.f32.mrf.mxu0
  %v576 = vpop.f32.mrf.mxu0
  %v577 = vadd.f32 0.0, %v576
  %v578 = vpop.f32.mrf.mxu0
  %579 = vmatprep.mubr.bf16.mxu0 0
  %580 = vmatmul.mubr.bf16.gmra.mxu0 %v343
  %v581 = vpop.f32.mrf.mxu0
  %v582 = vadd.f32 0.0, %v581
  %v583 = vpop.f32.mrf.mxu0
  %v584 = vpop.f32.mrf.mxu0
  %v585 = vadd.f32 0.0, %v584
  %v586 = vpop.f32.mrf.mxu0
  %587 = vmatprep.mubr.bf16.mxu0 0
  %588 = vmatmul.mubr.bf16.gmra.mxu0 %v346
  %v589 = vpop.f32.mrf.mxu0
  %v590 = vadd.f32 0.0, %v589
  %v591 = vpop.f32.mrf.mxu0
  %v592 = vpop.f32.mrf.mxu0
  %v593 = vadd.f32 0.0, %v592
  %v594 = vpop.f32.mrf.mxu0
  %595 = vmatprep.mubr.bf16.mxu0 0
  %596 = vmatmul.mubr.bf16.gmra.mxu0 %v349
  %v597 = vpop.f32.mrf.mxu0
  %v598 = vadd.f32 0.0, %v597
  %v599 = vpop.f32.mrf.mxu0
  %v600 = vpop.f32.mrf.mxu0
  %v601 = vadd.f32 0.0, %v600
  %v602 = vpop.f32.mrf.mxu0
  %603 = vmatprep.mubr.bf16.mxu0 0
  %604 = vmatmul.mubr.bf16.gmra.mxu0 %v352
  %v605 = vpop.f32.mrf.mxu0
  %v606 = vadd.f32 0.0, %v605
  %v607 = vpop.f32.mrf.mxu0
  %v608 = vpop.f32.mrf.mxu0
  %v609 = vadd.f32 0.0, %v608
  %v610 = vpop.f32.mrf.mxu0
  %611 = vmatprep.mubr.bf16.mxu0 0
  %612 = vmatmul.mubr.bf16.gmra.mxu0 %v355
  %v613 = vpop.f32.mrf.mxu0
  %v614 = vadd.f32 0.0, %v613
  %v615 = vpop.f32.mrf.mxu0
  %v616 = vpop.f32.mrf.mxu0
  %v617 = vadd.f32 0.0, %v616
  %v618 = vpop.f32.mrf.mxu0
  %619 = vmatprep.mubr.bf16.mxu0 0
  %620 = vmatmul.mubr.bf16.gmra.mxu0 %v358
  %v621 = vpop.f32.mrf.mxu0
  %v622 = vadd.f32 0.0, %v621
  %v623 = vpop.f32.mrf.mxu0
  %v624 = vpop.f32.mrf.mxu0
  %v625 = vadd.f32 0.0, %v624
  %v626 = vpop.f32.mrf.mxu0
  %627 = vmatprep.mubr.bf16.mxu0 0
  %628 = vmatmul.mubr.bf16.gmra.mxu0 %v361
  %v629 = vpop.f32.mrf.mxu0
  %v630 = vadd.f32 0.0, %v629
  %v631 = vpop.f32.mrf.mxu0
  %v632 = vpop.f32.mrf.mxu0
  %v633 = vadd.f32 0.0, %v632
  %v634 = vpop.f32.mrf.mxu0
  %635 = vmatprep.mubr.bf16.mxu0 0
  %636 = vmatmul.mubr.bf16.gmra.mxu0 %v364
  %v637 = vpop.f32.mrf.mxu0
  %v638 = vadd.f32 0.0, %v637
  %v639 = vpop.f32.mrf.mxu0
  %v640 = vpop.f32.mrf.mxu0
  %v641 = vadd.f32 0.0, %v640
  %v642 = vpop.f32.mrf.mxu0
  %643 = vmatprep.mubr.bf16.mxu0 0
  %644 = vmatmul.mubr.bf16.gmra.mxu0 %v367
  %v645 = vpop.f32.mrf.mxu0
  %v646 = vadd.f32 0.0, %v645
  %v647 = vpop.f32.mrf.mxu0
  %v648 = vpop.f32.mrf.mxu0
  %v649 = vadd.f32 0.0, %v648
  %v650 = vpop.f32.mrf.mxu0
  %651 = vmatprep.mubr.bf16.mxu0 0
  %652 = vmatmul.mubr.bf16.gmra.mxu0 %v370
  %v653 = vpop.f32.mrf.mxu0
  %v654 = vadd.f32 0.0, %v653
  %v655 = vpop.f32.mrf.mxu0
  %v656 = vpop.f32.mrf.mxu0
  %v657 = vadd.f32 0.0, %v656
  %v658 = vpop.f32.mrf.mxu0
  %659 = vmatprep.mubr.bf16.mxu0 0
  %660 = vmatmul.mubr.bf16.gmra.mxu0 %v373
  %v661 = vpop.f32.mrf.mxu0
  %v662 = vadd.f32 0.0, %v661
  %v663 = vpop.f32.mrf.mxu0
  %v664 = vpop.f32.mrf.mxu0
  %v665 = vadd.f32 0.0, %v664
  %v666 = vpop.f32.mrf.mxu0
  %667 = vdwg.mxu0
  %v668 = vld [vmem:[%s2] sm:$0x1]
  %v670 = vlaneseq
  %v671 = vshrl.u32 %v670, 7
  %v672 = vsub.s32 0, %v671
  %v673 = vrot.slane %v668, %v672
  %v675 = vmul.f32 %v414, %v673
  %v676 = vmul.f32 %v417, %v673
  %v677 = vmul.f32 %v422, %v673
  %v678 = vmul.f32 %v425, %v673
  %v679 = vmul.f32 %v430, %v673
  %v680 = vmul.f32 %v433, %v673
  %v681 = vmul.f32 %v438, %v673
  %v682 = vmul.f32 %v441, %v673
  %v683 = vmul.f32 %v446, %v673
  %v684 = vmul.f32 %v449, %v673
  %v685 = vmul.f32 %v454, %v673
  %v686 = vmul.f32 %v457, %v673
  %v687 = vmul.f32 %v462, %v673
  %v688 = vmul.f32 %v465, %v673
  %v689 = vmul.f32 %v470, %v673
  %v690 = vmul.f32 %v473, %v673
  %v691 = vmul.f32 %v478, %v673
  %v692 = vmul.f32 %v481, %v673
  %v693 = vmul.f32 %v486, %v673
  %v694 = vmul.f32 %v489, %v673
  %v695 = vmul.f32 %v494, %v673
  %v696 = vmul.f32 %v497, %v673
  %v697 = vmul.f32 %v502, %v673
  %v698 = vmul.f32 %v505, %v673
  %v699 = vmul.f32 %v510, %v673
  %v700 = vmul.f32 %v513, %v673
  %v701 = vmul.f32 %v518, %v673
  %v702 = vmul.f32 %v521, %v673
  %v703 = vmul.f32 %v526, %v673
  %v704 = vmul.f32 %v529, %v673
  %v705 = vmul.f32 %v534, %v673
  %v706 = vmul.f32 %v537, %v673
  %v707 = vmul.f32 %v542, %v673
  %v708 = vmul.f32 %v545, %v673
  %v709 = vmul.f32 %v550, %v673
  %v710 = vmul.f32 %v553, %v673
  %v711 = vmul.f32 %v558, %v673
  %v712 = vmul.f32 %v561, %v673
  %v713 = vmul.f32 %v566, %v673
  %v714 = vmul.f32 %v569, %v673
  %v715 = vmul.f32 %v574, %v673
  %v716 = vmul.f32 %v577, %v673
  %v717 = vmul.f32 %v582, %v673
  %v718 = vmul.f32 %v585, %v673
  %v719 = vmul.f32 %v590, %v673
  %v720 = vmul.f32 %v593, %v673
  %v721 = vmul.f32 %v598, %v673
  %v722 = vmul.f32 %v601, %v673
  %v723 = vmul.f32 %v606, %v673
  %v724 = vmul.f32 %v609, %v673
  %v725 = vmul.f32 %v614, %v673
  %v726 = vmul.f32 %v617, %v673
  %v727 = vmul.f32 %v622, %v673
  %v728 = vmul.f32 %v625, %v673
  %v729 = vmul.f32 %v630, %v673
  %v730 = vmul.f32 %v633, %v673
  %v731 = vmul.f32 %v638, %v673
  %v732 = vmul.f32 %v641, %v673
  %v733 = vmul.f32 %v646, %v673
  %v734 = vmul.f32 %v649, %v673
  %v735 = vmul.f32 %v654, %v673
  %v736 = vmul.f32 %v657, %v673
  %v737 = vmul.f32 %v662, %v673
  %v738 = vmul.f32 %v665, %v673
  %v739 = vld [vmem:[%s3] sm:$0x1]
  %v741 = vlaneseq
  %v742 = vshrl.u32 %v741, 7
  %v743 = vsub.s32 0, %v742
  %v744 = vrot.slane %v739, %v743
  %v746 = vadd.f32 %v675, %v744
  %v747 = vadd.f32 %v676, %v744
  %v748 = vadd.f32 %v677, %v744
  %v749 = vadd.f32 %v678, %v744
  %v750 = vadd.f32 %v679, %v744
  %v751 = vadd.f32 %v680, %v744
  %v752 = vadd.f32 %v681, %v744
  %v753 = vadd.f32 %v682, %v744
  %v754 = vadd.f32 %v683, %v744
  %v755 = vadd.f32 %v684, %v744
  %v756 = vadd.f32 %v685, %v744
  %v757 = vadd.f32 %v686, %v744
  %v758 = vadd.f32 %v687, %v744
  %v759 = vadd.f32 %v688, %v744
  %v760 = vadd.f32 %v689, %v744
  %v761 = vadd.f32 %v690, %v744
  %v762 = vadd.f32 %v691, %v744
  %v763 = vadd.f32 %v692, %v744
  %v764 = vadd.f32 %v693, %v744
  %v765 = vadd.f32 %v694, %v744
  %v766 = vadd.f32 %v695, %v744
  %v767 = vadd.f32 %v696, %v744
  %v768 = vadd.f32 %v697, %v744
  %v769 = vadd.f32 %v698, %v744
  %v770 = vadd.f32 %v699, %v744
  %v771 = vadd.f32 %v700, %v744
  %v772 = vadd.f32 %v701, %v744
  %v773 = vadd.f32 %v702, %v744
  %v774 = vadd.f32 %v703, %v744
  %v775 = vadd.f32 %v704, %v744
  %v776 = vadd.f32 %v705, %v744
  %v777 = vadd.f32 %v706, %v744
  %v778 = vadd.f32 %v707, %v744
  %v779 = vadd.f32 %v708, %v744
  %v780 = vadd.f32 %v709, %v744
  %v781 = vadd.f32 %v710, %v744
  %v782 = vadd.f32 %v711, %v744
  %v783 = vadd.f32 %v712, %v744
  %v784 = vadd.f32 %v713, %v744
  %v785 = vadd.f32 %v714, %v744
  %v786 = vadd.f32 %v715, %v744
  %v787 = vadd.f32 %v716, %v744
  %v788 = vadd.f32 %v717, %v744
  %v789 = vadd.f32 %v718, %v744
  %v790 = vadd.f32 %v719, %v744
  %v791 = vadd.f32 %v720, %v744
  %v792 = vadd.f32 %v721, %v744
  %v793 = vadd.f32 %v722, %v744
  %v794 = vadd.f32 %v723, %v744
  %v795 = vadd.f32 %v724, %v744
  %v796 = vadd.f32 %v725, %v744
  %v797 = vadd.f32 %v726, %v744
  %v798 = vadd.f32 %v727, %v744
  %v799 = vadd.f32 %v728, %v744
  %v800 = vadd.f32 %v729, %v744
  %v801 = vadd.f32 %v730, %v744
  %v802 = vadd.f32 %v731, %v744
  %v803 = vadd.f32 %v732, %v744
  %v804 = vadd.f32 %v733, %v744
  %v805 = vadd.f32 %v734, %v744
  %v806 = vadd.f32 %v735, %v744
  %v807 = vadd.f32 %v736, %v744
  %v808 = vadd.f32 %v737, %v744
  %v809 = vadd.f32 %v738, %v744
  %v810 = vmax.f32 %v746, 0.0
  %v811 = vmax.f32 %v747, 0.0
  %v812 = vmax.f32 %v748, 0.0
  %v813 = vmax.f32 %v749, 0.0
  %v814 = vmax.f32 %v750, 0.0
  %v815 = vmax.f32 %v751, 0.0
  %v816 = vmax.f32 %v752, 0.0
  %v817 = vmax.f32 %v753, 0.0
  %v818 = vmax.f32 %v754, 0.0
  %v819 = vmax.f32 %v755, 0.0
  %v820 = vmax.f32 %v756, 0.0
  %v821 = vmax.f32 %v757, 0.0
  %v822 = vmax.f32 %v758, 0.0
  %v823 = vmax.f32 %v759, 0.0
  %v824 = vmax.f32 %v760, 0.0
  %v825 = vmax.f32 %v761, 0.0
  %v826 = vmax.f32 %v762, 0.0
  %v827 = vmax.f32 %v763, 0.0
  %v828 = vmax.f32 %v764, 0.0
  %v829 = vmax.f32 %v765, 0.0
  %v830 = vmax.f32 %v766, 0.0
  %v831 = vmax.f32 %v767, 0.0
  %v832 = vmax.f32 %v768, 0.0
  %v833 = vmax.f32 %v769, 0.0
  %v834 = vmax.f32 %v770, 0.0
  %v835 = vmax.f32 %v771, 0.0
  %v836 = vmax.f32 %v772, 0.0
  %v837 = vmax.f32 %v773, 0.0
  %v838 = vmax.f32 %v774, 0.0
  %v839 = vmax.f32 %v775, 0.0
  %v840 = vmax.f32 %v776, 0.0
  %v841 = vmax.f32 %v777, 0.0
  %v842 = vmax.f32 %v778, 0.0
  %v843 = vmax.f32 %v779, 0.0
  %v844 = vmax.f32 %v780, 0.0
  %v845 = vmax.f32 %v781, 0.0
  %v846 = vmax.f32 %v782, 0.0
  %v847 = vmax.f32 %v783, 0.0
  %v848 = vmax.f32 %v784, 0.0
  %v849 = vmax.f32 %v785, 0.0
  %v850 = vmax.f32 %v786, 0.0
  %v851 = vmax.f32 %v787, 0.0
  %v852 = vmax.f32 %v788, 0.0
  %v853 = vmax.f32 %v789, 0.0
  %v854 = vmax.f32 %v790, 0.0
  %v855 = vmax.f32 %v791, 0.0
  %v856 = vmax.f32 %v792, 0.0
  %v857 = vmax.f32 %v793, 0.0
  %v858 = vmax.f32 %v794, 0.0
  %v859 = vmax.f32 %v795, 0.0
  %v860 = vmax.f32 %v796, 0.0
  %v861 = vmax.f32 %v797, 0.0
  %v862 = vmax.f32 %v798, 0.0
  %v863 = vmax.f32 %v799, 0.0
  %v864 = vmax.f32 %v800, 0.0
  %v865 = vmax.f32 %v801, 0.0
  %v866 = vmax.f32 %v802, 0.0
  %v867 = vmax.f32 %v803, 0.0
  %v868 = vmax.f32 %v804, 0.0
  %v869 = vmax.f32 %v805, 0.0
  %v870 = vmax.f32 %v806, 0.0
  %v871 = vmax.f32 %v807, 0.0
  %v872 = vmax.f32 %v808, 0.0
  %v873 = vmax.f32 %v809, 0.0
  %v874 = vpack.c.bf16 %v811, %v810
  %v875 = vpack.c.bf16 %v813, %v812
  %v876 = vpack.c.bf16 %v815, %v814
  %v877 = vpack.c.bf16 %v817, %v816
  %v878 = vpack.c.bf16 %v819, %v818
  %v879 = vpack.c.bf16 %v821, %v820
  %v880 = vpack.c.bf16 %v823, %v822
  %v881 = vpack.c.bf16 %v825, %v824
  %v882 = vpack.c.bf16 %v827, %v826
  %v883 = vpack.c.bf16 %v829, %v828
  %v884 = vpack.c.bf16 %v831, %v830
  %v885 = vpack.c.bf16 %v833, %v832
  %v886 = vpack.c.bf16 %v835, %v834
  %v887 = vpack.c.bf16 %v837, %v836
  %v888 = vpack.c.bf16 %v839, %v838
  %v889 = vpack.c.bf16 %v841, %v840
  %v890 = vpack.c.bf16 %v843, %v842
  %v891 = vpack.c.bf16 %v845, %v844
  %v892 = vpack.c.bf16 %v847, %v846
  %v893 = vpack.c.bf16 %v849, %v848
  %v894 = vpack.c.bf16 %v851, %v850
  %v895 = vpack.c.bf16 %v853, %v852
  %v896 = vpack.c.bf16 %v855, %v854
  %v897 = vpack.c.bf16 %v857, %v856
  %v898 = vpack.c.bf16 %v859, %v858
  %v899 = vpack.c.bf16 %v861, %v860
  %v900 = vpack.c.bf16 %v863, %v862
  %v901 = vpack.c.bf16 %v865, %v864
  %v902 = vpack.c.bf16 %v867, %v866
  %v903 = vpack.c.bf16 %v869, %v868
  %v904 = vpack.c.bf16 %v871, %v870
  %v905 = vpack.c.bf16 %v873, %v872
  %v938 = vunpack.c.l.b16 %v874
  %v939 = vunpack.c.h.b16 %v874
  %v940 = vunpack.c.l.b16 %v875
  %v941 = vunpack.c.h.b16 %v875
  %v942 = vunpack.c.l.b16 %v876
  %v943 = vunpack.c.h.b16 %v876
  %v944 = vunpack.c.l.b16 %v877
  %v945 = vunpack.c.h.b16 %v877
  %v946 = vunpack.c.l.b16 %v878
  %v947 = vunpack.c.h.b16 %v878
  %v948 = vunpack.c.l.b16 %v879
  %v949 = vunpack.c.h.b16 %v879
  %v950 = vunpack.c.l.b16 %v880
  %v951 = vunpack.c.h.b16 %v880
  %v952 = vunpack.c.l.b16 %v881
  %v953 = vunpack.c.h.b16 %v881
  %v954 = vunpack.c.l.b16 %v882
  %v955 = vunpack.c.h.b16 %v882
  %v956 = vunpack.c.l.b16 %v883
  %v957 = vunpack.c.h.b16 %v883
  %v958 = vunpack.c.l.b16 %v884
  %v959 = vunpack.c.h.b16 %v884
  %v960 = vunpack.c.l.b16 %v885
  %v961 = vunpack.c.h.b16 %v885
  %v962 = vunpack.c.l.b16 %v886
  %v963 = vunpack.c.h.b16 %v886
  %v964 = vunpack.c.l.b16 %v887
  %v965 = vunpack.c.h.b16 %v887
  %v966 = vunpack.c.l.b16 %v888
  %v967 = vunpack.c.h.b16 %v888
  %v968 = vunpack.c.l.b16 %v889
  %v969 = vunpack.c.h.b16 %v889
  %v970 = vunpack.c.l.b16 %v890
  %v971 = vunpack.c.h.b16 %v890
  %v972 = vunpack.c.l.b16 %v891
  %v973 = vunpack.c.h.b16 %v891
  %v974 = vunpack.c.l.b16 %v892
  %v975 = vunpack.c.h.b16 %v892
  %v976 = vunpack.c.l.b16 %v893
  %v977 = vunpack.c.h.b16 %v893
  %v978 = vunpack.c.l.b16 %v894
  %v979 = vunpack.c.h.b16 %v894
  %v980 = vunpack.c.l.b16 %v895
  %v981 = vunpack.c.h.b16 %v895
  %v982 = vunpack.c.l.b16 %v896
  %v983 = vunpack.c.h.b16 %v896
  %v984 = vunpack.c.l.b16 %v897
  %v985 = vunpack.c.h.b16 %v897
  %v986 = vunpack.c.l.b16 %v898
  %v987 = vunpack.c.h.b16 %v898
  %v988 = vunpack.c.l.b16 %v899
  %v989 = vunpack.c.h.b16 %v899
  %v990 = vunpack.c.l.b16 %v900
  %v991 = vunpack.c.h.b16 %v900
  %v992 = vunpack.c.l.b16 %v901
  %v993 = vunpack.c.h.b16 %v901
  %v994 = vunpack.c.l.b16 %v902
  %v995 = vunpack.c.h.b16 %v902
  %v996 = vunpack.c.l.b16 %v903
  %v997 = vunpack.c.h.b16 %v903
  %v998 = vunpack.c.l.b16 %v904
  %v999 = vunpack.c.h.b16 %v904
  %v1000 = vunpack.c.l.b16 %v905
  %v1001 = vunpack.c.h.b16 %v905
  %v1002 = vpack.c.b16 %v938, %v938
  %v1003 = vpack.c.b16 %v939, %v939
  %v1004 = vpack.c.b16 %v940, %v940
  %v1005 = vpack.c.b16 %v941, %v941
  %v1006 = vpack.c.b16 %v942, %v942
  %v1007 = vpack.c.b16 %v943, %v943
  %v1008 = vpack.c.b16 %v944, %v944
  %v1009 = vpack.c.b16 %v945, %v945
  %v1010 = vpack.c.b16 %v946, %v946
  %v1011 = vpack.c.b16 %v947, %v947
  %v1012 = vpack.c.b16 %v948, %v948
  %v1013 = vpack.c.b16 %v949, %v949
  %v1014 = vpack.c.b16 %v950, %v950
  %v1015 = vpack.c.b16 %v951, %v951
  %v1016 = vpack.c.b16 %v952, %v952
  %v1017 = vpack.c.b16 %v953, %v953
  %v1018 = vpack.c.b16 %v954, %v954
  %v1019 = vpack.c.b16 %v955, %v955
  %v1020 = vpack.c.b16 %v956, %v956
  %v1021 = vpack.c.b16 %v957, %v957
  %v1022 = vpack.c.b16 %v958, %v958
  %v1023 = vpack.c.b16 %v959, %v959
  %v1024 = vpack.c.b16 %v960, %v960
  %v1025 = vpack.c.b16 %v961, %v961
  %v1026 = vpack.c.b16 %v962, %v962
  %v1027 = vpack.c.b16 %v963, %v963
  %v1028 = vpack.c.b16 %v964, %v964
  %v1029 = vpack.c.b16 %v965, %v965
  %v1030 = vpack.c.b16 %v966, %v966
  %v1031 = vpack.c.b16 %v967, %v967
  %v1032 = vpack.c.b16 %v968, %v968
  %v1033 = vpack.c.b16 %v969, %v969
  %v1034 = vpack.c.b16 %v970, %v970
  %v1035 = vpack.c.b16 %v971, %v971
  %v1036 = vpack.c.b16 %v972, %v972
  %v1037 = vpack.c.b16 %v973, %v973
  %v1038 = vpack.c.b16 %v974, %v974
  %v1039 = vpack.c.b16 %v975, %v975
  %v1040 = vpack.c.b16 %v976, %v976
  %v1041 = vpack.c.b16 %v977, %v977
  %v1042 = vpack.c.b16 %v978, %v978
  %v1043 = vpack.c.b16 %v979, %v979
  %v1044 = vpack.c.b16 %v980, %v980
  %v1045 = vpack.c.b16 %v981, %v981
  %v1046 = vpack.c.b16 %v982, %v982
  %v1047 = vpack.c.b16 %v983, %v983
  %v1048 = vpack.c.b16 %v984, %v984
  %v1049 = vpack.c.b16 %v985, %v985
  %v1050 = vpack.c.b16 %v986, %v986
  %v1051 = vpack.c.b16 %v987, %v987
  %v1052 = vpack.c.b16 %v988, %v988
  %v1053 = vpack.c.b16 %v989, %v989
  %v1054 = vpack.c.b16 %v990, %v990
  %v1055 = vpack.c.b16 %v991, %v991
  %v1056 = vpack.c.b16 %v992, %v992
  %v1057 = vpack.c.b16 %v993, %v993
  %v1058 = vpack.c.b16 %v994, %v994
  %v1059 = vpack.c.b16 %v995, %v995
  %v1060 = vpack.c.b16 %v996, %v996
  %v1061 = vpack.c.b16 %v997, %v997
  %v1062 = vpack.c.b16 %v998, %v998
  %v1063 = vpack.c.b16 %v999, %v999
  %v1064 = vpack.c.b16 %v1000, %v1000
  %v1065 = vpack.c.b16 %v1001, %v1001
  %vm1130 = vcmask 60416
  %1131 = vst.msk [vmem:[%s4] sm:$0xf] %vm1130, %v1002
  %1132 = vst.msk [vmem:[%s4 + $0x4] sm:$0xf] %vm1130, %v1003
  %1133 = vst.msk [vmem:[%s4 + $0x8] sm:$0xf] %vm1130, %v1004
  %1134 = vst.msk [vmem:[%s4 + $0xc] sm:$0xf] %vm1130, %v1005
  %1135 = vst.msk [vmem:[%s4 + $0x10] sm:$0xf] %vm1130, %v1006
  %1136 = vst.msk [vmem:[%s4 + $0x14] sm:$0xf] %vm1130, %v1007
  %1137 = vst.msk [vmem:[%s4 + $0x18] sm:$0xf] %vm1130, %v1008
  %1138 = vst.msk [vmem:[%s4 + $0x1c] sm:$0xf] %vm1130, %v1009
  %1139 = vst.msk [vmem:[%s4 + $0x20] sm:$0xf] %vm1130, %v1010
  %1140 = vst.msk [vmem:[%s4 + $0x24] sm:$0xf] %vm1130, %v1011
  %1141 = vst.msk [vmem:[%s4 + $0x28] sm:$0xf] %vm1130, %v1012
  %1142 = vst.msk [vmem:[%s4 + $0x2c] sm:$0xf] %vm1130, %v1013
  %1143 = vst.msk [vmem:[%s4 + $0x30] sm:$0xf] %vm1130, %v1014
  %1144 = vst.msk [vmem:[%s4 + $0x34] sm:$0xf] %vm1130, %v1015
  %1145 = vst.msk [vmem:[%s4 + $0x38] sm:$0xf] %vm1130, %v1016
  %1146 = vst.msk [vmem:[%s4 + $0x3c] sm:$0xf] %vm1130, %v1017
  %1147 = vst.msk [vmem:[%s4 + $0x40] sm:$0xf] %vm1130, %v1018
  %1148 = vst.msk [vmem:[%s4 + $0x44] sm:$0xf] %vm1130, %v1019
  %1149 = vst.msk [vmem:[%s4 + $0x48] sm:$0xf] %vm1130, %v1020
  %1150 = vst.msk [vmem:[%s4 + $0x4c] sm:$0xf] %vm1130, %v1021
  %1151 = vst.msk [vmem:[%s4 + $0x50] sm:$0xf] %vm1130, %v1022
  %1152 = vst.msk [vmem:[%s4 + $0x54] sm:$0xf] %vm1130, %v1023
  %1153 = vst.msk [vmem:[%s4 + $0x58] sm:$0xf] %vm1130, %v1024
  %1154 = vst.msk [vmem:[%s4 + $0x5c] sm:$0xf] %vm1130, %v1025
  %1155 = vst.msk [vmem:[%s4 + $0x60] sm:$0xf] %vm1130, %v1026
  %1156 = vst.msk [vmem:[%s4 + $0x64] sm:$0xf] %vm1130, %v1027
  %1157 = vst.msk [vmem:[%s4 + $0x68] sm:$0xf] %vm1130, %v1028
  %1158 = vst.msk [vmem:[%s4 + $0x6c] sm:$0xf] %vm1130, %v1029
  %1159 = vst.msk [vmem:[%s4 + $0x70] sm:$0xf] %vm1130, %v1030
  %1160 = vst.msk [vmem:[%s4 + $0x74] sm:$0xf] %vm1130, %v1031
  %1161 = vst.msk [vmem:[%s4 + $0x78] sm:$0xf] %vm1130, %v1032
  %1162 = vst.msk [vmem:[%s4 + $0x7c] sm:$0xf] %vm1130, %v1033
  %1163 = vst.msk [vmem:[%s4 + $0x80] sm:$0xf] %vm1130, %v1034
  %1164 = vst.msk [vmem:[%s4 + $0x84] sm:$0xf] %vm1130, %v1035
  %1165 = vst.msk [vmem:[%s4 + $0x88] sm:$0xf] %vm1130, %v1036
  %1166 = vst.msk [vmem:[%s4 + $0x8c] sm:$0xf] %vm1130, %v1037
  %1167 = vst.msk [vmem:[%s4 + $0x90] sm:$0xf] %vm1130, %v1038
  %1168 = vst.msk [vmem:[%s4 + $0x94] sm:$0xf] %vm1130, %v1039
  %1169 = vst.msk [vmem:[%s4 + $0x98] sm:$0xf] %vm1130, %v1040
  %1170 = vst.msk [vmem:[%s4 + $0x9c] sm:$0xf] %vm1130, %v1041
  %1171 = vst.msk [vmem:[%s4 + $0xa0] sm:$0xf] %vm1130, %v1042
  %1172 = vst.msk [vmem:[%s4 + $0xa4] sm:$0xf] %vm1130, %v1043
  %1173 = vst.msk [vmem:[%s4 + $0xa8] sm:$0xf] %vm1130, %v1044
  %1174 = vst.msk [vmem:[%s4 + $0xac] sm:$0xf] %vm1130, %v1045
  %1175 = vst.msk [vmem:[%s4 + $0xb0] sm:$0xf] %vm1130, %v1046
  %1176 = vst.msk [vmem:[%s4 + $0xb4] sm:$0xf] %vm1130, %v1047
  %1177 = vst.msk [vmem:[%s4 + $0xb8] sm:$0xf] %vm1130, %v1048
  %1178 = vst.msk [vmem:[%s4 + $0xbc] sm:$0xf] %vm1130, %v1049
  %1179 = vst.msk [vmem:[%s4 + $0xc0] sm:$0xf] %vm1130, %v1050
  %1180 = vst.msk [vmem:[%s4 + $0xc4] sm:$0xf] %vm1130, %v1051
  %1181 = vst.msk [vmem:[%s4 + $0xc8] sm:$0xf] %vm1130, %v1052
  %1182 = vst.msk [vmem:[%s4 + $0xcc] sm:$0xf] %vm1130, %v1053
  %1183 = vst.msk [vmem:[%s4 + $0xd0] sm:$0xf] %vm1130, %v1054
  %1184 = vst.msk [vmem:[%s4 + $0xd4] sm:$0xf] %vm1130, %v1055
  %1185 = vst.msk [vmem:[%s4 + $0xd8] sm:$0xf] %vm1130, %v1056
  %1186 = vst.msk [vmem:[%s4 + $0xdc] sm:$0xf] %vm1130, %v1057
  %1187 = vst.msk [vmem:[%s4 + $0xe0] sm:$0xf] %vm1130, %v1058
  %1188 = vst.msk [vmem:[%s4 + $0xe4] sm:$0xf] %vm1130, %v1059
  %1189 = vst.msk [vmem:[%s4 + $0xe8] sm:$0xf] %vm1130, %v1060
  %1190 = vst.msk [vmem:[%s4 + $0xec] sm:$0xf] %vm1130, %v1061
  %1191 = vst.msk [vmem:[%s4 + $0xf0] sm:$0xf] %vm1130, %v1062
  %1192 = vst.msk [vmem:[%s4 + $0xf4] sm:$0xf] %vm1130, %v1063
  %1193 = vst.msk [vmem:[%s4 + $0xf8] sm:$0xf] %vm1130, %v1064
  %1194 = vst.msk [vmem:[%s4 + $0xfc] sm:$0xf] %vm1130, %v1065
  // Predicated region
  $region18: #{resnet18_grouped_forward.24} parent=0 // pred_check
    _
  $region19: #{resnet18_grouped_forward.24} parent=0 // pred_check_branch
    %1196 = sbr.rel (0) target = $region21
  $region20: #{resnet18_grouped_forward.24} parent=0 // pred_region
    _
  $region21: #{resnet18_grouped_forward.24} parent=0 // pred_fallthru
    _
  // Predicated region
  $region22: #{resnet18_grouped_forward.24} parent=0 // pred_check
    _
  $region23: #{resnet18_grouped_forward.24} parent=0 // pred_check_branch
    %1198 = sbr.rel (0) target = $region25
  $region24: #{resnet18_grouped_forward.24} parent=0 // pred_region
    _
  $region25: #{resnet18_grouped_forward.24} parent=0 // pred_fallthru
    _

// kernel: resnet18_grouped_forward.25
$region0: #{resnet18_grouped_forward.25}
  #allocation0 [shape = 'u32[]', space=smem, size = 0x4, offset = 0x4, fixed_abs, tag = 'smem constant byte address 0x4 - core index']
  #allocation1 [shape = 'u32[144,128]{1,0:T(1,128)}', space=vmem, size = 0x12000, scoped, tag = 'internal scratch']
  %s0 = inlined_call_operand.vmem [shape: bf16[512,72], index: 0, kind: input, shape index: {}]
  %s1 = inlined_call_operand.vmem [shape: bf16[72,8], index: 1, kind: input, shape index: {}]
  %s2 = inlined_call_operand.vmem [shape: f32[1,8], index: 2, kind: input, shape index: {}]
  %s3 = inlined_call_operand.vmem [shape: f32[1,8], index: 3, kind: input, shape index: {}]
  %s4 = inlined_call_operand.vmem [shape: bf16[512,8], index: 4, kind: input, shape index: {}]
  %s5 = inlined_call_operand.vmem [shape: bf16[512,8], index: 5, kind: output, shape index: {}]
  %s6 = sld [smem:[#allocation0]]
  $region30: #{resnet18_grouped_forward.25} parent=0
    _
  %s8 = ssub.s32 1, %s6
  %s9 = scalar_select 0, %s8, %s6
  // Predicated region
  $region2: #{resnet18_grouped_forward.25} parent=0 // pred_check
    _
  $region3: #{resnet18_grouped_forward.25} parent=0 // pred_check_branch
    %11 = sbr.rel (0) target = $region5
  $region4: #{resnet18_grouped_forward.25} parent=0 // pred_region
    _
  $region5: #{resnet18_grouped_forward.25} parent=0 // pred_fallthru
    _
  // Predicated region
  $region6: #{resnet18_grouped_forward.25} parent=0 // pred_check
    _
  $region7: #{resnet18_grouped_forward.25} parent=0 // pred_check_branch
    %13 = sbr.rel (0) target = $region9
  $region8: #{resnet18_grouped_forward.25} parent=0 // pred_region
    _
  $region9: #{resnet18_grouped_forward.25} parent=0 // pred_fallthru
    _
  // Predicated region
  $region10: #{resnet18_grouped_forward.25} parent=0 // pred_check
    _
  $region11: #{resnet18_grouped_forward.25} parent=0 // pred_check_branch
    %15 = sbr.rel (0) target = $region13
  $region12: #{resnet18_grouped_forward.25} parent=0 // pred_region
    _
  $region13: #{resnet18_grouped_forward.25} parent=0 // pred_fallthru
    _
  // Predicated region
  $region14: #{resnet18_grouped_forward.25} parent=0 // pred_check
    _
  $region15: #{resnet18_grouped_forward.25} parent=0 // pred_check_branch
    %17 = sbr.rel (0) target = $region17
  $region16: #{resnet18_grouped_forward.25} parent=0 // pred_region
    _
  $region17: #{resnet18_grouped_forward.25} parent=0 // pred_fallthru
    _
  // Predicated region
  $region18: #{resnet18_grouped_forward.25} parent=0 // pred_check
    _
  $region19: #{resnet18_grouped_forward.25} parent=0 // pred_check_branch
    %19 = sbr.rel (0) target = $region21
  $region20: #{resnet18_grouped_forward.25} parent=0 // pred_region
    _
  $region21: #{resnet18_grouped_forward.25} parent=0 // pred_fallthru
    _
  %v21 = vld [vmem:[%s0] sm:$0xf]
  %v22 = vld [vmem:[%s0 + $0x4] sm:$0xf]
  %v23 = vld [vmem:[%s0 + $0x8] sm:$0xf]
  %v24 = vld [vmem:[%s0 + $0xc] sm:$0xf]
  %v25 = vld [vmem:[%s0 + $0x10] sm:$0xf]
  %v26 = vld [vmem:[%s0 + $0x14] sm:$0xf]
  %v27 = vld [vmem:[%s0 + $0x18] sm:$0xf]
  %v28 = vld [vmem:[%s0 + $0x1c] sm:$0xf]
  %v29 = vld [vmem:[%s0 + $0x20] sm:$0xf]
  %v30 = vld [vmem:[%s0 + $0x24] sm:$0xf]
  %v31 = vld [vmem:[%s0 + $0x28] sm:$0xf]
  %v32 = vld [vmem:[%s0 + $0x2c] sm:$0xf]
  %v33 = vld [vmem:[%s0 + $0x30] sm:$0xf]
  %v34 = vld [vmem:[%s0 + $0x34] sm:$0xf]
  %v35 = vld [vmem:[%s0 + $0x38] sm:$0xf]
  %v36 = vld [vmem:[%s0 + $0x3c] sm:$0xf]
  %v37 = vld [vmem:[%s0 + $0x40] sm:$0xf]
  %v38 = vld [vmem:[%s0 + $0x44] sm:$0xf]
  %v39 = vld [vmem:[%s0 + $0x48] sm:$0xf]
  %v40 = vld [vmem:[%s0 + $0x4c] sm:$0xf]
  %v41 = vld [vmem:[%s0 + $0x50] sm:$0xf]
  %v42 = vld [vmem:[%s0 + $0x54] sm:$0xf]
  %v43 = vld [vmem:[%s0 + $0x58] sm:$0xf]
  %v44 = vld [vmem:[%s0 + $0x5c] sm:$0xf]
  %v45 = vld [vmem:[%s0 + $0x60] sm:$0xf]
  %v46 = vld [vmem:[%s0 + $0x64] sm:$0xf]
  %v47 = vld [vmem:[%s0 + $0x68] sm:$0xf]
  %v48 = vld [vmem:[%s0 + $0x6c] sm:$0xf]
  %v49 = vld [vmem:[%s0 + $0x70] sm:$0xf]
  %v50 = vld [vmem:[%s0 + $0x74] sm:$0xf]
  %v51 = vld [vmem:[%s0 + $0x78] sm:$0xf]
  %v52 = vld [vmem:[%s0 + $0x7c] sm:$0xf]
  %v53 = vld [vmem:[%s0 + $0x80] sm:$0xf]
  %v54 = vld [vmem:[%s0 + $0x84] sm:$0xf]
  %v55 = vld [vmem:[%s0 + $0x88] sm:$0xf]
  %v56 = vld [vmem:[%s0 + $0x8c] sm:$0xf]
  %v57 = vld [vmem:[%s0 + $0x90] sm:$0xf]
  %v58 = vld [vmem:[%s0 + $0x94] sm:$0xf]
  %v59 = vld [vmem:[%s0 + $0x98] sm:$0xf]
  %v60 = vld [vmem:[%s0 + $0x9c] sm:$0xf]
  %v61 = vld [vmem:[%s0 + $0xa0] sm:$0xf]
  %v62 = vld [vmem:[%s0 + $0xa4] sm:$0xf]
  %v63 = vld [vmem:[%s0 + $0xa8] sm:$0xf]
  %v64 = vld [vmem:[%s0 + $0xac] sm:$0xf]
  %v65 = vld [vmem:[%s0 + $0xb0] sm:$0xf]
  %v66 = vld [vmem:[%s0 + $0xb4] sm:$0xf]
  %v67 = vld [vmem:[%s0 + $0xb8] sm:$0xf]
  %v68 = vld [vmem:[%s0 + $0xbc] sm:$0xf]
  %v69 = vld [vmem:[%s0 + $0xc0] sm:$0xf]
  %v70 = vld [vmem:[%s0 + $0xc4] sm:$0xf]
  %v71 = vld [vmem:[%s0 + $0xc8] sm:$0xf]
  %v72 = vld [vmem:[%s0 + $0xcc] sm:$0xf]
  %v73 = vld [vmem:[%s0 + $0xd0] sm:$0xf]
  %v74 = vld [vmem:[%s0 + $0xd4] sm:$0xf]
  %v75 = vld [vmem:[%s0 + $0xd8] sm:$0xf]
  %v76 = vld [vmem:[%s0 + $0xdc] sm:$0xf]
  %v77 = vld [vmem:[%s0 + $0xe0] sm:$0xf]
  %v78 = vld [vmem:[%s0 + $0xe4] sm:$0xf]
  %v79 = vld [vmem:[%s0 + $0xe8] sm:$0xf]
  %v80 = vld [vmem:[%s0 + $0xec] sm:$0xf]
  %v81 = vld [vmem:[%s0 + $0xf0] sm:$0xf]
  %v82 = vld [vmem:[%s0 + $0xf4] sm:$0xf]
  %v83 = vld [vmem:[%s0 + $0xf8] sm:$0xf]
  %v84 = vld [vmem:[%s0 + $0xfc] sm:$0xf]
  %v85 = vld [vmem:[%s1] sm:$0xf]
  %v86 = vld [vmem:[%s1 + $0x4] sm:$0xf]
  %v87 = vld [vmem:[%s1 + $0x8] sm:$0xf]
  %v88 = vld [vmem:[%s1 + $0xc] sm:$0xf]
  %v89 = vld [vmem:[%s1 + $0x10] sm:$0xf]
  %v90 = vld [vmem:[%s1 + $0x14] sm:$0xf]
  %v91 = vld [vmem:[%s1 + $0x18] sm:$0xf]
  %v92 = vld [vmem:[%s1 + $0x1c] sm:$0xf]
  %v93 = vld [vmem:[%s1 + $0x20] sm:$0xf]
  %v158 = vunpack.c.l.b16 %v21
  %v159 = vunpack.c.l.b16 %v22
  %v160 = vunpack.c.l.b16 %v23
  %v161 = vunpack.c.l.b16 %v24
  %v162 = vunpack.c.l.b16 %v25
  %v163 = vunpack.c.l.b16 %v26
  %v164 = vunpack.c.l.b16 %v27
  %v165 = vunpack.c.l.b16 %v28
  %v166 = vunpack.c.l.b16 %v29
  %v167 = vunpack.c.l.b16 %v30
  %v168 = vunpack.c.l.b16 %v31
  %v169 = vunpack.c.l.b16 %v32
  %v170 = vunpack.c.l.b16 %v33
  %v171 = vunpack.c.l.b16 %v34
  %v172 = vunpack.c.l.b16 %v35
  %v173 = vunpack.c.l.b16 %v36
  %v174 = vunpack.c.l.b16 %v37
  %v175 = vunpack.c.l.b16 %v38
  %v176 = vunpack.c.l.b16 %v39
  %v177 = vunpack.c.l.b16 %v40
  %v178 = vunpack.c.l.b16 %v41
  %v179 = vunpack.c.l.b16 %v42
  %v180 = vunpack.c.l.b16 %v43
  %v181 = vunpack.c.l.b16 %v44
  %v182 = vunpack.c.l.b16 %v45
  %v183 = vunpack.c.l.b16 %v46
  %v184 = vunpack.c.l.b16 %v47
  %v185 = vunpack.c.l.b16 %v48
  %v186 = vunpack.c.l.b16 %v49
  %v187 = vunpack.c.l.b16 %v50
  %v188 = vunpack.c.l.b16 %v51
  %v189 = vunpack.c.l.b16 %v52
  %v190 = vunpack.c.l.b16 %v53
  %v191 = vunpack.c.l.b16 %v54
  %v192 = vunpack.c.l.b16 %v55
  %v193 = vunpack.c.l.b16 %v56
  %v194 = vunpack.c.l.b16 %v57
  %v195 = vunpack.c.l.b16 %v58
  %v196 = vunpack.c.l.b16 %v59
  %v197 = vunpack.c.l.b16 %v60
  %v198 = vunpack.c.l.b16 %v61
  %v199 = vunpack.c.l.b16 %v62
  %v200 = vunpack.c.l.b16 %v63
  %v201 = vunpack.c.l.b16 %v64
  %v202 = vunpack.c.l.b16 %v65
  %v203 = vunpack.c.l.b16 %v66
  %v204 = vunpack.c.l.b16 %v67
  %v205 = vunpack.c.l.b16 %v68
  %v206 = vunpack.c.l.b16 %v69
  %v207 = vunpack.c.l.b16 %v70
  %v208 = vunpack.c.l.b16 %v71
  %v209 = vunpack.c.l.b16 %v72
  %v210 = vunpack.c.l.b16 %v73
  %v211 = vunpack.c.l.b16 %v74
  %v212 = vunpack.c.l.b16 %v75
  %v213 = vunpack.c.l.b16 %v76
  %v214 = vunpack.c.l.b16 %v77
  %v215 = vunpack.c.l.b16 %v78
  %v216 = vunpack.c.l.b16 %v79
  %v217 = vunpack.c.l.b16 %v80
  %v218 = vunpack.c.l.b16 %v81
  %v219 = vunpack.c.l.b16 %v82
  %v220 = vunpack.c.l.b16 %v83
  %v221 = vunpack.c.l.b16 %v84
  %v222 = vpack.c.b16 %v159, %v158
  %v223 = vpack.c.b16 %v161, %v160
  %v224 = vpack.c.b16 %v163, %v162
  %v225 = vpack.c.b16 %v165, %v164
  %v226 = vpack.c.b16 %v167, %v166
  %v227 = vpack.c.b16 %v169, %v168
  %v228 = vpack.c.b16 %v171, %v170
  %v229 = vpack.c.b16 %v173, %v172
  %v230 = vpack.c.b16 %v175, %v174
  %v231 = vpack.c.b16 %v177, %v176
  %v232 = vpack.c.b16 %v179, %v178
  %v233 = vpack.c.b16 %v181, %v180
  %v234 = vpack.c.b16 %v183, %v182
  %v235 = vpack.c.b16 %v185, %v184
  %v236 = vpack.c.b16 %v187, %v186
  %v237 = vpack.c.b16 %v189, %v188
  %v238 = vpack.c.b16 %v191, %v190
  %v239 = vpack.c.b16 %v193, %v192
  %v240 = vpack.c.b16 %v195, %v194
  %v241 = vpack.c.b16 %v197, %v196
  %v242 = vpack.c.b16 %v199, %v198
  %v243 = vpack.c.b16 %v201, %v200
  %v244 = vpack.c.b16 %v203, %v202
  %v245 = vpack.c.b16 %v205, %v204
  %v246 = vpack.c.b16 %v207, %v206
  %v247 = vpack.c.b16 %v209, %v208
  %v248 = vpack.c.b16 %v211, %v210
  %v249 = vpack.c.b16 %v213, %v212
  %v250 = vpack.c.b16 %v215, %v214
  %v251 = vpack.c.b16 %v217, %v216
  %v252 = vpack.c.b16 %v219, %v218
  %v253 = vpack.c.b16 %v221, %v220
  %v263 = vunpack.c.l.b16 %v85
  %v264 = vunpack.c.l.b16 %v86
  %v265 = vunpack.c.l.b16 %v87
  %v266 = vunpack.c.l.b16 %v88
  %v267 = vunpack.c.l.b16 %v89
  %v268 = vunpack.c.l.b16 %v90
  %v269 = vunpack.c.l.b16 %v91
  %v270 = vunpack.c.l.b16 %v92
  %v271 = vunpack.c.l.b16 %v93
  %v272 = vpack.c.b16 %v264, %v263
  %v273 = vpack.c.b16 %v266, %v265
  %v274 = vpack.c.b16 %v268, %v267
  %v275 = vpack.c.b16 %v270, %v269
  %v276 = vpack.c.b16 %v271, %v271
  %vm281 = vcmask 588800
  %v283 = vsel %vm281, %v222, 0
  %v286 = vsel %vm281, %v223, 0
  %v289 = vsel %vm281, %v224, 0
  %v292 = vsel %vm281, %v225, 0
  %v295 = vsel %vm281, %v226, 0
  %v298 = vsel %vm281, %v227, 0
  %v301 = vsel %vm281, %v228, 0
  %v304 = vsel %vm281, %v229, 0
  %v307 = vsel %vm281, %v230, 0
  %v310 = vsel %vm281, %v231, 0
  %v313 = vsel %vm281, %v232, 0
  %v316 = vsel %vm281, %v233, 0
  %v319 = vsel %vm281, %v234, 0
  %v322 = vsel %vm281, %v235, 0
  %v325 = vsel %vm281, %v236, 0
  %v328 = vsel %vm281, %v237, 0
  %v331 = vsel %vm281, %v238, 0
  %v334 = vsel %vm281, %v239, 0
  %v337 = vsel %vm281, %v240, 0
  %v340 = vsel %vm281, %v241, 0
  %v343 = vsel %vm281, %v242, 0
  %v346 = vsel %vm281, %v243, 0
  %v349 = vsel %vm281, %v244, 0
  %v352 = vsel %vm281, %v245, 0
  %v355 = vsel %vm281, %v246, 0
  %v358 = vsel %vm281, %v247, 0
  %v361 = vsel %vm281, %v248, 0
  %v364 = vsel %vm281, %v249, 0
  %v367 = vsel %vm281, %v250, 0
  %v370 = vsel %vm281, %v251, 0
  %v373 = vsel %vm281, %v252, 0
  %v376 = vsel %vm281, %v253, 0
  %vm378 = vcmask 1043456
  %v380 = vsel %vm378, %v276, 0
  %382 = vmatprep.subr.bf16.mxu0 0
  %383 = vmatpush1.bf16.msra.mxu0 0
  %384 = vmatprep.subr.bf16.mxu0 0
  %385 = vmatpush1.bf16.msra.mxu0 0
  %386 = vmatprep.subr.bf16.mxu0 0
  %387 = vmatpush1.bf16.msra.mxu0 0
  %388 = vmatprep.subr.bf16.mxu0 0
  %389 = vmatpush1.bf16.msra.mxu0 %v380
  %390 = vmatprep.subr.bf16.mxu0 0
  %391 = vmatpush1.bf16.msra.mxu0 %v275
  %392 = vmatprep.subr.bf16.mxu0 0
  %393 = vmatpush1.bf16.msra.mxu0 %v274
  %394 = vmatprep.subr.bf16.mxu0 0
  %395 = vmatpush1.bf16.msra.mxu0 %v273
  %396 = vmatprep.subr.bf16.mxu0 0
  %397 = vmatpush1.bf16.msra.mxu0 %v272
  %398 = vmatprep.subr.bf16.mxu0 0
  %399 = vmatpush2.bf16.msra.mxu0 0
  %400 = vmatprep.subr.bf16.mxu0 0
  %401 = vmatpush2.bf16.msra.mxu0 0
  %402 = vmatprep.subr.bf16.mxu0 0
  %403 = vmatpush2.bf16.msra.mxu0 0
  %404 = vmatprep.subr.bf16.mxu0 0
  %405 = vmatpush2.bf16.msra.mxu0 0
  %406 = vmatprep.subr.bf16.mxu0 0
  %407 = vmatpush2.bf16.msra.mxu0 0
  %408 = vmatprep.subr.bf16.mxu0 0
  %409 = vmatpush2.bf16.msra.mxu0 0
  %410 = vmatprep.subr.bf16.mxu0 0
  %411 = vmatpush2.bf16.msra.mxu0 0
  %412 = vmatprep.subr.bf16.mxu0 0
  %413 = vmatpush2.bf16.msra.mxu0 0
  %414 = vmatprep.mubr.bf16.mxu0 0
  %415 = vmatmul.mubr.bf16.gmra.mxu0 %v283
  %v416 = vpop.f32.mrf.mxu0
  %v417 = vadd.f32 0.0, %v416
  %v418 = vpop.f32.mrf.mxu0
  %v419 = vpop.f32.mrf.mxu0
  %v420 = vadd.f32 0.0, %v419
  %v421 = vpop.f32.mrf.mxu0
  %422 = vmatprep.mubr.bf16.mxu0 0
  %423 = vmatmul.mubr.bf16.gmra.mxu0 %v286
  %v424 = vpop.f32.mrf.mxu0
  %v425 = vadd.f32 0.0, %v424
  %v426 = vpop.f32.mrf.mxu0
  %v427 = vpop.f32.mrf.mxu0
  %v428 = vadd.f32 0.0, %v427
  %v429 = vpop.f32.mrf.mxu0
  %430 = vmatprep.mubr.bf16.mxu0 0
  %431 = vmatmul.mubr.bf16.gmra.mxu0 %v289
  %v432 = vpop.f32.mrf.mxu0
  %v433 = vadd.f32 0.0, %v432
  %v434 = vpop.f32.mrf.mxu0
  %v435 = vpop.f32.mrf.mxu0
  %v436 = vadd.f32 0.0, %v435
  %v437 = vpop.f32.mrf.mxu0
  %438 = vmatprep.mubr.bf16.mxu0 0
  %439 = vmatmul.mubr.bf16.gmra.mxu0 %v292
  %v440 = vpop.f32.mrf.mxu0
  %v441 = vadd.f32 0.0, %v440
  %v442 = vpop.f32.mrf.mxu0
  %v443 = vpop.f32.mrf.mxu0
  %v444 = vadd.f32 0.0, %v443
  %v445 = vpop.f32.mrf.mxu0
  %446 = vmatprep.mubr.bf16.mxu0 0
  %447 = vmatmul.mubr.bf16.gmra.mxu0 %v295
  %v448 = vpop.f32.mrf.mxu0
  %v449 = vadd.f32 0.0, %v448
  %v450 = vpop.f32.mrf.mxu0
  %v451 = vpop.f32.mrf.mxu0
  %v452 = vadd.f32 0.0, %v451
  %v453 = vpop.f32.mrf.mxu0
  %454 = vmatprep.mubr.bf16.mxu0 0
  %455 = vmatmul.mubr.bf16.gmra.mxu0 %v298
  %v456 = vpop.f32.mrf.mxu0
  %v457 = vadd.f32 0.0, %v456
  %v458 = vpop.f32.mrf.mxu0
  %v459 = vpop.f32.mrf.mxu0
  %v460 = vadd.f32 0.0, %v459
  %v461 = vpop.f32.mrf.mxu0
  %462 = vmatprep.mubr.bf16.mxu0 0
  %463 = vmatmul.mubr.bf16.gmra.mxu0 %v301
  %v464 = vpop.f32.mrf.mxu0
  %v465 = vadd.f32 0.0, %v464
  %v466 = vpop.f32.mrf.mxu0
  %v467 = vpop.f32.mrf.mxu0
  %v468 = vadd.f32 0.0, %v467
  %v469 = vpop.f32.mrf.mxu0
  %470 = vmatprep.mubr.bf16.mxu0 0
  %471 = vmatmul.mubr.bf16.gmra.mxu0 %v304
  %v472 = vpop.f32.mrf.mxu0
  %v473 = vadd.f32 0.0, %v472
  %v474 = vpop.f32.mrf.mxu0
  %v475 = vpop.f32.mrf.mxu0
  %v476 = vadd.f32 0.0, %v475
  %v477 = vpop.f32.mrf.mxu0
  %478 = vmatprep.mubr.bf16.mxu0 0
  %479 = vmatmul.mubr.bf16.gmra.mxu0 %v307
  %v480 = vpop.f32.mrf.mxu0
  %v481 = vadd.f32 0.0, %v480
  %v482 = vpop.f32.mrf.mxu0
  %v483 = vpop.f32.mrf.mxu0
  %v484 = vadd.f32 0.0, %v483
  %v485 = vpop.f32.mrf.mxu0
  %486 = vmatprep.mubr.bf16.mxu0 0
  %487 = vmatmul.mubr.bf16.gmra.mxu0 %v310
  %v488 = vpop.f32.mrf.mxu0
  %v489 = vadd.f32 0.0, %v488
  %v490 = vpop.f32.mrf.mxu0
  %v491 = vpop.f32.mrf.mxu0
  %v492 = vadd.f32 0.0, %v491
  %v493 = vpop.f32.mrf.mxu0
  %494 = vmatprep.mubr.bf16.mxu0 0
  %495 = vmatmul.mubr.bf16.gmra.mxu0 %v313
  %v496 = vpop.f32.mrf.mxu0
  %v497 = vadd.f32 0.0, %v496
  %v498 = vpop.f32.mrf.mxu0
  %v499 = vpop.f32.mrf.mxu0
  %v500 = vadd.f32 0.0, %v499
  %v501 = vpop.f32.mrf.mxu0
  %502 = vmatprep.mubr.bf16.mxu0 0
  %503 = vmatmul.mubr.bf16.gmra.mxu0 %v316
  %v504 = vpop.f32.mrf.mxu0
  %v505 = vadd.f32 0.0, %v504
  %v506 = vpop.f32.mrf.mxu0
  %v507 = vpop.f32.mrf.mxu0
  %v508 = vadd.f32 0.0, %v507
  %v509 = vpop.f32.mrf.mxu0
  %510 = vmatprep.mubr.bf16.mxu0 0
  %511 = vmatmul.mubr.bf16.gmra.mxu0 %v319
  %v512 = vpop.f32.mrf.mxu0
  %v513 = vadd.f32 0.0, %v512
  %v514 = vpop.f32.mrf.mxu0
  %v515 = vpop.f32.mrf.mxu0
  %v516 = vadd.f32 0.0, %v515
  %v517 = vpop.f32.mrf.mxu0
  %518 = vmatprep.mubr.bf16.mxu0 0
  %519 = vmatmul.mubr.bf16.gmra.mxu0 %v322
  %v520 = vpop.f32.mrf.mxu0
  %v521 = vadd.f32 0.0, %v520
  %v522 = vpop.f32.mrf.mxu0
  %v523 = vpop.f32.mrf.mxu0
  %v524 = vadd.f32 0.0, %v523
  %v525 = vpop.f32.mrf.mxu0
  %526 = vmatprep.mubr.bf16.mxu0 0
  %527 = vmatmul.mubr.bf16.gmra.mxu0 %v325
  %v528 = vpop.f32.mrf.mxu0
  %v529 = vadd.f32 0.0, %v528
  %v530 = vpop.f32.mrf.mxu0
  %v531 = vpop.f32.mrf.mxu0
  %v532 = vadd.f32 0.0, %v531
  %v533 = vpop.f32.mrf.mxu0
  %534 = vmatprep.mubr.bf16.mxu0 0
  %535 = vmatmul.mubr.bf16.gmra.mxu0 %v328
  %v536 = vpop.f32.mrf.mxu0
  %v537 = vadd.f32 0.0, %v536
  %v538 = vpop.f32.mrf.mxu0
  %v539 = vpop.f32.mrf.mxu0
  %v540 = vadd.f32 0.0, %v539
  %v541 = vpop.f32.mrf.mxu0
  %542 = vmatprep.mubr.bf16.mxu0 0
  %543 = vmatmul.mubr.bf16.gmra.mxu0 %v331
  %v544 = vpop.f32.mrf.mxu0
  %v545 = vadd.f32 0.0, %v544
  %v546 = vpop.f32.mrf.mxu0
  %v547 = vpop.f32.mrf.mxu0
  %v548 = vadd.f32 0.0, %v547
  %v549 = vpop.f32.mrf.mxu0
  %550 = vmatprep.mubr.bf16.mxu0 0
  %551 = vmatmul.mubr.bf16.gmra.mxu0 %v334
  %v552 = vpop.f32.mrf.mxu0
  %v553 = vadd.f32 0.0, %v552
  %v554 = vpop.f32.mrf.mxu0
  %v555 = vpop.f32.mrf.mxu0
  %v556 = vadd.f32 0.0, %v555
  %v557 = vpop.f32.mrf.mxu0
  %558 = vmatprep.mubr.bf16.mxu0 0
  %559 = vmatmul.mubr.bf16.gmra.mxu0 %v337
  %v560 = vpop.f32.mrf.mxu0
  %v561 = vadd.f32 0.0, %v560
  %v562 = vpop.f32.mrf.mxu0
  %v563 = vpop.f32.mrf.mxu0
  %v564 = vadd.f32 0.0, %v563
  %v565 = vpop.f32.mrf.mxu0
  %566 = vmatprep.mubr.bf16.mxu0 0
  %567 = vmatmul.mubr.bf16.gmra.mxu0 %v340
  %v568 = vpop.f32.mrf.mxu0
  %v569 = vadd.f32 0.0, %v568
  %v570 = vpop.f32.mrf.mxu0
  %v571 = vpop.f32.mrf.mxu0
  %v572 = vadd.f32 0.0, %v571
  %v573 = vpop.f32.mrf.mxu0
  %574 = vmatprep.mubr.bf16.mxu0 0
  %575 = vmatmul.mubr.bf16.gmra.mxu0 %v343
  %v576 = vpop.f32.mrf.mxu0
  %v577 = vadd.f32 0.0, %v576
  %v578 = vpop.f32.mrf.mxu0
  %v579 = vpop.f32.mrf.mxu0
  %v580 = vadd.f32 0.0, %v579
  %v581 = vpop.f32.mrf.mxu0
  %582 = vmatprep.mubr.bf16.mxu0 0
  %583 = vmatmul.mubr.bf16.gmra.mxu0 %v346
  %v584 = vpop.f32.mrf.mxu0
  %v585 = vadd.f32 0.0, %v584
  %v586 = vpop.f32.mrf.mxu0
  %v587 = vpop.f32.mrf.mxu0
  %v588 = vadd.f32 0.0, %v587
  %v589 = vpop.f32.mrf.mxu0
  %590 = vmatprep.mubr.bf16.mxu0 0
  %591 = vmatmul.mubr.bf16.gmra.mxu0 %v349
  %v592 = vpop.f32.mrf.mxu0
  %v593 = vadd.f32 0.0, %v592
  %v594 = vpop.f32.mrf.mxu0
  %v595 = vpop.f32.mrf.mxu0
  %v596 = vadd.f32 0.0, %v595
  %v597 = vpop.f32.mrf.mxu0
  %598 = vmatprep.mubr.bf16.mxu0 0
  %599 = vmatmul.mubr.bf16.gmra.mxu0 %v352
  %v600 = vpop.f32.mrf.mxu0
  %v601 = vadd.f32 0.0, %v600
  %v602 = vpop.f32.mrf.mxu0
  %v603 = vpop.f32.mrf.mxu0
  %v604 = vadd.f32 0.0, %v603
  %v605 = vpop.f32.mrf.mxu0
  %606 = vmatprep.mubr.bf16.mxu0 0
  %607 = vmatmul.mubr.bf16.gmra.mxu0 %v355
  %v608 = vpop.f32.mrf.mxu0
  %v609 = vadd.f32 0.0, %v608
  %v610 = vpop.f32.mrf.mxu0
  %v611 = vpop.f32.mrf.mxu0
  %v612 = vadd.f32 0.0, %v611
  %v613 = vpop.f32.mrf.mxu0
  %614 = vmatprep.mubr.bf16.mxu0 0
  %615 = vmatmul.mubr.bf16.gmra.mxu0 %v358
  %v616 = vpop.f32.mrf.mxu0
  %v617 = vadd.f32 0.0, %v616
  %v618 = vpop.f32.mrf.mxu0
  %v619 = vpop.f32.mrf.mxu0
  %v620 = vadd.f32 0.0, %v619
  %v621 = vpop.f32.mrf.mxu0
  %622 = vmatprep.mubr.bf16.mxu0 0
  %623 = vmatmul.mubr.bf16.gmra.mxu0 %v361
  %v624 = vpop.f32.mrf.mxu0
  %v625 = vadd.f32 0.0, %v624
  %v626 = vpop.f32.mrf.mxu0
  %v627 = vpop.f32.mrf.mxu0
  %v628 = vadd.f32 0.0, %v627
  %v629 = vpop.f32.mrf.mxu0
  %630 = vmatprep.mubr.bf16.mxu0 0
  %631 = vmatmul.mubr.bf16.gmra.mxu0 %v364
  %v632 = vpop.f32.mrf.mxu0
  %v633 = vadd.f32 0.0, %v632
  %v634 = vpop.f32.mrf.mxu0
  %v635 = vpop.f32.mrf.mxu0
  %v636 = vadd.f32 0.0, %v635
  %v637 = vpop.f32.mrf.mxu0
  %638 = vmatprep.mubr.bf16.mxu0 0
  %639 = vmatmul.mubr.bf16.gmra.mxu0 %v367
  %v640 = vpop.f32.mrf.mxu0
  %v641 = vadd.f32 0.0, %v640
  %v642 = vpop.f32.mrf.mxu0
  %v643 = vpop.f32.mrf.mxu0
  %v644 = vadd.f32 0.0, %v643
  %v645 = vpop.f32.mrf.mxu0
  %646 = vmatprep.mubr.bf16.mxu0 0
  %647 = vmatmul.mubr.bf16.gmra.mxu0 %v370
  %v648 = vpop.f32.mrf.mxu0
  %v649 = vadd.f32 0.0, %v648
  %v650 = vpop.f32.mrf.mxu0
  %v651 = vpop.f32.mrf.mxu0
  %v652 = vadd.f32 0.0, %v651
  %v653 = vpop.f32.mrf.mxu0
  %654 = vmatprep.mubr.bf16.mxu0 0
  %655 = vmatmul.mubr.bf16.gmra.mxu0 %v373
  %v656 = vpop.f32.mrf.mxu0
  %v657 = vadd.f32 0.0, %v656
  %v658 = vpop.f32.mrf.mxu0
  %v659 = vpop.f32.mrf.mxu0
  %v660 = vadd.f32 0.0, %v659
  %v661 = vpop.f32.mrf.mxu0
  %662 = vmatprep.mubr.bf16.mxu0 0
  %663 = vmatmul.mubr.bf16.gmra.mxu0 %v376
  %v664 = vpop.f32.mrf.mxu0
  %v665 = vadd.f32 0.0, %v664
  %v666 = vpop.f32.mrf.mxu0
  %v667 = vpop.f32.mrf.mxu0
  %v668 = vadd.f32 0.0, %v667
  %v669 = vpop.f32.mrf.mxu0
  %670 = vdwg.mxu0
  %v671 = vld [vmem:[%s2] sm:$0x1]
  %v673 = vlaneseq
  %v674 = vshrl.u32 %v673, 7
  %v675 = vsub.s32 0, %v674
  %v676 = vrot.slane %v671, %v675
  %v678 = vmul.f32 %v417, %v676
  %v679 = vmul.f32 %v420, %v676
  %v680 = vmul.f32 %v425, %v676
  %v681 = vmul.f32 %v428, %v676
  %v682 = vmul.f32 %v433, %v676
  %v683 = vmul.f32 %v436, %v676
  %v684 = vmul.f32 %v441, %v676
  %v685 = vmul.f32 %v444, %v676
  %v686 = vmul.f32 %v449, %v676
  %v687 = vmul.f32 %v452, %v676
  %v688 = vmul.f32 %v457, %v676
  %v689 = vmul.f32 %v460, %v676
  %v690 = vmul.f32 %v465, %v676
  %v691 = vmul.f32 %v468, %v676
  %v692 = vmul.f32 %v473, %v676
  %v693 = vmul.f32 %v476, %v676
  %v694 = vmul.f32 %v481, %v676
  %v695 = vmul.f32 %v484, %v676
  %v696 = vmul.f32 %v489, %v676
  %v697 = vmul.f32 %v492, %v676
  %v698 = vmul.f32 %v497, %v676
  %v699 = vmul.f32 %v500, %v676
  %v700 = vmul.f32 %v505, %v676
  %v701 = vmul.f32 %v508, %v676
  %v702 = vmul.f32 %v513, %v676
  %v703 = vmul.f32 %v516, %v676
  %v704 = vmul.f32 %v521, %v676
  %v705 = vmul.f32 %v524, %v676
  %v706 = vmul.f32 %v529, %v676
  %v707 = vmul.f32 %v532, %v676
  %v708 = vmul.f32 %v537, %v676
  %v709 = vmul.f32 %v540, %v676
  %v710 = vmul.f32 %v545, %v676
  %v711 = vmul.f32 %v548, %v676
  %v712 = vmul.f32 %v553, %v676
  %v713 = vmul.f32 %v556, %v676
  %v714 = vmul.f32 %v561, %v676
  %v715 = vmul.f32 %v564, %v676
  %v716 = vmul.f32 %v569, %v676
  %v717 = vmul.f32 %v572, %v676
  %v718 = vmul.f32 %v577, %v676
  %v719 = vmul.f32 %v580, %v676
  %v720 = vmul.f32 %v585, %v676
  %v721 = vmul.f32 %v588, %v676
  %v722 = vmul.f32 %v593, %v676
  %v723 = vmul.f32 %v596, %v676
  %v724 = vmul.f32 %v601, %v676
  %v725 = vmul.f32 %v604, %v676
  %v726 = vmul.f32 %v609, %v676
  %v727 = vmul.f32 %v612, %v676
  %v728 = vmul.f32 %v617, %v676
  %v729 = vmul.f32 %v620, %v676
  %v730 = vmul.f32 %v625, %v676
  %v731 = vmul.f32 %v628, %v676
  %v732 = vmul.f32 %v633, %v676
  %v733 = vmul.f32 %v636, %v676
  %v734 = vmul.f32 %v641, %v676
  %v735 = vmul.f32 %v644, %v676
  %v736 = vmul.f32 %v649, %v676
  %v737 = vmul.f32 %v652, %v676
  %v738 = vmul.f32 %v657, %v676
  %v739 = vmul.f32 %v660, %v676
  %v740 = vmul.f32 %v665, %v676
  %v741 = vmul.f32 %v668, %v676
  %v742 = vld [vmem:[%s3] sm:$0x1]
  %v744 = vlaneseq
  %v745 = vshrl.u32 %v744, 7
  %v746 = vsub.s32 0, %v745
  %v747 = vrot.slane %v742, %v746
  %v749 = vadd.f32 %v678, %v747
  %v750 = vadd.f32 %v679, %v747
  %v751 = vadd.f32 %v680, %v747
  %v752 = vadd.f32 %v681, %v747
  %v753 = vadd.f32 %v682, %v747
  %v754 = vadd.f32 %v683, %v747
  %v755 = vadd.f32 %v684, %v747
  %v756 = vadd.f32 %v685, %v747
  %v757 = vadd.f32 %v686, %v747
  %v758 = vadd.f32 %v687, %v747
  %v759 = vadd.f32 %v688, %v747
  %v760 = vadd.f32 %v689, %v747
  %v761 = vadd.f32 %v690, %v747
  %v762 = vadd.f32 %v691, %v747
  %v763 = vadd.f32 %v692, %v747
  %v764 = vadd.f32 %v693, %v747
  %v765 = vadd.f32 %v694, %v747
  %v766 = vadd.f32 %v695, %v747
  %v767 = vadd.f32 %v696, %v747
  %v768 = vadd.f32 %v697, %v747
  %v769 = vadd.f32 %v698, %v747
  %v770 = vadd.f32 %v699, %v747
  %v771 = vadd.f32 %v700, %v747
  %v772 = vadd.f32 %v701, %v747
  %v773 = vadd.f32 %v702, %v747
  %v774 = vadd.f32 %v703, %v747
  %v775 = vadd.f32 %v704, %v747
  %v776 = vadd.f32 %v705, %v747
  %v777 = vadd.f32 %v706, %v747
  %v778 = vadd.f32 %v707, %v747
  %v779 = vadd.f32 %v708, %v747
  %v780 = vadd.f32 %v709, %v747
  %v781 = vadd.f32 %v710, %v747
  %v782 = vadd.f32 %v711, %v747
  %v783 = vadd.f32 %v712, %v747
  %v784 = vadd.f32 %v713, %v747
  %v785 = vadd.f32 %v714, %v747
  %v786 = vadd.f32 %v715, %v747
  %v787 = vadd.f32 %v716, %v747
  %v788 = vadd.f32 %v717, %v747
  %v789 = vadd.f32 %v718, %v747
  %v790 = vadd.f32 %v719, %v747
  %v791 = vadd.f32 %v720, %v747
  %v792 = vadd.f32 %v721, %v747
  %v793 = vadd.f32 %v722, %v747
  %v794 = vadd.f32 %v723, %v747
  %v795 = vadd.f32 %v724, %v747
  %v796 = vadd.f32 %v725, %v747
  %v797 = vadd.f32 %v726, %v747
  %v798 = vadd.f32 %v727, %v747
  %v799 = vadd.f32 %v728, %v747
  %v800 = vadd.f32 %v729, %v747
  %v801 = vadd.f32 %v730, %v747
  %v802 = vadd.f32 %v731, %v747
  %v803 = vadd.f32 %v732, %v747
  %v804 = vadd.f32 %v733, %v747
  %v805 = vadd.f32 %v734, %v747
  %v806 = vadd.f32 %v735, %v747
  %v807 = vadd.f32 %v736, %v747
  %v808 = vadd.f32 %v737, %v747
  %v809 = vadd.f32 %v738, %v747
  %v810 = vadd.f32 %v739, %v747
  %v811 = vadd.f32 %v740, %v747
  %v812 = vadd.f32 %v741, %v747
  %v813 = vld [vmem:[%s4] sm:$0xf]
  %v814 = vld [vmem:[%s4 + $0x4] sm:$0xf]
  %v815 = vld [vmem:[%s4 + $0x8] sm:$0xf]
  %v816 = vld [vmem:[%s4 + $0xc] sm:$0xf]
  %v817 = vld [vmem:[%s4 + $0x10] sm:$0xf]
  %v818 = vld [vmem:[%s4 + $0x14] sm:$0xf]
  %v819 = vld [vmem:[%s4 + $0x18] sm:$0xf]
  %v820 = vld [vmem:[%s4 + $0x1c] sm:$0xf]
  %v821 = vld [vmem:[%s4 + $0x20] sm:$0xf]
  %v822 = vld [vmem:[%s4 + $0x24] sm:$0xf]
  %v823 = vld [vmem:[%s4 + $0x28] sm:$0xf]
  %v824 = vld [vmem:[%s4 + $0x2c] sm:$0xf]
  %v825 = vld [vmem:[%s4 + $0x30] sm:$0xf]
  %v826 = vld [vmem:[%s4 + $0x34] sm:$0xf]
  %v827 = vld [vmem:[%s4 + $0x38] sm:$0xf]
  %v828 = vld [vmem:[%s4 + $0x3c] sm:$0xf]
  %v829 = vld [vmem:[%s4 + $0x40] sm:$0xf]
  %v830 = vld [vmem:[%s4 + $0x44] sm:$0xf]
  %v831 = vld [vmem:[%s4 + $0x48] sm:$0xf]
  %v832 = vld [vmem:[%s4 + $0x4c] sm:$0xf]
  %v833 = vld [vmem:[%s4 + $0x50] sm:$0xf]
  %v834 = vld [vmem:[%s4 + $0x54] sm:$0xf]
  %v835 = vld [vmem:[%s4 + $0x58] sm:$0xf]
  %v836 = vld [vmem:[%s4 + $0x5c] sm:$0xf]
  %v837 = vld [vmem:[%s4 + $0x60] sm:$0xf]
  %v838 = vld [vmem:[%s4 + $0x64] sm:$0xf]
  %v839 = vld [vmem:[%s4 + $0x68] sm:$0xf]
  %v840 = vld [vmem:[%s4 + $0x6c] sm:$0xf]
  %v841 = vld [vmem:[%s4 + $0x70] sm:$0xf]
  %v842 = vld [vmem:[%s4 + $0x74] sm:$0xf]
  %v843 = vld [vmem:[%s4 + $0x78] sm:$0xf]
  %v844 = vld [vmem:[%s4 + $0x7c] sm:$0xf]
  %v845 = vld [vmem:[%s4 + $0x80] sm:$0xf]
  %v846 = vld [vmem:[%s4 + $0x84] sm:$0xf]
  %v847 = vld [vmem:[%s4 + $0x88] sm:$0xf]
  %v848 = vld [vmem:[%s4 + $0x8c] sm:$0xf]
  %v849 = vld [vmem:[%s4 + $0x90] sm:$0xf]
  %v850 = vld [vmem:[%s4 + $0x94] sm:$0xf]
  %v851 = vld [vmem:[%s4 + $0x98] sm:$0xf]
  %v852 = vld [vmem:[%s4 + $0x9c] sm:$0xf]
  %v853 = vld [vmem:[%s4 + $0xa0] sm:$0xf]
  %v854 = vld [vmem:[%s4 + $0xa4] sm:$0xf]
  %v855 = vld [vmem:[%s4 + $0xa8] sm:$0xf]
  %v856 = vld [vmem:[%s4 + $0xac] sm:$0xf]
  %v857 = vld [vmem:[%s4 + $0xb0] sm:$0xf]
  %v858 = vld [vmem:[%s4 + $0xb4] sm:$0xf]
  %v859 = vld [vmem:[%s4 + $0xb8] sm:$0xf]
  %v860 = vld [vmem:[%s4 + $0xbc] sm:$0xf]
  %v861 = vld [vmem:[%s4 + $0xc0] sm:$0xf]
  %v862 = vld [vmem:[%s4 + $0xc4] sm:$0xf]
  %v863 = vld [vmem:[%s4 + $0xc8] sm:$0xf]
  %v864 = vld [vmem:[%s4 + $0xcc] sm:$0xf]
  %v865 = vld [vmem:[%s4 + $0xd0] sm:$0xf]
  %v866 = vld [vmem:[%s4 + $0xd4] sm:$0xf]
  %v867 = vld [vmem:[%s4 + $0xd8] sm:$0xf]
  %v868 = vld [vmem:[%s4 + $0xdc] sm:$0xf]
  %v869 = vld [vmem:[%s4 + $0xe0] sm:$0xf]
  %v870 = vld [vmem:[%s4 + $0xe4] sm:$0xf]
  %v871 = vld [vmem:[%s4 + $0xe8] sm:$0xf]
  %v872 = vld [vmem:[%s4 + $0xec] sm:$0xf]
  %v873 = vld [vmem:[%s4 + $0xf0] sm:$0xf]
  %v874 = vld [vmem:[%s4 + $0xf4] sm:$0xf]
  %v875 = vld [vmem:[%s4 + $0xf8] sm:$0xf]
  %v876 = vld [vmem:[%s4 + $0xfc] sm:$0xf]
  %v877 = vunpack.c.l.bf16 %v813
  %v878 = vunpack.c.l.bf16 %v814
  %v879 = vunpack.c.l.bf16 %v815
  %v880 = vunpack.c.l.bf16 %v816
  %v881 = vunpack.c.l.bf16 %v817
  %v882 = vunpack.c.l.bf16 %v818
  %v883 = vunpack.c.l.bf16 %v819
  %v884 = vunpack.c.l.bf16 %v820
  %v885 = vunpack.c.l.bf16 %v821
  %v886 = vunpack.c.l.bf16 %v822
  %v887 = vunpack.c.l.bf16 %v823
  %v888 = vunpack.c.l.bf16 %v824
  %v889 = vunpack.c.l.bf16 %v825
  %v890 = vunpack.c.l.bf16 %v826
  %v891 = vunpack.c.l.bf16 %v827
  %v892 = vunpack.c.l.bf16 %v828
  %v893 = vunpack.c.l.bf16 %v829
  %v894 = vunpack.c.l.bf16 %v830
  %v895 = vunpack.c.l.bf16 %v831
  %v896 = vunpack.c.l.bf16 %v832
  %v897 = vunpack.c.l.bf16 %v833
  %v898 = vunpack.c.l.bf16 %v834
  %v899 = vunpack.c.l.bf16 %v835
  %v900 = vunpack.c.l.bf16 %v836
  %v901 = vunpack.c.l.bf16 %v837
  %v902 = vunpack.c.l.bf16 %v838
  %v903 = vunpack.c.l.bf16 %v839
  %v904 = vunpack.c.l.bf16 %v840
  %v905 = vunpack.c.l.bf16 %v841
  %v906 = vunpack.c.l.bf16 %v842
  %v907 = vunpack.c.l.bf16 %v843
  %v908 = vunpack.c.l.bf16 %v844
  %v909 = vunpack.c.l.bf16 %v845
  %v910 = vunpack.c.l.bf16 %v846
  %v911 = vunpack.c.l.bf16 %v847
  %v912 = vunpack.c.l.bf16 %v848
  %v913 = vunpack.c.l.bf16 %v849
  %v914 = vunpack.c.l.bf16 %v850
  %v915 = vunpack.c.l.bf16 %v851
  %v916 = vunpack.c.l.bf16 %v852
  %v917 = vunpack.c.l.bf16 %v853
  %v918 = vunpack.c.l.bf16 %v854
  %v919 = vunpack.c.l.bf16 %v855
  %v920 = vunpack.c.l.bf16 %v856
  %v921 = vunpack.c.l.bf16 %v857
  %v922 = vunpack.c.l.bf16 %v858
  %v923 = vunpack.c.l.bf16 %v859
  %v924 = vunpack.c.l.bf16 %v860
  %v925 = vunpack.c.l.bf16 %v861
  %v926 = vunpack.c.l.bf16 %v862
  %v927 = vunpack.c.l.bf16 %v863
  %v928 = vunpack.c.l.bf16 %v864
  %v929 = vunpack.c.l.bf16 %v865
  %v930 = vunpack.c.l.bf16 %v866
  %v931 = vunpack.c.l.bf16 %v867
  %v932 = vunpack.c.l.bf16 %v868
  %v933 = vunpack.c.l.bf16 %v869
  %v934 = vunpack.c.l.bf16 %v870
  %v935 = vunpack.c.l.bf16 %v871
  %v936 = vunpack.c.l.bf16 %v872
  %v937 = vunpack.c.l.bf16 %v873
  %v938 = vunpack.c.l.bf16 %v874
  %v939 = vunpack.c.l.bf16 %v875
  %v940 = vunpack.c.l.bf16 %v876
  %v941 = vadd.f32 %v749, %v877
  %v942 = vadd.f32 %v750, %v878
  %v943 = vadd.f32 %v751, %v879
  %v944 = vadd.f32 %v752, %v880
  %v945 = vadd.f32 %v753, %v881
  %v946 = vadd.f32 %v754, %v882
  %v947 = vadd.f32 %v755, %v883
  %v948 = vadd.f32 %v756, %v884
  %v949 = vadd.f32 %v757, %v885
  %v950 = vadd.f32 %v758, %v886
  %v951 = vadd.f32 %v759, %v887
  %v952 = vadd.f32 %v760, %v888
  %v953 = vadd.f32 %v761, %v889
  %v954 = vadd.f32 %v762, %v890
  %v955 = vadd.f32 %v763, %v891
  %v956 = vadd.f32 %v764, %v892
  %v957 = vadd.f32 %v765, %v893
  %v958 = vadd.f32 %v766, %v894
  %v959 = vadd.f32 %v767, %v895
  %v960 = vadd.f32 %v768, %v896
  %v961 = vadd.f32 %v769, %v897
  %v962 = vadd.f32 %v770, %v898
  %v963 = vadd.f32 %v771, %v899
  %v964 = vadd.f32 %v772, %v900
  %v965 = vadd.f32 %v773, %v901
  %v966 = vadd.f32 %v774, %v902
  %v967 = vadd.f32 %v775, %v903
  %v968 = vadd.f32 %v776, %v904
  %v969 = vadd.f32 %v777, %v905
  %v970 = vadd.f32 %v778, %v906
  %v971 = vadd.f32 %v779, %v907
  %v972 = vadd.f32 %v780, %v908
  %v973 = vadd.f32 %v781, %v909
  %v974 = vadd.f32 %v782, %v910
  %v975 = vadd.f32 %v783, %v911
  %v976 = vadd.f32 %v784, %v912
  %v977 = vadd.f32 %v785, %v913
  %v978 = vadd.f32 %v786, %v914
  %v979 = vadd.f32 %v787, %v915
  %v980 = vadd.f32 %v788, %v916
  %v981 = vadd.f32 %v789, %v917
  %v982 = vadd.f32 %v790, %v918
  %v983 = vadd.f32 %v791, %v919
  %v984 = vadd.f32 %v792, %v920
  %v985 = vadd.f32 %v793, %v921
  %v986 = vadd.f32 %v794, %v922
  %v987 = vadd.f32 %v795, %v923
  %v988 = vadd.f32 %v796, %v924
  %v989 = vadd.f32 %v797, %v925
  %v990 = vadd.f32 %v798, %v926
  %v991 = vadd.f32 %v799, %v927
  %v992 = vadd.f32 %v800, %v928
  %v993 = vadd.f32 %v801, %v929
  %v994 = vadd.f32 %v802, %v930
  %v995 = vadd.f32 %v803, %v931
  %v996 = vadd.f32 %v804, %v932
  %v997 = vadd.f32 %v805, %v933
  %v998 = vadd.f32 %v806, %v934
  %v999 = vadd.f32 %v807, %v935
  %v1000 = vadd.f32 %v808, %v936
  %v1001 = vadd.f32 %v809, %v937
  %v1002 = vadd.f32 %v810, %v938
  %v1003 = vadd.f32 %v811, %v939
  %v1004 = vadd.f32 %v812, %v940
  %v1005 = vmax.f32 %v941, 0.0
  %v1006 = vmax.f32 %v942, 0.0
  %v1007 = vmax.f32 %v943, 0.0
  %v1008 = vmax.f32 %v944, 0.0
  %v1009 = vmax.f32 %v945, 0.0
  %v1010 = vmax.f32 %v946, 0.0
  %v1011 = vmax.f32 %v947, 0.0
  %v1012 = vmax.f32 %v948, 0.0
  %v1013 = vmax.f32 %v949, 0.0
  %v1014 = vmax.f32 %v950, 0.0
  %v1015 = vmax.f32 %v951, 0.0
  %v1016 = vmax.f32 %v952, 0.0
  %v1017 = vmax.f32 %v953, 0.0
  %v1018 = vmax.f32 %v954, 0.0
  %v1019 = vmax.f32 %v955, 0.0
  %v1020 = vmax.f32 %v956, 0.0
  %v1021 = vmax.f32 %v957, 0.0
  %v1022 = vmax.f32 %v958, 0.0
  %v1023 = vmax.f32 %v959, 0.0
  %v1024 = vmax.f32 %v960, 0.0
  %v1025 = vmax.f32 %v961, 0.0
  %v1026 = vmax.f32 %v962, 0.0
  %v1027 = vmax.f32 %v963, 0.0
  %v1028 = vmax.f32 %v964, 0.0
  %v1029 = vmax.f32 %v965, 0.0
  %v1030 = vmax.f32 %v966, 0.0
  %v1031 = vmax.f32 %v967, 0.0
  %v1032 = vmax.f32 %v968, 0.0
  %v1033 = vmax.f32 %v969, 0.0
  %v1034 = vmax.f32 %v970, 0.0
  %v1035 = vmax.f32 %v971, 0.0
  %v1036 = vmax.f32 %v972, 0.0
  %v1037 = vmax.f32 %v973, 0.0
  %v1038 = vmax.f32 %v974, 0.0
  %v1039 = vmax.f32 %v975, 0.0
  %v1040 = vmax.f32 %v976, 0.0
  %v1041 = vmax.f32 %v977, 0.0
  %v1042 = vmax.f32 %v978, 0.0
  %v1043 = vmax.f32 %v979, 0.0
  %v1044 = vmax.f32 %v980, 0.0
  %v1045 = vmax.f32 %v981, 0.0
  %v1046 = vmax.f32 %v982, 0.0
  %v1047 = vmax.f32 %v983, 0.0
  %v1048 = vmax.f32 %v984, 0.0
  %v1049 = vmax.f32 %v985, 0.0
  %v1050 = vmax.f32 %v986, 0.0
  %v1051 = vmax.f32 %v987, 0.0
  %v1052 = vmax.f32 %v988, 0.0
  %v1053 = vmax.f32 %v989, 0.0
  %v1054 = vmax.f32 %v990, 0.0
  %v1055 = vmax.f32 %v991, 0.0
  %v1056 = vmax.f32 %v992, 0.0
  %v1057 = vmax.f32 %v993, 0.0
  %v1058 = vmax.f32 %v994, 0.0
  %v1059 = vmax.f32 %v995, 0.0
  %v1060 = vmax.f32 %v996, 0.0
  %v1061 = vmax.f32 %v997, 0.0
  %v1062 = vmax.f32 %v998, 0.0
  %v1063 = vmax.f32 %v999, 0.0
  %v1064 = vmax.f32 %v1000, 0.0
  %v1065 = vmax.f32 %v1001, 0.0
  %v1066 = vmax.f32 %v1002, 0.0
  %v1067 = vmax.f32 %v1003, 0.0
  %v1068 = vmax.f32 %v1004, 0.0
  %v1069 = vpack.c.bf16 %v1006, %v1005
  %v1070 = vpack.c.bf16 %v1008, %v1007
  %v1071 = vpack.c.bf16 %v1010, %v1009
  %v1072 = vpack.c.bf16 %v1012, %v1011
  %v1073 = vpack.c.bf16 %v1014, %v1013
  %v1074 = vpack.c.bf16 %v1016, %v1015
  %v1075 = vpack.c.bf16 %v1018, %v1017
  %v1076 = vpack.c.bf16 %v1020, %v1019
  %v1077 = vpack.c.bf16 %v1022, %v1021
  %v1078 = vpack.c.bf16 %v1024, %v1023
  %v1079 = vpack.c.bf16 %v1026, %v1025
  %v1080 = vpack.c.bf16 %v1028, %v1027
  %v1081 = vpack.c.bf16 %v1030, %v1029
  %v1082 = vpack.c.bf16 %v1032, %v1031
  %v1083 = vpack.c.bf16 %v1034, %v1033
  %v1084 = vpack.c.bf16 %v1036, %v1035
  %v1085 = vpack.c.bf16 %v1038, %v1037
  %v1086 = vpack.c.bf16 %v1040, %v1039
  %v1087 = vpack.c.bf16 %v1042, %v1041
  %v1088 = vpack.c.bf16 %v1044, %v1043
  %v1089 = vpack.c.bf16 %v1046, %v1045
  %v1090 = vpack.c.bf16 %v1048, %v1047
  %v1091 = vpack.c.bf16 %v1050, %v1049
  %v1092 = vpack.c.bf16 %v1052, %v1051
  %v1093 = vpack.c.bf16 %v1054, %v1053
  %v1094 = vpack.c.bf16 %v1056, %v1055
  %v1095 = vpack.c.bf16 %v1058, %v1057
  %v1096 = vpack.c.bf16 %v1060, %v1059
  %v1097 = vpack.c.bf16 %v1062, %v1061
  %v1098 = vpack.c.bf16 %v1064, %v1063
  %v1099 = vpack.c.bf16 %v1066, %v1065
  %v1100 = vpack.c.bf16 %v1068, %v1067
  %v1133 = vunpack.c.l.b16 %v1069
  %v1134 = vunpack.c.h.b16 %v1069
  %v1135 = vunpack.c.l.b16 %v1070
  %v1136 = vunpack.c.h.b16 %v1070
  %v1137 = vunpack.c.l.b16 %v1071
  %v1138 = vunpack.c.h.b16 %v1071
  %v1139 = vunpack.c.l.b16 %v1072
  %v1140 = vunpack.c.h.b16 %v1072
  %v1141 = vunpack.c.l.b16 %v1073
  %v1142 = vunpack.c.h.b16 %v1073
  %v1143 = vunpack.c.l.b16 %v1074
  %v1144 = vunpack.c.h.b16 %v1074
  %v1145 = vunpack.c.l.b16 %v1075
  %v1146 = vunpack.c.h.b16 %v1075
  %v1147 = vunpack.c.l.b16 %v1076
  %v1148 = vunpack.c.h.b16 %v1076
  %v1149 = vunpack.c.l.b16 %v1077
  %v1150 = vunpack.c.h.b16 %v1077
  %v1151 = vunpack.c.l.b16 %v1078
  %v1152 = vunpack.c.h.b16 %v1078
  %v1153 = vunpack.c.l.b16 %v1079
  %v1154 = vunpack.c.h.b16 %v1079
  %v1155 = vunpack.c.l.b16 %v1080
  %v1156 = vunpack.c.h.b16 %v1080
  %v1157 = vunpack.c.l.b16 %v1081
  %v1158 = vunpack.c.h.b16 %v1081
  %v1159 = vunpack.c.l.b16 %v1082
  %v1160 = vunpack.c.h.b16 %v1082
  %v1161 = vunpack.c.l.b16 %v1083
  %v1162 = vunpack.c.h.b16 %v1083
  %v1163 = vunpack.c.l.b16 %v1084
  %v1164 = vunpack.c.h.b16 %v1084
  %v1165 = vunpack.c.l.b16 %v1085
  %v1166 = vunpack.c.h.b16 %v1085
  %v1167 = vunpack.c.l.b16 %v1086
  %v1168 = vunpack.c.h.b16 %v1086
  %v1169 = vunpack.c.l.b16 %v1087
  %v1170 = vunpack.c.h.b16 %v1087
  %v1171 = vunpack.c.l.b16 %v1088
  %v1172 = vunpack.c.h.b16 %v1088
  %v1173 = vunpack.c.l.b16 %v1089
  %v1174 = vunpack.c.h.b16 %v1089
  %v1175 = vunpack.c.l.b16 %v1090
  %v1176 = vunpack.c.h.b16 %v1090
  %v1177 = vunpack.c.l.b16 %v1091
  %v1178 = vunpack.c.h.b16 %v1091
  %v1179 = vunpack.c.l.b16 %v1092
  %v1180 = vunpack.c.h.b16 %v1092
  %v1181 = vunpack.c.l.b16 %v1093
  %v1182 = vunpack.c.h.b16 %v1093
  %v1183 = vunpack.c.l.b16 %v1094
  %v1184 = vunpack.c.h.b16 %v1094
  %v1185 = vunpack.c.l.b16 %v1095
  %v1186 = vunpack.c.h.b16 %v1095
  %v1187 = vunpack.c.l.b16 %v1096
  %v1188 = vunpack.c.h.b16 %v1096
  %v1189 = vunpack.c.l.b16 %v1097
  %v1190 = vunpack.c.h.b16 %v1097
  %v1191 = vunpack.c.l.b16 %v1098
  %v1192 = vunpack.c.h.b16 %v1098
  %v1193 = vunpack.c.l.b16 %v1099
  %v1194 = vunpack.c.h.b16 %v1099
  %v1195 = vunpack.c.l.b16 %v1100
  %v1196 = vunpack.c.h.b16 %v1100
  %v1197 = vpack.c.b16 %v1133, %v1133
  %v1198 = vpack.c.b16 %v1134, %v1134
  %v1199 = vpack.c.b16 %v1135, %v1135
  %v1200 = vpack.c.b16 %v1136, %v1136
  %v1201 = vpack.c.b16 %v1137, %v1137
  %v1202 = vpack.c.b16 %v1138, %v1138
  %v1203 = vpack.c.b16 %v1139, %v1139
  %v1204 = vpack.c.b16 %v1140, %v1140
  %v1205 = vpack.c.b16 %v1141, %v1141
  %v1206 = vpack.c.b16 %v1142, %v1142
  %v1207 = vpack.c.b16 %v1143, %v1143
  %v1208 = vpack.c.b16 %v1144, %v1144
  %v1209 = vpack.c.b16 %v1145, %v1145
  %v1210 = vpack.c.b16 %v1146, %v1146
  %v1211 = vpack.c.b16 %v1147, %v1147
  %v1212 = vpack.c.b16 %v1148, %v1148
  %v1213 = vpack.c.b16 %v1149, %v1149
  %v1214 = vpack.c.b16 %v1150, %v1150
  %v1215 = vpack.c.b16 %v1151, %v1151
  %v1216 = vpack.c.b16 %v1152, %v1152
  %v1217 = vpack.c.b16 %v1153, %v1153
  %v1218 = vpack.c.b16 %v1154, %v1154
  %v1219 = vpack.c.b16 %v1155, %v1155
  %v1220 = vpack.c.b16 %v1156, %v1156
  %v1221 = vpack.c.b16 %v1157, %v1157
  %v1222 = vpack.c.b16 %v1158, %v1158
  %v1223 = vpack.c.b16 %v1159, %v1159
  %v1224 = vpack.c.b16 %v1160, %v1160
  %v1225 = vpack.c.b16 %v1161, %v1161
  %v1226 = vpack.c.b16 %v1162, %v1162
  %v1227 = vpack.c.b16 %v1163, %v1163
  %v1228 = vpack.c.b16 %v1164, %v1164
  %v1229 = vpack.c.b16 %v1165, %v1165
  %v1230 = vpack.c.b16 %v1166, %v1166
  %v1231 = vpack.c.b16 %v1167, %v1167
  %v1232 = vpack.c.b16 %v1168, %v1168
  %v1233 = vpack.c.b16 %v1169, %v1169
  %v1234 = vpack.c.b16 %v1170, %v1170
  %v1235 = vpack.c.b16 %v1171, %v1171
  %v1236 = vpack.c.b16 %v1172, %v1172
  %v1237 = vpack.c.b16 %v1173, %v1173
  %v1238 = vpack.c.b16 %v1174, %v1174
  %v1239 = vpack.c.b16 %v1175, %v1175
  %v1240 = vpack.c.b16 %v1176, %v1176
  %v1241 = vpack.c.b16 %v1177, %v1177
  %v1242 = vpack.c.b16 %v1178, %v1178
  %v1243 = vpack.c.b16 %v1179, %v1179
  %v1244 = vpack.c.b16 %v1180, %v1180
  %v1245 = vpack.c.b16 %v1181, %v1181
  %v1246 = vpack.c.b16 %v1182, %v1182
  %v1247 = vpack.c.b16 %v1183, %v1183
  %v1248 = vpack.c.b16 %v1184, %v1184
  %v1249 = vpack.c.b16 %v1185, %v1185
  %v1250 = vpack.c.b16 %v1186, %v1186
  %v1251 = vpack.c.b16 %v1187, %v1187
  %v1252 = vpack.c.b16 %v1188, %v1188
  %v1253 = vpack.c.b16 %v1189, %v1189
  %v1254 = vpack.c.b16 %v1190, %v1190
  %v1255 = vpack.c.b16 %v1191, %v1191
  %v1256 = vpack.c.b16 %v1192, %v1192
  %v1257 = vpack.c.b16 %v1193, %v1193
  %v1258 = vpack.c.b16 %v1194, %v1194
  %v1259 = vpack.c.b16 %v1195, %v1195
  %v1260 = vpack.c.b16 %v1196, %v1196
  %vm1325 = vcmask 60416
  %1326 = vst.msk [vmem:[%s5] sm:$0xf] %vm1325, %v1197
  %1327 = vst.msk [vmem:[%s5 + $0x4] sm:$0xf] %vm1325, %v1198
  %1328 = vst.msk [vmem:[%s5 + $0x8] sm:$0xf] %vm1325, %v1199
  %1329 = vst.msk [vmem:[%s5 + $0xc] sm:$0xf] %vm1325, %v1200
  %1330 = vst.msk [vmem:[%s5 + $0x10] sm:$0xf] %vm1325, %v1201
  %1331 = vst.msk [vmem:[%s5 + $0x14] sm:$0xf] %vm1325, %v1202
  %1332 = vst.msk [vmem:[%s5 + $0x18] sm:$0xf] %vm1325, %v1203
  %1333 = vst.msk [vmem:[%s5 + $0x1c] sm:$0xf] %vm1325, %v1204
  %1334 = vst.msk [vmem:[%s5 + $0x20] sm:$0xf] %vm1325, %v1205
  %1335 = vst.msk [vmem:[%s5 + $0x24] sm:$0xf] %vm1325, %v1206
  %1336 = vst.msk [vmem:[%s5 + $0x28] sm:$0xf] %vm1325, %v1207
  %1337 = vst.msk [vmem:[%s5 + $0x2c] sm:$0xf] %vm1325, %v1208
  %1338 = vst.msk [vmem:[%s5 + $0x30] sm:$0xf] %vm1325, %v1209
  %1339 = vst.msk [vmem:[%s5 + $0x34] sm:$0xf] %vm1325, %v1210
  %1340 = vst.msk [vmem:[%s5 + $0x38] sm:$0xf] %vm1325, %v1211
  %1341 = vst.msk [vmem:[%s5 + $0x3c] sm:$0xf] %vm1325, %v1212
  %1342 = vst.msk [vmem:[%s5 + $0x40] sm:$0xf] %vm1325, %v1213
  %1343 = vst.msk [vmem:[%s5 + $0x44] sm:$0xf] %vm1325, %v1214
  %1344 = vst.msk [vmem:[%s5 + $0x48] sm:$0xf] %vm1325, %v1215
  %1345 = vst.msk [vmem:[%s5 + $0x4c] sm:$0xf] %vm1325, %v1216
  %1346 = vst.msk [vmem:[%s5 + $0x50] sm:$0xf] %vm1325, %v1217
  %1347 = vst.msk [vmem:[%s5 + $0x54] sm:$0xf] %vm1325, %v1218
  %1348 = vst.msk [vmem:[%s5 + $0x58] sm:$0xf] %vm1325, %v1219
  %1349 = vst.msk [vmem:[%s5 + $0x5c] sm:$0xf] %vm1325, %v1220
  %1350 = vst.msk [vmem:[%s5 + $0x60] sm:$0xf] %vm1325, %v1221
  %1351 = vst.msk [vmem:[%s5 + $0x64] sm:$0xf] %vm1325, %v1222
  %1352 = vst.msk [vmem:[%s5 + $0x68] sm:$0xf] %vm1325, %v1223
  %1353 = vst.msk [vmem:[%s5 + $0x6c] sm:$0xf] %vm1325, %v1224
  %1354 = vst.msk [vmem:[%s5 + $0x70] sm:$0xf] %vm1325, %v1225
  %1355 = vst.msk [vmem:[%s5 + $0x74] sm:$0xf] %vm1325, %v1226
  %1356 = vst.msk [vmem:[%s5 + $0x78] sm:$0xf] %vm1325, %v1227
  %1357 = vst.msk [vmem:[%s5 + $0x7c] sm:$0xf] %vm1325, %v1228
  %1358 = vst.msk [vmem:[%s5 + $0x80] sm:$0xf] %vm1325, %v1229
  %1359 = vst.msk [vmem:[%s5 + $0x84] sm:$0xf] %vm1325, %v1230
  %1360 = vst.msk [vmem:[%s5 + $0x88] sm:$0xf] %vm1325, %v1231
  %1361 = vst.msk [vmem:[%s5 + $0x8c] sm:$0xf] %vm1325, %v1232
  %1362 = vst.msk [vmem:[%s5 + $0x90] sm:$0xf] %vm1325, %v1233
  %1363 = vst.msk [vmem:[%s5 + $0x94] sm:$0xf] %vm1325, %v1234
  %1364 = vst.msk [vmem:[%s5 + $0x98] sm:$0xf] %vm1325, %v1235
  %1365 = vst.msk [vmem:[%s5 + $0x9c] sm:$0xf] %vm1325, %v1236
  %1366 = vst.msk [vmem:[%s5 + $0xa0] sm:$0xf] %vm1325, %v1237
  %1367 = vst.msk [vmem:[%s5 + $0xa4] sm:$0xf] %vm1325, %v1238
  %1368 = vst.msk [vmem:[%s5 + $0xa8] sm:$0xf] %vm1325, %v1239
  %1369 = vst.msk [vmem:[%s5 + $0xac] sm:$0xf] %vm1325, %v1240
  %1370 = vst.msk [vmem:[%s5 + $0xb0] sm:$0xf] %vm1325, %v1241
  %1371 = vst.msk [vmem:[%s5 + $0xb4] sm:$0xf] %vm1325, %v1242
  %1372 = vst.msk [vmem:[%s5 + $0xb8] sm:$0xf] %vm1325, %v1243
  %1373 = vst.msk [vmem:[%s5 + $0xbc] sm:$0xf] %vm1325, %v1244
  %1374 = vst.msk [vmem:[%s5 + $0xc0] sm:$0xf] %vm1325, %v1245
  %1375 = vst.msk [vmem:[%s5 + $0xc4] sm:$0xf] %vm1325, %v1246
  %1376 = vst.msk [vmem:[%s5 + $0xc8] sm:$0xf] %vm1325, %v1247
  %1377 = vst.msk [vmem:[%s5 + $0xcc] sm:$0xf] %vm1325, %v1248
  %1378 = vst.msk [vmem:[%s5 + $0xd0] sm:$0xf] %vm1325, %v1249
  %1379 = vst.msk [vmem:[%s5 + $0xd4] sm:$0xf] %vm1325, %v1250
  %1380 = vst.msk [vmem:[%s5 + $0xd8] sm:$0xf] %vm1325, %v1251
  %1381 = vst.msk [vmem:[%s5 + $0xdc] sm:$0xf] %vm1325, %v1252
  %1382 = vst.msk [vmem:[%s5 + $0xe0] sm:$0xf] %vm1325, %v1253
  %1383 = vst.msk [vmem:[%s5 + $0xe4] sm:$0xf] %vm1325, %v1254
  %1384 = vst.msk [vmem:[%s5 + $0xe8] sm:$0xf] %vm1325, %v1255
  %1385 = vst.msk [vmem:[%s5 + $0xec] sm:$0xf] %vm1325, %v1256
  %1386 = vst.msk [vmem:[%s5 + $0xf0] sm:$0xf] %vm1325, %v1257
  %1387 = vst.msk [vmem:[%s5 + $0xf4] sm:$0xf] %vm1325, %v1258
  %1388 = vst.msk [vmem:[%s5 + $0xf8] sm:$0xf] %vm1325, %v1259
  %1389 = vst.msk [vmem:[%s5 + $0xfc] sm:$0xf] %vm1325, %v1260
  // Predicated region
  $region22: #{resnet18_grouped_forward.25} parent=0 // pred_check
    _
  $region23: #{resnet18_grouped_forward.25} parent=0 // pred_check_branch
    %1391 = sbr.rel (0) target = $region25
  $region24: #{resnet18_grouped_forward.25} parent=0 // pred_region
    _
  $region25: #{resnet18_grouped_forward.25} parent=0 // pred_fallthru
    _
  // Predicated region
  $region26: #{resnet18_grouped_forward.25} parent=0 // pred_check
    _
  $region27: #{resnet18_grouped_forward.25} parent=0 // pred_check_branch
    %1393 = sbr.rel (0) target = $region29
  $region28: #{resnet18_grouped_forward.25} parent=0 // pred_region
    _
  $region29: #{resnet18_grouped_forward.25} parent=0 // pred_fallthru
    _

// kernel: resnet18_grouped_forward.28
$region0: #{resnet18_grouped_forward.28}
  #allocation0 [shape = 'u32[]', space=smem, size = 0x4, offset = 0x4, fixed_abs, tag = 'smem constant byte address 0x4 - core index']
  #allocation1 [shape = 'u32[144,128]{1,0:T(1,128)}', space=vmem, size = 0x12000, scoped, tag = 'internal scratch']
  %s0 = inlined_call_operand.vmem [shape: bf16[128,72], index: 0, kind: input, shape index: {}]
  %s1 = inlined_call_operand.vmem [shape: bf16[72,16], index: 1, kind: input, shape index: {}]
  %s2 = inlined_call_operand.vmem [shape: f32[1,16], index: 2, kind: input, shape index: {}]
  %s3 = inlined_call_operand.vmem [shape: f32[1,16], index: 3, kind: input, shape index: {}]
  %s4 = inlined_call_operand.vmem [shape: bf16[128,16], index: 4, kind: output, shape index: {}]
  %s5 = sld [smem:[#allocation0]]
  $region26: #{resnet18_grouped_forward.28} parent=0
    _
  %s7 = ssub.s32 1, %s5
  %s8 = scalar_select 0, %s7, %s5
  // Predicated region
  $region2: #{resnet18_grouped_forward.28} parent=0 // pred_check
    _
  $region3: #{resnet18_grouped_forward.28} parent=0 // pred_check_branch
    %10 = sbr.rel (0) target = $region5
  $region4: #{resnet18_grouped_forward.28} parent=0 // pred_region
    _
  $region5: #{resnet18_grouped_forward.28} parent=0 // pred_fallthru
    _
  // Predicated region
  $region6: #{resnet18_grouped_forward.28} parent=0 // pred_check
    _
  $region7: #{resnet18_grouped_forward.28} parent=0 // pred_check_branch
    %12 = sbr.rel (0) target = $region9
  $region8: #{resnet18_grouped_forward.28} parent=0 // pred_region
    _
  $region9: #{resnet18_grouped_forward.28} parent=0 // pred_fallthru
    _
  // Predicated region
  $region10: #{resnet18_grouped_forward.28} parent=0 // pred_check
    _
  $region11: #{resnet18_grouped_forward.28} parent=0 // pred_check_branch
    %14 = sbr.rel (0) target = $region13
  $region12: #{resnet18_grouped_forward.28} parent=0 // pred_region
    _
  $region13: #{resnet18_grouped_forward.28} parent=0 // pred_fallthru
    _
  // Predicated region
  $region14: #{resnet18_grouped_forward.28} parent=0 // pred_check
    _
  $region15: #{resnet18_grouped_forward.28} parent=0 // pred_check_branch
    %16 = sbr.rel (0) target = $region17
  $region16: #{resnet18_grouped_forward.28} parent=0 // pred_region
    _
  $region17: #{resnet18_grouped_forward.28} parent=0 // pred_fallthru
    _
  %v18 = vld [vmem:[%s0] sm:$0xf]
  %v19 = vld [vmem:[%s0 + $0x4] sm:$0xf]
  %v20 = vld [vmem:[%s0 + $0x8] sm:$0xf]
  %v21 = vld [vmem:[%s0 + $0xc] sm:$0xf]
  %v22 = vld [vmem:[%s0 + $0x10] sm:$0xf]
  %v23 = vld [vmem:[%s0 + $0x14] sm:$0xf]
  %v24 = vld [vmem:[%s0 + $0x18] sm:$0xf]
  %v25 = vld [vmem:[%s0 + $0x1c] sm:$0xf]
  %v26 = vld [vmem:[%s0 + $0x20] sm:$0xf]
  %v27 = vld [vmem:[%s0 + $0x24] sm:$0xf]
  %v28 = vld [vmem:[%s0 + $0x28] sm:$0xf]
  %v29 = vld [vmem:[%s0 + $0x2c] sm:$0xf]
  %v30 = vld [vmem:[%s0 + $0x30] sm:$0xf]
  %v31 = vld [vmem:[%s0 + $0x34] sm:$0xf]
  %v32 = vld [vmem:[%s0 + $0x38] sm:$0xf]
  %v33 = vld [vmem:[%s0 + $0x3c] sm:$0xf]
  %v34 = vld [vmem:[%s1] sm:$0xf]
  %v35 = vld [vmem:[%s1 + $0x4] sm:$0xf]
  %v36 = vld [vmem:[%s1 + $0x8] sm:$0xf]
  %v37 = vld [vmem:[%s1 + $0xc] sm:$0xf]
  %v38 = vld [vmem:[%s1 + $0x10] sm:$0xf]
  %v39 = vld [vmem:[%s1 + $0x14] sm:$0xf]
  %v40 = vld [vmem:[%s1 + $0x18] sm:$0xf]
  %v41 = vld [vmem:[%s1 + $0x1c] sm:$0xf]
  %v42 = vld [vmem:[%s1 + $0x20] sm:$0xf]
  %v59 = vunpack.c.l.b16 %v18
  %v60 = vunpack.c.l.b16 %v19
  %v61 = vunpack.c.l.b16 %v20
  %v62 = vunpack.c.l.b16 %v21
  %v63 = vunpack.c.l.b16 %v22
  %v64 = vunpack.c.l.b16 %v23
  %v65 = vunpack.c.l.b16 %v24
  %v66 = vunpack.c.l.b16 %v25
  %v67 = vunpack.c.l.b16 %v26
  %v68 = vunpack.c.l.b16 %v27
  %v69 = vunpack.c.l.b16 %v28
  %v70 = vunpack.c.l.b16 %v29
  %v71 = vunpack.c.l.b16 %v30
  %v72 = vunpack.c.l.b16 %v31
  %v73 = vunpack.c.l.b16 %v32
  %v74 = vunpack.c.l.b16 %v33
  %v75 = vpack.c.b16 %v60, %v59
  %v76 = vpack.c.b16 %v62, %v61
  %v77 = vpack.c.b16 %v64, %v63
  %v78 = vpack.c.b16 %v66, %v65
  %v79 = vpack.c.b16 %v68, %v67
  %v80 = vpack.c.b16 %v70, %v69
  %v81 = vpack.c.b16 %v72, %v71
  %v82 = vpack.c.b16 %v74, %v73
  %v92 = vunpack.c.l.b16 %v34
  %v93 = vunpack.c.l.b16 %v35
  %v94 = vunpack.c.l.b16 %v36
  %v95 = vunpack.c.l.b16 %v37
  %v96 = vunpack.c.l.b16 %v38
  %v97 = vunpack.c.l.b16 %v39
  %v98 = vunpack.c.l.b16 %v40
  %v99 = vunpack.c.l.b16 %v41
  %v100 = vunpack.c.l.b16 %v42
  %v101 = vpack.c.b16 %v93, %v92
  %v102 = vpack.c.b16 %v95, %v94
  %v103 = vpack.c.b16 %v97, %v96
  %v104 = vpack.c.b16 %v99, %v98
  %v105 = vpack.c.b16 %v100, %v100
  %vm110 = vcmask 588800
  %v112 = vsel %vm110, %v75, 0
  %v115 = vsel %vm110, %v76, 0
  %v118 = vsel %vm110, %v77, 0
  %v121 = vsel %vm110, %v78, 0
  %v124 = vsel %vm110, %v79, 0
  %v127 = vsel %vm110, %v80, 0
  %v130 = vsel %vm110, %v81, 0
  %v133 = vsel %vm110, %v82, 0
  %vm135 = vcmask 1043456
  %v137 = vsel %vm135, %v105, 0
  %139 = vmatprep.subr.bf16.mxu0 0
  %140 = vmatpush1.bf16.msra.mxu0 0
  %141 = vmatprep.subr.bf16.mxu0 0
  %142 = vmatpush1.bf16.msra.mxu0 0
  %143 = vmatprep.subr.bf16.mxu0 0
  %144 = vmatpush1.bf16.msra.mxu0 0
  %145 = vmatprep.subr.bf16.mxu0 0
  %146 = vmatpush1.bf16.msra.mxu0 %v137
  %147 = vmatprep.subr.bf16.mxu0 0
  %148 = vmatpush1.bf16.msra.mxu0 %v104
  %149 = vmatprep.subr.bf16.mxu0 0
  %150 = vmatpush1.bf16.msra.mxu0 %v103
  %151 = vmatprep.subr.bf16.mxu0 0
  %152 = vmatpush1.bf16.msra.mxu0 %v102
  %153 = vmatprep.subr.bf16.mxu0 0
  %154 = vmatpush1.bf16.msra.mxu0 %v101
  %155 = vmatprep.subr.bf16.mxu0 0
  %156 = vmatpush2.bf16.msra.mxu0 0
  %157 = vmatprep.subr.bf16.mxu0 0
  %158 = vmatpush2.bf16.msra.mxu0 0
  %159 = vmatprep.subr.bf16.mxu0 0
  %160 = vmatpush2.bf16.msra.mxu0 0
  %161 = vmatprep.subr.bf16.mxu0 0
  %162 = vmatpush2.bf16.msra.mxu0 0
  %163 = vmatprep.subr.bf16.mxu0 0
  %164 = vmatpush2.bf16.msra.mxu0 0
  %165 = vmatprep.subr.bf16.mxu0 0
  %166 = vmatpush2.bf16.msra.mxu0 0
  %167 = vmatprep.subr.bf16.mxu0 0
  %168 = vmatpush2.bf16.msra.mxu0 0
  %169 = vmatprep.subr.bf16.mxu0 0
  %170 = vmatpush2.bf16.msra.mxu0 0
  %171 = vmatprep.mubr.bf16.mxu0 0
  %172 = vmatmul.mubr.bf16.gmra.mxu0 %v112
  %v173 = vpop.f32.mrf.mxu0
  %v174 = vadd.f32 0.0, %v173
  %v175 = vpop.f32.mrf.mxu0
  %v176 = vpop.f32.mrf.mxu0
  %v177 = vadd.f32 0.0, %v176
  %v178 = vpop.f32.mrf.mxu0
  %179 = vmatprep.mubr.bf16.mxu0 0
  %180 = vmatmul.mubr.bf16.gmra.mxu0 %v115
  %v181 = vpop.f32.mrf.mxu0
  %v182 = vadd.f32 0.0, %v181
  %v183 = vpop.f32.mrf.mxu0
  %v184 = vpop.f32.mrf.mxu0
  %v185 = vadd.f32 0.0, %v184
  %v186 = vpop.f32.mrf.mxu0
  %187 = vmatprep.mubr.bf16.mxu0 0
  %188 = vmatmul.mubr.bf16.gmra.mxu0 %v118
  %v189 = vpop.f32.mrf.mxu0
  %v190 = vadd.f32 0.0, %v189
  %v191 = vpop.f32.mrf.mxu0
  %v192 = vpop.f32.mrf.mxu0
  %v193 = vadd.f32 0.0, %v192
  %v194 = vpop.f32.mrf.mxu0
  %195 = vmatprep.mubr.bf16.mxu0 0
  %196 = vmatmul.mubr.bf16.gmra.mxu0 %v121
  %v197 = vpop.f32.mrf.mxu0
  %v198 = vadd.f32 0.0, %v197
  %v199 = vpop.f32.mrf.mxu0
  %v200 = vpop.f32.mrf.mxu0
  %v201 = vadd.f32 0.0, %v200
  %v202 = vpop.f32.mrf.mxu0
  %203 = vmatprep.mubr.bf16.mxu0 0
  %204 = vmatmul.mubr.bf16.gmra.mxu0 %v124
  %v205 = vpop.f32.mrf.mxu0
  %v206 = vadd.f32 0.0, %v205
  %v207 = vpop.f32.mrf.mxu0
  %v208 = vpop.f32.mrf.mxu0
  %v209 = vadd.f32 0.0, %v208
  %v210 = vpop.f32.mrf.mxu0
  %211 = vmatprep.mubr.bf16.mxu0 0
  %212 = vmatmul.mubr.bf16.gmra.mxu0 %v127
  %v213 = vpop.f32.mrf.mxu0
  %v214 = vadd.f32 0.0, %v213
  %v215 = vpop.f32.mrf.mxu0
  %v216 = vpop.f32.mrf.mxu0
  %v217 = vadd.f32 0.0, %v216
  %v218 = vpop.f32.mrf.mxu0
  %219 = vmatprep.mubr.bf16.mxu0 0
  %220 = vmatmul.mubr.bf16.gmra.mxu0 %v130
  %v221 = vpop.f32.mrf.mxu0
  %v222 = vadd.f32 0.0, %v221
  %v223 = vpop.f32.mrf.mxu0
  %v224 = vpop.f32.mrf.mxu0
  %v225 = vadd.f32 0.0, %v224
  %v226 = vpop.f32.mrf.mxu0
  %227 = vmatprep.mubr.bf16.mxu0 0
  %228 = vmatmul.mubr.bf16.gmra.mxu0 %v133
  %v229 = vpop.f32.mrf.mxu0
  %v230 = vadd.f32 0.0, %v229
  %v231 = vpop.f32.mrf.mxu0
  %v232 = vpop.f32.mrf.mxu0
  %v233 = vadd.f32 0.0, %v232
  %v234 = vpop.f32.mrf.mxu0
  %235 = vdwg.mxu0
  %v236 = vld [vmem:[%s2] sm:$0x1]
  %v238 = vlaneseq
  %v239 = vshrl.u32 %v238, 7
  %v240 = vsub.s32 0, %v239
  %v241 = vrot.slane %v236, %v240
  %v243 = vmul.f32 %v174, %v241
  %v244 = vmul.f32 %v177, %v241
  %v245 = vmul.f32 %v182, %v241
  %v246 = vmul.f32 %v185, %v241
  %v247 = vmul.f32 %v190, %v241
  %v248 = vmul.f32 %v193, %v241
  %v249 = vmul.f32 %v198, %v241
  %v250 = vmul.f32 %v201, %v241
  %v251 = vmul.f32 %v206, %v241
  %v252 = vmul.f32 %v209, %v241
  %v253 = vmul.f32 %v214, %v241
  %v254 = vmul.f32 %v217, %v241
  %v255 = vmul.f32 %v222, %v241
  %v256 = vmul.f32 %v225, %v241
  %v257 = vmul.f32 %v230, %v241
  %v258 = vmul.f32 %v233, %v241
  %v259 = vld [vmem:[%s3] sm:$0x1]
  %v261 = vlaneseq
  %v262 = vshrl.u32 %v261, 7
  %v263 = vsub.s32 0, %v262
  %v264 = vrot.slane %v259, %v263
  %v266 = vadd.f32 %v243, %v264
  %v267 = vadd.f32 %v244, %v264
  %v268 = vadd.f32 %v245, %v264
  %v269 = vadd.f32 %v246, %v264
  %v270 = vadd.f32 %v247, %v264
  %v271 = vadd.f32 %v248, %v264
  %v272 = vadd.f32 %v249, %v264
  %v273 = vadd.f32 %v250, %v264
  %v274 = vadd.f32 %v251, %v264
  %v275 = vadd.f32 %v252, %v264
  %v276 = vadd.f32 %v253, %v264
  %v277 = vadd.f32 %v254, %v264
  %v278 = vadd.f32 %v255, %v264
  %v279 = vadd.f32 %v256, %v264
  %v280 = vadd.f32 %v257, %v264
  %v281 = vadd.f32 %v258, %v264
  %v282 = vmax.f32 %v266, 0.0
  %v283 = vmax.f32 %v267, 0.0
  %v284 = vmax.f32 %v268, 0.0
  %v285 = vmax.f32 %v269, 0.0
  %v286 = vmax.f32 %v270, 0.0
  %v287 = vmax.f32 %v271, 0.0
  %v288 = vmax.f32 %v272, 0.0
  %v289 = vmax.f32 %v273, 0.0
  %v290 = vmax.f32 %v274, 0.0
  %v291 = vmax.f32 %v275, 0.0
  %v292 = vmax.f32 %v276, 0.0
  %v293 = vmax.f32 %v277, 0.0
  %v294 = vmax.f32 %v278, 0.0
  %v295 = vmax.f32 %v279, 0.0
  %v296 = vmax.f32 %v280, 0.0
  %v297 = vmax.f32 %v281, 0.0
  %v298 = vpack.c.bf16 %v283, %v282
  %v299 = vpack.c.bf16 %v285, %v284
  %v300 = vpack.c.bf16 %v287, %v286
  %v301 = vpack.c.bf16 %v289, %v288
  %v302 = vpack.c.bf16 %v291, %v290
  %v303 = vpack.c.bf16 %v293, %v292
  %v304 = vpack.c.bf16 %v295, %v294
  %v305 = vpack.c.bf16 %v297, %v296
  %v314 = vunpack.c.l.b16 %v298
  %v315 = vunpack.c.h.b16 %v298
  %v316 = vunpack.c.l.b16 %v299
  %v317 = vunpack.c.h.b16 %v299
  %v318 = vunpack.c.l.b16 %v300
  %v319 = vunpack.c.h.b16 %v300
  %v320 = vunpack.c.l.b16 %v301
  %v321 = vunpack.c.h.b16 %v301
  %v322 = vunpack.c.l.b16 %v302
  %v323 = vunpack.c.h.b16 %v302
  %v324 = vunpack.c.l.b16 %v303
  %v325 = vunpack.c.h.b16 %v303
  %v326 = vunpack.c.l.b16 %v304
  %v327 = vunpack.c.h.b16 %v304
  %v328 = vunpack.c.l.b16 %v305
  %v329 = vunpack.c.h.b16 %v305
  %v330 = vpack.c.b16 %v314, %v314
  %v331 = vpack.c.b16 %v315, %v315
  %v332 = vpack.c.b16 %v316, %v316
  %v333 = vpack.c.b16 %v317, %v317
  %v334 = vpack.c.b16 %v318, %v318
  %v335 = vpack.c.b16 %v319, %v319
  %v336 = vpack.c.b16 %v320, %v320
  %v337 = vpack.c.b16 %v321, %v321
  %v338 = vpack.c.b16 %v322, %v322
  %v339 = vpack.c.b16 %v323, %v323
  %v340 = vpack.c.b16 %v324, %v324
  %v341 = vpack.c.b16 %v325, %v325
  %v342 = vpack.c.b16 %v326, %v326
  %v343 = vpack.c.b16 %v327, %v327
  %v344 = vpack.c.b16 %v328, %v328
  %v345 = vpack.c.b16 %v329, %v329
  %vm362 = vcmask 125952
  %363 = vst.msk [vmem:[%s4] sm:$0xf] %vm362, %v330
  %364 = vst.msk [vmem:[%s4 + $0x4] sm:$0xf] %vm362, %v331
  %365 = vst.msk [vmem:[%s4 + $0x8] sm:$0xf] %vm362, %v332
  %366 = vst.msk [vmem:[%s4 + $0xc] sm:$0xf] %vm362, %v333
  %367 = vst.msk [vmem:[%s4 + $0x10] sm:$0xf] %vm362, %v334
  %368 = vst.msk [vmem:[%s4 + $0x14] sm:$0xf] %vm362, %v335
  %369 = vst.msk [vmem:[%s4 + $0x18] sm:$0xf] %vm362, %v336
  %370 = vst.msk [vmem:[%s4 + $0x1c] sm:$0xf] %vm362, %v337
  %371 = vst.msk [vmem:[%s4 + $0x20] sm:$0xf] %vm362, %v338
  %372 = vst.msk [vmem:[%s4 + $0x24] sm:$0xf] %vm362, %v339
  %373 = vst.msk [vmem:[%s4 + $0x28] sm:$0xf] %vm362, %v340
  %374 = vst.msk [vmem:[%s4 + $0x2c] sm:$0xf] %vm362, %v341
  %375 = vst.msk [vmem:[%s4 + $0x30] sm:$0xf] %vm362, %v342
  %376 = vst.msk [vmem:[%s4 + $0x34] sm:$0xf] %vm362, %v343
  %377 = vst.msk [vmem:[%s4 + $0x38] sm:$0xf] %vm362, %v344
  %378 = vst.msk [vmem:[%s4 + $0x3c] sm:$0xf] %vm362, %v345
  // Predicated region
  $region18: #{resnet18_grouped_forward.28} parent=0 // pred_check
    _
  $region19: #{resnet18_grouped_forward.28} parent=0 // pred_check_branch
    %380 = sbr.rel (0) target = $region21
  $region20: #{resnet18_grouped_forward.28} parent=0 // pred_region
    _
  $region21: #{resnet18_grouped_forward.28} parent=0 // pred_fallthru
    _
  // Predicated region
  $region22: #{resnet18_grouped_forward.28} parent=0 // pred_check
    _
  $region23: #{resnet18_grouped_forward.28} parent=0 // pred_check_branch
    %382 = sbr.rel (0) target = $region25
  $region24: #{resnet18_grouped_forward.28} parent=0 // pred_region
    _
  $region25: #{resnet18_grouped_forward.28} parent=0 // pred_fallthru
    _

// kernel: resnet18_grouped_forward.29
$region0: #{resnet18_grouped_forward.29}
  #allocation0 [shape = 'u32[]', space=smem, size = 0x4, offset = 0x4, fixed_abs, tag = 'smem constant byte address 0x4 - core index']
  #allocation1 [shape = 'u32[144,128]{1,0:T(1,128)}', space=vmem, size = 0x12000, scoped, tag = 'internal scratch']
  %s0 = inlined_call_operand.vmem [shape: bf16[128,8], index: 0, kind: input, shape index: {}]
  %s1 = inlined_call_operand.vmem [shape: bf16[8,16], index: 1, kind: input, shape index: {}]
  %s2 = inlined_call_operand.vmem [shape: f32[1,16], index: 2, kind: input, shape index: {}]
  %s3 = inlined_call_operand.vmem [shape: f32[1,16], index: 3, kind: input, shape index: {}]
  %s4 = inlined_call_operand.vmem [shape: bf16[128,16], index: 4, kind: output, shape index: {}]
  %s5 = sld [smem:[#allocation0]]
  $region26: #{resnet18_grouped_forward.29} parent=0
    _
  %s7 = ssub.s32 1, %s5
  %s8 = scalar_select 0, %s7, %s5
  // Predicated region
  $region2: #{resnet18_grouped_forward.29} parent=0 // pred_check
    _
  $region3: #{resnet18_grouped_forward.29} parent=0 // pred_check_branch
    %10 = sbr.rel (0) target = $region5
  $region4: #{resnet18_grouped_forward.29} parent=0 // pred_region
    _
  $region5: #{resnet18_grouped_forward.29} parent=0 // pred_fallthru
    _
  // Predicated region
  $region6: #{resnet18_grouped_forward.29} parent=0 // pred_check
    _
  $region7: #{resnet18_grouped_forward.29} parent=0 // pred_check_branch
    %12 = sbr.rel (0) target = $region9
  $region8: #{resnet18_grouped_forward.29} parent=0 // pred_region
    _
  $region9: #{resnet18_grouped_forward.29} parent=0 // pred_fallthru
    _
  // Predicated region
  $region10: #{resnet18_grouped_forward.29} parent=0 // pred_check
    _
  $region11: #{resnet18_grouped_forward.29} parent=0 // pred_check_branch
    %14 = sbr.rel (0) target = $region13
  $region12: #{resnet18_grouped_forward.29} parent=0 // pred_region
    _
  $region13: #{resnet18_grouped_forward.29} parent=0 // pred_fallthru
    _
  // Predicated region
  $region14: #{resnet18_grouped_forward.29} parent=0 // pred_check
    _
  $region15: #{resnet18_grouped_forward.29} parent=0 // pred_check_branch
    %16 = sbr.rel (0) target = $region17
  $region16: #{resnet18_grouped_forward.29} parent=0 // pred_region
    _
  $region17: #{resnet18_grouped_forward.29} parent=0 // pred_fallthru
    _
  %v18 = vld [vmem:[%s0] sm:$0xf]
  %v19 = vld [vmem:[%s0 + $0x4] sm:$0xf]
  %v20 = vld [vmem:[%s0 + $0x8] sm:$0xf]
  %v21 = vld [vmem:[%s0 + $0xc] sm:$0xf]
  %v22 = vld [vmem:[%s0 + $0x10] sm:$0xf]
  %v23 = vld [vmem:[%s0 + $0x14] sm:$0xf]
  %v24 = vld [vmem:[%s0 + $0x18] sm:$0xf]
  %v25 = vld [vmem:[%s0 + $0x1c] sm:$0xf]
  %v26 = vld [vmem:[%s0 + $0x20] sm:$0xf]
  %v27 = vld [vmem:[%s0 + $0x24] sm:$0xf]
  %v28 = vld [vmem:[%s0 + $0x28] sm:$0xf]
  %v29 = vld [vmem:[%s0 + $0x2c] sm:$0xf]
  %v30 = vld [vmem:[%s0 + $0x30] sm:$0xf]
  %v31 = vld [vmem:[%s0 + $0x34] sm:$0xf]
  %v32 = vld [vmem:[%s0 + $0x38] sm:$0xf]
  %v33 = vld [vmem:[%s0 + $0x3c] sm:$0xf]
  %v34 = vld [vmem:[%s1] sm:$0xf]
  %v51 = vunpack.c.l.b16 %v18
  %v52 = vunpack.c.l.b16 %v19
  %v53 = vunpack.c.l.b16 %v20
  %v54 = vunpack.c.l.b16 %v21
  %v55 = vunpack.c.l.b16 %v22
  %v56 = vunpack.c.l.b16 %v23
  %v57 = vunpack.c.l.b16 %v24
  %v58 = vunpack.c.l.b16 %v25
  %v59 = vunpack.c.l.b16 %v26
  %v60 = vunpack.c.l.b16 %v27
  %v61 = vunpack.c.l.b16 %v28
  %v62 = vunpack.c.l.b16 %v29
  %v63 = vunpack.c.l.b16 %v30
  %v64 = vunpack.c.l.b16 %v31
  %v65 = vunpack.c.l.b16 %v32
  %v66 = vunpack.c.l.b16 %v33
  %v67 = vpack.c.b16 %v52, %v51
  %v68 = vpack.c.b16 %v54, %v53
  %v69 = vpack.c.b16 %v56, %v55
  %v70 = vpack.c.b16 %v58, %v57
  %v71 = vpack.c.b16 %v60, %v59
  %v72 = vpack.c.b16 %v62, %v61
  %v73 = vpack.c.b16 %v64, %v63
  %v74 = vpack.c.b16 %v66, %v65
  %vm75 = vcmask 64512
  %v77 = vsel %vm75, %v67, 0
  %v80 = vsel %vm75, %v68, 0
  %v83 = vsel %vm75, %v69, 0
  %v86 = vsel %vm75, %v70, 0
  %v89 = vsel %vm75, %v71, 0
  %v92 = vsel %vm75, %v72, 0
  %v95 = vsel %vm75, %v73, 0
  %v98 = vsel %vm75, %v74, 0
  %vm100 = vcmask 1043456
  %v102 = vsel %vm100, %v34, 0
  %104 = vmatprep.subr.bf16.mxu0 0
  %105 = vmatpush1.bf16.msra.mxu0 0
  %106 = vmatprep.subr.bf16.mxu0 0
  %107 = vmatpush1.bf16.msra.mxu0 0
  %108 = vmatprep.subr.bf16.mxu0 0
  %109 = vmatpush1.bf16.msra.mxu0 0
  %110 = vmatprep.subr.bf16.mxu0 0
  %111 = vmatpush1.bf16.msra.mxu0 0
  %112 = vmatprep.subr.bf16.mxu0 0
  %113 = vmatpush1.bf16.msra.mxu0 0
  %114 = vmatprep.subr.bf16.mxu0 0
  %115 = vmatpush1.bf16.msra.mxu0 0
  %116 = vmatprep.subr.bf16.mxu0 0
  %117 = vmatpush1.bf16.msra.mxu0 0
  %118 = vmatprep.subr.bf16.mxu0 0
  %119 = vmatpush1.bf16.msra.mxu0 %v102
  %120 = vmatprep.subr.bf16.mxu0 0
  %121 = vmatpush2.bf16.msra.mxu0 0
  %122 = vmatprep.subr.bf16.mxu0 0
  %123 = vmatpush2.bf16.msra.mxu0 0
  %124 = vmatprep.subr.bf16.mxu0 0
  %125 = vmatpush2.bf16.msra.mxu0 0
  %126 = vmatprep.subr.bf16.mxu0 0
  %127 = vmatpush2.bf16.msra.mxu0 0
  %128 = vmatprep.subr.bf16.mxu0 0
  %129 = vmatpush2.bf16.msra.mxu0 0
  %130 = vmatprep.subr.bf16.mxu0 0
  %131 = vmatpush2.bf16.msra.mxu0 0
  %132 = vmatprep.subr.bf16.mxu0 0
  %133 = vmatpush2.bf16.msra.mxu0 0
  %134 = vmatprep.subr.bf16.mxu0 0
  %135 = vmatpush2.bf16.msra.mxu0 0
  %136 = vmatprep.mubr.bf16.mxu0 0
  %137 = vmatmul.mubr.bf16.gmra.mxu0 %v77
  %v138 = vpop.f32.mrf.mxu0
  %v139 = vadd.f32 0.0, %v138
  %v140 = vpop.f32.mrf.mxu0
  %v141 = vpop.f32.mrf.mxu0
  %v142 = vadd.f32 0.0, %v141
  %v143 = vpop.f32.mrf.mxu0
  %144 = vmatprep.mubr.bf16.mxu0 0
  %145 = vmatmul.mubr.bf16.gmra.mxu0 %v80
  %v146 = vpop.f32.mrf.mxu0
  %v147 = vadd.f32 0.0, %v146
  %v148 = vpop.f32.mrf.mxu0
  %v149 = vpop.f32.mrf.mxu0
  %v150 = vadd.f32 0.0, %v149
  %v151 = vpop.f32.mrf.mxu0
  %152 = vmatprep.mubr.bf16.mxu0 0
  %153 = vmatmul.mubr.bf16.gmra.mxu0 %v83
  %v154 = vpop.f32.mrf.mxu0
  %v155 = vadd.f32 0.0, %v154
  %v156 = vpop.f32.mrf.mxu0
  %v157 = vpop.f32.mrf.mxu0
  %v158 = vadd.f32 0.0, %v157
  %v159 = vpop.f32.mrf.mxu0
  %160 = vmatprep.mubr.bf16.mxu0 0
  %161 = vmatmul.mubr.bf16.gmra.mxu0 %v86
  %v162 = vpop.f32.mrf.mxu0
  %v163 = vadd.f32 0.0, %v162
  %v164 = vpop.f32.mrf.mxu0
  %v165 = vpop.f32.mrf.mxu0
  %v166 = vadd.f32 0.0, %v165
  %v167 = vpop.f32.mrf.mxu0
  %168 = vmatprep.mubr.bf16.mxu0 0
  %169 = vmatmul.mubr.bf16.gmra.mxu0 %v89
  %v170 = vpop.f32.mrf.mxu0
  %v171 = vadd.f32 0.0, %v170
  %v172 = vpop.f32.mrf.mxu0
  %v173 = vpop.f32.mrf.mxu0
  %v174 = vadd.f32 0.0, %v173
  %v175 = vpop.f32.mrf.mxu0
  %176 = vmatprep.mubr.bf16.mxu0 0
  %177 = vmatmul.mubr.bf16.gmra.mxu0 %v92
  %v178 = vpop.f32.mrf.mxu0
  %v179 = vadd.f32 0.0, %v178
  %v180 = vpop.f32.mrf.mxu0
  %v181 = vpop.f32.mrf.mxu0
  %v182 = vadd.f32 0.0, %v181
  %v183 = vpop.f32.mrf.mxu0
  %184 = vmatprep.mubr.bf16.mxu0 0
  %185 = vmatmul.mubr.bf16.gmra.mxu0 %v95
  %v186 = vpop.f32.mrf.mxu0
  %v187 = vadd.f32 0.0, %v186
  %v188 = vpop.f32.mrf.mxu0
  %v189 = vpop.f32.mrf.mxu0
  %v190 = vadd.f32 0.0, %v189
  %v191 = vpop.f32.mrf.mxu0
  %192 = vmatprep.mubr.bf16.mxu0 0
  %193 = vmatmul.mubr.bf16.gmra.mxu0 %v98
  %v194 = vpop.f32.mrf.mxu0
  %v195 = vadd.f32 0.0, %v194
  %v196 = vpop.f32.mrf.mxu0
  %v197 = vpop.f32.mrf.mxu0
  %v198 = vadd.f32 0.0, %v197
  %v199 = vpop.f32.mrf.mxu0
  %200 = vdwg.mxu0
  %v201 = vld [vmem:[%s2] sm:$0x1]
  %v203 = vlaneseq
  %v204 = vshrl.u32 %v203, 7
  %v205 = vsub.s32 0, %v204
  %v206 = vrot.slane %v201, %v205
  %v208 = vmul.f32 %v139, %v206
  %v209 = vmul.f32 %v142, %v206
  %v210 = vmul.f32 %v147, %v206
  %v211 = vmul.f32 %v150, %v206
  %v212 = vmul.f32 %v155, %v206
  %v213 = vmul.f32 %v158, %v206
  %v214 = vmul.f32 %v163, %v206
  %v215 = vmul.f32 %v166, %v206
  %v216 = vmul.f32 %v171, %v206
  %v217 = vmul.f32 %v174, %v206
  %v218 = vmul.f32 %v179, %v206
  %v219 = vmul.f32 %v182, %v206
  %v220 = vmul.f32 %v187, %v206
  %v221 = vmul.f32 %v190, %v206
  %v222 = vmul.f32 %v195, %v206
  %v223 = vmul.f32 %v198, %v206
  %v224 = vld [vmem:[%s3] sm:$0x1]
  %v226 = vlaneseq
  %v227 = vshrl.u32 %v226, 7
  %v228 = vsub.s32 0, %v227
  %v229 = vrot.slane %v224, %v228
  %v231 = vadd.f32 %v208, %v229
  %v232 = vadd.f32 %v209, %v229
  %v233 = vadd.f32 %v210, %v229
  %v234 = vadd.f32 %v211, %v229
  %v235 = vadd.f32 %v212, %v229
  %v236 = vadd.f32 %v213, %v229
  %v237 = vadd.f32 %v214, %v229
  %v238 = vadd.f32 %v215, %v229
  %v239 = vadd.f32 %v216, %v229
  %v240 = vadd.f32 %v217, %v229
  %v241 = vadd.f32 %v218, %v229
  %v242 = vadd.f32 %v219, %v229
  %v243 = vadd.f32 %v220, %v229
  %v244 = vadd.f32 %v221, %v229
  %v245 = vadd.f32 %v222, %v229
  %v246 = vadd.f32 %v223, %v229
  %v247 = vpack.c.bf16 %v232, %v231
  %v248 = vpack.c.bf16 %v234, %v233
  %v249 = vpack.c.bf16 %v236, %v235
  %v250 = vpack.c.bf16 %v238, %v237
  %v251 = vpack.c.bf16 %v240, %v239
  %v252 = vpack.c.bf16 %v242, %v241
  %v253 = vpack.c.bf16 %v244, %v243
  %v254 = vpack.c.bf16 %v246, %v245
  %v263 = vunpack.c.l.b16 %v247
  %v264 = vunpack.c.h.b16 %v247
  %v265 = vunpack.c.l.b16 %v248
  %v266 = vunpack.c.h.b16 %v248
  %v267 = vunpack.c.l.b16 %v249
  %v268 = vunpack.c.h.b16 %v249
  %v269 = vunpack.c.l.b16 %v250
  %v270 = vunpack.c.h.b16 %v250
  %v271 = vunpack.c.l.b16 %v251
  %v272 = vunpack.c.h.b16 %v251
  %v273 = vunpack.c.l.b16 %v252
  %v274 = vunpack.c.h.b16 %v252
  %v275 = vunpack.c.l.b16 %v253
  %v276 = vunpack.c.h.b16 %v253
  %v277 = vunpack.c.l.b16 %v254
  %v278 = vunpack.c.h.b16 %v254
  %v279 = vpack.c.b16 %v263, %v263
  %v280 = vpack.c.b16 %v264, %v264
  %v281 = vpack.c.b16 %v265, %v265
  %v282 = vpack.c.b16 %v266, %v266
  %v283 = vpack.c.b16 %v267, %v267
  %v284 = vpack.c.b16 %v268, %v268
  %v285 = vpack.c.b16 %v269, %v269
  %v286 = vpack.c.b16 %v270, %v270
  %v287 = vpack.c.b16 %v271, %v271
  %v288 = vpack.c.b16 %v272, %v272
  %v289 = vpack.c.b16 %v273, %v273
  %v290 = vpack.c.b16 %v274, %v274
  %v291 = vpack.c.b16 %v275, %v275
  %v292 = vpack.c.b16 %v276, %v276
  %v293 = vpack.c.b16 %v277, %v277
  %v294 = vpack.c.b16 %v278, %v278
  %vm311 = vcmask 125952
  %312 = vst.msk [vmem:[%s4] sm:$0xf] %vm311, %v279
  %313 = vst.msk [vmem:[%s4 + $0x4] sm:$0xf] %vm311, %v280
  %314 = vst.msk [vmem:[%s4 + $0x8] sm:$0xf] %vm311, %v281
  %315 = vst.msk [vmem:[%s4 + $0xc] sm:$0xf] %vm311, %v282
  %316 = vst.msk [vmem:[%s4 + $0x10] sm:$0xf] %vm311, %v283
  %317 = vst.msk [vmem:[%s4 + $0x14] sm:$0xf] %vm311, %v284
  %318 = vst.msk [vmem:[%s4 + $0x18] sm:$0xf] %vm311, %v285
  %319 = vst.msk [vmem:[%s4 + $0x1c] sm:$0xf] %vm311, %v286
  %320 = vst.msk [vmem:[%s4 + $0x20] sm:$0xf] %vm311, %v287
  %321 = vst.msk [vmem:[%s4 + $0x24] sm:$0xf] %vm311, %v288
  %322 = vst.msk [vmem:[%s4 + $0x28] sm:$0xf] %vm311, %v289
  %323 = vst.msk [vmem:[%s4 + $0x2c] sm:$0xf] %vm311, %v290
  %324 = vst.msk [vmem:[%s4 + $0x30] sm:$0xf] %vm311, %v291
  %325 = vst.msk [vmem:[%s4 + $0x34] sm:$0xf] %vm311, %v292
  %326 = vst.msk [vmem:[%s4 + $0x38] sm:$0xf] %vm311, %v293
  %327 = vst.msk [vmem:[%s4 + $0x3c] sm:$0xf] %vm311, %v294
  // Predicated region
  $region18: #{resnet18_grouped_forward.29} parent=0 // pred_check
    _
  $region19: #{resnet18_grouped_forward.29} parent=0 // pred_check_branch
    %329 = sbr.rel (0) target = $region21
  $region20: #{resnet18_grouped_forward.29} parent=0 // pred_region
    _
  $region21: #{resnet18_grouped_forward.29} parent=0 // pred_fallthru
    _
  // Predicated region
  $region22: #{resnet18_grouped_forward.29} parent=0 // pred_check
    _
  $region23: #{resnet18_grouped_forward.29} parent=0 // pred_check_branch
    %331 = sbr.rel (0) target = $region25
  $region24: #{resnet18_grouped_forward.29} parent=0 // pred_region
    _
  $region25: #{resnet18_grouped_forward.29} parent=0 // pred_fallthru
    _

// kernel: resnet18_grouped_forward.30
$region0: #{resnet18_grouped_forward.30}
  #allocation0 [shape = 'u32[]', space=smem, size = 0x4, offset = 0x4, fixed_abs, tag = 'smem constant byte address 0x4 - core index']
  #allocation1 [shape = 'u32[144,128]{1,0:T(1,128)}', space=vmem, size = 0x12000, scoped, tag = 'internal scratch']
  %s0 = inlined_call_operand.vmem [shape: bf16[128,144], index: 0, kind: input, shape index: {}]
  %s1 = inlined_call_operand.vmem [shape: bf16[144,16], index: 1, kind: input, shape index: {}]
  %s2 = inlined_call_operand.vmem [shape: f32[1,16], index: 2, kind: input, shape index: {}]
  %s3 = inlined_call_operand.vmem [shape: f32[1,16], index: 3, kind: input, shape index: {}]
  %s4 = inlined_call_operand.vmem [shape: bf16[128,16], index: 4, kind: input, shape index: {}]
  %s5 = inlined_call_operand.vmem [shape: bf16[128,16], index: 5, kind: output, shape index: {}]
  %s6 = sld [smem:[#allocation0]]
  $region30: #{resnet18_grouped_forward.30} parent=0
    _
  %s8 = ssub.s32 1, %s6
  %s9 = scalar_select 0, %s8, %s6
  // Predicated region
  $region2: #{resnet18_grouped_forward.30} parent=0 // pred_check
    _
  $region3: #{resnet18_grouped_forward.30} parent=0 // pred_check_branch
    %11 = sbr.rel (0) target = $region5
  $region4: #{resnet18_grouped_forward.30} parent=0 // pred_region
    _
  $region5: #{resnet18_grouped_forward.30} parent=0 // pred_fallthru
    _
  // Predicated region
  $region6: #{resnet18_grouped_forward.30} parent=0 // pred_check
    _
  $region7: #{resnet18_grouped_forward.30} parent=0 // pred_check_branch
    %13 = sbr.rel (0) target = $region9
  $region8: #{resnet18_grouped_forward.30} parent=0 // pred_region
    _
  $region9: #{resnet18_grouped_forward.30} parent=0 // pred_fallthru
    _
  // Predicated region
  $region10: #{resnet18_grouped_forward.30} parent=0 // pred_check
    _
  $region11: #{resnet18_grouped_forward.30} parent=0 // pred_check_branch
    %15 = sbr.rel (0) target = $region13
  $region12: #{resnet18_grouped_forward.30} parent=0 // pred_region
    _
  $region13: #{resnet18_grouped_forward.30} parent=0 // pred_fallthru
    _
  // Predicated region
  $region14: #{resnet18_grouped_forward.30} parent=0 // pred_check
    _
  $region15: #{resnet18_grouped_forward.30} parent=0 // pred_check_branch
    %17 = sbr.rel (0) target = $region17
  $region16: #{resnet18_grouped_forward.30} parent=0 // pred_region
    _
  $region17: #{resnet18_grouped_forward.30} parent=0 // pred_fallthru
    _
  // Predicated region
  $region18: #{resnet18_grouped_forward.30} parent=0 // pred_check
    _
  $region19: #{resnet18_grouped_forward.30} parent=0 // pred_check_branch
    %19 = sbr.rel (0) target = $region21
  $region20: #{resnet18_grouped_forward.30} parent=0 // pred_region
    _
  $region21: #{resnet18_grouped_forward.30} parent=0 // pred_fallthru
    _
  %v21 = vld [vmem:[%s0] sm:$0xff]
  %v22 = vld [vmem:[%s0 + $0x8] sm:$0xff]
  %v23 = vld [vmem:[%s0 + $0x10] sm:$0xff]
  %v24 = vld [vmem:[%s0 + $0x18] sm:$0xff]
  %v25 = vld [vmem:[%s0 + $0x20] sm:$0xff]
  %v26 = vld [vmem:[%s0 + $0x28] sm:$0xff]
  %v27 = vld [vmem:[%s0 + $0x30] sm:$0xff]
  %v28 = vld [vmem:[%s0 + $0x38] sm:$0xff]
  %v29 = vld [vmem:[%s0 + $0x40] sm:$0xff]
  %v30 = vld [vmem:[%s0 + $0x48] sm:$0xff]
  %v31 = vld [vmem:[%s0 + $0x50] sm:$0xff]
  %v32 = vld [vmem:[%s0 + $0x58] sm:$0xff]
  %v33 = vld [vmem:[%s0 + $0x60] sm:$0xff]
  %v34 = vld [vmem:[%s0 + $0x68] sm:$0xff]
  %v35 = vld [vmem:[%s0 + $0x70] sm:$0xff]
  %v36 = vld [vmem:[%s0 + $0x78] sm:$0xff]
  %v37 = vld [vmem:[%s1] sm:$0xf]
  %v38 = vld [vmem:[%s1 + $0x4] sm:$0xf]
  %v39 = vld [vmem:[%s1 + $0x8] sm:$0xf]
  %v40 = vld [vmem:[%s1 + $0xc] sm:$0xf]
  %v41 = vld [vmem:[%s1 + $0x10] sm:$0xf]
  %v42 = vld [vmem:[%s1 + $0x14] sm:$0xf]
  %v43 = vld [vmem:[%s1 + $0x18] sm:$0xf]
  %v44 = vld [vmem:[%s1 + $0x1c] sm:$0xf]
  %v45 = vld [vmem:[%s1 + $0x20] sm:$0xf]
  %v46 = vld [vmem:[%s1 + $0x24] sm:$0xf]
  %v47 = vld [vmem:[%s1 + $0x28] sm:$0xf]
  %v48 = vld [vmem:[%s1 + $0x2c] sm:$0xf]
  %v49 = vld [vmem:[%s1 + $0x30] sm:$0xf]
  %v50 = vld [vmem:[%s1 + $0x34] sm:$0xf]
  %v51 = vld [vmem:[%s1 + $0x38] sm:$0xf]
  %v52 = vld [vmem:[%s1 + $0x3c] sm:$0xf]
  %v53 = vld [vmem:[%s1 + $0x40] sm:$0xf]
  %v54 = vld [vmem:[%s1 + $0x44] sm:$0xf]
  %v71 = vunpack.c.l.b16 %v21
  %v72 = vunpack.c.h.b16 %v21
  %v73 = vunpack.c.l.b16 %v22
  %v74 = vunpack.c.h.b16 %v22
  %v75 = vunpack.c.l.b16 %v23
  %v76 = vunpack.c.h.b16 %v23
  %v77 = vunpack.c.l.b16 %v24
  %v78 = vunpack.c.h.b16 %v24
  %v79 = vunpack.c.l.b16 %v25
  %v80 = vunpack.c.h.b16 %v25
  %v81 = vunpack.c.l.b16 %v26
  %v82 = vunpack.c.h.b16 %v26
  %v83 = vunpack.c.l.b16 %v27
  %v84 = vunpack.c.h.b16 %v27
  %v85 = vunpack.c.l.b16 %v28
  %v86 = vunpack.c.h.b16 %v28
  %v87 = vunpack.c.l.b16 %v29
  %v88 = vunpack.c.h.b16 %v29
  %v89 = vunpack.c.l.b16 %v30
  %v90 = vunpack.c.h.b16 %v30
  %v91 = vunpack.c.l.b16 %v31
  %v92 = vunpack.c.h.b16 %v31
  %v93 = vunpack.c.l.b16 %v32
  %v94 = vunpack.c.h.b16 %v32
  %v95 = vunpack.c.l.b16 %v33
  %v96 = vunpack.c.h.b16 %v33
  %v97 = vunpack.c.l.b16 %v34
  %v98 = vunpack.c.h.b16 %v34
  %v99 = vunpack.c.l.b16 %v35
  %v100 = vunpack.c.h.b16 %v35
  %v101 = vunpack.c.l.b16 %v36
  %v102 = vunpack.c.h.b16 %v36
  %v103 = vpack.c.b16 %v73, %v71
  %v104 = vpack.c.b16 %v74, %v72
  %v105 = vpack.c.b16 %v77, %v75
  %v106 = vpack.c.b16 %v78, %v76
  %v107 = vpack.c.b16 %v81, %v79
  %v108 = vpack.c.b16 %v82, %v80
  %v109 = vpack.c.b16 %v85, %v83
  %v110 = vpack.c.b16 %v86, %v84
  %v111 = vpack.c.b16 %v89, %v87
  %v112 = vpack.c.b16 %v90, %v88
  %v113 = vpack.c.b16 %v93, %v91
  %v114 = vpack.c.b16 %v94, %v92
  %v115 = vpack.c.b16 %v97, %v95
  %v116 = vpack.c.b16 %v98, %v96
  %v117 = vpack.c.b16 %v101, %v99
  %v118 = vpack.c.b16 %v102, %v100
  %v145 = vunpack.c.l.b16 %v37
  %v146 = vunpack.c.l.b16 %v38
  %v147 = vunpack.c.l.b16 %v39
  %v148 = vunpack.c.l.b16 %v40
  %v149 = vunpack.c.l.b16 %v41
  %v150 = vunpack.c.l.b16 %v42
  %v151 = vunpack.c.l.b16 %v43
  %v152 = vunpack.c.l.b16 %v44
  %v153 = vunpack.c.l.b16 %v45
  %v154 = vunpack.c.l.b16 %v46
  %v155 = vunpack.c.l.b16 %v47
  %v156 = vunpack.c.l.b16 %v48
  %v157 = vunpack.c.l.b16 %v49
  %v158 = vunpack.c.l.b16 %v50
  %v159 = vunpack.c.l.b16 %v51
  %v160 = vunpack.c.l.b16 %v52
  %v161 = vunpack.c.l.b16 %v53
  %v162 = vunpack.c.l.b16 %v54
  %v163 = vpack.c.b16 %v146, %v145
  %v164 = vpack.c.b16 %v148, %v147
  %v165 = vpack.c.b16 %v150, %v149
  %v166 = vpack.c.b16 %v152, %v151
  %v167 = vpack.c.b16 %v154, %v153
  %v168 = vpack.c.b16 %v156, %v155
  %v169 = vpack.c.b16 %v158, %v157
  %v170 = vpack.c.b16 %v160, %v159
  %v171 = vpack.c.b16 %v162, %v161
  %vm181 = vcmask 130048
  %v183 = vsel %vm181, %v104, 0
  %v186 = vsel %vm181, %v106, 0
  %v189 = vsel %vm181, %v108, 0
  %v192 = vsel %vm181, %v110, 0
  %v195 = vsel %vm181, %v112, 0
  %v198 = vsel %vm181, %v114, 0
  %v201 = vsel %vm181, %v116, 0
  %v204 = vsel %vm181, %v118, 0
  %206 = vmatprep.subr.bf16.mxu0 0
  %207 = vmatpush1.bf16.msra.mxu0 %v170
  %208 = vmatprep.subr.bf16.mxu0 0
  %209 = vmatpush1.bf16.msra.mxu0 %v169
  %210 = vmatprep.subr.bf16.mxu0 0
  %211 = vmatpush1.bf16.msra.mxu0 %v168
  %212 = vmatprep.subr.bf16.mxu0 0
  %213 = vmatpush1.bf16.msra.mxu0 %v167
  %214 = vmatprep.subr.bf16.mxu0 0
  %215 = vmatpush1.bf16.msra.mxu0 %v166
  %216 = vmatprep.subr.bf16.mxu0 0
  %217 = vmatpush1.bf16.msra.mxu0 %v165
  %218 = vmatprep.subr.bf16.mxu0 0
  %219 = vmatpush1.bf16.msra.mxu0 %v164
  %220 = vmatprep.subr.bf16.mxu0 0
  %221 = vmatpush1.bf16.msra.mxu0 %v163
  %222 = vmatprep.subr.bf16.mxu0 0
  %223 = vmatpush2.bf16.msra.mxu0 0
  %224 = vmatprep.subr.bf16.mxu0 0
  %225 = vmatpush2.bf16.msra.mxu0 0
  %226 = vmatprep.subr.bf16.mxu0 0
  %227 = vmatpush2.bf16.msra.mxu0 0
  %228 = vmatprep.subr.bf16.mxu0 0
  %229 = vmatpush2.bf16.msra.mxu0 0
  %230 = vmatprep.subr.bf16.mxu0 0
  %231 = vmatpush2.bf16.msra.mxu0 0
  %232 = vmatprep.subr.bf16.mxu0 0
  %233 = vmatpush2.bf16.msra.mxu0 0
  %234 = vmatprep.subr.bf16.mxu0 0
  %235 = vmatpush2.bf16.msra.mxu0 0
  %236 = vmatprep.subr.bf16.mxu0 0
  %237 = vmatpush2.bf16.msra.mxu0 %v171
  %238 = vmatprep.mubr.bf16.mxu0 %v183
  %239 = vmatmul.mubr.bf16.gmra.mxu0 %v103
  %v240 = vpop.f32.mrf.mxu0
  %v241 = vadd.f32 0.0, %v240
  %v242 = vpop.f32.mrf.mxu0
  %v243 = vpop.f32.mrf.mxu0
  %v244 = vadd.f32 0.0, %v243
  %v245 = vpop.f32.mrf.mxu0
  %246 = vmatprep.mubr.bf16.mxu0 %v186
  %247 = vmatmul.mubr.bf16.gmra.mxu0 %v105
  %v248 = vpop.f32.mrf.mxu0
  %v249 = vadd.f32 0.0, %v248
  %v250 = vpop.f32.mrf.mxu0
  %v251 = vpop.f32.mrf.mxu0
  %v252 = vadd.f32 0.0, %v251
  %v253 = vpop.f32.mrf.mxu0
  %254 = vmatprep.mubr.bf16.mxu0 %v189
  %255 = vmatmul.mubr.bf16.gmra.mxu0 %v107
  %v256 = vpop.f32.mrf.mxu0
  %v257 = vadd.f32 0.0, %v256
  %v258 = vpop.f32.mrf.mxu0
  %v259 = vpop.f32.mrf.mxu0
  %v260 = vadd.f32 0.0, %v259
  %v261 = vpop.f32.mrf.mxu0
  %262 = vmatprep.mubr.bf16.mxu0 %v192
  %263 = vmatmul.mubr.bf16.gmra.mxu0 %v109
  %v264 = vpop.f32.mrf.mxu0
  %v265 = vadd.f32 0.0, %v264
  %v266 = vpop.f32.mrf.mxu0
  %v267 = vpop.f32.mrf.mxu0
  %v268 = vadd.f32 0.0, %v267
  %v269 = vpop.f32.mrf.mxu0
  %270 = vmatprep.mubr.bf16.mxu0 %v195
  %271 = vmatmul.mubr.bf16.gmra.mxu0 %v111
  %v272 = vpop.f32.mrf.mxu0
  %v273 = vadd.f32 0.0, %v272
  %v274 = vpop.f32.mrf.mxu0
  %v275 = vpop.f32.mrf.mxu0
  %v276 = vadd.f32 0.0, %v275
  %v277 = vpop.f32.mrf.mxu0
  %278 = vmatprep.mubr.bf16.mxu0 %v198
  %279 = vmatmul.mubr.bf16.gmra.mxu0 %v113
  %v280 = vpop.f32.mrf.mxu0
  %v281 = vadd.f32 0.0, %v280
  %v282 = vpop.f32.mrf.mxu0
  %v283 = vpop.f32.mrf.mxu0
  %v284 = vadd.f32 0.0, %v283
  %v285 = vpop.f32.mrf.mxu0
  %286 = vmatprep.mubr.bf16.mxu0 %v201
  %287 = vmatmul.mubr.bf16.gmra.mxu0 %v115
  %v288 = vpop.f32.mrf.mxu0
  %v289 = vadd.f32 0.0, %v288
  %v290 = vpop.f32.mrf.mxu0
  %v291 = vpop.f32.mrf.mxu0
  %v292 = vadd.f32 0.0, %v291
  %v293 = vpop.f32.mrf.mxu0
  %294 = vmatprep.mubr.bf16.mxu0 %v204
  %295 = vmatmul.mubr.bf16.gmra.mxu0 %v117
  %v296 = vpop.f32.mrf.mxu0
  %v297 = vadd.f32 0.0, %v296
  %v298 = vpop.f32.mrf.mxu0
  %v299 = vpop.f32.mrf.mxu0
  %v300 = vadd.f32 0.0, %v299
  %v301 = vpop.f32.mrf.mxu0
  %302 = vdwg.mxu0
  %v303 = vld [vmem:[%s2] sm:$0x1]
  %v305 = vlaneseq
  %v306 = vshrl.u32 %v305, 7
  %v307 = vsub.s32 0, %v306
  %v308 = vrot.slane %v303, %v307
  %v310 = vmul.f32 %v241, %v308
  %v311 = vmul.f32 %v244, %v308
  %v312 = vmul.f32 %v249, %v308
  %v313 = vmul.f32 %v252, %v308
  %v314 = vmul.f32 %v257, %v308
  %v315 = vmul.f32 %v260, %v308
  %v316 = vmul.f32 %v265, %v308
  %v317 = vmul.f32 %v268, %v308
  %v318 = vmul.f32 %v273, %v308
  %v319 = vmul.f32 %v276, %v308
  %v320 = vmul.f32 %v281, %v308
  %v321 = vmul.f32 %v284, %v308
  %v322 = vmul.f32 %v289, %v308
  %v323 = vmul.f32 %v292, %v308
  %v324 = vmul.f32 %v297, %v308
  %v325 = vmul.f32 %v300, %v308
  %v326 = vld [vmem:[%s3] sm:$0x1]
  %v328 = vlaneseq
  %v329 = vshrl.u32 %v328, 7
  %v330 = vsub.s32 0, %v329
  %v331 = vrot.slane %v326, %v330
  %v333 = vadd.f32 %v310, %v331
  %v334 = vadd.f32 %v311, %v331
  %v335 = vadd.f32 %v312, %v331
  %v336 = vadd.f32 %v313, %v331
  %v337 = vadd.f32 %v314, %v331
  %v338 = vadd.f32 %v315, %v331
  %v339 = vadd.f32 %v316, %v331
  %v340 = vadd.f32 %v317, %v331
  %v341 = vadd.f32 %v318, %v331
  %v342 = vadd.f32 %v319, %v331
  %v343 = vadd.f32 %v320, %v331
  %v344 = vadd.f32 %v321, %v331
  %v345 = vadd.f32 %v322, %v331
  %v346 = vadd.f32 %v323, %v331
  %v347 = vadd.f32 %v324, %v331
  %v348 = vadd.f32 %v325, %v331
  %v349 = vld [vmem:[%s4] sm:$0xf]
  %v350 = vld [vmem:[%s4 + $0x4] sm:$0xf]
  %v351 = vld [vmem:[%s4 + $0x8] sm:$0xf]
  %v352 = vld [vmem:[%s4 + $0xc] sm:$0xf]
  %v353 = vld [vmem:[%s4 + $0x10] sm:$0xf]
  %v354 = vld [vmem:[%s4 + $0x14] sm:$0xf]
  %v355 = vld [vmem:[%s4 + $0x18] sm:$0xf]
  %v356 = vld [vmem:[%s4 + $0x1c] sm:$0xf]
  %v357 = vld [vmem:[%s4 + $0x20] sm:$0xf]
  %v358 = vld [vmem:[%s4 + $0x24] sm:$0xf]
  %v359 = vld [vmem:[%s4 + $0x28] sm:$0xf]
  %v360 = vld [vmem:[%s4 + $0x2c] sm:$0xf]
  %v361 = vld [vmem:[%s4 + $0x30] sm:$0xf]
  %v362 = vld [vmem:[%s4 + $0x34] sm:$0xf]
  %v363 = vld [vmem:[%s4 + $0x38] sm:$0xf]
  %v364 = vld [vmem:[%s4 + $0x3c] sm:$0xf]
  %v365 = vunpack.c.l.bf16 %v349
  %v366 = vunpack.c.l.bf16 %v350
  %v367 = vunpack.c.l.bf16 %v351
  %v368 = vunpack.c.l.bf16 %v352
  %v369 = vunpack.c.l.bf16 %v353
  %v370 = vunpack.c.l.bf16 %v354
  %v371 = vunpack.c.l.bf16 %v355
  %v372 = vunpack.c.l.bf16 %v356
  %v373 = vunpack.c.l.bf16 %v357
  %v374 = vunpack.c.l.bf16 %v358
  %v375 = vunpack.c.l.bf16 %v359
  %v376 = vunpack.c.l.bf16 %v360
  %v377 = vunpack.c.l.bf16 %v361
  %v378 = vunpack.c.l.bf16 %v362
  %v379 = vunpack.c.l.bf16 %v363
  %v380 = vunpack.c.l.bf16 %v364
  %v381 = vadd.f32 %v333, %v365
  %v382 = vadd.f32 %v334, %v366
  %v383 = vadd.f32 %v335, %v367
  %v384 = vadd.f32 %v336, %v368
  %v385 = vadd.f32 %v337, %v369
  %v386 = vadd.f32 %v338, %v370
  %v387 = vadd.f32 %v339, %v371
  %v388 = vadd.f32 %v340, %v372
  %v389 = vadd.f32 %v341, %v373
  %v390 = vadd.f32 %v342, %v374
  %v391 = vadd.f32 %v343, %v375
  %v392 = vadd.f32 %v344, %v376
  %v393 = vadd.f32 %v345, %v377
  %v394 = vadd.f32 %v346, %v378
  %v395 = vadd.f32 %v347, %v379
  %v396 = vadd.f32 %v348, %v380
  %v397 = vmax.f32 %v381, 0.0
  %v398 = vmax.f32 %v382, 0.0
  %v399 = vmax.f32 %v383, 0.0
  %v400 = vmax.f32 %v384, 0.0
  %v401 = vmax.f32 %v385, 0.0
  %v402 = vmax.f32 %v386, 0.0
  %v403 = vmax.f32 %v387, 0.0
  %v404 = vmax.f32 %v388, 0.0
  %v405 = vmax.f32 %v389, 0.0
  %v406 = vmax.f32 %v390, 0.0
  %v407 = vmax.f32 %v391, 0.0
  %v408 = vmax.f32 %v392, 0.0
  %v409 = vmax.f32 %v393, 0.0
  %v410 = vmax.f32 %v394, 0.0
  %v411 = vmax.f32 %v395, 0.0
  %v412 = vmax.f32 %v396, 0.0
  %v413 = vpack.c.bf16 %v398, %v397
  %v414 = vpack.c.bf16 %v400, %v399
  %v415 = vpack.c.bf16 %v402, %v401
  %v416 = vpack.c.bf16 %v404, %v403
  %v417 = vpack.c.bf16 %v406, %v405
  %v418 = vpack.c.bf16 %v408, %v407
  %v419 = vpack.c.bf16 %v410, %v409
  %v420 = vpack.c.bf16 %v412, %v411
  %v429 = vunpack.c.l.b16 %v413
  %v430 = vunpack.c.h.b16 %v413
  %v431 = vunpack.c.l.b16 %v414
  %v432 = vunpack.c.h.b16 %v414
  %v433 = vunpack.c.l.b16 %v415
  %v434 = vunpack.c.h.b16 %v415
  %v435 = vunpack.c.l.b16 %v416
  %v436 = vunpack.c.h.b16 %v416
  %v437 = vunpack.c.l.b16 %v417
  %v438 = vunpack.c.h.b16 %v417
  %v439 = vunpack.c.l.b16 %v418
  %v440 = vunpack.c.h.b16 %v418
  %v441 = vunpack.c.l.b16 %v419
  %v442 = vunpack.c.h.b16 %v419
  %v443 = vunpack.c.l.b16 %v420
  %v444 = vunpack.c.h.b16 %v420
  %v445 = vpack.c.b16 %v429, %v429
  %v446 = vpack.c.b16 %v430, %v430
  %v447 = vpack.c.b16 %v431, %v431
  %v448 = vpack.c.b16 %v432, %v432
  %v449 = vpack.c.b16 %v433, %v433
  %v450 = vpack.c.b16 %v434, %v434
  %v451 = vpack.c.b16 %v435, %v435
  %v452 = vpack.c.b16 %v436, %v436
  %v453 = vpack.c.b16 %v437, %v437
  %v454 = vpack.c.b16 %v438, %v438
  %v455 = vpack.c.b16 %v439, %v439
  %v456 = vpack.c.b16 %v440, %v440
  %v457 = vpack.c.b16 %v441, %v441
  %v458 = vpack.c.b16 %v442, %v442
  %v459 = vpack.c.b16 %v443, %v443
  %v460 = vpack.c.b16 %v444, %v444
  %vm477 = vcmask 125952
  %478 = vst.msk [vmem:[%s5] sm:$0xf] %vm477, %v445
  %479 = vst.msk [vmem:[%s5 + $0x4] sm:$0xf] %vm477, %v446
  %480 = vst.msk [vmem:[%s5 + $0x8] sm:$0xf] %vm477, %v447
  %481 = vst.msk [vmem:[%s5 + $0xc] sm:$0xf] %vm477, %v448
  %482 = vst.msk [vmem:[%s5 + $0x10] sm:$0xf] %vm477, %v449
  %483 = vst.msk [vmem:[%s5 + $0x14] sm:$0xf] %vm477, %v450
  %484 = vst.msk [vmem:[%s5 + $0x18] sm:$0xf] %vm477, %v451
  %485 = vst.msk [vmem:[%s5 + $0x1c] sm:$0xf] %vm477, %v452
  %486 = vst.msk [vmem:[%s5 + $0x20] sm:$0xf] %vm477, %v453
  %487 = vst.msk [vmem:[%s5 + $0x24] sm:$0xf] %vm477, %v454
  %488 = vst.msk [vmem:[%s5 + $0x28] sm:$0xf] %vm477, %v455
  %489 = vst.msk [vmem:[%s5 + $0x2c] sm:$0xf] %vm477, %v456
  %490 = vst.msk [vmem:[%s5 + $0x30] sm:$0xf] %vm477, %v457
  %491 = vst.msk [vmem:[%s5 + $0x34] sm:$0xf] %vm477, %v458
  %492 = vst.msk [vmem:[%s5 + $0x38] sm:$0xf] %vm477, %v459
  %493 = vst.msk [vmem:[%s5 + $0x3c] sm:$0xf] %vm477, %v460
  // Predicated region
  $region22: #{resnet18_grouped_forward.30} parent=0 // pred_check
    _
  $region23: #{resnet18_grouped_forward.30} parent=0 // pred_check_branch
    %495 = sbr.rel (0) target = $region25
  $region24: #{resnet18_grouped_forward.30} parent=0 // pred_region
    _
  $region25: #{resnet18_grouped_forward.30} parent=0 // pred_fallthru
    _
  // Predicated region
  $region26: #{resnet18_grouped_forward.30} parent=0 // pred_check
    _
  $region27: #{resnet18_grouped_forward.30} parent=0 // pred_check_branch
    %497 = sbr.rel (0) target = $region29
  $region28: #{resnet18_grouped_forward.30} parent=0 // pred_region
    _
  $region29: #{resnet18_grouped_forward.30} parent=0 // pred_fallthru
    _

// kernel: resnet18_grouped_forward.31
$region0: #{resnet18_grouped_forward.31}
  #allocation0 [shape = 'u32[]', space=smem, size = 0x4, offset = 0x4, fixed_abs, tag = 'smem constant byte address 0x4 - core index']
  #allocation1 [shape = 'u32[144,128]{1,0:T(1,128)}', space=vmem, size = 0x12000, scoped, tag = 'internal scratch']
  %s0 = inlined_call_operand.vmem [shape: bf16[128,144], index: 0, kind: input, shape index: {}]
  %s1 = inlined_call_operand.vmem [shape: bf16[144,16], index: 1, kind: input, shape index: {}]
  %s2 = inlined_call_operand.vmem [shape: f32[1,16], index: 2, kind: input, shape index: {}]
  %s3 = inlined_call_operand.vmem [shape: f32[1,16], index: 3, kind: input, shape index: {}]
  %s4 = inlined_call_operand.vmem [shape: bf16[128,16], index: 4, kind: output, shape index: {}]
  %s5 = sld [smem:[#allocation0]]
  $region26: #{resnet18_grouped_forward.31} parent=0
    _
  %s7 = ssub.s32 1, %s5
  %s8 = scalar_select 0, %s7, %s5
  // Predicated region
  $region2: #{resnet18_grouped_forward.31} parent=0 // pred_check
    _
  $region3: #{resnet18_grouped_forward.31} parent=0 // pred_check_branch
    %10 = sbr.rel (0) target = $region5
  $region4: #{resnet18_grouped_forward.31} parent=0 // pred_region
    _
  $region5: #{resnet18_grouped_forward.31} parent=0 // pred_fallthru
    _
  // Predicated region
  $region6: #{resnet18_grouped_forward.31} parent=0 // pred_check
    _
  $region7: #{resnet18_grouped_forward.31} parent=0 // pred_check_branch
    %12 = sbr.rel (0) target = $region9
  $region8: #{resnet18_grouped_forward.31} parent=0 // pred_region
    _
  $region9: #{resnet18_grouped_forward.31} parent=0 // pred_fallthru
    _
  // Predicated region
  $region10: #{resnet18_grouped_forward.31} parent=0 // pred_check
    _
  $region11: #{resnet18_grouped_forward.31} parent=0 // pred_check_branch
    %14 = sbr.rel (0) target = $region13
  $region12: #{resnet18_grouped_forward.31} parent=0 // pred_region
    _
  $region13: #{resnet18_grouped_forward.31} parent=0 // pred_fallthru
    _
  // Predicated region
  $region14: #{resnet18_grouped_forward.31} parent=0 // pred_check
    _
  $region15: #{resnet18_grouped_forward.31} parent=0 // pred_check_branch
    %16 = sbr.rel (0) target = $region17
  $region16: #{resnet18_grouped_forward.31} parent=0 // pred_region
    _
  $region17: #{resnet18_grouped_forward.31} parent=0 // pred_fallthru
    _
  %v18 = vld [vmem:[%s0] sm:$0xff]
  %v19 = vld [vmem:[%s0 + $0x8] sm:$0xff]
  %v20 = vld [vmem:[%s0 + $0x10] sm:$0xff]
  %v21 = vld [vmem:[%s0 + $0x18] sm:$0xff]
  %v22 = vld [vmem:[%s0 + $0x20] sm:$0xff]
  %v23 = vld [vmem:[%s0 + $0x28] sm:$0xff]
  %v24 = vld [vmem:[%s0 + $0x30] sm:$0xff]
  %v25 = vld [vmem:[%s0 + $0x38] sm:$0xff]
  %v26 = vld [vmem:[%s0 + $0x40] sm:$0xff]
  %v27 = vld [vmem:[%s0 + $0x48] sm:$0xff]
  %v28 = vld [vmem:[%s0 + $0x50] sm:$0xff]
  %v29 = vld [vmem:[%s0 + $0x58] sm:$0xff]
  %v30 = vld [vmem:[%s0 + $0x60] sm:$0xff]
  %v31 = vld [vmem:[%s0 + $0x68] sm:$0xff]
  %v32 = vld [vmem:[%s0 + $0x70] sm:$0xff]
  %v33 = vld [vmem:[%s0 + $0x78] sm:$0xff]
  %v34 = vld [vmem:[%s1] sm:$0xf]
  %v35 = vld [vmem:[%s1 + $0x4] sm:$0xf]
  %v36 = vld [vmem:[%s1 + $0x8] sm:$0xf]
  %v37 = vld [vmem:[%s1 + $0xc] sm:$0xf]
  %v38 = vld [vmem:[%s1 + $0x10] sm:$0xf]
  %v39 = vld [vmem:[%s1 + $0x14] sm:$0xf]
  %v40 = vld [vmem:[%s1 + $0x18] sm:$0xf]
  %v41 = vld [vmem:[%s1 + $0x1c] sm:$0xf]
  %v42 = vld [vmem:[%s1 + $0x20] sm:$0xf]
  %v43 = vld [vmem:[%s1 + $0x24] sm:$0xf]
  %v44 = vld [vmem:[%s1 + $0x28] sm:$0xf]
  %v45 = vld [vmem:[%s1 + $0x2c] sm:$0xf]
  %v46 = vld [vmem:[%s1 + $0x30] sm:$0xf]
  %v47 = vld [vmem:[%s1 + $0x34] sm:$0xf]
  %v48 = vld [vmem:[%s1 + $0x38] sm:$0xf]
  %v49 = vld [vmem:[%s1 + $0x3c] sm:$0xf]
  %v50 = vld [vmem:[%s1 + $0x40] sm:$0xf]
  %v51 = vld [vmem:[%s1 + $0x44] sm:$0xf]
  %v68 = vunpack.c.l.b16 %v18
  %v69 = vunpack.c.h.b16 %v18
  %v70 = vunpack.c.l.b16 %v19
  %v71 = vunpack.c.h.b16 %v19
  %v72 = vunpack.c.l.b16 %v20
  %v73 = vunpack.c.h.b16 %v20
  %v74 = vunpack.c.l.b16 %v21
  %v75 = vunpack.c.h.b16 %v21
  %v76 = vunpack.c.l.b16 %v22
  %v77 = vunpack.c.h.b16 %v22
  %v78 = vunpack.c.l.b16 %v23
  %v79 = vunpack.c.h.b16 %v23
  %v80 = vunpack.c.l.b16 %v24
  %v81 = vunpack.c.h.b16 %v24
  %v82 = vunpack.c.l.b16 %v25
  %v83 = vunpack.c.h.b16 %v25
  %v84 = vunpack.c.l.b16 %v26
  %v85 = vunpack.c.h.b16 %v26
  %v86 = vunpack.c.l.b16 %v27
  %v87 = vunpack.c.h.b16 %v27
  %v88 = vunpack.c.l.b16 %v28
  %v89 = vunpack.c.h.b16 %v28
  %v90 = vunpack.c.l.b16 %v29
  %v91 = vunpack.c.h.b16 %v29
  %v92 = vunpack.c.l.b16 %v30
  %v93 = vunpack.c.h.b16 %v30
  %v94 = vunpack.c.l.b16 %v31
  %v95 = vunpack.c.h.b16 %v31
  %v96 = vunpack.c.l.b16 %v32
  %v97 = vunpack.c.h.b16 %v32
  %v98 = vunpack.c.l.b16 %v33
  %v99 = vunpack.c.h.b16 %v33
  %v100 = vpack.c.b16 %v70, %v68
  %v101 = vpack.c.b16 %v71, %v69
  %v102 = vpack.c.b16 %v74, %v72
  %v103 = vpack.c.b16 %v75, %v73
  %v104 = vpack.c.b16 %v78, %v76
  %v105 = vpack.c.b16 %v79, %v77
  %v106 = vpack.c.b16 %v82, %v80
  %v107 = vpack.c.b16 %v83, %v81
  %v108 = vpack.c.b16 %v86, %v84
  %v109 = vpack.c.b16 %v87, %v85
  %v110 = vpack.c.b16 %v90, %v88
  %v111 = vpack.c.b16 %v91, %v89
  %v112 = vpack.c.b16 %v94, %v92
  %v113 = vpack.c.b16 %v95, %v93
  %v114 = vpack.c.b16 %v98, %v96
  %v115 = vpack.c.b16 %v99, %v97
  %v142 = vunpack.c.l.b16 %v34
  %v143 = vunpack.c.l.b16 %v35
  %v144 = vunpack.c.l.b16 %v36
  %v145 = vunpack.c.l.b16 %v37
  %v146 = vunpack.c.l.b16 %v38
  %v147 = vunpack.c.l.b16 %v39
  %v148 = vunpack.c.l.b16 %v40
  %v149 = vunpack.c.l.b16 %v41
  %v150 = vunpack.c.l.b16 %v42
  %v151 = vunpack.c.l.b16 %v43
  %v152 = vunpack.c.l.b16 %v44
  %v153 = vunpack.c.l.b16 %v45
  %v154 = vunpack.c.l.b16 %v46
  %v155 = vunpack.c.l.b16 %v47
  %v156 = vunpack.c.l.b16 %v48
  %v157 = vunpack.c.l.b16 %v49
  %v158 = vunpack.c.l.b16 %v50
  %v159 = vunpack.c.l.b16 %v51
  %v160 = vpack.c.b16 %v143, %v142
  %v161 = vpack.c.b16 %v145, %v144
  %v162 = vpack.c.b16 %v147, %v146
  %v163 = vpack.c.b16 %v149, %v148
  %v164 = vpack.c.b16 %v151, %v150
  %v165 = vpack.c.b16 %v153, %v152
  %v166 = vpack.c.b16 %v155, %v154
  %v167 = vpack.c.b16 %v157, %v156
  %v168 = vpack.c.b16 %v159, %v158
  %vm178 = vcmask 130048
  %v180 = vsel %vm178, %v101, 0
  %v183 = vsel %vm178, %v103, 0
  %v186 = vsel %vm178, %v105, 0
  %v189 = vsel %vm178, %v107, 0
  %v192 = vsel %vm178, %v109, 0
  %v195 = vsel %vm178, %v111, 0
  %v198 = vsel %vm178, %v113, 0
  %v201 = vsel %vm178, %v115, 0
  %203 = vmatprep.subr.bf16.mxu0 0
  %204 = vmatpush1.bf16.msra.mxu0 %v167
  %205 = vmatprep.subr.bf16.mxu0 0
  %206 = vmatpush1.bf16.msra.mxu0 %v166
  %207 = vmatprep.subr.bf16.mxu0 0
  %208 = vmatpush1.bf16.msra.mxu0 %v165
  %209 = vmatprep.subr.bf16.mxu0 0
  %210 = vmatpush1.bf16.msra.mxu0 %v164
  %211 = vmatprep.subr.bf16.mxu0 0
  %212 = vmatpush1.bf16.msra.mxu0 %v163
  %213 = vmatprep.subr.bf16.mxu0 0
  %214 = vmatpush1.bf16.msra.mxu0 %v162
  %215 = vmatprep.subr.bf16.mxu0 0
  %216 = vmatpush1.bf16.msra.mxu0 %v161
  %217 = vmatprep.subr.bf16.mxu0 0
  %218 = vmatpush1.bf16.msra.mxu0 %v160
  %219 = vmatprep.subr.bf16.mxu0 0
  %220 = vmatpush2.bf16.msra.mxu0 0
  %221 = vmatprep.subr.bf16.mxu0 0
  %222 = vmatpush2.bf16.msra.mxu0 0
  %223 = vmatprep.subr.bf16.mxu0 0
  %224 = vmatpush2.bf16.msra.mxu0 0
  %225 = vmatprep.subr.bf16.mxu0 0
  %226 = vmatpush2.bf16.msra.mxu0 0
  %227 = vmatprep.subr.bf16.mxu0 0
  %228 = vmatpush2.bf16.msra.mxu0 0
  %229 = vmatprep.subr.bf16.mxu0 0
  %230 = vmatpush2.bf16.msra.mxu0 0
  %231 = vmatprep.subr.bf16.mxu0 0
  %232 = vmatpush2.bf16.msra.mxu0 0
  %233 = vmatprep.subr.bf16.mxu0 0
  %234 = vmatpush2.bf16.msra.mxu0 %v168
  %235 = vmatprep.mubr.bf16.mxu0 %v180
  %236 = vmatmul.mubr.bf16.gmra.mxu0 %v100
  %v237 = vpop.f32.mrf.mxu0
  %v238 = vadd.f32 0.0, %v237
  %v239 = vpop.f32.mrf.mxu0
  %v240 = vpop.f32.mrf.mxu0
  %v241 = vadd.f32 0.0, %v240
  %v242 = vpop.f32.mrf.mxu0
  %243 = vmatprep.mubr.bf16.mxu0 %v183
  %244 = vmatmul.mubr.bf16.gmra.mxu0 %v102
  %v245 = vpop.f32.mrf.mxu0
  %v246 = vadd.f32 0.0, %v245
  %v247 = vpop.f32.mrf.mxu0
  %v248 = vpop.f32.mrf.mxu0
  %v249 = vadd.f32 0.0, %v248
  %v250 = vpop.f32.mrf.mxu0
  %251 = vmatprep.mubr.bf16.mxu0 %v186
  %252 = vmatmul.mubr.bf16.gmra.mxu0 %v104
  %v253 = vpop.f32.mrf.mxu0
  %v254 = vadd.f32 0.0, %v253
  %v255 = vpop.f32.mrf.mxu0
  %v256 = vpop.f32.mrf.mxu0
  %v257 = vadd.f32 0.0, %v256
  %v258 = vpop.f32.mrf.mxu0
  %259 = vmatprep.mubr.bf16.mxu0 %v189
  %260 = vmatmul.mubr.bf16.gmra.mxu0 %v106
  %v261 = vpop.f32.mrf.mxu0
  %v262 = vadd.f32 0.0, %v261
  %v263 = vpop.f32.mrf.mxu0
  %v264 = vpop.f32.mrf.mxu0
  %v265 = vadd.f32 0.0, %v264
  %v266 = vpop.f32.mrf.mxu0
  %267 = vmatprep.mubr.bf16.mxu0 %v192
  %268 = vmatmul.mubr.bf16.gmra.mxu0 %v108
  %v269 = vpop.f32.mrf.mxu0
  %v270 = vadd.f32 0.0, %v269
  %v271 = vpop.f32.mrf.mxu0
  %v272 = vpop.f32.mrf.mxu0
  %v273 = vadd.f32 0.0, %v272
  %v274 = vpop.f32.mrf.mxu0
  %275 = vmatprep.mubr.bf16.mxu0 %v195
  %276 = vmatmul.mubr.bf16.gmra.mxu0 %v110
  %v277 = vpop.f32.mrf.mxu0
  %v278 = vadd.f32 0.0, %v277
  %v279 = vpop.f32.mrf.mxu0
  %v280 = vpop.f32.mrf.mxu0
  %v281 = vadd.f32 0.0, %v280
  %v282 = vpop.f32.mrf.mxu0
  %283 = vmatprep.mubr.bf16.mxu0 %v198
  %284 = vmatmul.mubr.bf16.gmra.mxu0 %v112
  %v285 = vpop.f32.mrf.mxu0
  %v286 = vadd.f32 0.0, %v285
  %v287 = vpop.f32.mrf.mxu0
  %v288 = vpop.f32.mrf.mxu0
  %v289 = vadd.f32 0.0, %v288
  %v290 = vpop.f32.mrf.mxu0
  %291 = vmatprep.mubr.bf16.mxu0 %v201
  %292 = vmatmul.mubr.bf16.gmra.mxu0 %v114
  %v293 = vpop.f32.mrf.mxu0
  %v294 = vadd.f32 0.0, %v293
  %v295 = vpop.f32.mrf.mxu0
  %v296 = vpop.f32.mrf.mxu0
  %v297 = vadd.f32 0.0, %v296
  %v298 = vpop.f32.mrf.mxu0
  %299 = vdwg.mxu0
  %v300 = vld [vmem:[%s2] sm:$0x1]
  %v302 = vlaneseq
  %v303 = vshrl.u32 %v302, 7
  %v304 = vsub.s32 0, %v303
  %v305 = vrot.slane %v300, %v304
  %v307 = vmul.f32 %v238, %v305
  %v308 = vmul.f32 %v241, %v305
  %v309 = vmul.f32 %v246, %v305
  %v310 = vmul.f32 %v249, %v305
  %v311 = vmul.f32 %v254, %v305
  %v312 = vmul.f32 %v257, %v305
  %v313 = vmul.f32 %v262, %v305
  %v314 = vmul.f32 %v265, %v305
  %v315 = vmul.f32 %v270, %v305
  %v316 = vmul.f32 %v273, %v305
  %v317 = vmul.f32 %v278, %v305
  %v318 = vmul.f32 %v281, %v305
  %v319 = vmul.f32 %v286, %v305
  %v320 = vmul.f32 %v289, %v305
  %v321 = vmul.f32 %v294, %v305
  %v322 = vmul.f32 %v297, %v305
  %v323 = vld [vmem:[%s3] sm:$0x1]
  %v325 = vlaneseq
  %v326 = vshrl.u32 %v325, 7
  %v327 = vsub.s32 0, %v326
  %v328 = vrot.slane %v323, %v327
  %v330 = vadd.f32 %v307, %v328
  %v331 = vadd.f32 %v308, %v328
  %v332 = vadd.f32 %v309, %v328
  %v333 = vadd.f32 %v310, %v328
  %v334 = vadd.f32 %v311, %v328
  %v335 = vadd.f32 %v312, %v328
  %v336 = vadd.f32 %v313, %v328
  %v337 = vadd.f32 %v314, %v328
  %v338 = vadd.f32 %v315, %v328
  %v339 = vadd.f32 %v316, %v328
  %v340 = vadd.f32 %v317, %v328
  %v341 = vadd.f32 %v318, %v328
  %v342 = vadd.f32 %v319, %v328
  %v343 = vadd.f32 %v320, %v328
  %v344 = vadd.f32 %v321, %v328
  %v345 = vadd.f32 %v322, %v328
  %v346 = vmax.f32 %v330, 0.0
  %v347 = vmax.f32 %v331, 0.0
  %v348 = vmax.f32 %v332, 0.0
  %v349 = vmax.f32 %v333, 0.0
  %v350 = vmax.f32 %v334, 0.0
  %v351 = vmax.f32 %v335, 0.0
  %v352 = vmax.f32 %v336, 0.0
  %v353 = vmax.f32 %v337, 0.0
  %v354 = vmax.f32 %v338, 0.0
  %v355 = vmax.f32 %v339, 0.0
  %v356 = vmax.f32 %v340, 0.0
  %v357 = vmax.f32 %v341, 0.0
  %v358 = vmax.f32 %v342, 0.0
  %v359 = vmax.f32 %v343, 0.0
  %v360 = vmax.f32 %v344, 0.0
  %v361 = vmax.f32 %v345, 0.0
  %v362 = vpack.c.bf16 %v347, %v346
  %v363 = vpack.c.bf16 %v349, %v348
  %v364 = vpack.c.bf16 %v351, %v350
  %v365 = vpack.c.bf16 %v353, %v352
  %v366 = vpack.c.bf16 %v355, %v354
  %v367 = vpack.c.bf16 %v357, %v356
  %v368 = vpack.c.bf16 %v359, %v358
  %v369 = vpack.c.bf16 %v361, %v360
  %v378 = vunpack.c.l.b16 %v362
  %v379 = vunpack.c.h.b16 %v362
  %v380 = vunpack.c.l.b16 %v363
  %v381 = vunpack.c.h.b16 %v363
  %v382 = vunpack.c.l.b16 %v364
  %v383 = vunpack.c.h.b16 %v364
  %v384 = vunpack.c.l.b16 %v365
  %v385 = vunpack.c.h.b16 %v365
  %v386 = vunpack.c.l.b16 %v366
  %v387 = vunpack.c.h.b16 %v366
  %v388 = vunpack.c.l.b16 %v367
  %v389 = vunpack.c.h.b16 %v367
  %v390 = vunpack.c.l.b16 %v368
  %v391 = vunpack.c.h.b16 %v368
  %v392 = vunpack.c.l.b16 %v369
  %v393 = vunpack.c.h.b16 %v369
  %v394 = vpack.c.b16 %v378, %v378
  %v395 = vpack.c.b16 %v379, %v379
  %v396 = vpack.c.b16 %v380, %v380
  %v397 = vpack.c.b16 %v381, %v381
  %v398 = vpack.c.b16 %v382, %v382
  %v399 = vpack.c.b16 %v383, %v383
  %v400 = vpack.c.b16 %v384, %v384
  %v401 = vpack.c.b16 %v385, %v385
  %v402 = vpack.c.b16 %v386, %v386
  %v403 = vpack.c.b16 %v387, %v387
  %v404 = vpack.c.b16 %v388, %v388
  %v405 = vpack.c.b16 %v389, %v389
  %v406 = vpack.c.b16 %v390, %v390
  %v407 = vpack.c.b16 %v391, %v391
  %v408 = vpack.c.b16 %v392, %v392
  %v409 = vpack.c.b16 %v393, %v393
  %vm426 = vcmask 125952
  %427 = vst.msk [vmem:[%s4] sm:$0xf] %vm426, %v394
  %428 = vst.msk [vmem:[%s4 + $0x4] sm:$0xf] %vm426, %v395
  %429 = vst.msk [vmem:[%s4 + $0x8] sm:$0xf] %vm426, %v396
  %430 = vst.msk [vmem:[%s4 + $0xc] sm:$0xf] %vm426, %v397
  %431 = vst.msk [vmem:[%s4 + $0x10] sm:$0xf] %vm426, %v398
  %432 = vst.msk [vmem:[%s4 + $0x14] sm:$0xf] %vm426, %v399
  %433 = vst.msk [vmem:[%s4 + $0x18] sm:$0xf] %vm426, %v400
  %434 = vst.msk [vmem:[%s4 + $0x1c] sm:$0xf] %vm426, %v401
  %435 = vst.msk [vmem:[%s4 + $0x20] sm:$0xf] %vm426, %v402
  %436 = vst.msk [vmem:[%s4 + $0x24] sm:$0xf] %vm426, %v403
  %437 = vst.msk [vmem:[%s4 + $0x28] sm:$0xf] %vm426, %v404
  %438 = vst.msk [vmem:[%s4 + $0x2c] sm:$0xf] %vm426, %v405
  %439 = vst.msk [vmem:[%s4 + $0x30] sm:$0xf] %vm426, %v406
  %440 = vst.msk [vmem:[%s4 + $0x34] sm:$0xf] %vm426, %v407
  %441 = vst.msk [vmem:[%s4 + $0x38] sm:$0xf] %vm426, %v408
  %442 = vst.msk [vmem:[%s4 + $0x3c] sm:$0xf] %vm426, %v409
  // Predicated region
  $region18: #{resnet18_grouped_forward.31} parent=0 // pred_check
    _
  $region19: #{resnet18_grouped_forward.31} parent=0 // pred_check_branch
    %444 = sbr.rel (0) target = $region21
  $region20: #{resnet18_grouped_forward.31} parent=0 // pred_region
    _
  $region21: #{resnet18_grouped_forward.31} parent=0 // pred_fallthru
    _
  // Predicated region
  $region22: #{resnet18_grouped_forward.31} parent=0 // pred_check
    _
  $region23: #{resnet18_grouped_forward.31} parent=0 // pred_check_branch
    %446 = sbr.rel (0) target = $region25
  $region24: #{resnet18_grouped_forward.31} parent=0 // pred_region
    _
  $region25: #{resnet18_grouped_forward.31} parent=0 // pred_fallthru
    _

// kernel: resnet18_grouped_forward.33
$region0: #{resnet18_grouped_forward.33}
  #allocation0 [shape = 'u32[]', space=smem, size = 0x4, offset = 0x4, fixed_abs, tag = 'smem constant byte address 0x4 - core index']
  #allocation1 [shape = 'u32[144,128]{1,0:T(1,128)}', space=vmem, size = 0x12000, scoped, tag = 'internal scratch']
  %s0 = inlined_call_operand.vmem [shape: bf16[32,144], index: 0, kind: input, shape index: {}]
  %s1 = inlined_call_operand.vmem [shape: bf16[144,32], index: 1, kind: input, shape index: {}]
  %s2 = inlined_call_operand.vmem [shape: f32[1,32], index: 2, kind: input, shape index: {}]
  %s3 = inlined_call_operand.vmem [shape: f32[1,32], index: 3, kind: input, shape index: {}]
  %s4 = inlined_call_operand.vmem [shape: bf16[32,32], index: 4, kind: output, shape index: {}]
  %s5 = sld [smem:[#allocation0]]
  $region26: #{resnet18_grouped_forward.33} parent=0
    _
  %s7 = ssub.s32 1, %s5
  %s8 = scalar_select 0, %s7, %s5
  // Predicated region
  $region2: #{resnet18_grouped_forward.33} parent=0 // pred_check
    _
  $region3: #{resnet18_grouped_forward.33} parent=0 // pred_check_branch
    %10 = sbr.rel (0) target = $region5
  $region4: #{resnet18_grouped_forward.33} parent=0 // pred_region
    _
  $region5: #{resnet18_grouped_forward.33} parent=0 // pred_fallthru
    _
  // Predicated region
  $region6: #{resnet18_grouped_forward.33} parent=0 // pred_check
    _
  $region7: #{resnet18_grouped_forward.33} parent=0 // pred_check_branch
    %12 = sbr.rel (0) target = $region9
  $region8: #{resnet18_grouped_forward.33} parent=0 // pred_region
    _
  $region9: #{resnet18_grouped_forward.33} parent=0 // pred_fallthru
    _
  // Predicated region
  $region10: #{resnet18_grouped_forward.33} parent=0 // pred_check
    _
  $region11: #{resnet18_grouped_forward.33} parent=0 // pred_check_branch
    %14 = sbr.rel (0) target = $region13
  $region12: #{resnet18_grouped_forward.33} parent=0 // pred_region
    _
  $region13: #{resnet18_grouped_forward.33} parent=0 // pred_fallthru
    _
  // Predicated region
  $region14: #{resnet18_grouped_forward.33} parent=0 // pred_check
    _
  $region15: #{resnet18_grouped_forward.33} parent=0 // pred_check_branch
    %16 = sbr.rel (0) target = $region17
  $region16: #{resnet18_grouped_forward.33} parent=0 // pred_region
    _
  $region17: #{resnet18_grouped_forward.33} parent=0 // pred_fallthru
    _
  %v18 = vld [vmem:[%s0] sm:$0xff]
  %v19 = vld [vmem:[%s0 + $0x8] sm:$0xff]
  %v20 = vld [vmem:[%s0 + $0x10] sm:$0xff]
  %v21 = vld [vmem:[%s0 + $0x18] sm:$0xff]
  %v22 = vld [vmem:[%s1] sm:$0xf]
  %v23 = vld [vmem:[%s1 + $0x4] sm:$0xf]
  %v24 = vld [vmem:[%s1 + $0x8] sm:$0xf]
  %v25 = vld [vmem:[%s1 + $0xc] sm:$0xf]
  %v26 = vld [vmem:[%s1 + $0x10] sm:$0xf]
  %v27 = vld [vmem:[%s1 + $0x14] sm:$0xf]
  %v28 = vld [vmem:[%s1 + $0x18] sm:$0xf]
  %v29 = vld [vmem:[%s1 + $0x1c] sm:$0xf]
  %v30 = vld [vmem:[%s1 + $0x20] sm:$0xf]
  %v31 = vld [vmem:[%s1 + $0x24] sm:$0xf]
  %v32 = vld [vmem:[%s1 + $0x28] sm:$0xf]
  %v33 = vld [vmem:[%s1 + $0x2c] sm:$0xf]
  %v34 = vld [vmem:[%s1 + $0x30] sm:$0xf]
  %v35 = vld [vmem:[%s1 + $0x34] sm:$0xf]
  %v36 = vld [vmem:[%s1 + $0x38] sm:$0xf]
  %v37 = vld [vmem:[%s1 + $0x3c] sm:$0xf]
  %v38 = vld [vmem:[%s1 + $0x40] sm:$0xf]
  %v39 = vld [vmem:[%s1 + $0x44] sm:$0xf]
  %v44 = vunpack.c.l.b16 %v18
  %v45 = vunpack.c.h.b16 %v18
  %v46 = vunpack.c.l.b16 %v19
  %v47 = vunpack.c.h.b16 %v19
  %v48 = vunpack.c.l.b16 %v20
  %v49 = vunpack.c.h.b16 %v20
  %v50 = vunpack.c.l.b16 %v21
  %v51 = vunpack.c.h.b16 %v21
  %v52 = vpack.c.b16 %v46, %v44
  %v53 = vpack.c.b16 %v47, %v45
  %v54 = vpack.c.b16 %v50, %v48
  %v55 = vpack.c.b16 %v51, %v49
  %v76 = vunpack.c.l.b16 %v22
  %v77 = vunpack.c.l.b16 %v23
  %v78 = vunpack.c.l.b16 %v24
  %v79 = vunpack.c.l.b16 %v25
  %v80 = vunpack.c.l.b16 %v26
  %v81 = vunpack.c.l.b16 %v27
  %v82 = vunpack.c.l.b16 %v28
  %v83 = vunpack.c.l.b16 %v29
  %v84 = vunpack.c.l.b16 %v30
  %v85 = vunpack.c.l.b16 %v31
  %v86 = vunpack.c.l.b16 %v32
  %v87 = vunpack.c.l.b16 %v33
  %v88 = vunpack.c.l.b16 %v34
  %v89 = vunpack.c.l.b16 %v35
  %v90 = vunpack.c.l.b16 %v36
  %v91 = vunpack.c.l.b16 %v37
  %v92 = vunpack.c.l.b16 %v38
  %v93 = vunpack.c.l.b16 %v39
  %v94 = vpack.c.b16 %v77, %v76
  %v95 = vpack.c.b16 %v79, %v78
  %v96 = vpack.c.b16 %v81, %v80
  %v97 = vpack.c.b16 %v83, %v82
  %v98 = vpack.c.b16 %v85, %v84
  %v99 = vpack.c.b16 %v87, %v86
  %v100 = vpack.c.b16 %v89, %v88
  %v101 = vpack.c.b16 %v91, %v90
  %v102 = vpack.c.b16 %v93, %v92
  %vm112 = vcmask 130048
  %v114 = vsel %vm112, %v53, 0
  %v117 = vsel %vm112, %v55, 0
  %119 = vmatprep.subr.bf16.mxu0 0
  %120 = vmatpush1.bf16.msra.mxu0 %v101
  %121 = vmatprep.subr.bf16.mxu0 0
  %122 = vmatpush1.bf16.msra.mxu0 %v100
  %123 = vmatprep.subr.bf16.mxu0 0
  %124 = vmatpush1.bf16.msra.mxu0 %v99
  %125 = vmatprep.subr.bf16.mxu0 0
  %126 = vmatpush1.bf16.msra.mxu0 %v98
  %127 = vmatprep.subr.bf16.mxu0 0
  %128 = vmatpush1.bf16.msra.mxu0 %v97
  %129 = vmatprep.subr.bf16.mxu0 0
  %130 = vmatpush1.bf16.msra.mxu0 %v96
  %131 = vmatprep.subr.bf16.mxu0 0
  %132 = vmatpush1.bf16.msra.mxu0 %v95
  %133 = vmatprep.subr.bf16.mxu0 0
  %134 = vmatpush1.bf16.msra.mxu0 %v94
  %135 = vmatprep.subr.bf16.mxu0 0
  %136 = vmatpush2.bf16.msra.mxu0 0
  %137 = vmatprep.subr.bf16.mxu0 0
  %138 = vmatpush2.bf16.msra.mxu0 0
  %139 = vmatprep.subr.bf16.mxu0 0
  %140 = vmatpush2.bf16.msra.mxu0 0
  %141 = vmatprep.subr.bf16.mxu0 0
  %142 = vmatpush2.bf16.msra.mxu0 0
  %143 = vmatprep.subr.bf16.mxu0 0
  %144 = vmatpush2.bf16.msra.mxu0 0
  %145 = vmatprep.subr.bf16.mxu0 0
  %146 = vmatpush2.bf16.msra.mxu0 0
  %147 = vmatprep.subr.bf16.mxu0 0
  %148 = vmatpush2.bf16.msra.mxu0 0
  %149 = vmatprep.subr.bf16.mxu0 0
  %150 = vmatpush2.bf16.msra.mxu0 %v102
  %151 = vmatprep.mubr.bf16.mxu0 %v114
  %152 = vmatmul.mubr.bf16.gmra.mxu0 %v52
  %v153 = vpop.f32.mrf.mxu0
  %v154 = vadd.f32 0.0, %v153
  %v155 = vpop.f32.mrf.mxu0
  %v156 = vpop.f32.mrf.mxu0
  %v157 = vadd.f32 0.0, %v156
  %v158 = vpop.f32.mrf.mxu0
  %159 = vmatprep.mubr.bf16.mxu0 %v117
  %160 = vmatmul.mubr.bf16.gmra.mxu0 %v54
  %v161 = vpop.f32.mrf.mxu0
  %v162 = vadd.f32 0.0, %v161
  %v163 = vpop.f32.mrf.mxu0
  %v164 = vpop.f32.mrf.mxu0
  %v165 = vadd.f32 0.0, %v164
  %v166 = vpop.f32.mrf.mxu0
  %167 = vdwg.mxu0
  %v168 = vld [vmem:[%s2] sm:$0x1]
  %v170 = vlaneseq
  %v171 = vshrl.u32 %v170, 7
  %v172 = vsub.s32 0, %v171
  %v173 = vrot.slane %v168, %v172
  %v175 = vmul.f32 %v154, %v173
  %v176 = vmul.f32 %v157, %v173
  %v177 = vmul.f32 %v162, %v173
  %v178 = vmul.f32 %v165, %v173
  %v179 = vld [vmem:[%s3] sm:$0x1]
  %v181 = vlaneseq
  %v182 = vshrl.u32 %v181, 7
  %v183 = vsub.s32 0, %v182
  %v184 = vrot.slane %v179, %v183
  %v186 = vadd.f32 %v175, %v184
  %v187 = vadd.f32 %v176, %v184
  %v188 = vadd.f32 %v177, %v184
  %v189 = vadd.f32 %v178, %v184
  %v190 = vmax.f32 %v186, 0.0
  %v191 = vmax.f32 %v187, 0.0
  %v192 = vmax.f32 %v188, 0.0
  %v193 = vmax.f32 %v189, 0.0
  %v194 = vpack.c.bf16 %v191, %v190
  %v195 = vpack.c.bf16 %v193, %v192
  %v198 = vunpack.c.l.b16 %v194
  %v199 = vunpack.c.h.b16 %v194
  %v200 = vunpack.c.l.b16 %v195
  %v201 = vunpack.c.h.b16 %v195
  %v202 = vpack.c.b16 %v198, %v198
  %v203 = vpack.c.b16 %v199, %v199
  %v204 = vpack.c.b16 %v200, %v200
  %v205 = vpack.c.b16 %v201, %v201
  %vm210 = vcmask 257024
  %211 = vst.msk [vmem:[%s4] sm:$0xf] %vm210, %v202
  %212 = vst.msk [vmem:[%s4 + $0x4] sm:$0xf] %vm210, %v203
  %213 = vst.msk [vmem:[%s4 + $0x8] sm:$0xf] %vm210, %v204
  %214 = vst.msk [vmem:[%s4 + $0xc] sm:$0xf] %vm210, %v205
  // Predicated region
  $region18: #{resnet18_grouped_forward.33} parent=0 // pred_check
    _
  $region19: #{resnet18_grouped_forward.33} parent=0 // pred_check_branch
    %216 = sbr.rel (0) target = $region21
  $region20: #{resnet18_grouped_forward.33} parent=0 // pred_region
    _
  $region21: #{resnet18_grouped_forward.33} parent=0 // pred_fallthru
    _
  // Predicated region
  $region22: #{resnet18_grouped_forward.33} parent=0 // pred_check
    _
  $region23: #{resnet18_grouped_forward.33} parent=0 // pred_check_branch
    %218 = sbr.rel (0) target = $region25
  $region24: #{resnet18_grouped_forward.33} parent=0 // pred_region
    _
  $region25: #{resnet18_grouped_forward.33} parent=0 // pred_fallthru
    _

// kernel: resnet18_grouped_forward.34
$region0: #{resnet18_grouped_forward.34}
  #allocation0 [shape = 'u32[]', space=smem, size = 0x4, offset = 0x4, fixed_abs, tag = 'smem constant byte address 0x4 - core index']
  #allocation1 [shape = 'u32[144,128]{1,0:T(1,128)}', space=vmem, size = 0x12000, scoped, tag = 'internal scratch']
  %s0 = inlined_call_operand.vmem [shape: bf16[32,16], index: 0, kind: input, shape index: {}]
  %s1 = inlined_call_operand.vmem [shape: bf16[16,32], index: 1, kind: input, shape index: {}]
  %s2 = inlined_call_operand.vmem [shape: f32[1,32], index: 2, kind: input, shape index: {}]
  %s3 = inlined_call_operand.vmem [shape: f32[1,32], index: 3, kind: input, shape index: {}]
  %s4 = inlined_call_operand.vmem [shape: bf16[32,32], index: 4, kind: output, shape index: {}]
  %s5 = sld [smem:[#allocation0]]
  $region26: #{resnet18_grouped_forward.34} parent=0
    _
  %s7 = ssub.s32 1, %s5
  %s8 = scalar_select 0, %s7, %s5
  // Predicated region
  $region2: #{resnet18_grouped_forward.34} parent=0 // pred_check
    _
  $region3: #{resnet18_grouped_forward.34} parent=0 // pred_check_branch
    %10 = sbr.rel (0) target = $region5
  $region4: #{resnet18_grouped_forward.34} parent=0 // pred_region
    _
  $region5: #{resnet18_grouped_forward.34} parent=0 // pred_fallthru
    _
  // Predicated region
  $region6: #{resnet18_grouped_forward.34} parent=0 // pred_check
    _
  $region7: #{resnet18_grouped_forward.34} parent=0 // pred_check_branch
    %12 = sbr.rel (0) target = $region9
  $region8: #{resnet18_grouped_forward.34} parent=0 // pred_region
    _
  $region9: #{resnet18_grouped_forward.34} parent=0 // pred_fallthru
    _
  // Predicated region
  $region10: #{resnet18_grouped_forward.34} parent=0 // pred_check
    _
  $region11: #{resnet18_grouped_forward.34} parent=0 // pred_check_branch
    %14 = sbr.rel (0) target = $region13
  $region12: #{resnet18_grouped_forward.34} parent=0 // pred_region
    _
  $region13: #{resnet18_grouped_forward.34} parent=0 // pred_fallthru
    _
  // Predicated region
  $region14: #{resnet18_grouped_forward.34} parent=0 // pred_check
    _
  $region15: #{resnet18_grouped_forward.34} parent=0 // pred_check_branch
    %16 = sbr.rel (0) target = $region17
  $region16: #{resnet18_grouped_forward.34} parent=0 // pred_region
    _
  $region17: #{resnet18_grouped_forward.34} parent=0 // pred_fallthru
    _
  %v18 = vld [vmem:[%s0] sm:$0xf]
  %v19 = vld [vmem:[%s0 + $0x4] sm:$0xf]
  %v20 = vld [vmem:[%s0 + $0x8] sm:$0xf]
  %v21 = vld [vmem:[%s0 + $0xc] sm:$0xf]
  %v22 = vld [vmem:[%s1] sm:$0xf]
  %v23 = vld [vmem:[%s1 + $0x4] sm:$0xf]
  %v28 = vunpack.c.l.b16 %v18
  %v29 = vunpack.c.l.b16 %v19
  %v30 = vunpack.c.l.b16 %v20
  %v31 = vunpack.c.l.b16 %v21
  %v32 = vpack.c.b16 %v29, %v28
  %v33 = vpack.c.b16 %v31, %v30
  %v36 = vunpack.c.l.b16 %v22
  %v37 = vunpack.c.l.b16 %v23
  %v38 = vpack.c.b16 %v37, %v36
  %vm40 = vcmask 130048
  %v42 = vsel %vm40, %v32, 0
  %v45 = vsel %vm40, %v33, 0
  %47 = vmatprep.subr.bf16.mxu0 0
  %48 = vmatpush1.bf16.msra.mxu0 0
  %49 = vmatprep.subr.bf16.mxu0 0
  %50 = vmatpush1.bf16.msra.mxu0 0
  %51 = vmatprep.subr.bf16.mxu0 0
  %52 = vmatpush1.bf16.msra.mxu0 0
  %53 = vmatprep.subr.bf16.mxu0 0
  %54 = vmatpush1.bf16.msra.mxu0 0
  %55 = vmatprep.subr.bf16.mxu0 0
  %56 = vmatpush1.bf16.msra.mxu0 0
  %57 = vmatprep.subr.bf16.mxu0 0
  %58 = vmatpush1.bf16.msra.mxu0 0
  %59 = vmatprep.subr.bf16.mxu0 0
  %60 = vmatpush1.bf16.msra.mxu0 0
  %61 = vmatprep.subr.bf16.mxu0 0
  %62 = vmatpush1.bf16.msra.mxu0 %v38
  %63 = vmatprep.subr.bf16.mxu0 0
  %64 = vmatpush2.bf16.msra.mxu0 0
  %65 = vmatprep.subr.bf16.mxu0 0
  %66 = vmatpush2.bf16.msra.mxu0 0
  %67 = vmatprep.subr.bf16.mxu0 0
  %68 = vmatpush2.bf16.msra.mxu0 0
  %69 = vmatprep.subr.bf16.mxu0 0
  %70 = vmatpush2.bf16.msra.mxu0 0
  %71 = vmatprep.subr.bf16.mxu0 0
  %72 = vmatpush2.bf16.msra.mxu0 0
  %73 = vmatprep.subr.bf16.mxu0 0
  %74 = vmatpush2.bf16.msra.mxu0 0
  %75 = vmatprep.subr.bf16.mxu0 0
  %76 = vmatpush2.bf16.msra.mxu0 0
  %77 = vmatprep.subr.bf16.mxu0 0
  %78 = vmatpush2.bf16.msra.mxu0 0
  %79 = vmatprep.mubr.bf16.mxu0 0
  %80 = vmatmul.mubr.bf16.gmra.mxu0 %v42
  %v81 = vpop.f32.mrf.mxu0
  %v82 = vadd.f32 0.0, %v81
  %v83 = vpop.f32.mrf.mxu0
  %v84 = vpop.f32.mrf.mxu0
  %v85 = vadd.f32 0.0, %v84
  %v86 = vpop.f32.mrf.mxu0
  %87 = vmatprep.mubr.bf16.mxu0 0
  %88 = vmatmul.mubr.bf16.gmra.mxu0 %v45
  %v89 = vpop.f32.mrf.mxu0
  %v90 = vadd.f32 0.0, %v89
  %v91 = vpop.f32.mrf.mxu0
  %v92 = vpop.f32.mrf.mxu0
  %v93 = vadd.f32 0.0, %v92
  %v94 = vpop.f32.mrf.mxu0
  %95 = vdwg.mxu0
  %v96 = vld [vmem:[%s2] sm:$0x1]
  %v98 = vlaneseq
  %v99 = vshrl.u32 %v98, 7
  %v100 = vsub.s32 0, %v99
  %v101 = vrot.slane %v96, %v100
  %v103 = vmul.f32 %v82, %v101
  %v104 = vmul.f32 %v85, %v101
  %v105 = vmul.f32 %v90, %v101
  %v106 = vmul.f32 %v93, %v101
  %v107 = vld [vmem:[%s3] sm:$0x1]
  %v109 = vlaneseq
  %v110 = vshrl.u32 %v109, 7
  %v111 = vsub.s32 0, %v110
  %v112 = vrot.slane %v107, %v111
  %v114 = vadd.f32 %v103, %v112
  %v115 = vadd.f32 %v104, %v112
  %v116 = vadd.f32 %v105, %v112
  %v117 = vadd.f32 %v106, %v112
  %v118 = vpack.c.bf16 %v115, %v114
  %v119 = vpack.c.bf16 %v117, %v116
  %v122 = vunpack.c.l.b16 %v118
  %v123 = vunpack.c.h.b16 %v118
  %v124 = vunpack.c.l.b16 %v119
  %v125 = vunpack.c.h.b16 %v119
  %v126 = vpack.c.b16 %v122, %v122
  %v127 = vpack.c.b16 %v123, %v123
  %v128 = vpack.c.b16 %v124, %v124
  %v129 = vpack.c.b16 %v125, %v125
  %vm134 = vcmask 257024
  %135 = vst.msk [vmem:[%s4] sm:$0xf] %vm134, %v126
  %136 = vst.msk [vmem:[%s4 + $0x4] sm:$0xf] %vm134, %v127
  %137 = vst.msk [vmem:[%s4 + $0x8] sm:$0xf] %vm134, %v128
  %138 = vst.msk [vmem:[%s4 + $0xc] sm:$0xf] %vm134, %v129
  // Predicated region
  $region18: #{resnet18_grouped_forward.34} parent=0 // pred_check
    _
  $region19: #{resnet18_grouped_forward.34} parent=0 // pred_check_branch
    %140 = sbr.rel (0) target = $region21
  $region20: #{resnet18_grouped_forward.34} parent=0 // pred_region
    _
  $region21: #{resnet18_grouped_forward.34} parent=0 // pred_fallthru
    _
  // Predicated region
  $region22: #{resnet18_grouped_forward.34} parent=0 // pred_check
    _
  $region23: #{resnet18_grouped_forward.34} parent=0 // pred_check_branch
    %142 = sbr.rel (0) target = $region25
  $region24: #{resnet18_grouped_forward.34} parent=0 // pred_region
    _
  $region25: #{resnet18_grouped_forward.34} parent=0 // pred_fallthru
    _

// kernel: resnet18_grouped_forward.35
$region0: #{resnet18_grouped_forward.35}
  #allocation0 [shape = 'u32[]', space=smem, size = 0x4, offset = 0x4, fixed_abs, tag = 'smem constant byte address 0x4 - core index']
  #allocation1 [shape = 'u32[144,128]{1,0:T(1,128)}', space=vmem, size = 0x12000, scoped, tag = 'internal scratch']
  %s0 = inlined_call_operand.vmem [shape: bf16[32,288], index: 0, kind: input, shape index: {}]
  %s1 = inlined_call_operand.vmem [shape: bf16[288,32], index: 1, kind: input, shape index: {}]
  %s2 = inlined_call_operand.vmem [shape: f32[1,32], index: 2, kind: input, shape index: {}]
  %s3 = inlined_call_operand.vmem [shape: f32[1,32], index: 3, kind: input, shape index: {}]
  %s4 = inlined_call_operand.vmem [shape: bf16[32,32], index: 4, kind: input, shape index: {}]
  %s5 = inlined_call_operand.vmem [shape: bf16[32,32], index: 5, kind: output, shape index: {}]
  %s6 = sld [smem:[#allocation0]]
  $region30: #{resnet18_grouped_forward.35} parent=0
    _
  %s8 = ssub.s32 1, %s6
  %s9 = scalar_select 0, %s8, %s6
  // Predicated region
  $region2: #{resnet18_grouped_forward.35} parent=0 // pred_check
    _
  $region3: #{resnet18_grouped_forward.35} parent=0 // pred_check_branch
    %11 = sbr.rel (0) target = $region5
  $region4: #{resnet18_grouped_forward.35} parent=0 // pred_region
    _
  $region5: #{resnet18_grouped_forward.35} parent=0 // pred_fallthru
    _
  // Predicated region
  $region6: #{resnet18_grouped_forward.35} parent=0 // pred_check
    _
  $region7: #{resnet18_grouped_forward.35} parent=0 // pred_check_branch
    %13 = sbr.rel (0) target = $region9
  $region8: #{resnet18_grouped_forward.35} parent=0 // pred_region
    _
  $region9: #{resnet18_grouped_forward.35} parent=0 // pred_fallthru
    _
  // Predicated region
  $region10: #{resnet18_grouped_forward.35} parent=0 // pred_check
    _
  $region11: #{resnet18_grouped_forward.35} parent=0 // pred_check_branch
    %15 = sbr.rel (0) target = $region13
  $region12: #{resnet18_grouped_forward.35} parent=0 // pred_region
    _
  $region13: #{resnet18_grouped_forward.35} parent=0 // pred_fallthru
    _
  // Predicated region
  $region14: #{resnet18_grouped_forward.35} parent=0 // pred_check
    _
  $region15: #{resnet18_grouped_forward.35} parent=0 // pred_check_branch
    %17 = sbr.rel (0) target = $region17
  $region16: #{resnet18_grouped_forward.35} parent=0 // pred_region
    _
  $region17: #{resnet18_grouped_forward.35} parent=0 // pred_fallthru
    _
  // Predicated region
  $region18: #{resnet18_grouped_forward.35} parent=0 // pred_check
    _
  $region19: #{resnet18_grouped_forward.35} parent=0 // pred_check_branch
    %19 = sbr.rel (0) target = $region21
  $region20: #{resnet18_grouped_forward.35} parent=0 // pred_region
    _
  $region21: #{resnet18_grouped_forward.35} parent=0 // pred_fallthru
    _
  %v21 = vld [vmem:[%s0] sm:$0xff]
  %v22 = vld [vmem:[%s0 + $0x8] sm:$0xf]
  %v23 = vld [vmem:[%s0 + $0xc] sm:$0xff]
  %v24 = vld [vmem:[%s0 + $0x14] sm:$0xf]
  %v25 = vld [vmem:[%s0 + $0x18] sm:$0xff]
  %v26 = vld [vmem:[%s0 + $0x20] sm:$0xf]
  %v27 = vld [vmem:[%s0 + $0x24] sm:$0xff]
  %v28 = vld [vmem:[%s0 + $0x2c] sm:$0xf]
  %v29 = vld [vmem:[%s1] sm:$0xf]
  %v30 = vld [vmem:[%s1 + $0x4] sm:$0xf]
  %v31 = vld [vmem:[%s1 + $0x8] sm:$0xf]
  %v32 = vld [vmem:[%s1 + $0xc] sm:$0xf]
  %v33 = vld [vmem:[%s1 + $0x10] sm:$0xf]
  %v34 = vld [vmem:[%s1 + $0x14] sm:$0xf]
  %v35 = vld [vmem:[%s1 + $0x18] sm:$0xf]
  %v36 = vld [vmem:[%s1 + $0x1c] sm:$0xf]
  %v37 = vld [vmem:[%s1 + $0x20] sm:$0xf]
  %v38 = vld [vmem:[%s1 + $0x24] sm:$0xf]
  %v39 = vld [vmem:[%s1 + $0x28] sm:$0xf]
  %v40 = vld [vmem:[%s1 + $0x2c] sm:$0xf]
  %v41 = vld [vmem:[%s1 + $0x30] sm:$0xf]
  %v42 = vld [vmem:[%s1 + $0x34] sm:$0xf]
  %v43 = vld [vmem:[%s1 + $0x38] sm:$0xf]
  %v44 = vld [vmem:[%s1 + $0x3c] sm:$0xf]
  %v45 = vld [vmem:[%s1 + $0x40] sm:$0xf]
  %v46 = vld [vmem:[%s1 + $0x44] sm:$0xf]
  %v47 = vld [vmem:[%s1 + $0x48] sm:$0xf]
  %v48 = vld [vmem:[%s1 + $0x4c] sm:$0xf]
  %v49 = vld [vmem:[%s1 + $0x50] sm:$0xf]
  %v50 = vld [vmem:[%s1 + $0x54] sm:$0xf]
  %v51 = vld [vmem:[%s1 + $0x58] sm:$0xf]
  %v52 = vld [vmem:[%s1 + $0x5c] sm:$0xf]
  %v53 = vld [vmem:[%s1 + $0x60] sm:$0xf]
  %v54 = vld [vmem:[%s1 + $0x64] sm:$0xf]
  %v55 = vld [vmem:[%s1 + $0x68] sm:$0xf]
  %v56 = vld [vmem:[%s1 + $0x6c] sm:$0xf]
  %v57 = vld [vmem:[%s1 + $0x70] sm:$0xf]
  %v58 = vld [vmem:[%s1 + $0x74] sm:$0xf]
  %v59 = vld [vmem:[%s1 + $0x78] sm:$0xf]
  %v60 = vld [vmem:[%s1 + $0x7c] sm:$0xf]
  %v61 = vld [vmem:[%s1 + $0x80] sm:$0xf]
  %v62 = vld [vmem:[%s1 + $0x84] sm:$0xf]
  %v63 = vld [vmem:[%s1 + $0x88] sm:$0xf]
  %v64 = vld [vmem:[%s1 + $0x8c] sm:$0xf]
  %v73 = vunpack.c.l.b16 %v21
  %v74 = vunpack.c.h.b16 %v21
  %v75 = vunpack.c.l.b16 %v22
  %v76 = vunpack.c.l.b16 %v23
  %v77 = vunpack.c.h.b16 %v23
  %v78 = vunpack.c.l.b16 %v24
  %v79 = vunpack.c.l.b16 %v25
  %v80 = vunpack.c.h.b16 %v25
  %v81 = vunpack.c.l.b16 %v26
  %v82 = vunpack.c.l.b16 %v27
  %v83 = vunpack.c.h.b16 %v27
  %v84 = vunpack.c.l.b16 %v28
  %v85 = vpack.c.b16 %v76, %v73
  %v86 = vpack.c.b16 %v77, %v74
  %v87 = vpack.c.b16 %v78, %v75
  %v88 = vpack.c.b16 %v82, %v79
  %v89 = vpack.c.b16 %v83, %v80
  %v90 = vpack.c.b16 %v84, %v81
  %v131 = vunpack.c.l.b16 %v29
  %v132 = vunpack.c.l.b16 %v30
  %v133 = vunpack.c.l.b16 %v31
  %v134 = vunpack.c.l.b16 %v32
  %v135 = vunpack.c.l.b16 %v33
  %v136 = vunpack.c.l.b16 %v34
  %v137 = vunpack.c.l.b16 %v35
  %v138 = vunpack.c.l.b16 %v36
  %v139 = vunpack.c.l.b16 %v37
  %v140 = vunpack.c.l.b16 %v38
  %v141 = vunpack.c.l.b16 %v39
  %v142 = vunpack.c.l.b16 %v40
  %v143 = vunpack.c.l.b16 %v41
  %v144 = vunpack.c.l.b16 %v42
  %v145 = vunpack.c.l.b16 %v43
  %v146 = vunpack.c.l.b16 %v44
  %v147 = vunpack.c.l.b16 %v45
  %v148 = vunpack.c.l.b16 %v46
  %v149 = vunpack.c.l.b16 %v47
  %v150 = vunpack.c.l.b16 %v48
  %v151 = vunpack.c.l.b16 %v49
  %v152 = vunpack.c.l.b16 %v50
  %v153 = vunpack.c.l.b16 %v51
  %v154 = vunpack.c.l.b16 %v52
  %v155 = vunpack.c.l.b16 %v53
  %v156 = vunpack.c.l.b16 %v54
  %v157 = vunpack.c.l.b16 %v55
  %v158 = vunpack.c.l.b16 %v56
  %v159 = vunpack.c.l.b16 %v57
  %v160 = vunpack.c.l.b16 %v58
  %v161 = vunpack.c.l.b16 %v59
  %v162 = vunpack.c.l.b16 %v60
  %v163 = vunpack.c.l.b16 %v61
  %v164 = vunpack.c.l.b16 %v62
  %v165 = vunpack.c.l.b16 %v63
  %v166 = vunpack.c.l.b16 %v64
  %v167 = vpack.c.b16 %v132, %v131
  %v168 = vpack.c.b16 %v134, %v133
  %v169 = vpack.c.b16 %v136, %v135
  %v170 = vpack.c.b16 %v138, %v137
  %v171 = vpack.c.b16 %v140, %v139
  %v172 = vpack.c.b16 %v142, %v141
  %v173 = vpack.c.b16 %v144, %v143
  %v174 = vpack.c.b16 %v146, %v145
  %v175 = vpack.c.b16 %v148, %v147
  %v176 = vpack.c.b16 %v150, %v149
  %v177 = vpack.c.b16 %v152, %v151
  %v178 = vpack.c.b16 %v154, %v153
  %v179 = vpack.c.b16 %v156, %v155
  %v180 = vpack.c.b16 %v158, %v157
  %v181 = vpack.c.b16 %v160, %v159
  %v182 = vpack.c.b16 %v162, %v161
  %v183 = vpack.c.b16 %v164, %v163
  %v184 = vpack.c.b16 %v166, %v165
  %vm203 = vcmask 261120
  %v205 = vsel %vm203, %v87, 0
  %v208 = vsel %vm203, %v90, 0
  %210 = vmatprep.subr.bf16.mxu0 0
  %211 = vmatpush1.bf16.msra.mxu0 %v174
  %212 = vmatprep.subr.bf16.mxu0 0
  %213 = vmatpush1.bf16.msra.mxu0 %v173
  %214 = vmatprep.subr.bf16.mxu0 0
  %215 = vmatpush1.bf16.msra.mxu0 %v172
  %216 = vmatprep.subr.bf16.mxu0 0
  %217 = vmatpush1.bf16.msra.mxu0 %v171
  %218 = vmatprep.subr.bf16.mxu0 0
  %219 = vmatpush1.bf16.msra.mxu0 %v170
  %220 = vmatprep.subr.bf16.mxu0 0
  %221 = vmatpush1.bf16.msra.mxu0 %v169
  %222 = vmatprep.subr.bf16.mxu0 0
  %223 = vmatpush1.bf16.msra.mxu0 %v168
  %224 = vmatprep.subr.bf16.mxu0 0
  %225 = vmatpush1.bf16.msra.mxu0 %v167
  %226 = vmatprep.subr.bf16.mxu0 0
  %227 = vmatpush2.bf16.msra.mxu0 %v182
  %228 = vmatprep.subr.bf16.mxu0 0
  %229 = vmatpush2.bf16.msra.mxu0 %v181
  %230 = vmatprep.subr.bf16.mxu0 0
  %231 = vmatpush2.bf16.msra.mxu0 %v180
  %232 = vmatprep.subr.bf16.mxu0 0
  %233 = vmatpush2.bf16.msra.mxu0 %v179
  %234 = vmatprep.subr.bf16.mxu0 0
  %235 = vmatpush2.bf16.msra.mxu0 %v178
  %236 = vmatprep.subr.bf16.mxu0 0
  %237 = vmatpush2.bf16.msra.mxu0 %v177
  %238 = vmatprep.subr.bf16.mxu0 0
  %239 = vmatpush2.bf16.msra.mxu0 %v176
  %240 = vmatprep.subr.bf16.mxu0 0
  %241 = vmatpush2.bf16.msra.mxu0 %v175
  %242 = vmatprep.mubr.bf16.mxu0 %v86
  %243 = vmatmul.mubr.bf16.gmra.mxu0 %v85
  %v244 = vpop.f32.mrf.mxu0
  %v245 = vadd.f32 0.0, %v244
  %v246 = vpop.f32.mrf.mxu0
  %v247 = vpop.f32.mrf.mxu0
  %v248 = vadd.f32 0.0, %v247
  %v249 = vpop.f32.mrf.mxu0
  %250 = vmatprep.mubr.bf16.mxu0 %v89
  %251 = vmatmul.mubr.bf16.gmra.mxu0 %v88
  %v252 = vpop.f32.mrf.mxu0
  %v253 = vadd.f32 0.0, %v252
  %v254 = vpop.f32.mrf.mxu0
  %v255 = vpop.f32.mrf.mxu0
  %v256 = vadd.f32 0.0, %v255
  %v257 = vpop.f32.mrf.mxu0
  %258 = vdwg.mxu0
  %259 = vmatprep.subr.bf16.mxu0 0
  %260 = vmatpush1.bf16.msra.mxu0 0
  %261 = vmatprep.subr.bf16.mxu0 0
  %262 = vmatpush1.bf16.msra.mxu0 0
  %263 = vmatprep.subr.bf16.mxu0 0
  %264 = vmatpush1.bf16.msra.mxu0 0
  %265 = vmatprep.subr.bf16.mxu0 0
  %266 = vmatpush1.bf16.msra.mxu0 0
  %267 = vmatprep.subr.bf16.mxu0 0
  %268 = vmatpush1.bf16.msra.mxu0 0
  %269 = vmatprep.subr.bf16.mxu0 0
  %270 = vmatpush1.bf16.msra.mxu0 0
  %271 = vmatprep.subr.bf16.mxu0 0
  %272 = vmatpush1.bf16.msra.mxu0 %v184
  %273 = vmatprep.subr.bf16.mxu0 0
  %274 = vmatpush1.bf16.msra.mxu0 %v183
  %275 = vmatprep.subr.bf16.mxu0 0
  %276 = vmatpush2.bf16.msra.mxu0 0
  %277 = vmatprep.subr.bf16.mxu0 0
  %278 = vmatpush2.bf16.msra.mxu0 0
  %279 = vmatprep.subr.bf16.mxu0 0
  %280 = vmatpush2.bf16.msra.mxu0 0
  %281 = vmatprep.subr.bf16.mxu0 0
  %282 = vmatpush2.bf16.msra.mxu0 0
  %283 = vmatprep.subr.bf16.mxu0 0
  %284 = vmatpush2.bf16.msra.mxu0 0
  %285 = vmatprep.subr.bf16.mxu0 0
  %286 = vmatpush2.bf16.msra.mxu0 0
  %287 = vmatprep.subr.bf16.mxu0 0
  %288 = vmatpush2.bf16.msra.mxu0 0
  %289 = vmatprep.subr.bf16.mxu0 0
  %290 = vmatpush2.bf16.msra.mxu0 0
  %291 = vmatprep.mubr.bf16.mxu0 0
  %292 = vmatmul.mubr.bf16.gmra.mxu0 %v205
  %v293 = vpop.f32.mrf.mxu0
  %v294 = vadd.f32 %v245, %v293
  %v295 = vpop.f32.mrf.mxu0
  %v296 = vpop.f32.mrf.mxu0
  %v297 = vadd.f32 %v248, %v296
  %v298 = vpop.f32.mrf.mxu0
  %299 = vmatprep.mubr.bf16.mxu0 0
  %300 = vmatmul.mubr.bf16.gmra.mxu0 %v208
  %v301 = vpop.f32.mrf.mxu0
  %v302 = vadd.f32 %v253, %v301
  %v303 = vpop.f32.mrf.mxu0
  %v304 = vpop.f32.mrf.mxu0
  %v305 = vadd.f32 %v256, %v304
  %v306 = vpop.f32.mrf.mxu0
  %307 = vdwg.mxu0
  %v308 = vld [vmem:[%s2] sm:$0x1]
  %v310 = vlaneseq
  %v311 = vshrl.u32 %v310, 7
  %v312 = vsub.s32 0, %v311
  %v313 = vrot.slane %v308, %v312
  %v315 = vmul.f32 %v294, %v313
  %v316 = vmul.f32 %v297, %v313
  %v317 = vmul.f32 %v302, %v313
  %v318 = vmul.f32 %v305, %v313
  %v319 = vld [vmem:[%s3] sm:$0x1]
  %v321 = vlaneseq
  %v322 = vshrl.u32 %v321, 7
  %v323 = vsub.s32 0, %v322
  %v324 = vrot.slane %v319, %v323
  %v326 = vadd.f32 %v315, %v324
  %v327 = vadd.f32 %v316, %v324
  %v328 = vadd.f32 %v317, %v324
  %v329 = vadd.f32 %v318, %v324
  %v330 = vld [vmem:[%s4] sm:$0xf]
  %v331 = vld [vmem:[%s4 + $0x4] sm:$0xf]
  %v332 = vld [vmem:[%s4 + $0x8] sm:$0xf]
  %v333 = vld [vmem:[%s4 + $0xc] sm:$0xf]
  %v334 = vunpack.c.l.bf16 %v330
  %v335 = vunpack.c.l.bf16 %v331
  %v336 = vunpack.c.l.bf16 %v332
  %v337 = vunpack.c.l.bf16 %v333
  %v338 = vadd.f32 %v326, %v334
  %v339 = vadd.f32 %v327, %v335
  %v340 = vadd.f32 %v328, %v336
  %v341 = vadd.f32 %v329, %v337
  %v342 = vmax.f32 %v338, 0.0
  %v343 = vmax.f32 %v339, 0.0
  %v344 = vmax.f32 %v340, 0.0
  %v345 = vmax.f32 %v341, 0.0
  %v346 = vpack.c.bf16 %v343, %v342
  %v347 = vpack.c.bf16 %v345, %v344
  %v350 = vunpack.c.l.b16 %v346
  %v351 = vunpack.c.h.b16 %v346
  %v352 = vunpack.c.l.b16 %v347
  %v353 = vunpack.c.h.b16 %v347
  %v354 = vpack.c.b16 %v350, %v350
  %v355 = vpack.c.b16 %v351, %v351
  %v356 = vpack.c.b16 %v352, %v352
  %v357 = vpack.c.b16 %v353, %v353
  %vm362 = vcmask 257024
  %363 = vst.msk [vmem:[%s5] sm:$0xf] %vm362, %v354
  %364 = vst.msk [vmem:[%s5 + $0x4] sm:$0xf] %vm362, %v355
  %365 = vst.msk [vmem:[%s5 + $0x8] sm:$0xf] %vm362, %v356
  %366 = vst.msk [vmem:[%s5 + $0xc] sm:$0xf] %vm362, %v357
  // Predicated region
  $region22: #{resnet18_grouped_forward.35} parent=0 // pred_check
    _
  $region23: #{resnet18_grouped_forward.35} parent=0 // pred_check_branch
    %368 = sbr.rel (0) target = $region25
  $region24: #{resnet18_grouped_forward.35} parent=0 // pred_region
    _
  $region25: #{resnet18_grouped_forward.35} parent=0 // pred_fallthru
    _
  // Predicated region
  $region26: #{resnet18_grouped_forward.35} parent=0 // pred_check
    _
  $region27: #{resnet18_grouped_forward.35} parent=0 // pred_check_branch
    %370 = sbr.rel (0) target = $region29
  $region28: #{resnet18_grouped_forward.35} parent=0 // pred_region
    _
  $region29: #{resnet18_grouped_forward.35} parent=0 // pred_fallthru
    _

// kernel: resnet18_grouped_forward.36
$region0: #{resnet18_grouped_forward.36}
  #allocation0 [shape = 'u32[]', space=smem, size = 0x4, offset = 0x4, fixed_abs, tag = 'smem constant byte address 0x4 - core index']
  #allocation1 [shape = 'u32[144,128]{1,0:T(1,128)}', space=vmem, size = 0x12000, scoped, tag = 'internal scratch']
  %s0 = inlined_call_operand.vmem [shape: bf16[32,288], index: 0, kind: input, shape index: {}]
  %s1 = inlined_call_operand.vmem [shape: bf16[288,32], index: 1, kind: input, shape index: {}]
  %s2 = inlined_call_operand.vmem [shape: f32[1,32], index: 2, kind: input, shape index: {}]
  %s3 = inlined_call_operand.vmem [shape: f32[1,32], index: 3, kind: input, shape index: {}]
  %s4 = inlined_call_operand.vmem [shape: bf16[32,32], index: 4, kind: output, shape index: {}]
  %s5 = sld [smem:[#allocation0]]
  $region26: #{resnet18_grouped_forward.36} parent=0
    _
  %s7 = ssub.s32 1, %s5
  %s8 = scalar_select 0, %s7, %s5
  // Predicated region
  $region2: #{resnet18_grouped_forward.36} parent=0 // pred_check
    _
  $region3: #{resnet18_grouped_forward.36} parent=0 // pred_check_branch
    %10 = sbr.rel (0) target = $region5
  $region4: #{resnet18_grouped_forward.36} parent=0 // pred_region
    _
  $region5: #{resnet18_grouped_forward.36} parent=0 // pred_fallthru
    _
  // Predicated region
  $region6: #{resnet18_grouped_forward.36} parent=0 // pred_check
    _
  $region7: #{resnet18_grouped_forward.36} parent=0 // pred_check_branch
    %12 = sbr.rel (0) target = $region9
  $region8: #{resnet18_grouped_forward.36} parent=0 // pred_region
    _
  $region9: #{resnet18_grouped_forward.36} parent=0 // pred_fallthru
    _
  // Predicated region
  $region10: #{resnet18_grouped_forward.36} parent=0 // pred_check
    _
  $region11: #{resnet18_grouped_forward.36} parent=0 // pred_check_branch
    %14 = sbr.rel (0) target = $region13
  $region12: #{resnet18_grouped_forward.36} parent=0 // pred_region
    _
  $region13: #{resnet18_grouped_forward.36} parent=0 // pred_fallthru
    _
  // Predicated region
  $region14: #{resnet18_grouped_forward.36} parent=0 // pred_check
    _
  $region15: #{resnet18_grouped_forward.36} parent=0 // pred_check_branch
    %16 = sbr.rel (0) target = $region17
  $region16: #{resnet18_grouped_forward.36} parent=0 // pred_region
    _
  $region17: #{resnet18_grouped_forward.36} parent=0 // pred_fallthru
    _
  %v18 = vld [vmem:[%s0] sm:$0xff]
  %v19 = vld [vmem:[%s0 + $0x8] sm:$0xf]
  %v20 = vld [vmem:[%s0 + $0xc] sm:$0xff]
  %v21 = vld [vmem:[%s0 + $0x14] sm:$0xf]
  %v22 = vld [vmem:[%s0 + $0x18] sm:$0xff]
  %v23 = vld [vmem:[%s0 + $0x20] sm:$0xf]
  %v24 = vld [vmem:[%s0 + $0x24] sm:$0xff]
  %v25 = vld [vmem:[%s0 + $0x2c] sm:$0xf]
  %v26 = vld [vmem:[%s1] sm:$0xf]
  %v27 = vld [vmem:[%s1 + $0x4] sm:$0xf]
  %v28 = vld [vmem:[%s1 + $0x8] sm:$0xf]
  %v29 = vld [vmem:[%s1 + $0xc] sm:$0xf]
  %v30 = vld [vmem:[%s1 + $0x10] sm:$0xf]
  %v31 = vld [vmem:[%s1 + $0x14] sm:$0xf]
  %v32 = vld [vmem:[%s1 + $0x18] sm:$0xf]
  %v33 = vld [vmem:[%s1 + $0x1c] sm:$0xf]
  %v34 = vld [vmem:[%s1 + $0x20] sm:$0xf]
  %v35 = vld [vmem:[%s1 + $0x24] sm:$0xf]
  %v36 = vld [vmem:[%s1 + $0x28] sm:$0xf]
  %v37 = vld [vmem:[%s1 + $0x2c] sm:$0xf]
  %v38 = vld [vmem:[%s1 + $0x30] sm:$0xf]
  %v39 = vld [vmem:[%s1 + $0x34] sm:$0xf]
  %v40 = vld [vmem:[%s1 + $0x38] sm:$0xf]
  %v41 = vld [vmem:[%s1 + $0x3c] sm:$0xf]
  %v42 = vld [vmem:[%s1 + $0x40] sm:$0xf]
  %v43 = vld [vmem:[%s1 + $0x44] sm:$0xf]
  %v44 = vld [vmem:[%s1 + $0x48] sm:$0xf]
  %v45 = vld [vmem:[%s1 + $0x4c] sm:$0xf]
  %v46 = vld [vmem:[%s1 + $0x50] sm:$0xf]
  %v47 = vld [vmem:[%s1 + $0x54] sm:$0xf]
  %v48 = vld [vmem:[%s1 + $0x58] sm:$0xf]
  %v49 = vld [vmem:[%s1 + $0x5c] sm:$0xf]
  %v50 = vld [vmem:[%s1 + $0x60] sm:$0xf]
  %v51 = vld [vmem:[%s1 + $0x64] sm:$0xf]
  %v52 = vld [vmem:[%s1 + $0x68] sm:$0xf]
  %v53 = vld [vmem:[%s1 + $0x6c] sm:$0xf]
  %v54 = vld [vmem:[%s1 + $0x70] sm:$0xf]
  %v55 = vld [vmem:[%s1 + $0x74] sm:$0xf]
  %v56 = vld [vmem:[%s1 + $0x78] sm:$0xf]
  %v57 = vld [vmem:[%s1 + $0x7c] sm:$0xf]
  %v58 = vld [vmem:[%s1 + $0x80] sm:$0xf]
  %v59 = vld [vmem:[%s1 + $0x84] sm:$0xf]
  %v60 = vld [vmem:[%s1 + $0x88] sm:$0xf]
  %v61 = vld [vmem:[%s1 + $0x8c] sm:$0xf]
  %v70 = vunpack.c.l.b16 %v18
  %v71 = vunpack.c.h.b16 %v18
  %v72 = vunpack.c.l.b16 %v19
  %v73 = vunpack.c.l.b16 %v20
  %v74 = vunpack.c.h.b16 %v20
  %v75 = vunpack.c.l.b16 %v21
  %v76 = vunpack.c.l.b16 %v22
  %v77 = vunpack.c.h.b16 %v22
  %v78 = vunpack.c.l.b16 %v23
  %v79 = vunpack.c.l.b16 %v24
  %v80 = vunpack.c.h.b16 %v24
  %v81 = vunpack.c.l.b16 %v25
  %v82 = vpack.c.b16 %v73, %v70
  %v83 = vpack.c.b16 %v74, %v71
  %v84 = vpack.c.b16 %v75, %v72
  %v85 = vpack.c.b16 %v79, %v76
  %v86 = vpack.c.b16 %v80, %v77
  %v87 = vpack.c.b16 %v81, %v78
  %v128 = vunpack.c.l.b16 %v26
  %v129 = vunpack.c.l.b16 %v27
  %v130 = vunpack.c.l.b16 %v28
  %v131 = vunpack.c.l.b16 %v29
  %v132 = vunpack.c.l.b16 %v30
  %v133 = vunpack.c.l.b16 %v31
  %v134 = vunpack.c.l.b16 %v32
  %v135 = vunpack.c.l.b16 %v33
  %v136 = vunpack.c.l.b16 %v34
  %v137 = vunpack.c.l.b16 %v35
  %v138 = vunpack.c.l.b16 %v36
  %v139 = vunpack.c.l.b16 %v37
  %v140 = vunpack.c.l.b16 %v38
  %v141 = vunpack.c.l.b16 %v39
  %v142 = vunpack.c.l.b16 %v40
  %v143 = vunpack.c.l.b16 %v41
  %v144 = vunpack.c.l.b16 %v42
  %v145 = vunpack.c.l.b16 %v43
  %v146 = vunpack.c.l.b16 %v44
  %v147 = vunpack.c.l.b16 %v45
  %v148 = vunpack.c.l.b16 %v46
  %v149 = vunpack.c.l.b16 %v47
  %v150 = vunpack.c.l.b16 %v48
  %v151 = vunpack.c.l.b16 %v49
  %v152 = vunpack.c.l.b16 %v50
  %v153 = vunpack.c.l.b16 %v51
  %v154 = vunpack.c.l.b16 %v52
  %v155 = vunpack.c.l.b16 %v53
  %v156 = vunpack.c.l.b16 %v54
  %v157 = vunpack.c.l.b16 %v55
  %v158 = vunpack.c.l.b16 %v56
  %v159 = vunpack.c.l.b16 %v57
  %v160 = vunpack.c.l.b16 %v58
  %v161 = vunpack.c.l.b16 %v59
  %v162 = vunpack.c.l.b16 %v60
  %v163 = vunpack.c.l.b16 %v61
  %v164 = vpack.c.b16 %v129, %v128
  %v165 = vpack.c.b16 %v131, %v130
  %v166 = vpack.c.b16 %v133, %v132
  %v167 = vpack.c.b16 %v135, %v134
  %v168 = vpack.c.b16 %v137, %v136
  %v169 = vpack.c.b16 %v139, %v138
  %v170 = vpack.c.b16 %v141, %v140
  %v171 = vpack.c.b16 %v143, %v142
  %v172 = vpack.c.b16 %v145, %v144
  %v173 = vpack.c.b16 %v147, %v146
  %v174 = vpack.c.b16 %v149, %v148
  %v175 = vpack.c.b16 %v151, %v150
  %v176 = vpack.c.b16 %v153, %v152
  %v177 = vpack.c.b16 %v155, %v154
  %v178 = vpack.c.b16 %v157, %v156
  %v179 = vpack.c.b16 %v159, %v158
  %v180 = vpack.c.b16 %v161, %v160
  %v181 = vpack.c.b16 %v163, %v162
  %vm200 = vcmask 261120
  %v202 = vsel %vm200, %v84, 0
  %v205 = vsel %vm200, %v87, 0
  %207 = vmatprep.subr.bf16.mxu0 0
  %208 = vmatpush1.bf16.msra.mxu0 %v171
  %209 = vmatprep.subr.bf16.mxu0 0
  %210 = vmatpush1.bf16.msra.mxu0 %v170
  %211 = vmatprep.subr.bf16.mxu0 0
  %212 = vmatpush1.bf16.msra.mxu0 %v169
  %213 = vmatprep.subr.bf16.mxu0 0
  %214 = vmatpush1.bf16.msra.mxu0 %v168
  %215 = vmatprep.subr.bf16.mxu0 0
  %216 = vmatpush1.bf16.msra.mxu0 %v167
  %217 = vmatprep.subr.bf16.mxu0 0
  %218 = vmatpush1.bf16.msra.mxu0 %v166
  %219 = vmatprep.subr.bf16.mxu0 0
  %220 = vmatpush1.bf16.msra.mxu0 %v165
  %221 = vmatprep.subr.bf16.mxu0 0
  %222 = vmatpush1.bf16.msra.mxu0 %v164
  %223 = vmatprep.subr.bf16.mxu0 0
  %224 = vmatpush2.bf16.msra.mxu0 %v179
  %225 = vmatprep.subr.bf16.mxu0 0
  %226 = vmatpush2.bf16.msra.mxu0 %v178
  %227 = vmatprep.subr.bf16.mxu0 0
  %228 = vmatpush2.bf16.msra.mxu0 %v177
  %229 = vmatprep.subr.bf16.mxu0 0
  %230 = vmatpush2.bf16.msra.mxu0 %v176
  %231 = vmatprep.subr.bf16.mxu0 0
  %232 = vmatpush2.bf16.msra.mxu0 %v175
  %233 = vmatprep.subr.bf16.mxu0 0
  %234 = vmatpush2.bf16.msra.mxu0 %v174
  %235 = vmatprep.subr.bf16.mxu0 0
  %236 = vmatpush2.bf16.msra.mxu0 %v173
  %237 = vmatprep.subr.bf16.mxu0 0
  %238 = vmatpush2.bf16.msra.mxu0 %v172
  %239 = vmatprep.mubr.bf16.mxu0 %v83
  %240 = vmatmul.mubr.bf16.gmra.mxu0 %v82
  %v241 = vpop.f32.mrf.mxu0
  %v242 = vadd.f32 0.0, %v241
  %v243 = vpop.f32.mrf.mxu0
  %v244 = vpop.f32.mrf.mxu0
  %v245 = vadd.f32 0.0, %v244
  %v246 = vpop.f32.mrf.mxu0
  %247 = vmatprep.mubr.bf16.mxu0 %v86
  %248 = vmatmul.mubr.bf16.gmra.mxu0 %v85
  %v249 = vpop.f32.mrf.mxu0
  %v250 = vadd.f32 0.0, %v249
  %v251 = vpop.f32.mrf.mxu0
  %v252 = vpop.f32.mrf.mxu0
  %v253 = vadd.f32 0.0, %v252
  %v254 = vpop.f32.mrf.mxu0
  %255 = vdwg.mxu0
  %256 = vmatprep.subr.bf16.mxu0 0
  %257 = vmatpush1.bf16.msra.mxu0 0
  %258 = vmatprep.subr.bf16.mxu0 0
  %259 = vmatpush1.bf16.msra.mxu0 0
  %260 = vmatprep.subr.bf16.mxu0 0
  %261 = vmatpush1.bf16.msra.mxu0 0
  %262 = vmatprep.subr.bf16.mxu0 0
  %263 = vmatpush1.bf16.msra.mxu0 0
  %264 = vmatprep.subr.bf16.mxu0 0
  %265 = vmatpush1.bf16.msra.mxu0 0
  %266 = vmatprep.subr.bf16.mxu0 0
  %267 = vmatpush1.bf16.msra.mxu0 0
  %268 = vmatprep.subr.bf16.mxu0 0
  %269 = vmatpush1.bf16.msra.mxu0 %v181
  %270 = vmatprep.subr.bf16.mxu0 0
  %271 = vmatpush1.bf16.msra.mxu0 %v180
  %272 = vmatprep.subr.bf16.mxu0 0
  %273 = vmatpush2.bf16.msra.mxu0 0
  %274 = vmatprep.subr.bf16.mxu0 0
  %275 = vmatpush2.bf16.msra.mxu0 0
  %276 = vmatprep.subr.bf16.mxu0 0
  %277 = vmatpush2.bf16.msra.mxu0 0
  %278 = vmatprep.subr.bf16.mxu0 0
  %279 = vmatpush2.bf16.msra.mxu0 0
  %280 = vmatprep.subr.bf16.mxu0 0
  %281 = vmatpush2.bf16.msra.mxu0 0
  %282 = vmatprep.subr.bf16.mxu0 0
  %283 = vmatpush2.bf16.msra.mxu0 0
  %284 = vmatprep.subr.bf16.mxu0 0
  %285 = vmatpush2.bf16.msra.mxu0 0
  %286 = vmatprep.subr.bf16.mxu0 0
  %287 = vmatpush2.bf16.msra.mxu0 0
  %288 = vmatprep.mubr.bf16.mxu0 0
  %289 = vmatmul.mubr.bf16.gmra.mxu0 %v202
  %v290 = vpop.f32.mrf.mxu0
  %v291 = vadd.f32 %v242, %v290
  %v292 = vpop.f32.mrf.mxu0
  %v293 = vpop.f32.mrf.mxu0
  %v294 = vadd.f32 %v245, %v293
  %v295 = vpop.f32.mrf.mxu0
  %296 = vmatprep.mubr.bf16.mxu0 0
  %297 = vmatmul.mubr.bf16.gmra.mxu0 %v205
  %v298 = vpop.f32.mrf.mxu0
  %v299 = vadd.f32 %v250, %v298
  %v300 = vpop.f32.mrf.mxu0
  %v301 = vpop.f32.mrf.mxu0
  %v302 = vadd.f32 %v253, %v301
  %v303 = vpop.f32.mrf.mxu0
  %304 = vdwg.mxu0
  %v305 = vld [vmem:[%s2] sm:$0x1]
  %v307 = vlaneseq
  %v308 = vshrl.u32 %v307, 7
  %v309 = vsub.s32 0, %v308
  %v310 = vrot.slane %v305, %v309
  %v312 = vmul.f32 %v291, %v310
  %v313 = vmul.f32 %v294, %v310
  %v314 = vmul.f32 %v299, %v310
  %v315 = vmul.f32 %v302, %v310
  %v316 = vld [vmem:[%s3] sm:$0x1]
  %v318 = vlaneseq
  %v319 = vshrl.u32 %v318, 7
  %v320 = vsub.s32 0, %v319
  %v321 = vrot.slane %v316, %v320
  %v323 = vadd.f32 %v312, %v321
  %v324 = vadd.f32 %v313, %v321
  %v325 = vadd.f32 %v314, %v321
  %v326 = vadd.f32 %v315, %v321
  %v327 = vmax.f32 %v323, 0.0
  %v328 = vmax.f32 %v324, 0.0
  %v329 = vmax.f32 %v325, 0.0
  %v330 = vmax.f32 %v326, 0.0
  %v331 = vpack.c.bf16 %v328, %v327
  %v332 = vpack.c.bf16 %v330, %v329
  %v335 = vunpack.c.l.b16 %v331
  %v336 = vunpack.c.h.b16 %v331
  %v337 = vunpack.c.l.b16 %v332
  %v338 = vunpack.c.h.b16 %v332
  %v339 = vpack.c.b16 %v335, %v335
  %v340 = vpack.c.b16 %v336, %v336
  %v341 = vpack.c.b16 %v337, %v337
  %v342 = vpack.c.b16 %v338, %v338
  %vm347 = vcmask 257024
  %348 = vst.msk [vmem:[%s4] sm:$0xf] %vm347, %v339
  %349 = vst.msk [vmem:[%s4 + $0x4] sm:$0xf] %vm347, %v340
  %350 = vst.msk [vmem:[%s4 + $0x8] sm:$0xf] %vm347, %v341
  %351 = vst.msk [vmem:[%s4 + $0xc] sm:$0xf] %vm347, %v342
  // Predicated region
  $region18: #{resnet18_grouped_forward.36} parent=0 // pred_check
    _
  $region19: #{resnet18_grouped_forward.36} parent=0 // pred_check_branch
    %353 = sbr.rel (0) target = $region21
  $region20: #{resnet18_grouped_forward.36} parent=0 // pred_region
    _
  $region21: #{resnet18_grouped_forward.36} parent=0 // pred_fallthru
    _
  // Predicated region
  $region22: #{resnet18_grouped_forward.36} parent=0 // pred_check
    _
  $region23: #{resnet18_grouped_forward.36} parent=0 // pred_check_branch
    %355 = sbr.rel (0) target = $region25
  $region24: #{resnet18_grouped_forward.36} parent=0 // pred_region
    _
  $region25: #{resnet18_grouped_forward.36} parent=0 // pred_fallthru
    _

// kernel: resnet18_grouped_forward.38
$region0: #{resnet18_grouped_forward.38}
  #allocation0 [shape = 'u32[]', space=smem, size = 0x4, offset = 0x4, fixed_abs, tag = 'smem constant byte address 0x4 - core index']
  #allocation1 [shape = 'u32[144,128]{1,0:T(1,128)}', space=vmem, size = 0x12000, scoped, tag = 'internal scratch']
  %s0 = inlined_call_operand.vmem [shape: bf16[8,288], index: 0, kind: input, shape index: {}]
  %s1 = inlined_call_operand.vmem [shape: bf16[288,64], index: 1, kind: input, shape index: {}]
  %s2 = inlined_call_operand.vmem [shape: f32[1,64], index: 2, kind: input, shape index: {}]
  %s3 = inlined_call_operand.vmem [shape: f32[1,64], index: 3, kind: input, shape index: {}]
  %s4 = inlined_call_operand.vmem [shape: bf16[8,64], index: 4, kind: output, shape index: {}]
  %s5 = sld [smem:[#allocation0]]
  $region26: #{resnet18_grouped_forward.38} parent=0
    _
  %s7 = ssub.s32 1, %s5
  %s8 = scalar_select 0, %s7, %s5
  // Predicated region
  $region2: #{resnet18_grouped_forward.38} parent=0 // pred_check
    _
  $region3: #{resnet18_grouped_forward.38} parent=0 // pred_check_branch
    %10 = sbr.rel (0) target = $region5
  $region4: #{resnet18_grouped_forward.38} parent=0 // pred_region
    _
  $region5: #{resnet18_grouped_forward.38} parent=0 // pred_fallthru
    _
  // Predicated region
  $region6: #{resnet18_grouped_forward.38} parent=0 // pred_check
    _
  $region7: #{resnet18_grouped_forward.38} parent=0 // pred_check_branch
    %12 = sbr.rel (0) target = $region9
  $region8: #{resnet18_grouped_forward.38} parent=0 // pred_region
    _
  $region9: #{resnet18_grouped_forward.38} parent=0 // pred_fallthru
    _
  // Predicated region
  $region10: #{resnet18_grouped_forward.38} parent=0 // pred_check
    _
  $region11: #{resnet18_grouped_forward.38} parent=0 // pred_check_branch
    %14 = sbr.rel (0) target = $region13
  $region12: #{resnet18_grouped_forward.38} parent=0 // pred_region
    _
  $region13: #{resnet18_grouped_forward.38} parent=0 // pred_fallthru
    _
  // Predicated region
  $region14: #{resnet18_grouped_forward.38} parent=0 // pred_check
    _
  $region15: #{resnet18_grouped_forward.38} parent=0 // pred_check_branch
    %16 = sbr.rel (0) target = $region17
  $region16: #{resnet18_grouped_forward.38} parent=0 // pred_region
    _
  $region17: #{resnet18_grouped_forward.38} parent=0 // pred_fallthru
    _
  %v18 = vld [vmem:[%s0] sm:$0xff]
  %v19 = vld [vmem:[%s0 + $0x8] sm:$0xf]
  %v20 = vld [vmem:[%s1] sm:$0xf]
  %v21 = vld [vmem:[%s1 + $0x4] sm:$0xf]
  %v22 = vld [vmem:[%s1 + $0x8] sm:$0xf]
  %v23 = vld [vmem:[%s1 + $0xc] sm:$0xf]
  %v24 = vld [vmem:[%s1 + $0x10] sm:$0xf]
  %v25 = vld [vmem:[%s1 + $0x14] sm:$0xf]
  %v26 = vld [vmem:[%s1 + $0x18] sm:$0xf]
  %v27 = vld [vmem:[%s1 + $0x1c] sm:$0xf]
  %v28 = vld [vmem:[%s1 + $0x20] sm:$0xf]
  %v29 = vld [vmem:[%s1 + $0x24] sm:$0xf]
  %v30 = vld [vmem:[%s1 + $0x28] sm:$0xf]
  %v31 = vld [vmem:[%s1 + $0x2c] sm:$0xf]
  %v32 = vld [vmem:[%s1 + $0x30] sm:$0xf]
  %v33 = vld [vmem:[%s1 + $0x34] sm:$0xf]
  %v34 = vld [vmem:[%s1 + $0x38] sm:$0xf]
  %v35 = vld [vmem:[%s1 + $0x3c] sm:$0xf]
  %v36 = vld [vmem:[%s1 + $0x40] sm:$0xf]
  %v37 = vld [vmem:[%s1 + $0x44] sm:$0xf]
  %v38 = vld [vmem:[%s1 + $0x48] sm:$0xf]
  %v39 = vld [vmem:[%s1 + $0x4c] sm:$0xf]
  %v40 = vld [vmem:[%s1 + $0x50] sm:$0xf]
  %v41 = vld [vmem:[%s1 + $0x54] sm:$0xf]
  %v42 = vld [vmem:[%s1 + $0x58] sm:$0xf]
  %v43 = vld [vmem:[%s1 + $0x5c] sm:$0xf]
  %v44 = vld [vmem:[%s1 + $0x60] sm:$0xf]
  %v45 = vld [vmem:[%s1 + $0x64] sm:$0xf]
  %v46 = vld [vmem:[%s1 + $0x68] sm:$0xf]
  %v47 = vld [vmem:[%s1 + $0x6c] sm:$0xf]
  %v48 = vld [vmem:[%s1 + $0x70] sm:$0xf]
  %v49 = vld [vmem:[%s1 + $0x74] sm:$0xf]
  %v50 = vld [vmem:[%s1 + $0x78] sm:$0xf]
  %v51 = vld [vmem:[%s1 + $0x7c] sm:$0xf]
  %v52 = vld [vmem:[%s1 + $0x80] sm:$0xf]
  %v53 = vld [vmem:[%s1 + $0x84] sm:$0xf]
  %v54 = vld [vmem:[%s1 + $0x88] sm:$0xf]
  %v55 = vld [vmem:[%s1 + $0x8c] sm:$0xf]
  %v58 = vunpack.c.l.b16 %v18
  %v59 = vunpack.c.h.b16 %v18
  %v60 = vunpack.c.l.b16 %v19
  %v61 = vpack.c.b16 %v58, %v58
  %v62 = vpack.c.b16 %v59, %v59
  %v63 = vpack.c.b16 %v60, %v60
  %v102 = vunpack.c.l.b16 %v20
  %v103 = vunpack.c.l.b16 %v21
  %v104 = vunpack.c.l.b16 %v22
  %v105 = vunpack.c.l.b16 %v23
  %v106 = vunpack.c.l.b16 %v24
  %v107 = vunpack.c.l.b16 %v25
  %v108 = vunpack.c.l.b16 %v26
  %v109 = vunpack.c.l.b16 %v27
  %v110 = vunpack.c.l.b16 %v28
  %v111 = vunpack.c.l.b16 %v29
  %v112 = vunpack.c.l.b16 %v30
  %v113 = vunpack.c.l.b16 %v31
  %v114 = vunpack.c.l.b16 %v32
  %v115 = vunpack.c.l.b16 %v33
  %v116 = vunpack.c.l.b16 %v34
  %v117 = vunpack.c.l.b16 %v35
  %v118 = vunpack.c.l.b16 %v36
  %v119 = vunpack.c.l.b16 %v37
  %v120 = vunpack.c.l.b16 %v38
  %v121 = vunpack.c.l.b16 %v39
  %v122 = vunpack.c.l.b16 %v40
  %v123 = vunpack.c.l.b16 %v41
  %v124 = vunpack.c.l.b16 %v42
  %v125 = vunpack.c.l.b16 %v43
  %v126 = vunpack.c.l.b16 %v44
  %v127 = vunpack.c.l.b16 %v45
  %v128 = vunpack.c.l.b16 %v46
  %v129 = vunpack.c.l.b16 %v47
  %v130 = vunpack.c.l.b16 %v48
  %v131 = vunpack.c.l.b16 %v49
  %v132 = vunpack.c.l.b16 %v50
  %v133 = vunpack.c.l.b16 %v51
  %v134 = vunpack.c.l.b16 %v52
  %v135 = vunpack.c.l.b16 %v53
  %v136 = vunpack.c.l.b16 %v54
  %v137 = vunpack.c.l.b16 %v55
  %v138 = vpack.c.b16 %v103, %v102
  %v139 = vpack.c.b16 %v105, %v104
  %v140 = vpack.c.b16 %v107, %v106
  %v141 = vpack.c.b16 %v109, %v108
  %v142 = vpack.c.b16 %v111, %v110
  %v143 = vpack.c.b16 %v113, %v112
  %v144 = vpack.c.b16 %v115, %v114
  %v145 = vpack.c.b16 %v117, %v116
  %v146 = vpack.c.b16 %v119, %v118
  %v147 = vpack.c.b16 %v121, %v120
  %v148 = vpack.c.b16 %v123, %v122
  %v149 = vpack.c.b16 %v125, %v124
  %v150 = vpack.c.b16 %v127, %v126
  %v151 = vpack.c.b16 %v129, %v128
  %v152 = vpack.c.b16 %v131, %v130
  %v153 = vpack.c.b16 %v133, %v132
  %v154 = vpack.c.b16 %v135, %v134
  %v155 = vpack.c.b16 %v137, %v136
  %vm174 = vcmask 261120
  %v176 = vsel %vm174, %v63, 0
  %178 = vmatprep.subr.bf16.mxu0 0
  %179 = vmatpush1.bf16.msra.mxu0 %v145
  %180 = vmatprep.subr.bf16.mxu0 0
  %181 = vmatpush1.bf16.msra.mxu0 %v144
  %182 = vmatprep.subr.bf16.mxu0 0
  %183 = vmatpush1.bf16.msra.mxu0 %v143
  %184 = vmatprep.subr.bf16.mxu0 0
  %185 = vmatpush1.bf16.msra.mxu0 %v142
  %186 = vmatprep.subr.bf16.mxu0 0
  %187 = vmatpush1.bf16.msra.mxu0 %v141
  %188 = vmatprep.subr.bf16.mxu0 0
  %189 = vmatpush1.bf16.msra.mxu0 %v140
  %190 = vmatprep.subr.bf16.mxu0 0
  %191 = vmatpush1.bf16.msra.mxu0 %v139
  %192 = vmatprep.subr.bf16.mxu0 0
  %193 = vmatpush1.bf16.msra.mxu0 %v138
  %194 = vmatprep.subr.bf16.mxu0 0
  %195 = vmatpush2.bf16.msra.mxu0 %v153
  %196 = vmatprep.subr.bf16.mxu0 0
  %197 = vmatpush2.bf16.msra.mxu0 %v152
  %198 = vmatprep.subr.bf16.mxu0 0
  %199 = vmatpush2.bf16.msra.mxu0 %v151
  %200 = vmatprep.subr.bf16.mxu0 0
  %201 = vmatpush2.bf16.msra.mxu0 %v150
  %202 = vmatprep.subr.bf16.mxu0 0
  %203 = vmatpush2.bf16.msra.mxu0 %v149
  %204 = vmatprep.subr.bf16.mxu0 0
  %205 = vmatpush2.bf16.msra.mxu0 %v148
  %206 = vmatprep.subr.bf16.mxu0 0
  %207 = vmatpush2.bf16.msra.mxu0 %v147
  %208 = vmatprep.subr.bf16.mxu0 0
  %209 = vmatpush2.bf16.msra.mxu0 %v146
  %210 = vmatprep.mubr.bf16.mxu0 %v62
  %211 = vmatmul.mubr.bf16.gmra.mxu0 %v61
  %v212 = vpop.f32.mrf.mxu0
  %v213 = vadd.f32 0.0, %v212
  %v214 = vpop.f32.mrf.mxu0
  %v215 = vpop.f32.mrf.mxu0
  %v216 = vpop.f32.mrf.mxu0
  %217 = vdwg.mxu0
  %218 = vmatprep.subr.bf16.mxu0 0
  %219 = vmatpush1.bf16.msra.mxu0 0
  %220 = vmatprep.subr.bf16.mxu0 0
  %221 = vmatpush1.bf16.msra.mxu0 0
  %222 = vmatprep.subr.bf16.mxu0 0
  %223 = vmatpush1.bf16.msra.mxu0 0
  %224 = vmatprep.subr.bf16.mxu0 0
  %225 = vmatpush1.bf16.msra.mxu0 0
  %226 = vmatprep.subr.bf16.mxu0 0
  %227 = vmatpush1.bf16.msra.mxu0 0
  %228 = vmatprep.subr.bf16.mxu0 0
  %229 = vmatpush1.bf16.msra.mxu0 0
  %230 = vmatprep.subr.bf16.mxu0 0
  %231 = vmatpush1.bf16.msra.mxu0 %v155
  %232 = vmatprep.subr.bf16.mxu0 0
  %233 = vmatpush1.bf16.msra.mxu0 %v154
  %234 = vmatprep.subr.bf16.mxu0 0
  %235 = vmatpush2.bf16.msra.mxu0 0
  %236 = vmatprep.subr.bf16.mxu0 0
  %237 = vmatpush2.bf16.msra.mxu0 0
  %238 = vmatprep.subr.bf16.mxu0 0
  %239 = vmatpush2.bf16.msra.mxu0 0
  %240 = vmatprep.subr.bf16.mxu0 0
  %241 = vmatpush2.bf16.msra.mxu0 0
  %242 = vmatprep.subr.bf16.mxu0 0
  %243 = vmatpush2.bf16.msra.mxu0 0
  %244 = vmatprep.subr.bf16.mxu0 0
  %245 = vmatpush2.bf16.msra.mxu0 0
  %246 = vmatprep.subr.bf16.mxu0 0
  %247 = vmatpush2.bf16.msra.mxu0 0
  %248 = vmatprep.subr.bf16.mxu0 0
  %249 = vmatpush2.bf16.msra.mxu0 0
  %250 = vmatprep.mubr.bf16.mxu0 0
  %251 = vmatmul.mubr.bf16.gmra.mxu0 %v176
  %v252 = vpop.f32.mrf.mxu0
  %v253 = vadd.f32 %v213, %v252
  %v254 = vpop.f32.mrf.mxu0
  %v255 = vpop.f32.mrf.mxu0
  %v256 = vpop.f32.mrf.mxu0
  %257 = vdwg.mxu0
  %v258 = vld [vmem:[%s2] sm:$0x1]
  %v260 = vlaneseq
  %v261 = vshrl.u32 %v260, 7
  %v262 = vsub.s32 0, %v261
  %v263 = vrot.slane %v258, %v262
  %v265 = vmul.f32 %v253, %v263
  %v266 = vld [vmem:[%s3] sm:$0x1]
  %v268 = vlaneseq
  %v269 = vshrl.u32 %v268, 7
  %v270 = vsub.s32 0, %v269
  %v271 = vrot.slane %v266, %v270
  %v273 = vadd.f32 %v265, %v271
  %v274 = vmax.f32 %v273, 0.0
  %v275 = vpack.c.bf16 %v274, %v274
  %vm276 = vcmask 519168
  %277 = vst.msk [vmem:[%s4] sm:$0xf] %vm276, %v275
  // Predicated region
  $region18: #{resnet18_grouped_forward.38} parent=0 // pred_check
    _
  $region19: #{resnet18_grouped_forward.38} parent=0 // pred_check_branch
    %279 = sbr.rel (0) target = $region21
  $region20: #{resnet18_grouped_forward.38} parent=0 // pred_region
    _
  $region21: #{resnet18_grouped_forward.38} parent=0 // pred_fallthru
    _
  // Predicated region
  $region22: #{resnet18_grouped_forward.38} parent=0 // pred_check
    _
  $region23: #{resnet18_grouped_forward.38} parent=0 // pred_check_branch
    %281 = sbr.rel (0) target = $region25
  $region24: #{resnet18_grouped_forward.38} parent=0 // pred_region
    _
  $region25: #{resnet18_grouped_forward.38} parent=0 // pred_fallthru
    _

// kernel: resnet18_grouped_forward.39
$region0: #{resnet18_grouped_forward.39}
  #allocation0 [shape = 'u32[]', space=smem, size = 0x4, offset = 0x4, fixed_abs, tag = 'smem constant byte address 0x4 - core index']
  #allocation1 [shape = 'u32[144,128]{1,0:T(1,128)}', space=vmem, size = 0x12000, scoped, tag = 'internal scratch']
  %s0 = inlined_call_operand.vmem [shape: bf16[8,32], index: 0, kind: input, shape index: {}]
  %s1 = inlined_call_operand.vmem [shape: bf16[32,64], index: 1, kind: input, shape index: {}]
  %s2 = inlined_call_operand.vmem [shape: f32[1,64], index: 2, kind: input, shape index: {}]
  %s3 = inlined_call_operand.vmem [shape: f32[1,64], index: 3, kind: input, shape index: {}]
  %s4 = inlined_call_operand.vmem [shape: bf16[8,64], index: 4, kind: output, shape index: {}]
  %s5 = sld [smem:[#allocation0]]
  $region26: #{resnet18_grouped_forward.39} parent=0
    _
  %s7 = ssub.s32 1, %s5
  %s8 = scalar_select 0, %s7, %s5
  // Predicated region
  $region2: #{resnet18_grouped_forward.39} parent=0 // pred_check
    _
  $region3: #{resnet18_grouped_forward.39} parent=0 // pred_check_branch
    %10 = sbr.rel (0) target = $region5
  $region4: #{resnet18_grouped_forward.39} parent=0 // pred_region
    _
  $region5: #{resnet18_grouped_forward.39} parent=0 // pred_fallthru
    _
  // Predicated region
  $region6: #{resnet18_grouped_forward.39} parent=0 // pred_check
    _
  $region7: #{resnet18_grouped_forward.39} parent=0 // pred_check_branch
    %12 = sbr.rel (0) target = $region9
  $region8: #{resnet18_grouped_forward.39} parent=0 // pred_region
    _
  $region9: #{resnet18_grouped_forward.39} parent=0 // pred_fallthru
    _
  // Predicated region
  $region10: #{resnet18_grouped_forward.39} parent=0 // pred_check
    _
  $region11: #{resnet18_grouped_forward.39} parent=0 // pred_check_branch
    %14 = sbr.rel (0) target = $region13
  $region12: #{resnet18_grouped_forward.39} parent=0 // pred_region
    _
  $region13: #{resnet18_grouped_forward.39} parent=0 // pred_fallthru
    _
  // Predicated region
  $region14: #{resnet18_grouped_forward.39} parent=0 // pred_check
    _
  $region15: #{resnet18_grouped_forward.39} parent=0 // pred_check_branch
    %16 = sbr.rel (0) target = $region17
  $region16: #{resnet18_grouped_forward.39} parent=0 // pred_region
    _
  $region17: #{resnet18_grouped_forward.39} parent=0 // pred_fallthru
    _
  %v18 = vld [vmem:[%s0] sm:$0xf]
  %v19 = vld [vmem:[%s1] sm:$0xf]
  %v20 = vld [vmem:[%s1 + $0x4] sm:$0xf]
  %v21 = vld [vmem:[%s1 + $0x8] sm:$0xf]
  %v22 = vld [vmem:[%s1 + $0xc] sm:$0xf]
  %v27 = vunpack.c.l.b16 %v19
  %v28 = vunpack.c.l.b16 %v20
  %v29 = vunpack.c.l.b16 %v21
  %v30 = vunpack.c.l.b16 %v22
  %v31 = vpack.c.b16 %v28, %v27
  %v32 = vpack.c.b16 %v30, %v29
  %vm35 = vcmask 261120
  %v37 = vsel %vm35, %v18, 0
  %39 = vmatprep.subr.bf16.mxu0 0
  %40 = vmatpush1.bf16.msra.mxu0 0
  %41 = vmatprep.subr.bf16.mxu0 0
  %42 = vmatpush1.bf16.msra.mxu0 0
  %43 = vmatprep.subr.bf16.mxu0 0
  %44 = vmatpush1.bf16.msra.mxu0 0
  %45 = vmatprep.subr.bf16.mxu0 0
  %46 = vmatpush1.bf16.msra.mxu0 0
  %47 = vmatprep.subr.bf16.mxu0 0
  %48 = vmatpush1.bf16.msra.mxu0 0
  %49 = vmatprep.subr.bf16.mxu0 0
  %50 = vmatpush1.bf16.msra.mxu0 0
  %51 = vmatprep.subr.bf16.mxu0 0
  %52 = vmatpush1.bf16.msra.mxu0 %v32
  %53 = vmatprep.subr.bf16.mxu0 0
  %54 = vmatpush1.bf16.msra.mxu0 %v31
  %55 = vmatprep.subr.bf16.mxu0 0
  %56 = vmatpush2.bf16.msra.mxu0 0
  %57 = vmatprep.subr.bf16.mxu0 0
  %58 = vmatpush2.bf16.msra.mxu0 0
  %59 = vmatprep.subr.bf16.mxu0 0
  %60 = vmatpush2.bf16.msra.mxu0 0
  %61 = vmatprep.subr.bf16.mxu0 0
  %62 = vmatpush2.bf16.msra.mxu0 0
  %63 = vmatprep.subr.bf16.mxu0 0
  %64 = vmatpush2.bf16.msra.mxu0 0
  %65 = vmatprep.subr.bf16.mxu0 0
  %66 = vmatpush2.bf16.msra.mxu0 0
  %67 = vmatprep.subr.bf16.mxu0 0
  %68 = vmatpush2.bf16.msra.mxu0 0
  %69 = vmatprep.subr.bf16.mxu0 0
  %70 = vmatpush2.bf16.msra.mxu0 0
  %71 = vmatprep.mubr.bf16.mxu0 0
  %72 = vmatmul.mubr.bf16.gmra.mxu0 %v37
  %v73 = vpop.f32.mrf.mxu0
  %v74 = vadd.f32 0.0, %v73
  %v75 = vpop.f32.mrf.mxu0
  %v76 = vpop.f32.mrf.mxu0
  %v77 = vpop.f32.mrf.mxu0
  %78 = vdwg.mxu0
  %v79 = vld [vmem:[%s2] sm:$0x1]
  %v81 = vlaneseq
  %v82 = vshrl.u32 %v81, 7
  %v83 = vsub.s32 0, %v82
  %v84 = vrot.slane %v79, %v83
  %v86 = vmul.f32 %v74, %v84
  %v87 = vld [vmem:[%s3] sm:$0x1]
  %v89 = vlaneseq
  %v90 = vshrl.u32 %v89, 7
  %v91 = vsub.s32 0, %v90
  %v92 = vrot.slane %v87, %v91
  %v94 = vadd.f32 %v86, %v92
  %v95 = vpack.c.bf16 %v94, %v94
  %vm96 = vcmask 519168
  %97 = vst.msk [vmem:[%s4] sm:$0xf] %vm96, %v95
  // Predicated region
  $region18: #{resnet18_grouped_forward.39} parent=0 // pred_check
    _
  $region19: #{resnet18_grouped_forward.39} parent=0 // pred_check_branch
    %99 = sbr.rel (0) target = $region21
  $region20: #{resnet18_grouped_forward.39} parent=0 // pred_region
    _
  $region21: #{resnet18_grouped_forward.39} parent=0 // pred_fallthru
    _
  // Predicated region
  $region22: #{resnet18_grouped_forward.39} parent=0 // pred_check
    _
  $region23: #{resnet18_grouped_forward.39} parent=0 // pred_check_branch
    %101 = sbr.rel (0) target = $region25
  $region24: #{resnet18_grouped_forward.39} parent=0 // pred_region
    _
  $region25: #{resnet18_grouped_forward.39} parent=0 // pred_fallthru
    _

// kernel: resnet18_grouped_forward.40
$region0: #{resnet18_grouped_forward.40}
  #allocation0 [shape = 'u32[]', space=smem, size = 0x4, offset = 0x4, fixed_abs, tag = 'smem constant byte address 0x4 - core index']
  #allocation1 [shape = 'u32[144,128]{1,0:T(1,128)}', space=vmem, size = 0x12000, scoped, tag = 'internal scratch']
  %s0 = inlined_call_operand.vmem [shape: bf16[8,576], index: 0, kind: input, shape index: {}]
  %s1 = inlined_call_operand.vmem [shape: bf16[576,64], index: 1, kind: input, shape index: {}]
  %s2 = inlined_call_operand.vmem [shape: f32[1,64], index: 2, kind: input, shape index: {}]
  %s3 = inlined_call_operand.vmem [shape: f32[1,64], index: 3, kind: input, shape index: {}]
  %s4 = inlined_call_operand.vmem [shape: bf16[8,64], index: 4, kind: input, shape index: {}]
  %s5 = inlined_call_operand.vmem [shape: bf16[8,64], index: 5, kind: output, shape index: {}]
  %s6 = sld [smem:[#allocation0]]
  $region30: #{resnet18_grouped_forward.40} parent=0
    _
  %s8 = ssub.s32 1, %s6
  %s9 = scalar_select 0, %s8, %s6
  // Predicated region
  $region2: #{resnet18_grouped_forward.40} parent=0 // pred_check
    _
  $region3: #{resnet18_grouped_forward.40} parent=0 // pred_check_branch
    %11 = sbr.rel (0) target = $region5
  $region4: #{resnet18_grouped_forward.40} parent=0 // pred_region
    _
  $region5: #{resnet18_grouped_forward.40} parent=0 // pred_fallthru
    _
  // Predicated region
  $region6: #{resnet18_grouped_forward.40} parent=0 // pred_check
    _
  $region7: #{resnet18_grouped_forward.40} parent=0 // pred_check_branch
    %13 = sbr.rel (0) target = $region9
  $region8: #{resnet18_grouped_forward.40} parent=0 // pred_region
    _
  $region9: #{resnet18_grouped_forward.40} parent=0 // pred_fallthru
    _
  // Predicated region
  $region10: #{resnet18_grouped_forward.40} parent=0 // pred_check
    _
  $region11: #{resnet18_grouped_forward.40} parent=0 // pred_check_branch
    %15 = sbr.rel (0) target = $region13
  $region12: #{resnet18_grouped_forward.40} parent=0 // pred_region
    _
  $region13: #{resnet18_grouped_forward.40} parent=0 // pred_fallthru
    _
  // Predicated region
  $region14: #{resnet18_grouped_forward.40} parent=0 // pred_check
    _
  $region15: #{resnet18_grouped_forward.40} parent=0 // pred_check_branch
    %17 = sbr.rel (0) target = $region17
  $region16: #{resnet18_grouped_forward.40} parent=0 // pred_region
    _
  $region17: #{resnet18_grouped_forward.40} parent=0 // pred_fallthru
    _
  // Predicated region
  $region18: #{resnet18_grouped_forward.40} parent=0 // pred_check
    _
  $region19: #{resnet18_grouped_forward.40} parent=0 // pred_check_branch
    %19 = sbr.rel (0) target = $region21
  $region20: #{resnet18_grouped_forward.40} parent=0 // pred_region
    _
  $region21: #{resnet18_grouped_forward.40} parent=0 // pred_fallthru
    _
  %v21 = vld [vmem:[%s0] sm:$0xff]
  %v22 = vld [vmem:[%s0 + $0x8] sm:$0xff]
  %v23 = vld [vmem:[%s0 + $0x10] sm:$0xf]
  %v24 = vld [vmem:[%s1] sm:$0xf]
  %v25 = vld [vmem:[%s1 + $0x4] sm:$0xf]
  %v26 = vld [vmem:[%s1 + $0x8] sm:$0xf]
  %v27 = vld [vmem:[%s1 + $0xc] sm:$0xf]
  %v28 = vld [vmem:[%s1 + $0x10] sm:$0xf]
  %v29 = vld [vmem:[%s1 + $0x14] sm:$0xf]
  %v30 = vld [vmem:[%s1 + $0x18] sm:$0xf]
  %v31 = vld [vmem:[%s1 + $0x1c] sm:$0xf]
  %v32 = vld [vmem:[%s1 + $0x20] sm:$0xf]
  %v33 = vld [vmem:[%s1 + $0x24] sm:$0xf]
  %v34 = vld [vmem:[%s1 + $0x28] sm:$0xf]
  %v35 = vld [vmem:[%s1 + $0x2c] sm:$0xf]
  %v36 = vld [vmem:[%s1 + $0x30] sm:$0xf]
  %v37 = vld [vmem:[%s1 + $0x34] sm:$0xf]
  %v38 = vld [vmem:[%s1 + $0x38] sm:$0xf]
  %v39 = vld [vmem:[%s1 + $0x3c] sm:$0xf]
  %v40 = vld [vmem:[%s1 + $0x40] sm:$0xf]
  %v41 = vld [vmem:[%s1 + $0x44] sm:$0xf]
  %v42 = vld [vmem:[%s1 + $0x48] sm:$0xf]
  %v43 = vld [vmem:[%s1 + $0x4c] sm:$0xf]
  %v44 = vld [vmem:[%s1 + $0x50] sm:$0xf]
  %v45 = vld [vmem:[%s1 + $0x54] sm:$0xf]
  %v46 = vld [vmem:[%s1 + $0x58] sm:$0xf]
  %v47 = vld [vmem:[%s1 + $0x5c] sm:$0xf]
  %v48 = vld [vmem:[%s1 + $0x60] sm:$0xf]
  %v49 = vld [vmem:[%s1 + $0x64] sm:$0xf]
  %v50 = vld [vmem:[%s1 + $0x68] sm:$0xf]
  %v51 = vld [vmem:[%s1 + $0x6c] sm:$0xf]
  %v52 = vld [vmem:[%s1 + $0x70] sm:$0xf]
  %v53 = vld [vmem:[%s1 + $0x74] sm:$0xf]
  %v54 = vld [vmem:[%s1 + $0x78] sm:$0xf]
  %v55 = vld [vmem:[%s1 + $0x7c] sm:$0xf]
  %v56 = vld [vmem:[%s1 + $0x80] sm:$0xf]
  %v57 = vld [vmem:[%s1 + $0x84] sm:$0xf]
  %v58 = vld [vmem:[%s1 + $0x88] sm:$0xf]
  %v59 = vld [vmem:[%s1 + $0x8c] sm:$0xf]
  %v60 = vld [vmem:[%s1 + $0x90] sm:$0xf]
  %v61 = vld [vmem:[%s1 + $0x94] sm:$0xf]
  %v62 = vld [vmem:[%s1 + $0x98] sm:$0xf]
  %v63 = vld [vmem:[%s1 + $0x9c] sm:$0xf]
  %v64 = vld [vmem:[%s1 + $0xa0] sm:$0xf]
  %v65 = vld [vmem:[%s1 + $0xa4] sm:$0xf]
  %v66 = vld [vmem:[%s1 + $0xa8] sm:$0xf]
  %v67 = vld [vmem:[%s1 + $0xac] sm:$0xf]
  %v68 = vld [vmem:[%s1 + $0xb0] sm:$0xf]
  %v69 = vld [vmem:[%s1 + $0xb4] sm:$0xf]
  %v70 = vld [vmem:[%s1 + $0xb8] sm:$0xf]
  %v71 = vld [vmem:[%s1 + $0xbc] sm:$0xf]
  %v72 = vld [vmem:[%s1 + $0xc0] sm:$0xf]
  %v73 = vld [vmem:[%s1 + $0xc4] sm:$0xf]
  %v74 = vld [vmem:[%s1 + $0xc8] sm:$0xf]
  %v75 = vld [vmem:[%s1 + $0xcc] sm:$0xf]
  %v76 = vld [vmem:[%s1 + $0xd0] sm:$0xf]
  %v77 = vld [vmem:[%s1 + $0xd4] sm:$0xf]
  %v78 = vld [vmem:[%s1 + $0xd8] sm:$0xf]
  %v79 = vld [vmem:[%s1 + $0xdc] sm:$0xf]
  %v80 = vld [vmem:[%s1 + $0xe0] sm:$0xf]
  %v81 = vld [vmem:[%s1 + $0xe4] sm:$0xf]
  %v82 = vld [vmem:[%s1 + $0xe8] sm:$0xf]
  %v83 = vld [vmem:[%s1 + $0xec] sm:$0xf]
  %v84 = vld [vmem:[%s1 + $0xf0] sm:$0xf]
  %v85 = vld [vmem:[%s1 + $0xf4] sm:$0xf]
  %v86 = vld [vmem:[%s1 + $0xf8] sm:$0xf]
  %v87 = vld [vmem:[%s1 + $0xfc] sm:$0xf]
  %v88 = vld [vmem:[%s1 + $0x100] sm:$0xf]
  %v89 = vld [vmem:[%s1 + $0x104] sm:$0xf]
  %v90 = vld [vmem:[%s1 + $0x108] sm:$0xf]
  %v91 = vld [vmem:[%s1 + $0x10c] sm:$0xf]
  %v92 = vld [vmem:[%s1 + $0x110] sm:$0xf]
  %v93 = vld [vmem:[%s1 + $0x114] sm:$0xf]
  %v94 = vld [vmem:[%s1 + $0x118] sm:$0xf]
  %v95 = vld [vmem:[%s1 + $0x11c] sm:$0xf]
  %v99 = vunpack.c.l.b16 %v21
  %v100 = vunpack.c.h.b16 %v21
  %v101 = vunpack.c.l.b16 %v22
  %v102 = vunpack.c.h.b16 %v22
  %v103 = vunpack.c.l.b16 %v23
  %v104 = vpack.c.b16 %v99, %v99
  %v105 = vpack.c.b16 %v100, %v100
  %v106 = vpack.c.b16 %v101, %v101
  %v107 = vpack.c.b16 %v102, %v102
  %v108 = vpack.c.b16 %v103, %v103
  %v185 = vunpack.c.l.b16 %v24
  %v186 = vunpack.c.l.b16 %v25
  %v187 = vunpack.c.l.b16 %v26
  %v188 = vunpack.c.l.b16 %v27
  %v189 = vunpack.c.l.b16 %v28
  %v190 = vunpack.c.l.b16 %v29
  %v191 = vunpack.c.l.b16 %v30
  %v192 = vunpack.c.l.b16 %v31
  %v193 = vunpack.c.l.b16 %v32
  %v194 = vunpack.c.l.b16 %v33
  %v195 = vunpack.c.l.b16 %v34
  %v196 = vunpack.c.l.b16 %v35
  %v197 = vunpack.c.l.b16 %v36
  %v198 = vunpack.c.l.b16 %v37
  %v199 = vunpack.c.l.b16 %v38
  %v200 = vunpack.c.l.b16 %v39
  %v201 = vunpack.c.l.b16 %v40
  %v202 = vunpack.c.l.b16 %v41
  %v203 = vunpack.c.l.b16 %v42
  %v204 = vunpack.c.l.b16 %v43
  %v205 = vunpack.c.l.b16 %v44
  %v206 = vunpack.c.l.b16 %v45
  %v207 = vunpack.c.l.b16 %v46
  %v208 = vunpack.c.l.b16 %v47
  %v209 = vunpack.c.l.b16 %v48
  %v210 = vunpack.c.l.b16 %v49
  %v211 = vunpack.c.l.b16 %v50
  %v212 = vunpack.c.l.b16 %v51
  %v213 = vunpack.c.l.b16 %v52
  %v214 = vunpack.c.l.b16 %v53
  %v215 = vunpack.c.l.b16 %v54
  %v216 = vunpack.c.l.b16 %v55
  %v217 = vunpack.c.l.b16 %v56
  %v218 = vunpack.c.l.b16 %v57
  %v219 = vunpack.c.l.b16 %v58
  %v220 = vunpack.c.l.b16 %v59
  %v221 = vunpack.c.l.b16 %v60
  %v222 = vunpack.c.l.b16 %v61
  %v223 = vunpack.c.l.b16 %v62
  %v224 = vunpack.c.l.b16 %v63
  %v225 = vunpack.c.l.b16 %v64
  %v226 = vunpack.c.l.b16 %v65
  %v227 = vunpack.c.l.b16 %v66
  %v228 = vunpack.c.l.b16 %v67
  %v229 = vunpack.c.l.b16 %v68
  %v230 = vunpack.c.l.b16 %v69
  %v231 = vunpack.c.l.b16 %v70
  %v232 = vunpack.c.l.b16 %v71
  %v233 = vunpack.c.l.b16 %v72
  %v234 = vunpack.c.l.b16 %v73
  %v235 = vunpack.c.l.b16 %v74
  %v236 = vunpack.c.l.b16 %v75
  %v237 = vunpack.c.l.b16 %v76
  %v238 = vunpack.c.l.b16 %v77
  %v239 = vunpack.c.l.b16 %v78
  %v240 = vunpack.c.l.b16 %v79
  %v241 = vunpack.c.l.b16 %v80
  %v242 = vunpack.c.l.b16 %v81
  %v243 = vunpack.c.l.b16 %v82
  %v244 = vunpack.c.l.b16 %v83
  %v245 = vunpack.c.l.b16 %v84
  %v246 = vunpack.c.l.b16 %v85
  %v247 = vunpack.c.l.b16 %v86
  %v248 = vunpack.c.l.b16 %v87
  %v249 = vunpack.c.l.b16 %v88
  %v250 = vunpack.c.l.b16 %v89
  %v251 = vunpack.c.l.b16 %v90
  %v252 = vunpack.c.l.b16 %v91
  %v253 = vunpack.c.l.b16 %v92
  %v254 = vunpack.c.l.b16 %v93
  %v255 = vunpack.c.l.b16 %v94
  %v256 = vunpack.c.l.b16 %v95
  %v257 = vpack.c.b16 %v186, %v185
  %v258 = vpack.c.b16 %v188, %v187
  %v259 = vpack.c.b16 %v190, %v189
  %v260 = vpack.c.b16 %v192, %v191
  %v261 = vpack.c.b16 %v194, %v193
  %v262 = vpack.c.b16 %v196, %v195
  %v263 = vpack.c.b16 %v198, %v197
  %v264 = vpack.c.b16 %v200, %v199
  %v265 = vpack.c.b16 %v202, %v201
  %v266 = vpack.c.b16 %v204, %v203
  %v267 = vpack.c.b16 %v206, %v205
  %v268 = vpack.c.b16 %v208, %v207
  %v269 = vpack.c.b16 %v210, %v209
  %v270 = vpack.c.b16 %v212, %v211
  %v271 = vpack.c.b16 %v214, %v213
  %v272 = vpack.c.b16 %v216, %v215
  %v273 = vpack.c.b16 %v218, %v217
  %v274 = vpack.c.b16 %v220, %v219
  %v275 = vpack.c.b16 %v222, %v221
  %v276 = vpack.c.b16 %v224, %v223
  %v277 = vpack.c.b16 %v226, %v225
  %v278 = vpack.c.b16 %v228, %v227
  %v279 = vpack.c.b16 %v230, %v229
  %v280 = vpack.c.b16 %v232, %v231
  %v281 = vpack.c.b16 %v234, %v233
  %v282 = vpack.c.b16 %v236, %v235
  %v283 = vpack.c.b16 %v238, %v237
  %v284 = vpack.c.b16 %v240, %v239
  %v285 = vpack.c.b16 %v242, %v241
  %v286 = vpack.c.b16 %v244, %v243
  %v287 = vpack.c.b16 %v246, %v245
  %v288 = vpack.c.b16 %v248, %v247
  %v289 = vpack.c.b16 %v250, %v249
  %v290 = vpack.c.b16 %v252, %v251
  %v291 = vpack.c.b16 %v254, %v253
  %v292 = vpack.c.b16 %v256, %v255
  %vm329 = vcmask 523264
  %v331 = vsel %vm329, %v108, 0
  %333 = vmatprep.subr.bf16.mxu0 0
  %334 = vmatpush1.bf16.msra.mxu0 %v264
  %335 = vmatprep.subr.bf16.mxu0 0
  %336 = vmatpush1.bf16.msra.mxu0 %v263
  %337 = vmatprep.subr.bf16.mxu0 0
  %338 = vmatpush1.bf16.msra.mxu0 %v262
  %339 = vmatprep.subr.bf16.mxu0 0
  %340 = vmatpush1.bf16.msra.mxu0 %v261
  %341 = vmatprep.subr.bf16.mxu0 0
  %342 = vmatpush1.bf16.msra.mxu0 %v260
  %343 = vmatprep.subr.bf16.mxu0 0
  %344 = vmatpush1.bf16.msra.mxu0 %v259
  %345 = vmatprep.subr.bf16.mxu0 0
  %346 = vmatpush1.bf16.msra.mxu0 %v258
  %347 = vmatprep.subr.bf16.mxu0 0
  %348 = vmatpush1.bf16.msra.mxu0 %v257
  %349 = vmatprep.subr.bf16.mxu0 0
  %350 = vmatpush2.bf16.msra.mxu0 %v272
  %351 = vmatprep.subr.bf16.mxu0 0
  %352 = vmatpush2.bf16.msra.mxu0 %v271
  %353 = vmatprep.subr.bf16.mxu0 0
  %354 = vmatpush2.bf16.msra.mxu0 %v270
  %355 = vmatprep.subr.bf16.mxu0 0
  %356 = vmatpush2.bf16.msra.mxu0 %v269
  %357 = vmatprep.subr.bf16.mxu0 0
  %358 = vmatpush2.bf16.msra.mxu0 %v268
  %359 = vmatprep.subr.bf16.mxu0 0
  %360 = vmatpush2.bf16.msra.mxu0 %v267
  %361 = vmatprep.subr.bf16.mxu0 0
  %362 = vmatpush2.bf16.msra.mxu0 %v266
  %363 = vmatprep.subr.bf16.mxu0 0
  %364 = vmatpush2.bf16.msra.mxu0 %v265
  %365 = vmatprep.mubr.bf16.mxu0 %v105
  %366 = vmatmul.mubr.bf16.gmra.mxu0 %v104
  %v367 = vpop.f32.mrf.mxu0
  %v368 = vadd.f32 0.0, %v367
  %v369 = vpop.f32.mrf.mxu0
  %v370 = vpop.f32.mrf.mxu0
  %v371 = vpop.f32.mrf.mxu0
  %372 = vdwg.mxu0
  %373 = vmatprep.subr.bf16.mxu0 0
  %374 = vmatpush1.bf16.msra.mxu0 %v280
  %375 = vmatprep.subr.bf16.mxu0 0
  %376 = vmatpush1.bf16.msra.mxu0 %v279
  %377 = vmatprep.subr.bf16.mxu0 0
  %378 = vmatpush1.bf16.msra.mxu0 %v278
  %379 = vmatprep.subr.bf16.mxu0 0
  %380 = vmatpush1.bf16.msra.mxu0 %v277
  %381 = vmatprep.subr.bf16.mxu0 0
  %382 = vmatpush1.bf16.msra.mxu0 %v276
  %383 = vmatprep.subr.bf16.mxu0 0
  %384 = vmatpush1.bf16.msra.mxu0 %v275
  %385 = vmatprep.subr.bf16.mxu0 0
  %386 = vmatpush1.bf16.msra.mxu0 %v274
  %387 = vmatprep.subr.bf16.mxu0 0
  %388 = vmatpush1.bf16.msra.mxu0 %v273
  %389 = vmatprep.subr.bf16.mxu0 0
  %390 = vmatpush2.bf16.msra.mxu0 %v288
  %391 = vmatprep.subr.bf16.mxu0 0
  %392 = vmatpush2.bf16.msra.mxu0 %v287
  %393 = vmatprep.subr.bf16.mxu0 0
  %394 = vmatpush2.bf16.msra.mxu0 %v286
  %395 = vmatprep.subr.bf16.mxu0 0
  %396 = vmatpush2.bf16.msra.mxu0 %v285
  %397 = vmatprep.subr.bf16.mxu0 0
  %398 = vmatpush2.bf16.msra.mxu0 %v284
  %399 = vmatprep.subr.bf16.mxu0 0
  %400 = vmatpush2.bf16.msra.mxu0 %v283
  %401 = vmatprep.subr.bf16.mxu0 0
  %402 = vmatpush2.bf16.msra.mxu0 %v282
  %403 = vmatprep.subr.bf16.mxu0 0
  %404 = vmatpush2.bf16.msra.mxu0 %v281
  %405 = vmatprep.mubr.bf16.mxu0 %v107
  %406 = vmatmul.mubr.bf16.gmra.mxu0 %v106
  %v407 = vpop.f32.mrf.mxu0
  %v408 = vadd.f32 %v368, %v407
  %v409 = vpop.f32.mrf.mxu0
  %v410 = vpop.f32.mrf.mxu0
  %v411 = vpop.f32.mrf.mxu0
  %412 = vdwg.mxu0
  %413 = vmatprep.subr.bf16.mxu0 0
  %414 = vmatpush1.bf16.msra.mxu0 0
  %415 = vmatprep.subr.bf16.mxu0 0
  %416 = vmatpush1.bf16.msra.mxu0 0
  %417 = vmatprep.subr.bf16.mxu0 0
  %418 = vmatpush1.bf16.msra.mxu0 0
  %419 = vmatprep.subr.bf16.mxu0 0
  %420 = vmatpush1.bf16.msra.mxu0 0
  %421 = vmatprep.subr.bf16.mxu0 0
  %422 = vmatpush1.bf16.msra.mxu0 %v292
  %423 = vmatprep.subr.bf16.mxu0 0
  %424 = vmatpush1.bf16.msra.mxu0 %v291
  %425 = vmatprep.subr.bf16.mxu0 0
  %426 = vmatpush1.bf16.msra.mxu0 %v290
  %427 = vmatprep.subr.bf16.mxu0 0
  %428 = vmatpush1.bf16.msra.mxu0 %v289
  %429 = vmatprep.subr.bf16.mxu0 0
  %430 = vmatpush2.bf16.msra.mxu0 0
  %431 = vmatprep.subr.bf16.mxu0 0
  %432 = vmatpush2.bf16.msra.mxu0 0
  %433 = vmatprep.subr.bf16.mxu0 0
  %434 = vmatpush2.bf16.msra.mxu0 0
  %435 = vmatprep.subr.bf16.mxu0 0
  %436 = vmatpush2.bf16.msra.mxu0 0
  %437 = vmatprep.subr.bf16.mxu0 0
  %438 = vmatpush2.bf16.msra.mxu0 0
  %439 = vmatprep.subr.bf16.mxu0 0
  %440 = vmatpush2.bf16.msra.mxu0 0
  %441 = vmatprep.subr.bf16.mxu0 0
  %442 = vmatpush2.bf16.msra.mxu0 0
  %443 = vmatprep.subr.bf16.mxu0 0
  %444 = vmatpush2.bf16.msra.mxu0 0
  %445 = vmatprep.mubr.bf16.mxu0 0
  %446 = vmatmul.mubr.bf16.gmra.mxu0 %v331
  %v447 = vpop.f32.mrf.mxu0
  %v448 = vadd.f32 %v408, %v447
  %v449 = vpop.f32.mrf.mxu0
  %v450 = vpop.f32.mrf.mxu0
  %v451 = vpop.f32.mrf.mxu0
  %452 = vdwg.mxu0
  %v453 = vld [vmem:[%s2] sm:$0x1]
  %v455 = vlaneseq
  %v456 = vshrl.u32 %v455, 7
  %v457 = vsub.s32 0, %v456
  %v458 = vrot.slane %v453, %v457
  %v460 = vmul.f32 %v448, %v458
  %v461 = vld [vmem:[%s3] sm:$0x1]
  %v463 = vlaneseq
  %v464 = vshrl.u32 %v463, 7
  %v465 = vsub.s32 0, %v464
  %v466 = vrot.slane %v461, %v465
  %v468 = vadd.f32 %v460, %v466
  %v469 = vld [vmem:[%s4] sm:$0xf]
  %v470 = vunpack.c.l.bf16 %v469
  %v471 = vadd.f32 %v468, %v470
  %v472 = vmax.f32 %v471, 0.0
  %v473 = vpack.c.bf16 %v472, %v472
  %vm474 = vcmask 519168
  %475 = vst.msk [vmem:[%s5] sm:$0xf] %vm474, %v473
  // Predicated region
  $region22: #{resnet18_grouped_forward.40} parent=0 // pred_check
    _
  $region23: #{resnet18_grouped_forward.40} parent=0 // pred_check_branch
    %477 = sbr.rel (0) target = $region25
  $region24: #{resnet18_grouped_forward.40} parent=0 // pred_region
    _
  $region25: #{resnet18_grouped_forward.40} parent=0 // pred_fallthru
    _
  // Predicated region
  $region26: #{resnet18_grouped_forward.40} parent=0 // pred_check
    _
  $region27: #{resnet18_grouped_forward.40} parent=0 // pred_check_branch
    %479 = sbr.rel (0) target = $region29
  $region28: #{resnet18_grouped_forward.40} parent=0 // pred_region
    _
  $region29: #{resnet18_grouped_forward.40} parent=0 // pred_fallthru
    _

// kernel: resnet18_grouped_forward.43
$region0: #{resnet18_grouped_forward.43}
  #allocation0 [shape = 'u32[]', space=smem, size = 0x4, offset = 0x4, fixed_abs, tag = 'smem constant byte address 0x4 - core index']
  #allocation1 [shape = 'u32[144,128]{1,0:T(1,128)}', space=vmem, size = 0x12000, scoped, tag = 'internal scratch']
  %s0 = inlined_call_operand.vmem [shape: bf16[2,4,64], index: 0, kind: input, shape index: {}]
  %s1 = inlined_call_operand.vmem [shape: f32[64,10], index: 1, kind: input, shape index: {}]
  %s2 = inlined_call_operand.vmem [shape: f32[1,10], index: 2, kind: input, shape index: {}]
  %s3 = inlined_call_operand.hbm [shape: f32[2,10], index: 3, kind: output, shape index: {}]
  %s4 = sld [smem:[#allocation0]]
  $region22: #{resnet18_grouped_forward.43} parent=0
    _
  %s6 = ssub.s32 1, %s4
  %s7 = scalar_select 0, %s6, %s4
  $region1: #{resnet18_grouped_forward.43} parent=0
    #allocation2 [shape = 'u8[1024]{0}', space=vmem, size = 0x400, scoped, tag = 'output window, operand 0, single buffered']
    #allocation3 [shape = 's32[1]{0}', space=sflag, size = 0x4, scoped, tag = 'scoped memory for resnet18_grouped_forward.43']
    %8 = vsyncpa [#allocation3], 0
    // Predicated region
    $region2: #{resnet18_grouped_forward.43} parent=1 // pred_check
      _
    $region3: #{resnet18_grouped_forward.43} parent=1 // pred_check_branch
      %10 = sbr.rel (0) target = $region5
    $region4: #{resnet18_grouped_forward.43} parent=1 // pred_region
      _
    $region5: #{resnet18_grouped_forward.43} parent=1 // pred_fallthru
      _
    // Predicated region
    $region6: #{resnet18_grouped_forward.43} parent=1 // pred_check
      _
    $region7: #{resnet18_grouped_forward.43} parent=1 // pred_check_branch
      %12 = sbr.rel (0) target = $region9
    $region8: #{resnet18_grouped_forward.43} parent=1 // pred_region
      _
    $region9: #{resnet18_grouped_forward.43} parent=1 // pred_fallthru
      _
    // Predicated region
    $region10: #{resnet18_grouped_forward.43} parent=1 // pred_check
      _
    $region11: #{resnet18_grouped_forward.43} parent=1 // pred_check_branch
      %14 = sbr.rel (0) target = $region13
    $region12: #{resnet18_grouped_forward.43} parent=1 // pred_region
      _
    $region13: #{resnet18_grouped_forward.43} parent=1 // pred_fallthru
      _
    %v15 = vld [vmem:[%s0] sm:$0x3]
    %v16 = vld [vmem:[%s0 + $0x2] sm:$0x3]
    %v17 = vunpack.c.l.bf16 %v15
    %v18 = vunpack.c.l.bf16 %v16
    %vm19 = vcmask 519168
    %v20 = vsel %vm19, %v17, 0.0
    %v21 = vrot.slane %v20, 4
    %v22 = vadd.f32 %v20, %v21
    %v23 = vrot.slane %v22, 2
    %v24 = vadd.f32 %v22, %v23
    %v25 = vrot.slane %v24, 1
    %v26 = vadd.f32 %v24, %v25
    %v27 = vsel %vm19, %v18, 0.0
    %v28 = vrot.slane %v27, 4
    %v29 = vadd.f32 %v27, %v28
    %v30 = vrot.slane %v29, 2
    %v31 = vadd.f32 %v29, %v30
    %v32 = vrot.slane %v31, 1
    %v33 = vadd.f32 %v31, %v32
    %v34 = vrcp.pop 4.0
    %v35 = vmul.f32 %v26, %v34
    %v36 = vmul.f32 %v33, %v34
    %v37 = vld [vmem:[%s1] sm:$0xff]
    %v38 = vld [vmem:[%s1 + $0x8] sm:$0xff]
    %v39 = vld [vmem:[%s1 + $0x10] sm:$0xff]
    %v40 = vld [vmem:[%s1 + $0x18] sm:$0xff]
    %v41 = vld [vmem:[%s1 + $0x20] sm:$0xff]
    %v42 = vld [vmem:[%s1 + $0x28] sm:$0xff]
    %v43 = vld [vmem:[%s1 + $0x30] sm:$0xff]
    %v44 = vld [vmem:[%s1 + $0x38] sm:$0xff]
    %v45 = vld [vmem:[%s2] sm:$0x1]
    %v47 = vlaneseq
    %v48 = vshrl.u32 %v47, 7
    %v49 = vsub.s32 0, %v48
    %v50 = vrot.slane %v45, %v49
    %vm54 = vcmask 1041409
    %v55 = vsel %vm54, %v36, %v35
    %vm56 = vcmask 523264
    %v57 = vsel %vm56, %v55, 0
    %59 = vmatprep.subr.mxu0 0.0
    %60 = vmatpush1.msra.mxu0 0.0
    %61 = vmatprep.subr.mxu0 0.0
    %62 = vmatpush1.msra.mxu0 0.0
    %63 = vmatprep.subr.mxu0 0.0
    %64 = vmatpush1.msra.mxu0 0.0
    %65 = vmatprep.subr.mxu0 0.0
    %66 = vmatpush1.msra.mxu0 0.0
    %67 = vmatprep.subr.mxu0 0.0
    %68 = vmatpush1.msra.mxu0 0.0
    %69 = vmatprep.subr.mxu0 0.0
    %70 = vmatpush1.msra.mxu0 0.0
    %71 = vmatprep.subr.mxu0 0.0
    %72 = vmatpush1.msra.mxu0 0.0
    %73 = vmatprep.subr.mxu0 0.0
    %74 = vmatpush1.msra.mxu0 0.0
    %75 = vmatprep.subr.mxu0 0.0
    %76 = vmatpush1.msra.mxu0 %v44
    %77 = vmatprep.subr.mxu0 0.0
    %78 = vmatpush1.msra.mxu0 %v43
    %79 = vmatprep.subr.mxu0 0.0
    %80 = vmatpush1.msra.mxu0 %v42
    %81 = vmatprep.subr.mxu0 0.0
    %82 = vmatpush1.msra.mxu0 %v41
    %83 = vmatprep.subr.mxu0 0.0
    %84 = vmatpush1.msra.mxu0 %v40
    %85 = vmatprep.subr.mxu0 0.0
    %86 = vmatpush1.msra.mxu0 %v39
    %87 = vmatprep.subr.mxu0 0.0
    %88 = vmatpush1.msra.mxu0 %v38
    %89 = vmatprep.subr.mxu0 0.0
    %90 = vmatpush1.msra.mxu0 %v37
    %91 = vmatprep.subr.mxu0 0.0
    %92 = vmatpush2.msra.mxu0 0.0
    %93 = vmatprep.subr.mxu0 0.0
    %94 = vmatpush2.msra.mxu0 0.0
    %95 = vmatprep.subr.mxu0 0.0
    %96 = vmatpush2.msra.mxu0 0.0
    %97 = vmatprep.subr.mxu0 0.0
    %98 = vmatpush2.msra.mxu0 0.0
    %99 = vmatprep.subr.mxu0 0.0
    %100 = vmatpush2.msra.mxu0 0.0
    %101 = vmatprep.subr.mxu0 0.0
    %102 = vmatpush2.msra.mxu0 0.0
    %103 = vmatprep.subr.mxu0 0.0
    %104 = vmatpush2.msra.mxu0 0.0
    %105 = vmatprep.subr.mxu0 0.0
    %106 = vmatpush2.msra.mxu0 0.0
    %107 = vmatprep.subr.mxu0 0.0
    %108 = vmatpush2.msra.mxu0 0.0
    %109 = vmatprep.subr.mxu0 0.0
    %110 = vmatpush2.msra.mxu0 0.0
    %111 = vmatprep.subr.mxu0 0.0
    %112 = vmatpush2.msra.mxu0 0.0
    %113 = vmatprep.subr.mxu0 0.0
    %114 = vmatpush2.msra.mxu0 0.0
    %115 = vmatprep.subr.mxu0 0.0
    %116 = vmatpush2.msra.mxu0 0.0
    %117 = vmatprep.subr.mxu0 0.0
    %118 = vmatpush2.msra.mxu0 0.0
    %119 = vmatprep.subr.mxu0 0.0
    %120 = vmatpush2.msra.mxu0 0.0
    %121 = vmatprep.subr.mxu0 0.0
    %122 = vmatpush2.msra.mxu0 0.0
    %123 = vmatprep.mubr.f32.mxu0 0.0
    %124 = vmatmul.mubr.f32.gmra.mxu0 %v57
    %v125 = vpop.f32.mrf.mxu0
    %v126 = vadd.f32 %v50, %v125
    %v127 = vpop.f32.mrf.mxu0
    %128 = vdwg.mxu0
    %vm129 = vcmask 74752
    %130 = vst.msk [vmem:[#allocation2] sm:$0x3] %vm129, %v126
    // Predicated region
    $region14: #{resnet18_grouped_forward.43} parent=1 // pred_check
      _
    $region15: #{resnet18_grouped_forward.43} parent=1 // pred_check_branch
      %132 = sbr.rel (0) target = $region17
    $region16: #{resnet18_grouped_forward.43} parent=1 // pred_region
      %s134 = ssub.s32 32, 32
      %135 = vsyncadd [#allocation3], %s134
      %s137 = sshll.u32 [#allocation2], 4
      %s138 = int_to_ptr.vmem [resolvable:$true] %s137
      %140 = dma.vmem_to_hbm [thread:$0]  %s138, 32, %s3, [#allocation3]
    $region17: #{resnet18_grouped_forward.43} parent=1 // pred_fallthru
      _
    // Predicated region
    $region18: #{resnet18_grouped_forward.43} parent=1 // pred_check
      _
    $region19: #{resnet18_grouped_forward.43} parent=1 // pred_check_branch
      %142 = sbr.rel (0) target = $region21
    $region20: #{resnet18_grouped_forward.43} parent=1 // pred_region
      %143 = dma.done [#allocation3], 32
    $region21: #{resnet18_grouped_forward.43} parent=1 // pred_fallthru
      _
    %144 = vsyncpa [#allocation3], 1

// kernel: resnet18_grouped_forward.41
$region0: #{resnet18_grouped_forward.41}
  #allocation0 [shape = 'u32[]', space=smem, size = 0x4, offset = 0x4, fixed_abs, tag = 'smem constant byte address 0x4 - core index']
  #allocation1 [shape = 'u32[144,128]{1,0:T(1,128)}', space=vmem, size = 0x12000, scoped, tag = 'internal scratch']
  %s0 = inlined_call_operand.vmem [shape: bf16[8,576], index: 0, kind: input, shape index: {}]
  %s1 = inlined_call_operand.vmem [shape: bf16[576,64], index: 1, kind: input, shape index: {}]
  %s2 = inlined_call_operand.vmem [shape: f32[1,64], index: 2, kind: input, shape index: {}]
  %s3 = inlined_call_operand.vmem [shape: f32[1,64], index: 3, kind: input, shape index: {}]
  %s4 = inlined_call_operand.vmem [shape: bf16[8,64], index: 4, kind: output, shape index: {}]
  %s5 = sld [smem:[#allocation0]]
  $region26: #{resnet18_grouped_forward.41} parent=0
    _
  %s7 = ssub.s32 1, %s5
  %s8 = scalar_select 0, %s7, %s5
  // Predicated region
  $region2: #{resnet18_grouped_forward.41} parent=0 // pred_check
    _
  $region3: #{resnet18_grouped_forward.41} parent=0 // pred_check_branch
    %10 = sbr.rel (0) target = $region5
  $region4: #{resnet18_grouped_forward.41} parent=0 // pred_region
    _
  $region5: #{resnet18_grouped_forward.41} parent=0 // pred_fallthru
    _
  // Predicated region
  $region6: #{resnet18_grouped_forward.41} parent=0 // pred_check
    _
  $region7: #{resnet18_grouped_forward.41} parent=0 // pred_check_branch
    %12 = sbr.rel (0) target = $region9
  $region8: #{resnet18_grouped_forward.41} parent=0 // pred_region
    _
  $region9: #{resnet18_grouped_forward.41} parent=0 // pred_fallthru
    _
  // Predicated region
  $region10: #{resnet18_grouped_forward.41} parent=0 // pred_check
    _
  $region11: #{resnet18_grouped_forward.41} parent=0 // pred_check_branch
    %14 = sbr.rel (0) target = $region13
  $region12: #{resnet18_grouped_forward.41} parent=0 // pred_region
    _
  $region13: #{resnet18_grouped_forward.41} parent=0 // pred_fallthru
    _
  // Predicated region
  $region14: #{resnet18_grouped_forward.41} parent=0 // pred_check
    _
  $region15: #{resnet18_grouped_forward.41} parent=0 // pred_check_branch
    %16 = sbr.rel (0) target = $region17
  $region16: #{resnet18_grouped_forward.41} parent=0 // pred_region
    _
  $region17: #{resnet18_grouped_forward.41} parent=0 // pred_fallthru
    _
  %v18 = vld [vmem:[%s0] sm:$0xff]
  %v19 = vld [vmem:[%s0 + $0x8] sm:$0xff]
  %v20 = vld [vmem:[%s0 + $0x10] sm:$0xf]
  %v21 = vld [vmem:[%s1] sm:$0xf]
  %v22 = vld [vmem:[%s1 + $0x4] sm:$0xf]
  %v23 = vld [vmem:[%s1 + $0x8] sm:$0xf]
  %v24 = vld [vmem:[%s1 + $0xc] sm:$0xf]
  %v25 = vld [vmem:[%s1 + $0x10] sm:$0xf]
  %v26 = vld [vmem:[%s1 + $0x14] sm:$0xf]
  %v27 = vld [vmem:[%s1 + $0x18] sm:$0xf]
  %v28 = vld [vmem:[%s1 + $0x1c] sm:$0xf]
  %v29 = vld [vmem:[%s1 + $0x20] sm:$0xf]
  %v30 = vld [vmem:[%s1 + $0x24] sm:$0xf]
  %v31 = vld [vmem:[%s1 + $0x28] sm:$0xf]
  %v32 = vld [vmem:[%s1 + $0x2c] sm:$0xf]
  %v33 = vld [vmem:[%s1 + $0x30] sm:$0xf]
  %v34 = vld [vmem:[%s1 + $0x34] sm:$0xf]
  %v35 = vld [vmem:[%s1 + $0x38] sm:$0xf]
  %v36 = vld [vmem:[%s1 + $0x3c] sm:$0xf]
  %v37 = vld [vmem:[%s1 + $0x40] sm:$0xf]
  %v38 = vld [vmem:[%s1 + $0x44] sm:$0xf]
  %v39 = vld [vmem:[%s1 + $0x48] sm:$0xf]
  %v40 = vld [vmem:[%s1 + $0x4c] sm:$0xf]
  %v41 = vld [vmem:[%s1 + $0x50] sm:$0xf]
  %v42 = vld [vmem:[%s1 + $0x54] sm:$0xf]
  %v43 = vld [vmem:[%s1 + $0x58] sm:$0xf]
  %v44 = vld [vmem:[%s1 + $0x5c] sm:$0xf]
  %v45 = vld [vmem:[%s1 + $0x60] sm:$0xf]
  %v46 = vld [vmem:[%s1 + $0x64] sm:$0xf]
  %v47 = vld [vmem:[%s1 + $0x68] sm:$0xf]
  %v48 = vld [vmem:[%s1 + $0x6c] sm:$0xf]
  %v49 = vld [vmem:[%s1 + $0x70] sm:$0xf]
  %v50 = vld [vmem:[%s1 + $0x74] sm:$0xf]
  %v51 = vld [vmem:[%s1 + $0x78] sm:$0xf]
  %v52 = vld [vmem:[%s1 + $0x7c] sm:$0xf]
  %v53 = vld [vmem:[%s1 + $0x80] sm:$0xf]
  %v54 = vld [vmem:[%s1 + $0x84] sm:$0xf]
  %v55 = vld [vmem:[%s1 + $0x88] sm:$0xf]
  %v56 = vld [vmem:[%s1 + $0x8c] sm:$0xf]
  %v57 = vld [vmem:[%s1 + $0x90] sm:$0xf]
  %v58 = vld [vmem:[%s1 + $0x94] sm:$0xf]
  %v59 = vld [vmem:[%s1 + $0x98] sm:$0xf]
  %v60 = vld [vmem:[%s1 + $0x9c] sm:$0xf]
  %v61 = vld [vmem:[%s1 + $0xa0] sm:$0xf]
  %v62 = vld [vmem:[%s1 + $0xa4] sm:$0xf]
  %v63 = vld [vmem:[%s1 + $0xa8] sm:$0xf]
  %v64 = vld [vmem:[%s1 + $0xac] sm:$0xf]
  %v65 = vld [vmem:[%s1 + $0xb0] sm:$0xf]
  %v66 = vld [vmem:[%s1 + $0xb4] sm:$0xf]
  %v67 = vld [vmem:[%s1 + $0xb8] sm:$0xf]
  %v68 = vld [vmem:[%s1 + $0xbc] sm:$0xf]
  %v69 = vld [vmem:[%s1 + $0xc0] sm:$0xf]
  %v70 = vld [vmem:[%s1 + $0xc4] sm:$0xf]
  %v71 = vld [vmem:[%s1 + $0xc8] sm:$0xf]
  %v72 = vld [vmem:[%s1 + $0xcc] sm:$0xf]
  %v73 = vld [vmem:[%s1 + $0xd0] sm:$0xf]
  %v74 = vld [vmem:[%s1 + $0xd4] sm:$0xf]
  %v75 = vld [vmem:[%s1 + $0xd8] sm:$0xf]
  %v76 = vld [vmem:[%s1 + $0xdc] sm:$0xf]
  %v77 = vld [vmem:[%s1 + $0xe0] sm:$0xf]
  %v78 = vld [vmem:[%s1 + $0xe4] sm:$0xf]
  %v79 = vld [vmem:[%s1 + $0xe8] sm:$0xf]
  %v80 = vld [vmem:[%s1 + $0xec] sm:$0xf]
  %v81 = vld [vmem:[%s1 + $0xf0] sm:$0xf]
  %v82 = vld [vmem:[%s1 + $0xf4] sm:$0xf]
  %v83 = vld [vmem:[%s1 + $0xf8] sm:$0xf]
  %v84 = vld [vmem:[%s1 + $0xfc] sm:$0xf]
  %v85 = vld [vmem:[%s1 + $0x100] sm:$0xf]
  %v86 = vld [vmem:[%s1 + $0x104] sm:$0xf]
  %v87 = vld [vmem:[%s1 + $0x108] sm:$0xf]
  %v88 = vld [vmem:[%s1 + $0x10c] sm:$0xf]
  %v89 = vld [vmem:[%s1 + $0x110] sm:$0xf]
  %v90 = vld [vmem:[%s1 + $0x114] sm:$0xf]
  %v91 = vld [vmem:[%s1 + $0x118] sm:$0xf]
  %v92 = vld [vmem:[%s1 + $0x11c] sm:$0xf]
  %v96 = vunpack.c.l.b16 %v18
  %v97 = vunpack.c.h.b16 %v18
  %v98 = vunpack.c.l.b16 %v19
  %v99 = vunpack.c.h.b16 %v19
  %v100 = vunpack.c.l.b16 %v20
  %v101 = vpack.c.b16 %v96, %v96
  %v102 = vpack.c.b16 %v97, %v97
  %v103 = vpack.c.b16 %v98, %v98
  %v104 = vpack.c.b16 %v99, %v99
  %v105 = vpack.c.b16 %v100, %v100
  %v182 = vunpack.c.l.b16 %v21
  %v183 = vunpack.c.l.b16 %v22
  %v184 = vunpack.c.l.b16 %v23
  %v185 = vunpack.c.l.b16 %v24
  %v186 = vunpack.c.l.b16 %v25
  %v187 = vunpack.c.l.b16 %v26
  %v188 = vunpack.c.l.b16 %v27
  %v189 = vunpack.c.l.b16 %v28
  %v190 = vunpack.c.l.b16 %v29
  %v191 = vunpack.c.l.b16 %v30
  %v192 = vunpack.c.l.b16 %v31
  %v193 = vunpack.c.l.b16 %v32
  %v194 = vunpack.c.l.b16 %v33
  %v195 = vunpack.c.l.b16 %v34
  %v196 = vunpack.c.l.b16 %v35
  %v197 = vunpack.c.l.b16 %v36
  %v198 = vunpack.c.l.b16 %v37
  %v199 = vunpack.c.l.b16 %v38
  %v200 = vunpack.c.l.b16 %v39
  %v201 = vunpack.c.l.b16 %v40
  %v202 = vunpack.c.l.b16 %v41
  %v203 = vunpack.c.l.b16 %v42
  %v204 = vunpack.c.l.b16 %v43
  %v205 = vunpack.c.l.b16 %v44
  %v206 = vunpack.c.l.b16 %v45
  %v207 = vunpack.c.l.b16 %v46
  %v208 = vunpack.c.l.b16 %v47
  %v209 = vunpack.c.l.b16 %v48
  %v210 = vunpack.c.l.b16 %v49
  %v211 = vunpack.c.l.b16 %v50
  %v212 = vunpack.c.l.b16 %v51
  %v213 = vunpack.c.l.b16 %v52
  %v214 = vunpack.c.l.b16 %v53
  %v215 = vunpack.c.l.b16 %v54
  %v216 = vunpack.c.l.b16 %v55
  %v217 = vunpack.c.l.b16 %v56
  %v218 = vunpack.c.l.b16 %v57
  %v219 = vunpack.c.l.b16 %v58
  %v220 = vunpack.c.l.b16 %v59
  %v221 = vunpack.c.l.b16 %v60
  %v222 = vunpack.c.l.b16 %v61
  %v223 = vunpack.c.l.b16 %v62
  %v224 = vunpack.c.l.b16 %v63
  %v225 = vunpack.c.l.b16 %v64
  %v226 = vunpack.c.l.b16 %v65
  %v227 = vunpack.c.l.b16 %v66
  %v228 = vunpack.c.l.b16 %v67
  %v229 = vunpack.c.l.b16 %v68
  %v230 = vunpack.c.l.b16 %v69
  %v231 = vunpack.c.l.b16 %v70
  %v232 = vunpack.c.l.b16 %v71
  %v233 = vunpack.c.l.b16 %v72
  %v234 = vunpack.c.l.b16 %v73
  %v235 = vunpack.c.l.b16 %v74
  %v236 = vunpack.c.l.b16 %v75
  %v237 = vunpack.c.l.b16 %v76
  %v238 = vunpack.c.l.b16 %v77
  %v239 = vunpack.c.l.b16 %v78
  %v240 = vunpack.c.l.b16 %v79
  %v241 = vunpack.c.l.b16 %v80
  %v242 = vunpack.c.l.b16 %v81
  %v243 = vunpack.c.l.b16 %v82
  %v244 = vunpack.c.l.b16 %v83
  %v245 = vunpack.c.l.b16 %v84
  %v246 = vunpack.c.l.b16 %v85
  %v247 = vunpack.c.l.b16 %v86
  %v248 = vunpack.c.l.b16 %v87
  %v249 = vunpack.c.l.b16 %v88
  %v250 = vunpack.c.l.b16 %v89
  %v251 = vunpack.c.l.b16 %v90
  %v252 = vunpack.c.l.b16 %v91
  %v253 = vunpack.c.l.b16 %v92
  %v254 = vpack.c.b16 %v183, %v182
  %v255 = vpack.c.b16 %v185, %v184
  %v256 = vpack.c.b16 %v187, %v186
  %v257 = vpack.c.b16 %v189, %v188
  %v258 = vpack.c.b16 %v191, %v190
  %v259 = vpack.c.b16 %v193, %v192
  %v260 = vpack.c.b16 %v195, %v194
  %v261 = vpack.c.b16 %v197, %v196
  %v262 = vpack.c.b16 %v199, %v198
  %v263 = vpack.c.b16 %v201, %v200
  %v264 = vpack.c.b16 %v203, %v202
  %v265 = vpack.c.b16 %v205, %v204
  %v266 = vpack.c.b16 %v207, %v206
  %v267 = vpack.c.b16 %v209, %v208
  %v268 = vpack.c.b16 %v211, %v210
  %v269 = vpack.c.b16 %v213, %v212
  %v270 = vpack.c.b16 %v215, %v214
  %v271 = vpack.c.b16 %v217, %v216
  %v272 = vpack.c.b16 %v219, %v218
  %v273 = vpack.c.b16 %v221, %v220
  %v274 = vpack.c.b16 %v223, %v222
  %v275 = vpack.c.b16 %v225, %v224
  %v276 = vpack.c.b16 %v227, %v226
  %v277 = vpack.c.b16 %v229, %v228
  %v278 = vpack.c.b16 %v231, %v230
  %v279 = vpack.c.b16 %v233, %v232
  %v280 = vpack.c.b16 %v235, %v234
  %v281 = vpack.c.b16 %v237, %v236
  %v282 = vpack.c.b16 %v239, %v238
  %v283 = vpack.c.b16 %v241, %v240
  %v284 = vpack.c.b16 %v243, %v242
  %v285 = vpack.c.b16 %v245, %v244
  %v286 = vpack.c.b16 %v247, %v246
  %v287 = vpack.c.b16 %v249, %v248
  %v288 = vpack.c.b16 %v251, %v250
  %v289 = vpack.c.b16 %v253, %v252
  %vm326 = vcmask 523264
  %v328 = vsel %vm326, %v105, 0
  %330 = vmatprep.subr.bf16.mxu0 0
  %331 = vmatpush1.bf16.msra.mxu0 %v261
  %332 = vmatprep.subr.bf16.mxu0 0
  %333 = vmatpush1.bf16.msra.mxu0 %v260
  %334 = vmatprep.subr.bf16.mxu0 0
  %335 = vmatpush1.bf16.msra.mxu0 %v259
  %336 = vmatprep.subr.bf16.mxu0 0
  %337 = vmatpush1.bf16.msra.mxu0 %v258
  %338 = vmatprep.subr.bf16.mxu0 0
  %339 = vmatpush1.bf16.msra.mxu0 %v257
  %340 = vmatprep.subr.bf16.mxu0 0
  %341 = vmatpush1.bf16.msra.mxu0 %v256
  %342 = vmatprep.subr.bf16.mxu0 0
  %343 = vmatpush1.bf16.msra.mxu0 %v255
  %344 = vmatprep.subr.bf16.mxu0 0
  %345 = vmatpush1.bf16.msra.mxu0 %v254
  %346 = vmatprep.subr.bf16.mxu0 0
  %347 = vmatpush2.bf16.msra.mxu0 %v269
  %348 = vmatprep.subr.bf16.mxu0 0
  %349 = vmatpush2.bf16.msra.mxu0 %v268
  %350 = vmatprep.subr.bf16.mxu0 0
  %351 = vmatpush2.bf16.msra.mxu0 %v267
  %352 = vmatprep.subr.bf16.mxu0 0
  %353 = vmatpush2.bf16.msra.mxu0 %v266
  %354 = vmatprep.subr.bf16.mxu0 0
  %355 = vmatpush2.bf16.msra.mxu0 %v265
  %356 = vmatprep.subr.bf16.mxu0 0
  %357 = vmatpush2.bf16.msra.mxu0 %v264
  %358 = vmatprep.subr.bf16.mxu0 0
  %359 = vmatpush2.bf16.msra.mxu0 %v263
  %360 = vmatprep.subr.bf16.mxu0 0
  %361 = vmatpush2.bf16.msra.mxu0 %v262
  %362 = vmatprep.mubr.bf16.mxu0 %v102
  %363 = vmatmul.mubr.bf16.gmra.mxu0 %v101
  %v364 = vpop.f32.mrf.mxu0
  %v365 = vadd.f32 0.0, %v364
  %v366 = vpop.f32.mrf.mxu0
  %v367 = vpop.f32.mrf.mxu0
  %v368 = vpop.f32.mrf.mxu0
  %369 = vdwg.mxu0
  %370 = vmatprep.subr.bf16.mxu0 0
  %371 = vmatpush1.bf16.msra.mxu0 %v277
  %372 = vmatprep.subr.bf16.mxu0 0
  %373 = vmatpush1.bf16.msra.mxu0 %v276
  %374 = vmatprep.subr.bf16.mxu0 0
  %375 = vmatpush1.bf16.msra.mxu0 %v275
  %376 = vmatprep.subr.bf16.mxu0 0
  %377 = vmatpush1.bf16.msra.mxu0 %v274
  %378 = vmatprep.subr.bf16.mxu0 0
  %379 = vmatpush1.bf16.msra.mxu0 %v273
  %380 = vmatprep.subr.bf16.mxu0 0
  %381 = vmatpush1.bf16.msra.mxu0 %v272
  %382 = vmatprep.subr.bf16.mxu0 0
  %383 = vmatpush1.bf16.msra.mxu0 %v271
  %384 = vmatprep.subr.bf16.mxu0 0
  %385 = vmatpush1.bf16.msra.mxu0 %v270
  %386 = vmatprep.subr.bf16.mxu0 0
  %387 = vmatpush2.bf16.msra.mxu0 %v285
  %388 = vmatprep.subr.bf16.mxu0 0
  %389 = vmatpush2.bf16.msra.mxu0 %v284
  %390 = vmatprep.subr.bf16.mxu0 0
  %391 = vmatpush2.bf16.msra.mxu0 %v283
  %392 = vmatprep.subr.bf16.mxu0 0
  %393 = vmatpush2.bf16.msra.mxu0 %v282
  %394 = vmatprep.subr.bf16.mxu0 0
  %395 = vmatpush2.bf16.msra.mxu0 %v281
  %396 = vmatprep.subr.bf16.mxu0 0
  %397 = vmatpush2.bf16.msra.mxu0 %v280
  %398 = vmatprep.subr.bf16.mxu0 0
  %399 = vmatpush2.bf16.msra.mxu0 %v279
  %400 = vmatprep.subr.bf16.mxu0 0
  %401 = vmatpush2.bf16.msra.mxu0 %v278
  %402 = vmatprep.mubr.bf16.mxu0 %v104
  %403 = vmatmul.mubr.bf16.gmra.mxu0 %v103
  %v404 = vpop.f32.mrf.mxu0
  %v405 = vadd.f32 %v365, %v404
  %v406 = vpop.f32.mrf.mxu0
  %v407 = vpop.f32.mrf.mxu0
  %v408 = vpop.f32.mrf.mxu0
  %409 = vdwg.mxu0
  %410 = vmatprep.subr.bf16.mxu0 0
  %411 = vmatpush1.bf16.msra.mxu0 0
  %412 = vmatprep.subr.bf16.mxu0 0
  %413 = vmatpush1.bf16.msra.mxu0 0
  %414 = vmatprep.subr.bf16.mxu0 0
  %415 = vmatpush1.bf16.msra.mxu0 0
  %416 = vmatprep.subr.bf16.mxu0 0
  %417 = vmatpush1.bf16.msra.mxu0 0
  %418 = vmatprep.subr.bf16.mxu0 0
  %419 = vmatpush1.bf16.msra.mxu0 %v289
  %420 = vmatprep.subr.bf16.mxu0 0
  %421 = vmatpush1.bf16.msra.mxu0 %v288
  %422 = vmatprep.subr.bf16.mxu0 0
  %423 = vmatpush1.bf16.msra.mxu0 %v287
  %424 = vmatprep.subr.bf16.mxu0 0
  %425 = vmatpush1.bf16.msra.mxu0 %v286
  %426 = vmatprep.subr.bf16.mxu0 0
  %427 = vmatpush2.bf16.msra.mxu0 0
  %428 = vmatprep.subr.bf16.mxu0 0
  %429 = vmatpush2.bf16.msra.mxu0 0
  %430 = vmatprep.subr.bf16.mxu0 0
  %431 = vmatpush2.bf16.msra.mxu0 0
  %432 = vmatprep.subr.bf16.mxu0 0
  %433 = vmatpush2.bf16.msra.mxu0 0
  %434 = vmatprep.subr.bf16.mxu0 0
  %435 = vmatpush2.bf16.msra.mxu0 0
  %436 = vmatprep.subr.bf16.mxu0 0
  %437 = vmatpush2.bf16.msra.mxu0 0
  %438 = vmatprep.subr.bf16.mxu0 0
  %439 = vmatpush2.bf16.msra.mxu0 0
  %440 = vmatprep.subr.bf16.mxu0 0
  %441 = vmatpush2.bf16.msra.mxu0 0
  %442 = vmatprep.mubr.bf16.mxu0 0
  %443 = vmatmul.mubr.bf16.gmra.mxu0 %v328
  %v444 = vpop.f32.mrf.mxu0
  %v445 = vadd.f32 %v405, %v444
  %v446 = vpop.f32.mrf.mxu0
  %v447 = vpop.f32.mrf.mxu0
  %v448 = vpop.f32.mrf.mxu0
  %449 = vdwg.mxu0
  %v450 = vld [vmem:[%s2] sm:$0x1]
  %v452 = vlaneseq
  %v453 = vshrl.u32 %v452, 7
  %v454 = vsub.s32 0, %v453
  %v455 = vrot.slane %v450, %v454
  %v457 = vmul.f32 %v445, %v455
  %v458 = vld [vmem:[%s3] sm:$0x1]
  %v460 = vlaneseq
  %v461 = vshrl.u32 %v460, 7
  %v462 = vsub.s32 0, %v461
  %v463 = vrot.slane %v458, %v462
  %v465 = vadd.f32 %v457, %v463
  %v466 = vmax.f32 %v465, 0.0
  %v467 = vpack.c.bf16 %v466, %v466
  %vm468 = vcmask 519168
  %469 = vst.msk [vmem:[%s4] sm:$0xf] %vm468, %v467
  // Predicated region
  $region18: #{resnet18_grouped_forward.41} parent=0 // pred_check
    _
  $region19: #{resnet18_grouped_forward.41} parent=0 // pred_check_branch
    %471 = sbr.rel (0) target = $region21
  $region20: #{resnet18_grouped_forward.41} parent=0 // pred_region
    _
  $region21: #{resnet18_grouped_forward.41} parent=0 // pred_fallthru
    _
  // Predicated region
  $region22: #{resnet18_grouped_forward.41} parent=0 // pred_check
    _
  $region23: #{resnet18_grouped_forward.41} parent=0 // pred_check_branch
    %473 = sbr.rel (0) target = $region25
  $region24: #{resnet18_grouped_forward.41} parent=0 // pred_region
    _
  $region25: #{resnet18_grouped_forward.41} parent=0 // pred_fallthru
    _

</llo_original>
